<compile_context>
chip_gen: v5e
topology: v5e:2x2
jax: 0.10.0
libtpu: 0.0.40
codegen_flags: <defaults>
</compile_context>

<pallas_src>
import functools

import jax
import jax.numpy as jnp
from jax.experimental import pallas as pl
from jax.experimental.pallas import tpu as pltpu


# Parity tap tables.  With xp = x zero-padded by 1 pixel on each spatial side,
#   y[2m+pr, 2n+pc] = sum_{taps} sum_c xp[c, m+dh, n+dw] * W[c, d, kh, kw]
# Each entry is (dh, dw, kh, kw).
_PARITY_TAPS = {
    (0, 0): ((1, 1, 0, 0), (1, 0, 0, 2), (0, 1, 2, 0), (0, 0, 2, 2)),
    (0, 1): ((1, 1, 0, 1), (0, 1, 2, 1)),
    (1, 0): ((1, 1, 1, 0), (1, 0, 1, 2)),
    (1, 1): ((1, 1, 1, 1),),
}
_PARITIES = ((0, 0), (0, 1), (1, 0), (1, 1))


def _make_fused_kernel(Cin, Cout, H, W, Cskip):
    """Fused ConvTranspose2d(k=3,s=2,p=0) + ReLU + center_crop (+ skip concat)."""
    Hh, Wh = H + 1, W + 1          # per-parity plane size
    has_skip = Cskip > 0

    def kernel(*refs):
        if has_skip:
            x_ref, skip_ref, p_ref, e_ref, w_ref, b_ref, o_ref, xp_ref = refs
        else:
            x_ref, p_ref, e_ref, w_ref, b_ref, o_ref, xp_ref = refs
        # x_ref   : (1, Cin, H, W)                 VMEM block
        # skip_ref: (1, Cskip, Hs, Ws)             VMEM block (only if has_skip)
        # p_ref   : (2, Hs, Hh) f32                row parity-select / crop matrices
        # e_ref   : (2, Wh, Ws) f32                col parity-scatter / crop matrices
        # w_ref   : (9*Cin*Cout,) SMEM             flat[((kh*3+kw)*Cin + c)*Cout + d]
        # b_ref   : (Cout,)       SMEM
        # o_ref   : (1, Cskip+Cout, Hs, Ws)        VMEM block (final output)
        # xp_ref  : (Cin, H+2, W+2) f32            VMEM scratch, zero-padded x

        # ---- in-VMEM 1-pixel zero pad of x (no HBM pass for the pad) ----
        xp_ref[...] = jnp.zeros_like(xp_ref)
        xp_ref[:, 1:H + 1, 1:W + 1] = x_ref[0].astype(jnp.float32)

        # ---- selection matrices (loaded once, reused for all channels) ----
        P = (p_ref[0], p_ref[1])      # (Hs, Hh) each
        E = (e_ref[0], e_ref[1])      # (Wh, Ws) each

        # ---- skip passthrough: channel-concat fused into the same output ----
        if has_skip:
            o_ref[0, :Cskip] = skip_ref[0].astype(o_ref.dtype)

        # ---- polyphase deconv (VPU MACs) + MXU parity interleave / crop ----
        # rows[pr][d] : (Hh, Ws) column-interleaved (and column-cropped) plane.
        rows = [[None] * Cout for _ in range(2)]
        for (pr, pc) in _PARITIES:
            acc = [jnp.zeros((Hh, Wh), jnp.float32) for _ in range(Cout)]
            for (dh, dw, kh, kw) in _PARITY_TAPS[(pr, pc)]:
                for c in range(Cin):
                    # (Hh, Wh) window, reused across all Cout output channels.
                    win = xp_ref[c, dh:dh + Hh, dw:dw + Wh]
                    base = ((kh * 3 + kw) * Cin + c) * Cout
                    for d in range(Cout):
                        acc[d] = acc[d] + win * w_ref[base + d]
            for d in range(Cout):
                plane = jnp.maximum(acc[d] + b_ref[d], 0.0)        # bias + ReLU
                contrib = jnp.dot(plane, E[pc],
                                  preferred_element_type=jnp.float32)
                rows[pr][d] = contrib if rows[pr][d] is None else rows[pr][d] + contrib

        for d in range(Cout):
            y = (jnp.dot(P[0], rows[0][d], preferred_element_type=jnp.float32)
                 + jnp.dot(P[1], rows[1][d], preferred_element_type=jnp.float32))
            o_ref[0, Cskip + d] = y.astype(o_ref.dtype)

    return kernel


def center_crop(layer, max_height, max_width):
    """Matches the original PyTorch center_crop (floor bias for odd margins)."""
    _, _, h, w = layer.shape
    xy1 = (w - max_width) // 2
    xy2 = (h - max_height) // 2
    return layer[:, :, xy2:xy2 + max_height, xy1:xy1 + max_width]


@functools.partial(jax.jit, static_argnames=("use_skip",))
def transition_up_forward(x, skip, w_pt, b, use_skip=False):
    N, Cin, H, W = x.shape
    Cout = w_pt.shape[1]
    Ho, Wo = 2 * H + 1, 2 * W + 1
    Hh, Wh = H + 1, W + 1

    if use_skip:
        Cskip, Hs, Ws = skip.shape[1], skip.shape[2], skip.shape[3]
        r0, c0 = (Ho - Hs) // 2, (Wo - Ws) // 2       # center_crop offsets
    else:
        Cskip, Hs, Ws, r0, c0 = 0, Ho, Wo, 0, 0

    # ConvTranspose2d weight (Cin, Cout, 3, 3) -> flat SMEM scalars with index
    # ((kh*3 + kw)*Cin + c)*Cout + d.
    w_flat = jnp.transpose(w_pt, (2, 3, 0, 1)).reshape(-1).astype(jnp.float32)
    b_flat = b.astype(jnp.float32)

    # Static-shape parity-select / crop matrices:
    #   P[pr][i, m] = 1 iff (i + r0) == 2*m + pr     (output row -> source row)
    #   E[pc][k, j] = 1 iff (j + c0) == 2*k + pc     (source col -> output col)
    i_out = jnp.arange(Hs, dtype=jnp.int32)[:, None] + r0
    m_src = jnp.arange(Hh, dtype=jnp.int32)[None, :]
    P = jnp.stack([i_out == 2 * m_src, i_out == 2 * m_src + 1]).astype(jnp.float32)
    k_src = jnp.arange(Wh, dtype=jnp.int32)[:, None]
    j_out = jnp.arange(Ws, dtype=jnp.int32)[None, :] + c0
    E = jnp.stack([j_out == 2 * k_src, j_out == 2 * k_src + 1]).astype(jnp.float32)

    kernel = _make_fused_kernel(Cin, Cout, H, W, Cskip)

    in_specs = [pl.BlockSpec((1, Cin, H, W), lambda n: (n, 0, 0, 0))]
    operands = [x]
    if use_skip:
        in_specs.append(pl.BlockSpec((1, Cskip, Hs, Ws), lambda n: (n, 0, 0, 0)))
        operands.append(skip)
    in_specs += [
        pl.BlockSpec((2, Hs, Hh), lambda n: (0, 0, 0)),
        pl.BlockSpec((2, Wh, Ws), lambda n: (0, 0, 0)),
        pl.BlockSpec(memory_space=pltpu.MemorySpace.SMEM),
        pl.BlockSpec(memory_space=pltpu.MemorySpace.SMEM),
    ]
    operands += [P, E, w_flat, b_flat]

    return pl.pallas_call(
        kernel,
        out_shape=jax.ShapeDtypeStruct((N, Cskip + Cout, Hs, Ws), x.dtype),
        grid=(N,),
        in_specs=in_specs,
        out_specs=pl.BlockSpec((1, Cskip + Cout, Hs, Ws), lambda n: (n, 0, 0, 0)),
        scratch_shapes=[pltpu.VMEM((Cin, H + 2, W + 2), jnp.float32)],
        compiler_params=pltpu.CompilerParams(dimension_semantics=("parallel",)),
    )(*operands)


def _reference_forward(x, skip, w_pt, b, use_skip=True):
    """Pure-JAX reference of PyTorch ConvTranspose2d(k=3,s=2,p=0)+ReLU semantics."""
    N, Cin, H, W = x.shape
    Cout = w_pt.shape[1]
    y = jnp.zeros((N, Cout, 2 * H + 1, 2 * W + 1), jnp.float32)
    for kh in range(3):
        for kw in range(3):
            contrib = jnp.einsum('nchw,cd->ndhw', x, w_pt[:, :, kh, kw])
            y = y.at[:, :, kh:kh + 2 * H:2, kw:kw + 2 * W:2].add(contrib)
    y = jnp.maximum(y + b.reshape(1, Cout, 1, 1), 0.0)
    if use_skip:
        y = center_crop(y, skip.shape[2], skip.shape[3])
        y = jnp.concatenate([skip, y], axis=1)
    return y


if __name__ == "__main__":
    key = jax.random.PRNGKey(0)
    k1, k2, k3, k4 = jax.random.split(key, 4)

    N, Cin, Cout, H, W = 2, 8, 4, 16, 16
    Cskip, Hs, Ws = 6, 32, 32        # skip spatial <= 2H+1, as in the U-Net decoder

    x = jax.random.normal(k1, (N, Cin, H, W), jnp.float32)
    skip = jax.random.normal(k2, (N, Cskip, Hs, Ws), jnp.float32)
    # deterministic "kaiming-ish" init of ConvTranspose2d weight/bias
    w_pt = jax.random.normal(k3, (Cin, Cout, 3, 3), jnp.float32) * (2.0 / (Cin * 9)) ** 0.5
    b = jax.random.normal(k4, (Cout,), jnp.float32) * 0.01

    out = jax.block_until_ready(transition_up_forward(x, skip, w_pt, b, use_skip=True))
    ref = _reference_forward(x, skip, w_pt, b, use_skip=True)
    assert out.shape == (N, Cskip + Cout, Hs, Ws), out.shape
    assert jnp.allclose(out, ref, atol=1e-4, rtol=1e-4), float(jnp.max(jnp.abs(out - ref)))

    # use_skip=False branch (no crop / concat), matches PyTorch forward default.
    out2 = jax.block_until_ready(transition_up_forward(x, skip, w_pt, b, use_skip=False))
    ref2 = _reference_forward(x, skip, w_pt, b, use_skip=False)
    assert out2.shape == (N, Cout, 2 * H + 1, 2 * W + 1), out2.shape
    assert jnp.allclose(out2, ref2, atol=1e-4, rtol=1e-4), float(jnp.max(jnp.abs(out2 - ref2)))

    print("KERNEL_OK")
</pallas_src>

<mosaic_0001>
module attributes {stable_mosaic.version = 11 : i64} {
  func.func @kernel(%arg0: i32, %arg1: memref<1x8x16x16xf32, #tpu.memory_space<vmem>>, %arg2: memref<1x6x32x32xf32, #tpu.memory_space<vmem>>, %arg3: memref<2x32x17xf32, #tpu.memory_space<vmem>>, %arg4: memref<2x17x32xf32, #tpu.memory_space<vmem>>, %arg5: memref<288xf32, #tpu.memory_space<smem>>, %arg6: memref<4xf32, #tpu.memory_space<smem>>, %arg7: memref<1x10x32x32xf32, #tpu.memory_space<vmem>>, %arg8: memref<8x18x18xf32, #tpu.memory_space<vmem>>) attributes {dimension_semantics = [#tpu.dimension_semantics<parallel>], iteration_bounds = array<i64: 2>, scalar_prefetch = 0 : i64, scratch_operands = 1 : i64, tpu.core_type = #tpu.core_type<tc>, window_params = [{transform_indices = @transform_0, window_bounds = array<i64: 1, 8, 16, 16>}, {transform_indices = @transform_1, window_bounds = array<i64: 1, 6, 32, 32>}, {pipeline_mode = #tpu.pipeline_mode<synchronous>, transform_indices = @transform_2, window_bounds = array<i64: 2, 32, 17>}, {pipeline_mode = #tpu.pipeline_mode<synchronous>, transform_indices = @transform_3, window_bounds = array<i64: 2, 17, 32>}, {transform_indices = @transform_4, window_bounds = array<i64: 288>}, {transform_indices = @transform_5, window_bounds = array<i64: 4>}, {transform_indices = @transform_6, window_bounds = array<i64: 1, 10, 32, 32>}]} {
    %cst = arith.constant 0.000000e+00 : f32
    %0 = vector.broadcast %cst : f32 to vector<8x18x18xf32>
    %c0 = arith.constant 0 : index
    %c0_0 = arith.constant 0 : index
    %c0_1 = arith.constant 0 : index
    %1 = vector.load %arg8[%c0, %c0_0, %c0_1] : memref<8x18x18xf32, #tpu.memory_space<vmem>>, vector<8x18x18xf32>
    tpu.vector_store %arg8[%c0, %c0_0, %c0_1], %0 {strides = array<i32>} : memref<8x18x18xf32, #tpu.memory_space<vmem>>, vector<8x18x18xf32>,
    %c0_2 = arith.constant 0 : index
    %c0_3 = arith.constant 0 : index
    %c0_4 = arith.constant 0 : index
    %c0_5 = arith.constant 0 : index
    %2 = vector.load %arg1[%c0_2, %c0_3, %c0_4, %c0_5] : memref<1x8x16x16xf32, #tpu.memory_space<vmem>>, vector<1x8x16x16xf32>
    %3 = vector.shape_cast %2 : vector<1x8x16x16xf32> to vector<8x16x16xf32>
    %c0_6 = arith.constant 0 : index
    %c1 = arith.constant 1 : index
    %c1_7 = arith.constant 1 : index
    %4 = vector.load %arg8[%c0_6, %c1, %c1_7] : memref<8x18x18xf32, #tpu.memory_space<vmem>>, vector<8x16x16xf32>
    tpu.vector_store %arg8[%c0_6, %c1, %c1_7], %3 {strides = array<i32>} : memref<8x18x18xf32, #tpu.memory_space<vmem>>, vector<8x16x16xf32>,
    %c0_8 = arith.constant 0 : index
    %c0_9 = arith.constant 0 : index
    %c0_10 = arith.constant 0 : index
    %5 = vector.load %arg3[%c0_8, %c0_9, %c0_10] : memref<2x32x17xf32, #tpu.memory_space<vmem>>, vector<1x32x17xf32>
    %6 = vector.shape_cast %5 : vector<1x32x17xf32> to vector<32x17xf32>
    %c1_11 = arith.constant 1 : index
    %c0_12 = arith.constant 0 : index
    %c0_13 = arith.constant 0 : index
    %7 = vector.load %arg3[%c1_11, %c0_12, %c0_13] : memref<2x32x17xf32, #tpu.memory_space<vmem>>, vector<1x32x17xf32>
    %8 = vector.shape_cast %7 : vector<1x32x17xf32> to vector<32x17xf32>
    %c0_14 = arith.constant 0 : index
    %c0_15 = arith.constant 0 : index
    %c0_16 = arith.constant 0 : index
    %9 = vector.load %arg4[%c0_14, %c0_15, %c0_16] : memref<2x17x32xf32, #tpu.memory_space<vmem>>, vector<1x17x32xf32>
    %10 = vector.shape_cast %9 : vector<1x17x32xf32> to vector<17x32xf32>
    %c1_17 = arith.constant 1 : index
    %c0_18 = arith.constant 0 : index
    %c0_19 = arith.constant 0 : index
    %11 = vector.load %arg4[%c1_17, %c0_18, %c0_19] : memref<2x17x32xf32, #tpu.memory_space<vmem>>, vector<1x17x32xf32>
    %12 = vector.shape_cast %11 : vector<1x17x32xf32> to vector<17x32xf32>
    %c0_20 = arith.constant 0 : index
    %c0_21 = arith.constant 0 : index
    %c0_22 = arith.constant 0 : index
    %c0_23 = arith.constant 0 : index
    %13 = vector.load %arg2[%c0_20, %c0_21, %c0_22, %c0_23] : memref<1x6x32x32xf32, #tpu.memory_space<vmem>>, vector<1x6x32x32xf32>
    %14 = vector.shape_cast %13 : vector<1x6x32x32xf32> to vector<6x32x32xf32>
    %c0_24 = arith.constant 0 : index
    %c0_25 = arith.constant 0 : index
    %c0_26 = arith.constant 0 : index
    %c0_27 = arith.constant 0 : index
    %15 = vector.load %arg7[%c0_24, %c0_25, %c0_26, %c0_27] : memref<1x10x32x32xf32, #tpu.memory_space<vmem>>, vector<1x6x32x32xf32>
    %16 = vector.shape_cast %15 : vector<1x6x32x32xf32> to vector<6x32x32xf32>
    %17 = vector.shape_cast %14 : vector<6x32x32xf32> to vector<1x6x32x32xf32>
    tpu.vector_store %arg7[%c0_24, %c0_25, %c0_26, %c0_27], %17 {strides = array<i32>} : memref<1x10x32x32xf32, #tpu.memory_space<vmem>>, vector<1x6x32x32xf32>,
    %cst_28 = arith.constant 0.000000e+00 : f32
    %18 = vector.broadcast %cst_28 : f32 to vector<17x17xf32>
    %cst_29 = arith.constant 0.000000e+00 : f32
    %19 = vector.broadcast %cst_29 : f32 to vector<17x17xf32>
    %cst_30 = arith.constant 0.000000e+00 : f32
    %20 = vector.broadcast %cst_30 : f32 to vector<17x17xf32>
    %cst_31 = arith.constant 0.000000e+00 : f32
    %21 = vector.broadcast %cst_31 : f32 to vector<17x17xf32>
    %c0_32 = arith.constant 0 : index
    %c1_33 = arith.constant 1 : index
    %c1_34 = arith.constant 1 : index
    %22 = vector.load %arg8[%c0_32, %c1_33, %c1_34] : memref<8x18x18xf32, #tpu.memory_space<vmem>>, vector<1x17x17xf32>
    %23 = vector.shape_cast %22 : vector<1x17x17xf32> to vector<17x17xf32>
    %c0_35 = arith.constant 0 : index
    %24 = memref.load %arg5[%c0_35] : memref<288xf32, #tpu.memory_space<smem>>
    %25 = vector.broadcast %24 : f32 to vector<17x17xf32>
    %26 = arith.mulf %23, %25 : vector<17x17xf32>
    %27 = arith.addf %18, %26 : vector<17x17xf32>
    %c1_36 = arith.constant 1 : index
    %28 = memref.load %arg5[%c1_36] : memref<288xf32, #tpu.memory_space<smem>>
    %29 = vector.broadcast %28 : f32 to vector<17x17xf32>
    %30 = arith.mulf %23, %29 : vector<17x17xf32>
    %31 = arith.addf %19, %30 : vector<17x17xf32>
    %c2 = arith.constant 2 : index
    %32 = memref.load %arg5[%c2] : memref<288xf32, #tpu.memory_space<smem>>
    %33 = vector.broadcast %32 : f32 to vector<17x17xf32>
    %34 = arith.mulf %23, %33 : vector<17x17xf32>
    %35 = arith.addf %20, %34 : vector<17x17xf32>
    %c3 = arith.constant 3 : index
    %36 = memref.load %arg5[%c3] : memref<288xf32, #tpu.memory_space<smem>>
    %37 = vector.broadcast %36 : f32 to vector<17x17xf32>
    %38 = arith.mulf %23, %37 : vector<17x17xf32>
    %39 = arith.addf %21, %38 : vector<17x17xf32>
    %c1_37 = arith.constant 1 : index
    %c1_38 = arith.constant 1 : index
    %c1_39 = arith.constant 1 : index
    %40 = vector.load %arg8[%c1_37, %c1_38, %c1_39] : memref<8x18x18xf32, #tpu.memory_space<vmem>>, vector<1x17x17xf32>
    %41 = vector.shape_cast %40 : vector<1x17x17xf32> to vector<17x17xf32>
    %c4 = arith.constant 4 : index
    %42 = memref.load %arg5[%c4] : memref<288xf32, #tpu.memory_space<smem>>
    %43 = vector.broadcast %42 : f32 to vector<17x17xf32>
    %44 = arith.mulf %41, %43 : vector<17x17xf32>
    %45 = arith.addf %27, %44 : vector<17x17xf32>
    %c5 = arith.constant 5 : index
    %46 = memref.load %arg5[%c5] : memref<288xf32, #tpu.memory_space<smem>>
    %47 = vector.broadcast %46 : f32 to vector<17x17xf32>
    %48 = arith.mulf %41, %47 : vector<17x17xf32>
    %49 = arith.addf %31, %48 : vector<17x17xf32>
    %c6 = arith.constant 6 : index
    %50 = memref.load %arg5[%c6] : memref<288xf32, #tpu.memory_space<smem>>
    %51 = vector.broadcast %50 : f32 to vector<17x17xf32>
    %52 = arith.mulf %41, %51 : vector<17x17xf32>
    %53 = arith.addf %35, %52 : vector<17x17xf32>
    %c7 = arith.constant 7 : index
    %54 = memref.load %arg5[%c7] : memref<288xf32, #tpu.memory_space<smem>>
    %55 = vector.broadcast %54 : f32 to vector<17x17xf32>
    %56 = arith.mulf %41, %55 : vector<17x17xf32>
    %57 = arith.addf %39, %56 : vector<17x17xf32>
    %c2_40 = arith.constant 2 : index
    %c1_41 = arith.constant 1 : index
    %c1_42 = arith.constant 1 : index
    %58 = vector.load %arg8[%c2_40, %c1_41, %c1_42] : memref<8x18x18xf32, #tpu.memory_space<vmem>>, vector<1x17x17xf32>
    %59 = vector.shape_cast %58 : vector<1x17x17xf32> to vector<17x17xf32>
    %c8 = arith.constant 8 : index
    %60 = memref.load %arg5[%c8] : memref<288xf32, #tpu.memory_space<smem>>
    %61 = vector.broadcast %60 : f32 to vector<17x17xf32>
    %62 = arith.mulf %59, %61 : vector<17x17xf32>
    %63 = arith.addf %45, %62 : vector<17x17xf32>
    %c9 = arith.constant 9 : index
    %64 = memref.load %arg5[%c9] : memref<288xf32, #tpu.memory_space<smem>>
    %65 = vector.broadcast %64 : f32 to vector<17x17xf32>
    %66 = arith.mulf %59, %65 : vector<17x17xf32>
    %67 = arith.addf %49, %66 : vector<17x17xf32>
    %c10 = arith.constant 10 : index
    %68 = memref.load %arg5[%c10] : memref<288xf32, #tpu.memory_space<smem>>
    %69 = vector.broadcast %68 : f32 to vector<17x17xf32>
    %70 = arith.mulf %59, %69 : vector<17x17xf32>
    %71 = arith.addf %53, %70 : vector<17x17xf32>
    %c11 = arith.constant 11 : index
    %72 = memref.load %arg5[%c11] : memref<288xf32, #tpu.memory_space<smem>>
    %73 = vector.broadcast %72 : f32 to vector<17x17xf32>
    %74 = arith.mulf %59, %73 : vector<17x17xf32>
    %75 = arith.addf %57, %74 : vector<17x17xf32>
    %c3_43 = arith.constant 3 : index
    %c1_44 = arith.constant 1 : index
    %c1_45 = arith.constant 1 : index
    %76 = vector.load %arg8[%c3_43, %c1_44, %c1_45] : memref<8x18x18xf32, #tpu.memory_space<vmem>>, vector<1x17x17xf32>
    %77 = vector.shape_cast %76 : vector<1x17x17xf32> to vector<17x17xf32>
    %c12 = arith.constant 12 : index
    %78 = memref.load %arg5[%c12] : memref<288xf32, #tpu.memory_space<smem>>
    %79 = vector.broadcast %78 : f32 to vector<17x17xf32>
    %80 = arith.mulf %77, %79 : vector<17x17xf32>
    %81 = arith.addf %63, %80 : vector<17x17xf32>
    %c13 = arith.constant 13 : index
    %82 = memref.load %arg5[%c13] : memref<288xf32, #tpu.memory_space<smem>>
    %83 = vector.broadcast %82 : f32 to vector<17x17xf32>
    %84 = arith.mulf %77, %83 : vector<17x17xf32>
    %85 = arith.addf %67, %84 : vector<17x17xf32>
    %c14 = arith.constant 14 : index
    %86 = memref.load %arg5[%c14] : memref<288xf32, #tpu.memory_space<smem>>
    %87 = vector.broadcast %86 : f32 to vector<17x17xf32>
    %88 = arith.mulf %77, %87 : vector<17x17xf32>
    %89 = arith.addf %71, %88 : vector<17x17xf32>
    %c15 = arith.constant 15 : index
    %90 = memref.load %arg5[%c15] : memref<288xf32, #tpu.memory_space<smem>>
    %91 = vector.broadcast %90 : f32 to vector<17x17xf32>
    %92 = arith.mulf %77, %91 : vector<17x17xf32>
    %93 = arith.addf %75, %92 : vector<17x17xf32>
    %c4_46 = arith.constant 4 : index
    %c1_47 = arith.constant 1 : index
    %c1_48 = arith.constant 1 : index
    %94 = vector.load %arg8[%c4_46, %c1_47, %c1_48] : memref<8x18x18xf32, #tpu.memory_space<vmem>>, vector<1x17x17xf32>
    %95 = vector.shape_cast %94 : vector<1x17x17xf32> to vector<17x17xf32>
    %c16 = arith.constant 16 : index
    %96 = memref.load %arg5[%c16] : memref<288xf32, #tpu.memory_space<smem>>
    %97 = vector.broadcast %96 : f32 to vector<17x17xf32>
    %98 = arith.mulf %95, %97 : vector<17x17xf32>
    %99 = arith.addf %81, %98 : vector<17x17xf32>
    %c17 = arith.constant 17 : index
    %100 = memref.load %arg5[%c17] : memref<288xf32, #tpu.memory_space<smem>>
    %101 = vector.broadcast %100 : f32 to vector<17x17xf32>
    %102 = arith.mulf %95, %101 : vector<17x17xf32>
    %103 = arith.addf %85, %102 : vector<17x17xf32>
    %c18 = arith.constant 18 : index
    %104 = memref.load %arg5[%c18] : memref<288xf32, #tpu.memory_space<smem>>
    %105 = vector.broadcast %104 : f32 to vector<17x17xf32>
    %106 = arith.mulf %95, %105 : vector<17x17xf32>
    %107 = arith.addf %89, %106 : vector<17x17xf32>
    %c19 = arith.constant 19 : index
    %108 = memref.load %arg5[%c19] : memref<288xf32, #tpu.memory_space<smem>>
    %109 = vector.broadcast %108 : f32 to vector<17x17xf32>
    %110 = arith.mulf %95, %109 : vector<17x17xf32>
    %111 = arith.addf %93, %110 : vector<17x17xf32>
    %c5_49 = arith.constant 5 : index
    %c1_50 = arith.constant 1 : index
    %c1_51 = arith.constant 1 : index
    %112 = vector.load %arg8[%c5_49, %c1_50, %c1_51] : memref<8x18x18xf32, #tpu.memory_space<vmem>>, vector<1x17x17xf32>
    %113 = vector.shape_cast %112 : vector<1x17x17xf32> to vector<17x17xf32>
    %c20 = arith.constant 20 : index
    %114 = memref.load %arg5[%c20] : memref<288xf32, #tpu.memory_space<smem>>
    %115 = vector.broadcast %114 : f32 to vector<17x17xf32>
    %116 = arith.mulf %113, %115 : vector<17x17xf32>
    %117 = arith.addf %99, %116 : vector<17x17xf32>
    %c21 = arith.constant 21 : index
    %118 = memref.load %arg5[%c21] : memref<288xf32, #tpu.memory_space<smem>>
    %119 = vector.broadcast %118 : f32 to vector<17x17xf32>
    %120 = arith.mulf %113, %119 : vector<17x17xf32>
    %121 = arith.addf %103, %120 : vector<17x17xf32>
    %c22 = arith.constant 22 : index
    %122 = memref.load %arg5[%c22] : memref<288xf32, #tpu.memory_space<smem>>
    %123 = vector.broadcast %122 : f32 to vector<17x17xf32>
    %124 = arith.mulf %113, %123 : vector<17x17xf32>
    %125 = arith.addf %107, %124 : vector<17x17xf32>
    %c23 = arith.constant 23 : index
    %126 = memref.load %arg5[%c23] : memref<288xf32, #tpu.memory_space<smem>>
    %127 = vector.broadcast %126 : f32 to vector<17x17xf32>
    %128 = arith.mulf %113, %127 : vector<17x17xf32>
    %129 = arith.addf %111, %128 : vector<17x17xf32>
    %c6_52 = arith.constant 6 : index
    %c1_53 = arith.constant 1 : index
    %c1_54 = arith.constant 1 : index
    %130 = vector.load %arg8[%c6_52, %c1_53, %c1_54] : memref<8x18x18xf32, #tpu.memory_space<vmem>>, vector<1x17x17xf32>
    %131 = vector.shape_cast %130 : vector<1x17x17xf32> to vector<17x17xf32>
    %c24 = arith.constant 24 : index
    %132 = memref.load %arg5[%c24] : memref<288xf32, #tpu.memory_space<smem>>
    %133 = vector.broadcast %132 : f32 to vector<17x17xf32>
    %134 = arith.mulf %131, %133 : vector<17x17xf32>
    %135 = arith.addf %117, %134 : vector<17x17xf32>
    %c25 = arith.constant 25 : index
    %136 = memref.load %arg5[%c25] : memref<288xf32, #tpu.memory_space<smem>>
    %137 = vector.broadcast %136 : f32 to vector<17x17xf32>
    %138 = arith.mulf %131, %137 : vector<17x17xf32>
    %139 = arith.addf %121, %138 : vector<17x17xf32>
    %c26 = arith.constant 26 : index
    %140 = memref.load %arg5[%c26] : memref<288xf32, #tpu.memory_space<smem>>
    %141 = vector.broadcast %140 : f32 to vector<17x17xf32>
    %142 = arith.mulf %131, %141 : vector<17x17xf32>
    %143 = arith.addf %125, %142 : vector<17x17xf32>
    %c27 = arith.constant 27 : index
    %144 = memref.load %arg5[%c27] : memref<288xf32, #tpu.memory_space<smem>>
    %145 = vector.broadcast %144 : f32 to vector<17x17xf32>
    %146 = arith.mulf %131, %145 : vector<17x17xf32>
    %147 = arith.addf %129, %146 : vector<17x17xf32>
    %c7_55 = arith.constant 7 : index
    %c1_56 = arith.constant 1 : index
    %c1_57 = arith.constant 1 : index
    %148 = vector.load %arg8[%c7_55, %c1_56, %c1_57] : memref<8x18x18xf32, #tpu.memory_space<vmem>>, vector<1x17x17xf32>
    %149 = vector.shape_cast %148 : vector<1x17x17xf32> to vector<17x17xf32>
    %c28 = arith.constant 28 : index
    %150 = memref.load %arg5[%c28] : memref<288xf32, #tpu.memory_space<smem>>
    %151 = vector.broadcast %150 : f32 to vector<17x17xf32>
    %152 = arith.mulf %149, %151 : vector<17x17xf32>
    %153 = arith.addf %135, %152 : vector<17x17xf32>
    %c29 = arith.constant 29 : index
    %154 = memref.load %arg5[%c29] : memref<288xf32, #tpu.memory_space<smem>>
    %155 = vector.broadcast %154 : f32 to vector<17x17xf32>
    %156 = arith.mulf %149, %155 : vector<17x17xf32>
    %157 = arith.addf %139, %156 : vector<17x17xf32>
    %c30 = arith.constant 30 : index
    %158 = memref.load %arg5[%c30] : memref<288xf32, #tpu.memory_space<smem>>
    %159 = vector.broadcast %158 : f32 to vector<17x17xf32>
    %160 = arith.mulf %149, %159 : vector<17x17xf32>
    %161 = arith.addf %143, %160 : vector<17x17xf32>
    %c31 = arith.constant 31 : index
    %162 = memref.load %arg5[%c31] : memref<288xf32, #tpu.memory_space<smem>>
    %163 = vector.broadcast %162 : f32 to vector<17x17xf32>
    %164 = arith.mulf %149, %163 : vector<17x17xf32>
    %165 = arith.addf %147, %164 : vector<17x17xf32>
    %c0_58 = arith.constant 0 : index
    %c1_59 = arith.constant 1 : index
    %c0_60 = arith.constant 0 : index
    %166 = vector.load %arg8[%c0_58, %c1_59, %c0_60] : memref<8x18x18xf32, #tpu.memory_space<vmem>>, vector<1x17x17xf32>
    %167 = vector.shape_cast %166 : vector<1x17x17xf32> to vector<17x17xf32>
    %c64 = arith.constant 64 : index
    %168 = memref.load %arg5[%c64] : memref<288xf32, #tpu.memory_space<smem>>
    %169 = vector.broadcast %168 : f32 to vector<17x17xf32>
    %170 = arith.mulf %167, %169 : vector<17x17xf32>
    %171 = arith.addf %153, %170 : vector<17x17xf32>
    %c65 = arith.constant 65 : index
    %172 = memref.load %arg5[%c65] : memref<288xf32, #tpu.memory_space<smem>>
    %173 = vector.broadcast %172 : f32 to vector<17x17xf32>
    %174 = arith.mulf %167, %173 : vector<17x17xf32>
    %175 = arith.addf %157, %174 : vector<17x17xf32>
    %c66 = arith.constant 66 : index
    %176 = memref.load %arg5[%c66] : memref<288xf32, #tpu.memory_space<smem>>
    %177 = vector.broadcast %176 : f32 to vector<17x17xf32>
    %178 = arith.mulf %167, %177 : vector<17x17xf32>
    %179 = arith.addf %161, %178 : vector<17x17xf32>
    %c67 = arith.constant 67 : index
    %180 = memref.load %arg5[%c67] : memref<288xf32, #tpu.memory_space<smem>>
    %181 = vector.broadcast %180 : f32 to vector<17x17xf32>
    %182 = arith.mulf %167, %181 : vector<17x17xf32>
    %183 = arith.addf %165, %182 : vector<17x17xf32>
    %c1_61 = arith.constant 1 : index
    %c1_62 = arith.constant 1 : index
    %c0_63 = arith.constant 0 : index
    %184 = vector.load %arg8[%c1_61, %c1_62, %c0_63] : memref<8x18x18xf32, #tpu.memory_space<vmem>>, vector<1x17x17xf32>
    %185 = vector.shape_cast %184 : vector<1x17x17xf32> to vector<17x17xf32>
    %c68 = arith.constant 68 : index
    %186 = memref.load %arg5[%c68] : memref<288xf32, #tpu.memory_space<smem>>
    %187 = vector.broadcast %186 : f32 to vector<17x17xf32>
    %188 = arith.mulf %185, %187 : vector<17x17xf32>
    %189 = arith.addf %171, %188 : vector<17x17xf32>
    %c69 = arith.constant 69 : index
    %190 = memref.load %arg5[%c69] : memref<288xf32, #tpu.memory_space<smem>>
    %191 = vector.broadcast %190 : f32 to vector<17x17xf32>
    %192 = arith.mulf %185, %191 : vector<17x17xf32>
    %193 = arith.addf %175, %192 : vector<17x17xf32>
    %c70 = arith.constant 70 : index
    %194 = memref.load %arg5[%c70] : memref<288xf32, #tpu.memory_space<smem>>
    %195 = vector.broadcast %194 : f32 to vector<17x17xf32>
    %196 = arith.mulf %185, %195 : vector<17x17xf32>
    %197 = arith.addf %179, %196 : vector<17x17xf32>
    %c71 = arith.constant 71 : index
    %198 = memref.load %arg5[%c71] : memref<288xf32, #tpu.memory_space<smem>>
    %199 = vector.broadcast %198 : f32 to vector<17x17xf32>
    %200 = arith.mulf %185, %199 : vector<17x17xf32>
    %201 = arith.addf %183, %200 : vector<17x17xf32>
    %c2_64 = arith.constant 2 : index
    %c1_65 = arith.constant 1 : index
    %c0_66 = arith.constant 0 : index
    %202 = vector.load %arg8[%c2_64, %c1_65, %c0_66] : memref<8x18x18xf32, #tpu.memory_space<vmem>>, vector<1x17x17xf32>
    %203 = vector.shape_cast %202 : vector<1x17x17xf32> to vector<17x17xf32>
    %c72 = arith.constant 72 : index
    %204 = memref.load %arg5[%c72] : memref<288xf32, #tpu.memory_space<smem>>
    %205 = vector.broadcast %204 : f32 to vector<17x17xf32>
    %206 = arith.mulf %203, %205 : vector<17x17xf32>
    %207 = arith.addf %189, %206 : vector<17x17xf32>
    %c73 = arith.constant 73 : index
    %208 = memref.load %arg5[%c73] : memref<288xf32, #tpu.memory_space<smem>>
    %209 = vector.broadcast %208 : f32 to vector<17x17xf32>
    %210 = arith.mulf %203, %209 : vector<17x17xf32>
    %211 = arith.addf %193, %210 : vector<17x17xf32>
    %c74 = arith.constant 74 : index
    %212 = memref.load %arg5[%c74] : memref<288xf32, #tpu.memory_space<smem>>
    %213 = vector.broadcast %212 : f32 to vector<17x17xf32>
    %214 = arith.mulf %203, %213 : vector<17x17xf32>
    %215 = arith.addf %197, %214 : vector<17x17xf32>
    %c75 = arith.constant 75 : index
    %216 = memref.load %arg5[%c75] : memref<288xf32, #tpu.memory_space<smem>>
    %217 = vector.broadcast %216 : f32 to vector<17x17xf32>
    %218 = arith.mulf %203, %217 : vector<17x17xf32>
    %219 = arith.addf %201, %218 : vector<17x17xf32>
    %c3_67 = arith.constant 3 : index
    %c1_68 = arith.constant 1 : index
    %c0_69 = arith.constant 0 : index
    %220 = vector.load %arg8[%c3_67, %c1_68, %c0_69] : memref<8x18x18xf32, #tpu.memory_space<vmem>>, vector<1x17x17xf32>
    %221 = vector.shape_cast %220 : vector<1x17x17xf32> to vector<17x17xf32>
    %c76 = arith.constant 76 : index
    %222 = memref.load %arg5[%c76] : memref<288xf32, #tpu.memory_space<smem>>
    %223 = vector.broadcast %222 : f32 to vector<17x17xf32>
    %224 = arith.mulf %221, %223 : vector<17x17xf32>
    %225 = arith.addf %207, %224 : vector<17x17xf32>
    %c77 = arith.constant 77 : index
    %226 = memref.load %arg5[%c77] : memref<288xf32, #tpu.memory_space<smem>>
    %227 = vector.broadcast %226 : f32 to vector<17x17xf32>
    %228 = arith.mulf %221, %227 : vector<17x17xf32>
    %229 = arith.addf %211, %228 : vector<17x17xf32>
    %c78 = arith.constant 78 : index
    %230 = memref.load %arg5[%c78] : memref<288xf32, #tpu.memory_space<smem>>
    %231 = vector.broadcast %230 : f32 to vector<17x17xf32>
    %232 = arith.mulf %221, %231 : vector<17x17xf32>
    %233 = arith.addf %215, %232 : vector<17x17xf32>
    %c79 = arith.constant 79 : index
    %234 = memref.load %arg5[%c79] : memref<288xf32, #tpu.memory_space<smem>>
    %235 = vector.broadcast %234 : f32 to vector<17x17xf32>
    %236 = arith.mulf %221, %235 : vector<17x17xf32>
    %237 = arith.addf %219, %236 : vector<17x17xf32>
    %c4_70 = arith.constant 4 : index
    %c1_71 = arith.constant 1 : index
    %c0_72 = arith.constant 0 : index
    %238 = vector.load %arg8[%c4_70, %c1_71, %c0_72] : memref<8x18x18xf32, #tpu.memory_space<vmem>>, vector<1x17x17xf32>
    %239 = vector.shape_cast %238 : vector<1x17x17xf32> to vector<17x17xf32>
    %c80 = arith.constant 80 : index
    %240 = memref.load %arg5[%c80] : memref<288xf32, #tpu.memory_space<smem>>
    %241 = vector.broadcast %240 : f32 to vector<17x17xf32>
    %242 = arith.mulf %239, %241 : vector<17x17xf32>
    %243 = arith.addf %225, %242 : vector<17x17xf32>
    %c81 = arith.constant 81 : index
    %244 = memref.load %arg5[%c81] : memref<288xf32, #tpu.memory_space<smem>>
    %245 = vector.broadcast %244 : f32 to vector<17x17xf32>
    %246 = arith.mulf %239, %245 : vector<17x17xf32>
    %247 = arith.addf %229, %246 : vector<17x17xf32>
    %c82 = arith.constant 82 : index
    %248 = memref.load %arg5[%c82] : memref<288xf32, #tpu.memory_space<smem>>
    %249 = vector.broadcast %248 : f32 to vector<17x17xf32>
    %250 = arith.mulf %239, %249 : vector<17x17xf32>
    %251 = arith.addf %233, %250 : vector<17x17xf32>
    %c83 = arith.constant 83 : index
    %252 = memref.load %arg5[%c83] : memref<288xf32, #tpu.memory_space<smem>>
    %253 = vector.broadcast %252 : f32 to vector<17x17xf32>
    %254 = arith.mulf %239, %253 : vector<17x17xf32>
    %255 = arith.addf %237, %254 : vector<17x17xf32>
    %c5_73 = arith.constant 5 : index
    %c1_74 = arith.constant 1 : index
    %c0_75 = arith.constant 0 : index
    %256 = vector.load %arg8[%c5_73, %c1_74, %c0_75] : memref<8x18x18xf32, #tpu.memory_space<vmem>>, vector<1x17x17xf32>
    %257 = vector.shape_cast %256 : vector<1x17x17xf32> to vector<17x17xf32>
    %c84 = arith.constant 84 : index
    %258 = memref.load %arg5[%c84] : memref<288xf32, #tpu.memory_space<smem>>
    %259 = vector.broadcast %258 : f32 to vector<17x17xf32>
    %260 = arith.mulf %257, %259 : vector<17x17xf32>
    %261 = arith.addf %243, %260 : vector<17x17xf32>
    %c85 = arith.constant 85 : index
    %262 = memref.load %arg5[%c85] : memref<288xf32, #tpu.memory_space<smem>>
    %263 = vector.broadcast %262 : f32 to vector<17x17xf32>
    %264 = arith.mulf %257, %263 : vector<17x17xf32>
    %265 = arith.addf %247, %264 : vector<17x17xf32>
    %c86 = arith.constant 86 : index
    %266 = memref.load %arg5[%c86] : memref<288xf32, #tpu.memory_space<smem>>
    %267 = vector.broadcast %266 : f32 to vector<17x17xf32>
    %268 = arith.mulf %257, %267 : vector<17x17xf32>
    %269 = arith.addf %251, %268 : vector<17x17xf32>
    %c87 = arith.constant 87 : index
    %270 = memref.load %arg5[%c87] : memref<288xf32, #tpu.memory_space<smem>>
    %271 = vector.broadcast %270 : f32 to vector<17x17xf32>
    %272 = arith.mulf %257, %271 : vector<17x17xf32>
    %273 = arith.addf %255, %272 : vector<17x17xf32>
    %c6_76 = arith.constant 6 : index
    %c1_77 = arith.constant 1 : index
    %c0_78 = arith.constant 0 : index
    %274 = vector.load %arg8[%c6_76, %c1_77, %c0_78] : memref<8x18x18xf32, #tpu.memory_space<vmem>>, vector<1x17x17xf32>
    %275 = vector.shape_cast %274 : vector<1x17x17xf32> to vector<17x17xf32>
    %c88 = arith.constant 88 : index
    %276 = memref.load %arg5[%c88] : memref<288xf32, #tpu.memory_space<smem>>
    %277 = vector.broadcast %276 : f32 to vector<17x17xf32>
    %278 = arith.mulf %275, %277 : vector<17x17xf32>
    %279 = arith.addf %261, %278 : vector<17x17xf32>
    %c89 = arith.constant 89 : index
    %280 = memref.load %arg5[%c89] : memref<288xf32, #tpu.memory_space<smem>>
    %281 = vector.broadcast %280 : f32 to vector<17x17xf32>
    %282 = arith.mulf %275, %281 : vector<17x17xf32>
    %283 = arith.addf %265, %282 : vector<17x17xf32>
    %c90 = arith.constant 90 : index
    %284 = memref.load %arg5[%c90] : memref<288xf32, #tpu.memory_space<smem>>
    %285 = vector.broadcast %284 : f32 to vector<17x17xf32>
    %286 = arith.mulf %275, %285 : vector<17x17xf32>
    %287 = arith.addf %269, %286 : vector<17x17xf32>
    %c91 = arith.constant 91 : index
    %288 = memref.load %arg5[%c91] : memref<288xf32, #tpu.memory_space<smem>>
    %289 = vector.broadcast %288 : f32 to vector<17x17xf32>
    %290 = arith.mulf %275, %289 : vector<17x17xf32>
    %291 = arith.addf %273, %290 : vector<17x17xf32>
    %c7_79 = arith.constant 7 : index
    %c1_80 = arith.constant 1 : index
    %c0_81 = arith.constant 0 : index
    %292 = vector.load %arg8[%c7_79, %c1_80, %c0_81] : memref<8x18x18xf32, #tpu.memory_space<vmem>>, vector<1x17x17xf32>
    %293 = vector.shape_cast %292 : vector<1x17x17xf32> to vector<17x17xf32>
    %c92 = arith.constant 92 : index
    %294 = memref.load %arg5[%c92] : memref<288xf32, #tpu.memory_space<smem>>
    %295 = vector.broadcast %294 : f32 to vector<17x17xf32>
    %296 = arith.mulf %293, %295 : vector<17x17xf32>
    %297 = arith.addf %279, %296 : vector<17x17xf32>
    %c93 = arith.constant 93 : index
    %298 = memref.load %arg5[%c93] : memref<288xf32, #tpu.memory_space<smem>>
    %299 = vector.broadcast %298 : f32 to vector<17x17xf32>
    %300 = arith.mulf %293, %299 : vector<17x17xf32>
    %301 = arith.addf %283, %300 : vector<17x17xf32>
    %c94 = arith.constant 94 : index
    %302 = memref.load %arg5[%c94] : memref<288xf32, #tpu.memory_space<smem>>
    %303 = vector.broadcast %302 : f32 to vector<17x17xf32>
    %304 = arith.mulf %293, %303 : vector<17x17xf32>
    %305 = arith.addf %287, %304 : vector<17x17xf32>
    %c95 = arith.constant 95 : index
    %306 = memref.load %arg5[%c95] : memref<288xf32, #tpu.memory_space<smem>>
    %307 = vector.broadcast %306 : f32 to vector<17x17xf32>
    %308 = arith.mulf %293, %307 : vector<17x17xf32>
    %309 = arith.addf %291, %308 : vector<17x17xf32>
    %c0_82 = arith.constant 0 : index
    %c0_83 = arith.constant 0 : index
    %c1_84 = arith.constant 1 : index
    %310 = vector.load %arg8[%c0_82, %c0_83, %c1_84] : memref<8x18x18xf32, #tpu.memory_space<vmem>>, vector<1x17x17xf32>
    %311 = vector.shape_cast %310 : vector<1x17x17xf32> to vector<17x17xf32>
    %c192 = arith.constant 192 : index
    %312 = memref.load %arg5[%c192] : memref<288xf32, #tpu.memory_space<smem>>
    %313 = vector.broadcast %312 : f32 to vector<17x17xf32>
    %314 = arith.mulf %311, %313 : vector<17x17xf32>
    %315 = arith.addf %297, %314 : vector<17x17xf32>
    %c193 = arith.constant 193 : index
    %316 = memref.load %arg5[%c193] : memref<288xf32, #tpu.memory_space<smem>>
    %317 = vector.broadcast %316 : f32 to vector<17x17xf32>
    %318 = arith.mulf %311, %317 : vector<17x17xf32>
    %319 = arith.addf %301, %318 : vector<17x17xf32>
    %c194 = arith.constant 194 : index
    %320 = memref.load %arg5[%c194] : memref<288xf32, #tpu.memory_space<smem>>
    %321 = vector.broadcast %320 : f32 to vector<17x17xf32>
    %322 = arith.mulf %311, %321 : vector<17x17xf32>
    %323 = arith.addf %305, %322 : vector<17x17xf32>
    %c195 = arith.constant 195 : index
    %324 = memref.load %arg5[%c195] : memref<288xf32, #tpu.memory_space<smem>>
    %325 = vector.broadcast %324 : f32 to vector<17x17xf32>
    %326 = arith.mulf %311, %325 : vector<17x17xf32>
    %327 = arith.addf %309, %326 : vector<17x17xf32>
    %c1_85 = arith.constant 1 : index
    %c0_86 = arith.constant 0 : index
    %c1_87 = arith.constant 1 : index
    %328 = vector.load %arg8[%c1_85, %c0_86, %c1_87] : memref<8x18x18xf32, #tpu.memory_space<vmem>>, vector<1x17x17xf32>
    %329 = vector.shape_cast %328 : vector<1x17x17xf32> to vector<17x17xf32>
    %c196 = arith.constant 196 : index
    %330 = memref.load %arg5[%c196] : memref<288xf32, #tpu.memory_space<smem>>
    %331 = vector.broadcast %330 : f32 to vector<17x17xf32>
    %332 = arith.mulf %329, %331 : vector<17x17xf32>
    %333 = arith.addf %315, %332 : vector<17x17xf32>
    %c197 = arith.constant 197 : index
    %334 = memref.load %arg5[%c197] : memref<288xf32, #tpu.memory_space<smem>>
    %335 = vector.broadcast %334 : f32 to vector<17x17xf32>
    %336 = arith.mulf %329, %335 : vector<17x17xf32>
    %337 = arith.addf %319, %336 : vector<17x17xf32>
    %c198 = arith.constant 198 : index
    %338 = memref.load %arg5[%c198] : memref<288xf32, #tpu.memory_space<smem>>
    %339 = vector.broadcast %338 : f32 to vector<17x17xf32>
    %340 = arith.mulf %329, %339 : vector<17x17xf32>
    %341 = arith.addf %323, %340 : vector<17x17xf32>
    %c199 = arith.constant 199 : index
    %342 = memref.load %arg5[%c199] : memref<288xf32, #tpu.memory_space<smem>>
    %343 = vector.broadcast %342 : f32 to vector<17x17xf32>
    %344 = arith.mulf %329, %343 : vector<17x17xf32>
    %345 = arith.addf %327, %344 : vector<17x17xf32>
    %c2_88 = arith.constant 2 : index
    %c0_89 = arith.constant 0 : index
    %c1_90 = arith.constant 1 : index
    %346 = vector.load %arg8[%c2_88, %c0_89, %c1_90] : memref<8x18x18xf32, #tpu.memory_space<vmem>>, vector<1x17x17xf32>
    %347 = vector.shape_cast %346 : vector<1x17x17xf32> to vector<17x17xf32>
    %c200 = arith.constant 200 : index
    %348 = memref.load %arg5[%c200] : memref<288xf32, #tpu.memory_space<smem>>
    %349 = vector.broadcast %348 : f32 to vector<17x17xf32>
    %350 = arith.mulf %347, %349 : vector<17x17xf32>
    %351 = arith.addf %333, %350 : vector<17x17xf32>
    %c201 = arith.constant 201 : index
    %352 = memref.load %arg5[%c201] : memref<288xf32, #tpu.memory_space<smem>>
    %353 = vector.broadcast %352 : f32 to vector<17x17xf32>
    %354 = arith.mulf %347, %353 : vector<17x17xf32>
    %355 = arith.addf %337, %354 : vector<17x17xf32>
    %c202 = arith.constant 202 : index
    %356 = memref.load %arg5[%c202] : memref<288xf32, #tpu.memory_space<smem>>
    %357 = vector.broadcast %356 : f32 to vector<17x17xf32>
    %358 = arith.mulf %347, %357 : vector<17x17xf32>
    %359 = arith.addf %341, %358 : vector<17x17xf32>
    %c203 = arith.constant 203 : index
    %360 = memref.load %arg5[%c203] : memref<288xf32, #tpu.memory_space<smem>>
    %361 = vector.broadcast %360 : f32 to vector<17x17xf32>
    %362 = arith.mulf %347, %361 : vector<17x17xf32>
    %363 = arith.addf %345, %362 : vector<17x17xf32>
    %c3_91 = arith.constant 3 : index
    %c0_92 = arith.constant 0 : index
    %c1_93 = arith.constant 1 : index
    %364 = vector.load %arg8[%c3_91, %c0_92, %c1_93] : memref<8x18x18xf32, #tpu.memory_space<vmem>>, vector<1x17x17xf32>
    %365 = vector.shape_cast %364 : vector<1x17x17xf32> to vector<17x17xf32>
    %c204 = arith.constant 204 : index
    %366 = memref.load %arg5[%c204] : memref<288xf32, #tpu.memory_space<smem>>
    %367 = vector.broadcast %366 : f32 to vector<17x17xf32>
    %368 = arith.mulf %365, %367 : vector<17x17xf32>
    %369 = arith.addf %351, %368 : vector<17x17xf32>
    %c205 = arith.constant 205 : index
    %370 = memref.load %arg5[%c205] : memref<288xf32, #tpu.memory_space<smem>>
    %371 = vector.broadcast %370 : f32 to vector<17x17xf32>
    %372 = arith.mulf %365, %371 : vector<17x17xf32>
    %373 = arith.addf %355, %372 : vector<17x17xf32>
    %c206 = arith.constant 206 : index
    %374 = memref.load %arg5[%c206] : memref<288xf32, #tpu.memory_space<smem>>
    %375 = vector.broadcast %374 : f32 to vector<17x17xf32>
    %376 = arith.mulf %365, %375 : vector<17x17xf32>
    %377 = arith.addf %359, %376 : vector<17x17xf32>
    %c207 = arith.constant 207 : index
    %378 = memref.load %arg5[%c207] : memref<288xf32, #tpu.memory_space<smem>>
    %379 = vector.broadcast %378 : f32 to vector<17x17xf32>
    %380 = arith.mulf %365, %379 : vector<17x17xf32>
    %381 = arith.addf %363, %380 : vector<17x17xf32>
    %c4_94 = arith.constant 4 : index
    %c0_95 = arith.constant 0 : index
    %c1_96 = arith.constant 1 : index
    %382 = vector.load %arg8[%c4_94, %c0_95, %c1_96] : memref<8x18x18xf32, #tpu.memory_space<vmem>>, vector<1x17x17xf32>
    %383 = vector.shape_cast %382 : vector<1x17x17xf32> to vector<17x17xf32>
    %c208 = arith.constant 208 : index
    %384 = memref.load %arg5[%c208] : memref<288xf32, #tpu.memory_space<smem>>
    %385 = vector.broadcast %384 : f32 to vector<17x17xf32>
    %386 = arith.mulf %383, %385 : vector<17x17xf32>
    %387 = arith.addf %369, %386 : vector<17x17xf32>
    %c209 = arith.constant 209 : index
    %388 = memref.load %arg5[%c209] : memref<288xf32, #tpu.memory_space<smem>>
    %389 = vector.broadcast %388 : f32 to vector<17x17xf32>
    %390 = arith.mulf %383, %389 : vector<17x17xf32>
    %391 = arith.addf %373, %390 : vector<17x17xf32>
    %c210 = arith.constant 210 : index
    %392 = memref.load %arg5[%c210] : memref<288xf32, #tpu.memory_space<smem>>
    %393 = vector.broadcast %392 : f32 to vector<17x17xf32>
    %394 = arith.mulf %383, %393 : vector<17x17xf32>
    %395 = arith.addf %377, %394 : vector<17x17xf32>
    %c211 = arith.constant 211 : index
    %396 = memref.load %arg5[%c211] : memref<288xf32, #tpu.memory_space<smem>>
    %397 = vector.broadcast %396 : f32 to vector<17x17xf32>
    %398 = arith.mulf %383, %397 : vector<17x17xf32>
    %399 = arith.addf %381, %398 : vector<17x17xf32>
    %c5_97 = arith.constant 5 : index
    %c0_98 = arith.constant 0 : index
    %c1_99 = arith.constant 1 : index
    %400 = vector.load %arg8[%c5_97, %c0_98, %c1_99] : memref<8x18x18xf32, #tpu.memory_space<vmem>>, vector<1x17x17xf32>
    %401 = vector.shape_cast %400 : vector<1x17x17xf32> to vector<17x17xf32>
    %c212 = arith.constant 212 : index
    %402 = memref.load %arg5[%c212] : memref<288xf32, #tpu.memory_space<smem>>
    %403 = vector.broadcast %402 : f32 to vector<17x17xf32>
    %404 = arith.mulf %401, %403 : vector<17x17xf32>
    %405 = arith.addf %387, %404 : vector<17x17xf32>
    %c213 = arith.constant 213 : index
    %406 = memref.load %arg5[%c213] : memref<288xf32, #tpu.memory_space<smem>>
    %407 = vector.broadcast %406 : f32 to vector<17x17xf32>
    %408 = arith.mulf %401, %407 : vector<17x17xf32>
    %409 = arith.addf %391, %408 : vector<17x17xf32>
    %c214 = arith.constant 214 : index
    %410 = memref.load %arg5[%c214] : memref<288xf32, #tpu.memory_space<smem>>
    %411 = vector.broadcast %410 : f32 to vector<17x17xf32>
    %412 = arith.mulf %401, %411 : vector<17x17xf32>
    %413 = arith.addf %395, %412 : vector<17x17xf32>
    %c215 = arith.constant 215 : index
    %414 = memref.load %arg5[%c215] : memref<288xf32, #tpu.memory_space<smem>>
    %415 = vector.broadcast %414 : f32 to vector<17x17xf32>
    %416 = arith.mulf %401, %415 : vector<17x17xf32>
    %417 = arith.addf %399, %416 : vector<17x17xf32>
    %c6_100 = arith.constant 6 : index
    %c0_101 = arith.constant 0 : index
    %c1_102 = arith.constant 1 : index
    %418 = vector.load %arg8[%c6_100, %c0_101, %c1_102] : memref<8x18x18xf32, #tpu.memory_space<vmem>>, vector<1x17x17xf32>
    %419 = vector.shape_cast %418 : vector<1x17x17xf32> to vector<17x17xf32>
    %c216 = arith.constant 216 : index
    %420 = memref.load %arg5[%c216] : memref<288xf32, #tpu.memory_space<smem>>
    %421 = vector.broadcast %420 : f32 to vector<17x17xf32>
    %422 = arith.mulf %419, %421 : vector<17x17xf32>
    %423 = arith.addf %405, %422 : vector<17x17xf32>
    %c217 = arith.constant 217 : index
    %424 = memref.load %arg5[%c217] : memref<288xf32, #tpu.memory_space<smem>>
    %425 = vector.broadcast %424 : f32 to vector<17x17xf32>
    %426 = arith.mulf %419, %425 : vector<17x17xf32>
    %427 = arith.addf %409, %426 : vector<17x17xf32>
    %c218 = arith.constant 218 : index
    %428 = memref.load %arg5[%c218] : memref<288xf32, #tpu.memory_space<smem>>
    %429 = vector.broadcast %428 : f32 to vector<17x17xf32>
    %430 = arith.mulf %419, %429 : vector<17x17xf32>
    %431 = arith.addf %413, %430 : vector<17x17xf32>
    %c219 = arith.constant 219 : index
    %432 = memref.load %arg5[%c219] : memref<288xf32, #tpu.memory_space<smem>>
    %433 = vector.broadcast %432 : f32 to vector<17x17xf32>
    %434 = arith.mulf %419, %433 : vector<17x17xf32>
    %435 = arith.addf %417, %434 : vector<17x17xf32>
    %c7_103 = arith.constant 7 : index
    %c0_104 = arith.constant 0 : index
    %c1_105 = arith.constant 1 : index
    %436 = vector.load %arg8[%c7_103, %c0_104, %c1_105] : memref<8x18x18xf32, #tpu.memory_space<vmem>>, vector<1x17x17xf32>
    %437 = vector.shape_cast %436 : vector<1x17x17xf32> to vector<17x17xf32>
    %c220 = arith.constant 220 : index
    %438 = memref.load %arg5[%c220] : memref<288xf32, #tpu.memory_space<smem>>
    %439 = vector.broadcast %438 : f32 to vector<17x17xf32>
    %440 = arith.mulf %437, %439 : vector<17x17xf32>
    %441 = arith.addf %423, %440 : vector<17x17xf32>
    %c221 = arith.constant 221 : index
    %442 = memref.load %arg5[%c221] : memref<288xf32, #tpu.memory_space<smem>>
    %443 = vector.broadcast %442 : f32 to vector<17x17xf32>
    %444 = arith.mulf %437, %443 : vector<17x17xf32>
    %445 = arith.addf %427, %444 : vector<17x17xf32>
    %c222 = arith.constant 222 : index
    %446 = memref.load %arg5[%c222] : memref<288xf32, #tpu.memory_space<smem>>
    %447 = vector.broadcast %446 : f32 to vector<17x17xf32>
    %448 = arith.mulf %437, %447 : vector<17x17xf32>
    %449 = arith.addf %431, %448 : vector<17x17xf32>
    %c223 = arith.constant 223 : index
    %450 = memref.load %arg5[%c223] : memref<288xf32, #tpu.memory_space<smem>>
    %451 = vector.broadcast %450 : f32 to vector<17x17xf32>
    %452 = arith.mulf %437, %451 : vector<17x17xf32>
    %453 = arith.addf %435, %452 : vector<17x17xf32>
    %c0_106 = arith.constant 0 : index
    %c0_107 = arith.constant 0 : index
    %c0_108 = arith.constant 0 : index
    %454 = vector.load %arg8[%c0_106, %c0_107, %c0_108] : memref<8x18x18xf32, #tpu.memory_space<vmem>>, vector<1x17x17xf32>
    %455 = vector.shape_cast %454 : vector<1x17x17xf32> to vector<17x17xf32>
    %c256 = arith.constant 256 : index
    %456 = memref.load %arg5[%c256] : memref<288xf32, #tpu.memory_space<smem>>
    %457 = vector.broadcast %456 : f32 to vector<17x17xf32>
    %458 = arith.mulf %455, %457 : vector<17x17xf32>
    %459 = arith.addf %441, %458 : vector<17x17xf32>
    %c257 = arith.constant 257 : index
    %460 = memref.load %arg5[%c257] : memref<288xf32, #tpu.memory_space<smem>>
    %461 = vector.broadcast %460 : f32 to vector<17x17xf32>
    %462 = arith.mulf %455, %461 : vector<17x17xf32>
    %463 = arith.addf %445, %462 : vector<17x17xf32>
    %c258 = arith.constant 258 : index
    %464 = memref.load %arg5[%c258] : memref<288xf32, #tpu.memory_space<smem>>
    %465 = vector.broadcast %464 : f32 to vector<17x17xf32>
    %466 = arith.mulf %455, %465 : vector<17x17xf32>
    %467 = arith.addf %449, %466 : vector<17x17xf32>
    %c259 = arith.constant 259 : index
    %468 = memref.load %arg5[%c259] : memref<288xf32, #tpu.memory_space<smem>>
    %469 = vector.broadcast %468 : f32 to vector<17x17xf32>
    %470 = arith.mulf %455, %469 : vector<17x17xf32>
    %471 = arith.addf %453, %470 : vector<17x17xf32>
    %c1_109 = arith.constant 1 : index
    %c0_110 = arith.constant 0 : index
    %c0_111 = arith.constant 0 : index
    %472 = vector.load %arg8[%c1_109, %c0_110, %c0_111] : memref<8x18x18xf32, #tpu.memory_space<vmem>>, vector<1x17x17xf32>
    %473 = vector.shape_cast %472 : vector<1x17x17xf32> to vector<17x17xf32>
    %c260 = arith.constant 260 : index
    %474 = memref.load %arg5[%c260] : memref<288xf32, #tpu.memory_space<smem>>
    %475 = vector.broadcast %474 : f32 to vector<17x17xf32>
    %476 = arith.mulf %473, %475 : vector<17x17xf32>
    %477 = arith.addf %459, %476 : vector<17x17xf32>
    %c261 = arith.constant 261 : index
    %478 = memref.load %arg5[%c261] : memref<288xf32, #tpu.memory_space<smem>>
    %479 = vector.broadcast %478 : f32 to vector<17x17xf32>
    %480 = arith.mulf %473, %479 : vector<17x17xf32>
    %481 = arith.addf %463, %480 : vector<17x17xf32>
    %c262 = arith.constant 262 : index
    %482 = memref.load %arg5[%c262] : memref<288xf32, #tpu.memory_space<smem>>
    %483 = vector.broadcast %482 : f32 to vector<17x17xf32>
    %484 = arith.mulf %473, %483 : vector<17x17xf32>
    %485 = arith.addf %467, %484 : vector<17x17xf32>
    %c263 = arith.constant 263 : index
    %486 = memref.load %arg5[%c263] : memref<288xf32, #tpu.memory_space<smem>>
    %487 = vector.broadcast %486 : f32 to vector<17x17xf32>
    %488 = arith.mulf %473, %487 : vector<17x17xf32>
    %489 = arith.addf %471, %488 : vector<17x17xf32>
    %c2_112 = arith.constant 2 : index
    %c0_113 = arith.constant 0 : index
    %c0_114 = arith.constant 0 : index
    %490 = vector.load %arg8[%c2_112, %c0_113, %c0_114] : memref<8x18x18xf32, #tpu.memory_space<vmem>>, vector<1x17x17xf32>
    %491 = vector.shape_cast %490 : vector<1x17x17xf32> to vector<17x17xf32>
    %c264 = arith.constant 264 : index
    %492 = memref.load %arg5[%c264] : memref<288xf32, #tpu.memory_space<smem>>
    %493 = vector.broadcast %492 : f32 to vector<17x17xf32>
    %494 = arith.mulf %491, %493 : vector<17x17xf32>
    %495 = arith.addf %477, %494 : vector<17x17xf32>
    %c265 = arith.constant 265 : index
    %496 = memref.load %arg5[%c265] : memref<288xf32, #tpu.memory_space<smem>>
    %497 = vector.broadcast %496 : f32 to vector<17x17xf32>
    %498 = arith.mulf %491, %497 : vector<17x17xf32>
    %499 = arith.addf %481, %498 : vector<17x17xf32>
    %c266 = arith.constant 266 : index
    %500 = memref.load %arg5[%c266] : memref<288xf32, #tpu.memory_space<smem>>
    %501 = vector.broadcast %500 : f32 to vector<17x17xf32>
    %502 = arith.mulf %491, %501 : vector<17x17xf32>
    %503 = arith.addf %485, %502 : vector<17x17xf32>
    %c267 = arith.constant 267 : index
    %504 = memref.load %arg5[%c267] : memref<288xf32, #tpu.memory_space<smem>>
    %505 = vector.broadcast %504 : f32 to vector<17x17xf32>
    %506 = arith.mulf %491, %505 : vector<17x17xf32>
    %507 = arith.addf %489, %506 : vector<17x17xf32>
    %c3_115 = arith.constant 3 : index
    %c0_116 = arith.constant 0 : index
    %c0_117 = arith.constant 0 : index
    %508 = vector.load %arg8[%c3_115, %c0_116, %c0_117] : memref<8x18x18xf32, #tpu.memory_space<vmem>>, vector<1x17x17xf32>
    %509 = vector.shape_cast %508 : vector<1x17x17xf32> to vector<17x17xf32>
    %c268 = arith.constant 268 : index
    %510 = memref.load %arg5[%c268] : memref<288xf32, #tpu.memory_space<smem>>
    %511 = vector.broadcast %510 : f32 to vector<17x17xf32>
    %512 = arith.mulf %509, %511 : vector<17x17xf32>
    %513 = arith.addf %495, %512 : vector<17x17xf32>
    %c269 = arith.constant 269 : index
    %514 = memref.load %arg5[%c269] : memref<288xf32, #tpu.memory_space<smem>>
    %515 = vector.broadcast %514 : f32 to vector<17x17xf32>
    %516 = arith.mulf %509, %515 : vector<17x17xf32>
    %517 = arith.addf %499, %516 : vector<17x17xf32>
    %c270 = arith.constant 270 : index
    %518 = memref.load %arg5[%c270] : memref<288xf32, #tpu.memory_space<smem>>
    %519 = vector.broadcast %518 : f32 to vector<17x17xf32>
    %520 = arith.mulf %509, %519 : vector<17x17xf32>
    %521 = arith.addf %503, %520 : vector<17x17xf32>
    %c271 = arith.constant 271 : index
    %522 = memref.load %arg5[%c271] : memref<288xf32, #tpu.memory_space<smem>>
    %523 = vector.broadcast %522 : f32 to vector<17x17xf32>
    %524 = arith.mulf %509, %523 : vector<17x17xf32>
    %525 = arith.addf %507, %524 : vector<17x17xf32>
    %c4_118 = arith.constant 4 : index
    %c0_119 = arith.constant 0 : index
    %c0_120 = arith.constant 0 : index
    %526 = vector.load %arg8[%c4_118, %c0_119, %c0_120] : memref<8x18x18xf32, #tpu.memory_space<vmem>>, vector<1x17x17xf32>
    %527 = vector.shape_cast %526 : vector<1x17x17xf32> to vector<17x17xf32>
    %c272 = arith.constant 272 : index
    %528 = memref.load %arg5[%c272] : memref<288xf32, #tpu.memory_space<smem>>
    %529 = vector.broadcast %528 : f32 to vector<17x17xf32>
    %530 = arith.mulf %527, %529 : vector<17x17xf32>
    %531 = arith.addf %513, %530 : vector<17x17xf32>
    %c273 = arith.constant 273 : index
    %532 = memref.load %arg5[%c273] : memref<288xf32, #tpu.memory_space<smem>>
    %533 = vector.broadcast %532 : f32 to vector<17x17xf32>
    %534 = arith.mulf %527, %533 : vector<17x17xf32>
    %535 = arith.addf %517, %534 : vector<17x17xf32>
    %c274 = arith.constant 274 : index
    %536 = memref.load %arg5[%c274] : memref<288xf32, #tpu.memory_space<smem>>
    %537 = vector.broadcast %536 : f32 to vector<17x17xf32>
    %538 = arith.mulf %527, %537 : vector<17x17xf32>
    %539 = arith.addf %521, %538 : vector<17x17xf32>
    %c275 = arith.constant 275 : index
    %540 = memref.load %arg5[%c275] : memref<288xf32, #tpu.memory_space<smem>>
    %541 = vector.broadcast %540 : f32 to vector<17x17xf32>
    %542 = arith.mulf %527, %541 : vector<17x17xf32>
    %543 = arith.addf %525, %542 : vector<17x17xf32>
    %c5_121 = arith.constant 5 : index
    %c0_122 = arith.constant 0 : index
    %c0_123 = arith.constant 0 : index
    %544 = vector.load %arg8[%c5_121, %c0_122, %c0_123] : memref<8x18x18xf32, #tpu.memory_space<vmem>>, vector<1x17x17xf32>
    %545 = vector.shape_cast %544 : vector<1x17x17xf32> to vector<17x17xf32>
    %c276 = arith.constant 276 : index
    %546 = memref.load %arg5[%c276] : memref<288xf32, #tpu.memory_space<smem>>
    %547 = vector.broadcast %546 : f32 to vector<17x17xf32>
    %548 = arith.mulf %545, %547 : vector<17x17xf32>
    %549 = arith.addf %531, %548 : vector<17x17xf32>
    %c277 = arith.constant 277 : index
    %550 = memref.load %arg5[%c277] : memref<288xf32, #tpu.memory_space<smem>>
    %551 = vector.broadcast %550 : f32 to vector<17x17xf32>
    %552 = arith.mulf %545, %551 : vector<17x17xf32>
    %553 = arith.addf %535, %552 : vector<17x17xf32>
    %c278 = arith.constant 278 : index
    %554 = memref.load %arg5[%c278] : memref<288xf32, #tpu.memory_space<smem>>
    %555 = vector.broadcast %554 : f32 to vector<17x17xf32>
    %556 = arith.mulf %545, %555 : vector<17x17xf32>
    %557 = arith.addf %539, %556 : vector<17x17xf32>
    %c279 = arith.constant 279 : index
    %558 = memref.load %arg5[%c279] : memref<288xf32, #tpu.memory_space<smem>>
    %559 = vector.broadcast %558 : f32 to vector<17x17xf32>
    %560 = arith.mulf %545, %559 : vector<17x17xf32>
    %561 = arith.addf %543, %560 : vector<17x17xf32>
    %c6_124 = arith.constant 6 : index
    %c0_125 = arith.constant 0 : index
    %c0_126 = arith.constant 0 : index
    %562 = vector.load %arg8[%c6_124, %c0_125, %c0_126] : memref<8x18x18xf32, #tpu.memory_space<vmem>>, vector<1x17x17xf32>
    %563 = vector.shape_cast %562 : vector<1x17x17xf32> to vector<17x17xf32>
    %c280 = arith.constant 280 : index
    %564 = memref.load %arg5[%c280] : memref<288xf32, #tpu.memory_space<smem>>
    %565 = vector.broadcast %564 : f32 to vector<17x17xf32>
    %566 = arith.mulf %563, %565 : vector<17x17xf32>
    %567 = arith.addf %549, %566 : vector<17x17xf32>
    %c281 = arith.constant 281 : index
    %568 = memref.load %arg5[%c281] : memref<288xf32, #tpu.memory_space<smem>>
    %569 = vector.broadcast %568 : f32 to vector<17x17xf32>
    %570 = arith.mulf %563, %569 : vector<17x17xf32>
    %571 = arith.addf %553, %570 : vector<17x17xf32>
    %c282 = arith.constant 282 : index
    %572 = memref.load %arg5[%c282] : memref<288xf32, #tpu.memory_space<smem>>
    %573 = vector.broadcast %572 : f32 to vector<17x17xf32>
    %574 = arith.mulf %563, %573 : vector<17x17xf32>
    %575 = arith.addf %557, %574 : vector<17x17xf32>
    %c283 = arith.constant 283 : index
    %576 = memref.load %arg5[%c283] : memref<288xf32, #tpu.memory_space<smem>>
    %577 = vector.broadcast %576 : f32 to vector<17x17xf32>
    %578 = arith.mulf %563, %577 : vector<17x17xf32>
    %579 = arith.addf %561, %578 : vector<17x17xf32>
    %c7_127 = arith.constant 7 : index
    %c0_128 = arith.constant 0 : index
    %c0_129 = arith.constant 0 : index
    %580 = vector.load %arg8[%c7_127, %c0_128, %c0_129] : memref<8x18x18xf32, #tpu.memory_space<vmem>>, vector<1x17x17xf32>
    %581 = vector.shape_cast %580 : vector<1x17x17xf32> to vector<17x17xf32>
    %c284 = arith.constant 284 : index
    %582 = memref.load %arg5[%c284] : memref<288xf32, #tpu.memory_space<smem>>
    %583 = vector.broadcast %582 : f32 to vector<17x17xf32>
    %584 = arith.mulf %581, %583 : vector<17x17xf32>
    %585 = arith.addf %567, %584 : vector<17x17xf32>
    %c285 = arith.constant 285 : index
    %586 = memref.load %arg5[%c285] : memref<288xf32, #tpu.memory_space<smem>>
    %587 = vector.broadcast %586 : f32 to vector<17x17xf32>
    %588 = arith.mulf %581, %587 : vector<17x17xf32>
    %589 = arith.addf %571, %588 : vector<17x17xf32>
    %c286 = arith.constant 286 : index
    %590 = memref.load %arg5[%c286] : memref<288xf32, #tpu.memory_space<smem>>
    %591 = vector.broadcast %590 : f32 to vector<17x17xf32>
    %592 = arith.mulf %581, %591 : vector<17x17xf32>
    %593 = arith.addf %575, %592 : vector<17x17xf32>
    %c287 = arith.constant 287 : index
    %594 = memref.load %arg5[%c287] : memref<288xf32, #tpu.memory_space<smem>>
    %595 = vector.broadcast %594 : f32 to vector<17x17xf32>
    %596 = arith.mulf %581, %595 : vector<17x17xf32>
    %597 = arith.addf %579, %596 : vector<17x17xf32>
    %c0_130 = arith.constant 0 : index
    %598 = memref.load %arg6[%c0_130] : memref<4xf32, #tpu.memory_space<smem>>
    %599 = vector.broadcast %598 : f32 to vector<17x17xf32>
    %600 = arith.addf %585, %599 : vector<17x17xf32>
    %cst_131 = arith.constant 0.000000e+00 : f32
    %601 = vector.broadcast %cst_131 : f32 to vector<17x17xf32>
    %602 = arith.maximumf %600, %601 : vector<17x17xf32>
    %cst_132 = arith.constant dense<0.000000e+00> : vector<17x32xf32>
    %603 = tpu.matmul %602, %10, %cst_132 {dimension_numbers = #tpu.dot_dimension_numbers<[1], [0], [0], [1], [0, 0, 1, 1], [], []>} : vector<17x17xf32>, vector<17x32xf32>, vector<17x32xf32> -> vector<17x32xf32>
    %c1_133 = arith.constant 1 : index
    %604 = memref.load %arg6[%c1_133] : memref<4xf32, #tpu.memory_space<smem>>
    %605 = vector.broadcast %604 : f32 to vector<17x17xf32>
    %606 = arith.addf %589, %605 : vector<17x17xf32>
    %cst_134 = arith.constant 0.000000e+00 : f32
    %607 = vector.broadcast %cst_134 : f32 to vector<17x17xf32>
    %608 = arith.maximumf %606, %607 : vector<17x17xf32>
    %cst_135 = arith.constant dense<0.000000e+00> : vector<17x32xf32>
    %609 = tpu.matmul %608, %10, %cst_135 {dimension_numbers = #tpu.dot_dimension_numbers<[1], [0], [0], [1], [0, 0, 1, 1], [], []>} : vector<17x17xf32>, vector<17x32xf32>, vector<17x32xf32> -> vector<17x32xf32>
    %c2_136 = arith.constant 2 : index
    %610 = memref.load %arg6[%c2_136] : memref<4xf32, #tpu.memory_space<smem>>
    %611 = vector.broadcast %610 : f32 to vector<17x17xf32>
    %612 = arith.addf %593, %611 : vector<17x17xf32>
    %cst_137 = arith.constant 0.000000e+00 : f32
    %613 = vector.broadcast %cst_137 : f32 to vector<17x17xf32>
    %614 = arith.maximumf %612, %613 : vector<17x17xf32>
    %cst_138 = arith.constant dense<0.000000e+00> : vector<17x32xf32>
    %615 = tpu.matmul %614, %10, %cst_138 {dimension_numbers = #tpu.dot_dimension_numbers<[1], [0], [0], [1], [0, 0, 1, 1], [], []>} : vector<17x17xf32>, vector<17x32xf32>, vector<17x32xf32> -> vector<17x32xf32>
    %c3_139 = arith.constant 3 : index
    %616 = memref.load %arg6[%c3_139] : memref<4xf32, #tpu.memory_space<smem>>
    %617 = vector.broadcast %616 : f32 to vector<17x17xf32>
    %618 = arith.addf %597, %617 : vector<17x17xf32>
    %cst_140 = arith.constant 0.000000e+00 : f32
    %619 = vector.broadcast %cst_140 : f32 to vector<17x17xf32>
    %620 = arith.maximumf %618, %619 : vector<17x17xf32>
    %cst_141 = arith.constant dense<0.000000e+00> : vector<17x32xf32>
    %621 = tpu.matmul %620, %10, %cst_141 {dimension_numbers = #tpu.dot_dimension_numbers<[1], [0], [0], [1], [0, 0, 1, 1], [], []>} : vector<17x17xf32>, vector<17x32xf32>, vector<17x32xf32> -> vector<17x32xf32>
    %cst_142 = arith.constant 0.000000e+00 : f32
    %622 = vector.broadcast %cst_142 : f32 to vector<17x17xf32>
    %cst_143 = arith.constant 0.000000e+00 : f32
    %623 = vector.broadcast %cst_143 : f32 to vector<17x17xf32>
    %cst_144 = arith.constant 0.000000e+00 : f32
    %624 = vector.broadcast %cst_144 : f32 to vector<17x17xf32>
    %cst_145 = arith.constant 0.000000e+00 : f32
    %625 = vector.broadcast %cst_145 : f32 to vector<17x17xf32>
    %c0_146 = arith.constant 0 : index
    %c1_147 = arith.constant 1 : index
    %c1_148 = arith.constant 1 : index
    %626 = vector.load %arg8[%c0_146, %c1_147, %c1_148] : memref<8x18x18xf32, #tpu.memory_space<vmem>>, vector<1x17x17xf32>
    %627 = vector.shape_cast %626 : vector<1x17x17xf32> to vector<17x17xf32>
    %c32 = arith.constant 32 : index
    %628 = memref.load %arg5[%c32] : memref<288xf32, #tpu.memory_space<smem>>
    %629 = vector.broadcast %628 : f32 to vector<17x17xf32>
    %630 = arith.mulf %627, %629 : vector<17x17xf32>
    %631 = arith.addf %622, %630 : vector<17x17xf32>
    %c33 = arith.constant 33 : index
    %632 = memref.load %arg5[%c33] : memref<288xf32, #tpu.memory_space<smem>>
    %633 = vector.broadcast %632 : f32 to vector<17x17xf32>
    %634 = arith.mulf %627, %633 : vector<17x17xf32>
    %635 = arith.addf %623, %634 : vector<17x17xf32>
    %c34 = arith.constant 34 : index
    %636 = memref.load %arg5[%c34] : memref<288xf32, #tpu.memory_space<smem>>
    %637 = vector.broadcast %636 : f32 to vector<17x17xf32>
    %638 = arith.mulf %627, %637 : vector<17x17xf32>
    %639 = arith.addf %624, %638 : vector<17x17xf32>
    %c35 = arith.constant 35 : index
    %640 = memref.load %arg5[%c35] : memref<288xf32, #tpu.memory_space<smem>>
    %641 = vector.broadcast %640 : f32 to vector<17x17xf32>
    %642 = arith.mulf %627, %641 : vector<17x17xf32>
    %643 = arith.addf %625, %642 : vector<17x17xf32>
    %c1_149 = arith.constant 1 : index
    %c1_150 = arith.constant 1 : index
    %c1_151 = arith.constant 1 : index
    %644 = vector.load %arg8[%c1_149, %c1_150, %c1_151] : memref<8x18x18xf32, #tpu.memory_space<vmem>>, vector<1x17x17xf32>
    %645 = vector.shape_cast %644 : vector<1x17x17xf32> to vector<17x17xf32>
    %c36 = arith.constant 36 : index
    %646 = memref.load %arg5[%c36] : memref<288xf32, #tpu.memory_space<smem>>
    %647 = vector.broadcast %646 : f32 to vector<17x17xf32>
    %648 = arith.mulf %645, %647 : vector<17x17xf32>
    %649 = arith.addf %631, %648 : vector<17x17xf32>
    %c37 = arith.constant 37 : index
    %650 = memref.load %arg5[%c37] : memref<288xf32, #tpu.memory_space<smem>>
    %651 = vector.broadcast %650 : f32 to vector<17x17xf32>
    %652 = arith.mulf %645, %651 : vector<17x17xf32>
    %653 = arith.addf %635, %652 : vector<17x17xf32>
    %c38 = arith.constant 38 : index
    %654 = memref.load %arg5[%c38] : memref<288xf32, #tpu.memory_space<smem>>
    %655 = vector.broadcast %654 : f32 to vector<17x17xf32>
    %656 = arith.mulf %645, %655 : vector<17x17xf32>
    %657 = arith.addf %639, %656 : vector<17x17xf32>
    %c39 = arith.constant 39 : index
    %658 = memref.load %arg5[%c39] : memref<288xf32, #tpu.memory_space<smem>>
    %659 = vector.broadcast %658 : f32 to vector<17x17xf32>
    %660 = arith.mulf %645, %659 : vector<17x17xf32>
    %661 = arith.addf %643, %660 : vector<17x17xf32>
    %c2_152 = arith.constant 2 : index
    %c1_153 = arith.constant 1 : index
    %c1_154 = arith.constant 1 : index
    %662 = vector.load %arg8[%c2_152, %c1_153, %c1_154] : memref<8x18x18xf32, #tpu.memory_space<vmem>>, vector<1x17x17xf32>
    %663 = vector.shape_cast %662 : vector<1x17x17xf32> to vector<17x17xf32>
    %c40 = arith.constant 40 : index
    %664 = memref.load %arg5[%c40] : memref<288xf32, #tpu.memory_space<smem>>
    %665 = vector.broadcast %664 : f32 to vector<17x17xf32>
    %666 = arith.mulf %663, %665 : vector<17x17xf32>
    %667 = arith.addf %649, %666 : vector<17x17xf32>
    %c41 = arith.constant 41 : index
    %668 = memref.load %arg5[%c41] : memref<288xf32, #tpu.memory_space<smem>>
    %669 = vector.broadcast %668 : f32 to vector<17x17xf32>
    %670 = arith.mulf %663, %669 : vector<17x17xf32>
    %671 = arith.addf %653, %670 : vector<17x17xf32>
    %c42 = arith.constant 42 : index
    %672 = memref.load %arg5[%c42] : memref<288xf32, #tpu.memory_space<smem>>
    %673 = vector.broadcast %672 : f32 to vector<17x17xf32>
    %674 = arith.mulf %663, %673 : vector<17x17xf32>
    %675 = arith.addf %657, %674 : vector<17x17xf32>
    %c43 = arith.constant 43 : index
    %676 = memref.load %arg5[%c43] : memref<288xf32, #tpu.memory_space<smem>>
    %677 = vector.broadcast %676 : f32 to vector<17x17xf32>
    %678 = arith.mulf %663, %677 : vector<17x17xf32>
    %679 = arith.addf %661, %678 : vector<17x17xf32>
    %c3_155 = arith.constant 3 : index
    %c1_156 = arith.constant 1 : index
    %c1_157 = arith.constant 1 : index
    %680 = vector.load %arg8[%c3_155, %c1_156, %c1_157] : memref<8x18x18xf32, #tpu.memory_space<vmem>>, vector<1x17x17xf32>
    %681 = vector.shape_cast %680 : vector<1x17x17xf32> to vector<17x17xf32>
    %c44 = arith.constant 44 : index
    %682 = memref.load %arg5[%c44] : memref<288xf32, #tpu.memory_space<smem>>
    %683 = vector.broadcast %682 : f32 to vector<17x17xf32>
    %684 = arith.mulf %681, %683 : vector<17x17xf32>
    %685 = arith.addf %667, %684 : vector<17x17xf32>
    %c45 = arith.constant 45 : index
    %686 = memref.load %arg5[%c45] : memref<288xf32, #tpu.memory_space<smem>>
    %687 = vector.broadcast %686 : f32 to vector<17x17xf32>
    %688 = arith.mulf %681, %687 : vector<17x17xf32>
    %689 = arith.addf %671, %688 : vector<17x17xf32>
    %c46 = arith.constant 46 : index
    %690 = memref.load %arg5[%c46] : memref<288xf32, #tpu.memory_space<smem>>
    %691 = vector.broadcast %690 : f32 to vector<17x17xf32>
    %692 = arith.mulf %681, %691 : vector<17x17xf32>
    %693 = arith.addf %675, %692 : vector<17x17xf32>
    %c47 = arith.constant 47 : index
    %694 = memref.load %arg5[%c47] : memref<288xf32, #tpu.memory_space<smem>>
    %695 = vector.broadcast %694 : f32 to vector<17x17xf32>
    %696 = arith.mulf %681, %695 : vector<17x17xf32>
    %697 = arith.addf %679, %696 : vector<17x17xf32>
    %c4_158 = arith.constant 4 : index
    %c1_159 = arith.constant 1 : index
    %c1_160 = arith.constant 1 : index
    %698 = vector.load %arg8[%c4_158, %c1_159, %c1_160] : memref<8x18x18xf32, #tpu.memory_space<vmem>>, vector<1x17x17xf32>
    %699 = vector.shape_cast %698 : vector<1x17x17xf32> to vector<17x17xf32>
    %c48 = arith.constant 48 : index
    %700 = memref.load %arg5[%c48] : memref<288xf32, #tpu.memory_space<smem>>
    %701 = vector.broadcast %700 : f32 to vector<17x17xf32>
    %702 = arith.mulf %699, %701 : vector<17x17xf32>
    %703 = arith.addf %685, %702 : vector<17x17xf32>
    %c49 = arith.constant 49 : index
    %704 = memref.load %arg5[%c49] : memref<288xf32, #tpu.memory_space<smem>>
    %705 = vector.broadcast %704 : f32 to vector<17x17xf32>
    %706 = arith.mulf %699, %705 : vector<17x17xf32>
    %707 = arith.addf %689, %706 : vector<17x17xf32>
    %c50 = arith.constant 50 : index
    %708 = memref.load %arg5[%c50] : memref<288xf32, #tpu.memory_space<smem>>
    %709 = vector.broadcast %708 : f32 to vector<17x17xf32>
    %710 = arith.mulf %699, %709 : vector<17x17xf32>
    %711 = arith.addf %693, %710 : vector<17x17xf32>
    %c51 = arith.constant 51 : index
    %712 = memref.load %arg5[%c51] : memref<288xf32, #tpu.memory_space<smem>>
    %713 = vector.broadcast %712 : f32 to vector<17x17xf32>
    %714 = arith.mulf %699, %713 : vector<17x17xf32>
    %715 = arith.addf %697, %714 : vector<17x17xf32>
    %c5_161 = arith.constant 5 : index
    %c1_162 = arith.constant 1 : index
    %c1_163 = arith.constant 1 : index
    %716 = vector.load %arg8[%c5_161, %c1_162, %c1_163] : memref<8x18x18xf32, #tpu.memory_space<vmem>>, vector<1x17x17xf32>
    %717 = vector.shape_cast %716 : vector<1x17x17xf32> to vector<17x17xf32>
    %c52 = arith.constant 52 : index
    %718 = memref.load %arg5[%c52] : memref<288xf32, #tpu.memory_space<smem>>
    %719 = vector.broadcast %718 : f32 to vector<17x17xf32>
    %720 = arith.mulf %717, %719 : vector<17x17xf32>
    %721 = arith.addf %703, %720 : vector<17x17xf32>
    %c53 = arith.constant 53 : index
    %722 = memref.load %arg5[%c53] : memref<288xf32, #tpu.memory_space<smem>>
    %723 = vector.broadcast %722 : f32 to vector<17x17xf32>
    %724 = arith.mulf %717, %723 : vector<17x17xf32>
    %725 = arith.addf %707, %724 : vector<17x17xf32>
    %c54 = arith.constant 54 : index
    %726 = memref.load %arg5[%c54] : memref<288xf32, #tpu.memory_space<smem>>
    %727 = vector.broadcast %726 : f32 to vector<17x17xf32>
    %728 = arith.mulf %717, %727 : vector<17x17xf32>
    %729 = arith.addf %711, %728 : vector<17x17xf32>
    %c55 = arith.constant 55 : index
    %730 = memref.load %arg5[%c55] : memref<288xf32, #tpu.memory_space<smem>>
    %731 = vector.broadcast %730 : f32 to vector<17x17xf32>
    %732 = arith.mulf %717, %731 : vector<17x17xf32>
    %733 = arith.addf %715, %732 : vector<17x17xf32>
    %c6_164 = arith.constant 6 : index
    %c1_165 = arith.constant 1 : index
    %c1_166 = arith.constant 1 : index
    %734 = vector.load %arg8[%c6_164, %c1_165, %c1_166] : memref<8x18x18xf32, #tpu.memory_space<vmem>>, vector<1x17x17xf32>
    %735 = vector.shape_cast %734 : vector<1x17x17xf32> to vector<17x17xf32>
    %c56 = arith.constant 56 : index
    %736 = memref.load %arg5[%c56] : memref<288xf32, #tpu.memory_space<smem>>
    %737 = vector.broadcast %736 : f32 to vector<17x17xf32>
    %738 = arith.mulf %735, %737 : vector<17x17xf32>
    %739 = arith.addf %721, %738 : vector<17x17xf32>
    %c57 = arith.constant 57 : index
    %740 = memref.load %arg5[%c57] : memref<288xf32, #tpu.memory_space<smem>>
    %741 = vector.broadcast %740 : f32 to vector<17x17xf32>
    %742 = arith.mulf %735, %741 : vector<17x17xf32>
    %743 = arith.addf %725, %742 : vector<17x17xf32>
    %c58 = arith.constant 58 : index
    %744 = memref.load %arg5[%c58] : memref<288xf32, #tpu.memory_space<smem>>
    %745 = vector.broadcast %744 : f32 to vector<17x17xf32>
    %746 = arith.mulf %735, %745 : vector<17x17xf32>
    %747 = arith.addf %729, %746 : vector<17x17xf32>
    %c59 = arith.constant 59 : index
    %748 = memref.load %arg5[%c59] : memref<288xf32, #tpu.memory_space<smem>>
    %749 = vector.broadcast %748 : f32 to vector<17x17xf32>
    %750 = arith.mulf %735, %749 : vector<17x17xf32>
    %751 = arith.addf %733, %750 : vector<17x17xf32>
    %c7_167 = arith.constant 7 : index
    %c1_168 = arith.constant 1 : index
    %c1_169 = arith.constant 1 : index
    %752 = vector.load %arg8[%c7_167, %c1_168, %c1_169] : memref<8x18x18xf32, #tpu.memory_space<vmem>>, vector<1x17x17xf32>
    %753 = vector.shape_cast %752 : vector<1x17x17xf32> to vector<17x17xf32>
    %c60 = arith.constant 60 : index
    %754 = memref.load %arg5[%c60] : memref<288xf32, #tpu.memory_space<smem>>
    %755 = vector.broadcast %754 : f32 to vector<17x17xf32>
    %756 = arith.mulf %753, %755 : vector<17x17xf32>
    %757 = arith.addf %739, %756 : vector<17x17xf32>
    %c61 = arith.constant 61 : index
    %758 = memref.load %arg5[%c61] : memref<288xf32, #tpu.memory_space<smem>>
    %759 = vector.broadcast %758 : f32 to vector<17x17xf32>
    %760 = arith.mulf %753, %759 : vector<17x17xf32>
    %761 = arith.addf %743, %760 : vector<17x17xf32>
    %c62 = arith.constant 62 : index
    %762 = memref.load %arg5[%c62] : memref<288xf32, #tpu.memory_space<smem>>
    %763 = vector.broadcast %762 : f32 to vector<17x17xf32>
    %764 = arith.mulf %753, %763 : vector<17x17xf32>
    %765 = arith.addf %747, %764 : vector<17x17xf32>
    %c63 = arith.constant 63 : index
    %766 = memref.load %arg5[%c63] : memref<288xf32, #tpu.memory_space<smem>>
    %767 = vector.broadcast %766 : f32 to vector<17x17xf32>
    %768 = arith.mulf %753, %767 : vector<17x17xf32>
    %769 = arith.addf %751, %768 : vector<17x17xf32>
    %c0_170 = arith.constant 0 : index
    %c0_171 = arith.constant 0 : index
    %c1_172 = arith.constant 1 : index
    %770 = vector.load %arg8[%c0_170, %c0_171, %c1_172] : memref<8x18x18xf32, #tpu.memory_space<vmem>>, vector<1x17x17xf32>
    %771 = vector.shape_cast %770 : vector<1x17x17xf32> to vector<17x17xf32>
    %c224 = arith.constant 224 : index
    %772 = memref.load %arg5[%c224] : memref<288xf32, #tpu.memory_space<smem>>
    %773 = vector.broadcast %772 : f32 to vector<17x17xf32>
    %774 = arith.mulf %771, %773 : vector<17x17xf32>
    %775 = arith.addf %757, %774 : vector<17x17xf32>
    %c225 = arith.constant 225 : index
    %776 = memref.load %arg5[%c225] : memref<288xf32, #tpu.memory_space<smem>>
    %777 = vector.broadcast %776 : f32 to vector<17x17xf32>
    %778 = arith.mulf %771, %777 : vector<17x17xf32>
    %779 = arith.addf %761, %778 : vector<17x17xf32>
    %c226 = arith.constant 226 : index
    %780 = memref.load %arg5[%c226] : memref<288xf32, #tpu.memory_space<smem>>
    %781 = vector.broadcast %780 : f32 to vector<17x17xf32>
    %782 = arith.mulf %771, %781 : vector<17x17xf32>
    %783 = arith.addf %765, %782 : vector<17x17xf32>
    %c227 = arith.constant 227 : index
    %784 = memref.load %arg5[%c227] : memref<288xf32, #tpu.memory_space<smem>>
    %785 = vector.broadcast %784 : f32 to vector<17x17xf32>
    %786 = arith.mulf %771, %785 : vector<17x17xf32>
    %787 = arith.addf %769, %786 : vector<17x17xf32>
    %c1_173 = arith.constant 1 : index
    %c0_174 = arith.constant 0 : index
    %c1_175 = arith.constant 1 : index
    %788 = vector.load %arg8[%c1_173, %c0_174, %c1_175] : memref<8x18x18xf32, #tpu.memory_space<vmem>>, vector<1x17x17xf32>
    %789 = vector.shape_cast %788 : vector<1x17x17xf32> to vector<17x17xf32>
    %c228 = arith.constant 228 : index
    %790 = memref.load %arg5[%c228] : memref<288xf32, #tpu.memory_space<smem>>
    %791 = vector.broadcast %790 : f32 to vector<17x17xf32>
    %792 = arith.mulf %789, %791 : vector<17x17xf32>
    %793 = arith.addf %775, %792 : vector<17x17xf32>
    %c229 = arith.constant 229 : index
    %794 = memref.load %arg5[%c229] : memref<288xf32, #tpu.memory_space<smem>>
    %795 = vector.broadcast %794 : f32 to vector<17x17xf32>
    %796 = arith.mulf %789, %795 : vector<17x17xf32>
    %797 = arith.addf %779, %796 : vector<17x17xf32>
    %c230 = arith.constant 230 : index
    %798 = memref.load %arg5[%c230] : memref<288xf32, #tpu.memory_space<smem>>
    %799 = vector.broadcast %798 : f32 to vector<17x17xf32>
    %800 = arith.mulf %789, %799 : vector<17x17xf32>
    %801 = arith.addf %783, %800 : vector<17x17xf32>
    %c231 = arith.constant 231 : index
    %802 = memref.load %arg5[%c231] : memref<288xf32, #tpu.memory_space<smem>>
    %803 = vector.broadcast %802 : f32 to vector<17x17xf32>
    %804 = arith.mulf %789, %803 : vector<17x17xf32>
    %805 = arith.addf %787, %804 : vector<17x17xf32>
    %c2_176 = arith.constant 2 : index
    %c0_177 = arith.constant 0 : index
    %c1_178 = arith.constant 1 : index
    %806 = vector.load %arg8[%c2_176, %c0_177, %c1_178] : memref<8x18x18xf32, #tpu.memory_space<vmem>>, vector<1x17x17xf32>
    %807 = vector.shape_cast %806 : vector<1x17x17xf32> to vector<17x17xf32>
    %c232 = arith.constant 232 : index
    %808 = memref.load %arg5[%c232] : memref<288xf32, #tpu.memory_space<smem>>
    %809 = vector.broadcast %808 : f32 to vector<17x17xf32>
    %810 = arith.mulf %807, %809 : vector<17x17xf32>
    %811 = arith.addf %793, %810 : vector<17x17xf32>
    %c233 = arith.constant 233 : index
    %812 = memref.load %arg5[%c233] : memref<288xf32, #tpu.memory_space<smem>>
    %813 = vector.broadcast %812 : f32 to vector<17x17xf32>
    %814 = arith.mulf %807, %813 : vector<17x17xf32>
    %815 = arith.addf %797, %814 : vector<17x17xf32>
    %c234 = arith.constant 234 : index
    %816 = memref.load %arg5[%c234] : memref<288xf32, #tpu.memory_space<smem>>
    %817 = vector.broadcast %816 : f32 to vector<17x17xf32>
    %818 = arith.mulf %807, %817 : vector<17x17xf32>
    %819 = arith.addf %801, %818 : vector<17x17xf32>
    %c235 = arith.constant 235 : index
    %820 = memref.load %arg5[%c235] : memref<288xf32, #tpu.memory_space<smem>>
    %821 = vector.broadcast %820 : f32 to vector<17x17xf32>
    %822 = arith.mulf %807, %821 : vector<17x17xf32>
    %823 = arith.addf %805, %822 : vector<17x17xf32>
    %c3_179 = arith.constant 3 : index
    %c0_180 = arith.constant 0 : index
    %c1_181 = arith.constant 1 : index
    %824 = vector.load %arg8[%c3_179, %c0_180, %c1_181] : memref<8x18x18xf32, #tpu.memory_space<vmem>>, vector<1x17x17xf32>
    %825 = vector.shape_cast %824 : vector<1x17x17xf32> to vector<17x17xf32>
    %c236 = arith.constant 236 : index
    %826 = memref.load %arg5[%c236] : memref<288xf32, #tpu.memory_space<smem>>
    %827 = vector.broadcast %826 : f32 to vector<17x17xf32>
    %828 = arith.mulf %825, %827 : vector<17x17xf32>
    %829 = arith.addf %811, %828 : vector<17x17xf32>
    %c237 = arith.constant 237 : index
    %830 = memref.load %arg5[%c237] : memref<288xf32, #tpu.memory_space<smem>>
    %831 = vector.broadcast %830 : f32 to vector<17x17xf32>
    %832 = arith.mulf %825, %831 : vector<17x17xf32>
    %833 = arith.addf %815, %832 : vector<17x17xf32>
    %c238 = arith.constant 238 : index
    %834 = memref.load %arg5[%c238] : memref<288xf32, #tpu.memory_space<smem>>
    %835 = vector.broadcast %834 : f32 to vector<17x17xf32>
    %836 = arith.mulf %825, %835 : vector<17x17xf32>
    %837 = arith.addf %819, %836 : vector<17x17xf32>
    %c239 = arith.constant 239 : index
    %838 = memref.load %arg5[%c239] : memref<288xf32, #tpu.memory_space<smem>>
    %839 = vector.broadcast %838 : f32 to vector<17x17xf32>
    %840 = arith.mulf %825, %839 : vector<17x17xf32>
    %841 = arith.addf %823, %840 : vector<17x17xf32>
    %c4_182 = arith.constant 4 : index
    %c0_183 = arith.constant 0 : index
    %c1_184 = arith.constant 1 : index
    %842 = vector.load %arg8[%c4_182, %c0_183, %c1_184] : memref<8x18x18xf32, #tpu.memory_space<vmem>>, vector<1x17x17xf32>
    %843 = vector.shape_cast %842 : vector<1x17x17xf32> to vector<17x17xf32>
    %c240 = arith.constant 240 : index
    %844 = memref.load %arg5[%c240] : memref<288xf32, #tpu.memory_space<smem>>
    %845 = vector.broadcast %844 : f32 to vector<17x17xf32>
    %846 = arith.mulf %843, %845 : vector<17x17xf32>
    %847 = arith.addf %829, %846 : vector<17x17xf32>
    %c241 = arith.constant 241 : index
    %848 = memref.load %arg5[%c241] : memref<288xf32, #tpu.memory_space<smem>>
    %849 = vector.broadcast %848 : f32 to vector<17x17xf32>
    %850 = arith.mulf %843, %849 : vector<17x17xf32>
    %851 = arith.addf %833, %850 : vector<17x17xf32>
    %c242 = arith.constant 242 : index
    %852 = memref.load %arg5[%c242] : memref<288xf32, #tpu.memory_space<smem>>
    %853 = vector.broadcast %852 : f32 to vector<17x17xf32>
    %854 = arith.mulf %843, %853 : vector<17x17xf32>
    %855 = arith.addf %837, %854 : vector<17x17xf32>
    %c243 = arith.constant 243 : index
    %856 = memref.load %arg5[%c243] : memref<288xf32, #tpu.memory_space<smem>>
    %857 = vector.broadcast %856 : f32 to vector<17x17xf32>
    %858 = arith.mulf %843, %857 : vector<17x17xf32>
    %859 = arith.addf %841, %858 : vector<17x17xf32>
    %c5_185 = arith.constant 5 : index
    %c0_186 = arith.constant 0 : index
    %c1_187 = arith.constant 1 : index
    %860 = vector.load %arg8[%c5_185, %c0_186, %c1_187] : memref<8x18x18xf32, #tpu.memory_space<vmem>>, vector<1x17x17xf32>
    %861 = vector.shape_cast %860 : vector<1x17x17xf32> to vector<17x17xf32>
    %c244 = arith.constant 244 : index
    %862 = memref.load %arg5[%c244] : memref<288xf32, #tpu.memory_space<smem>>
    %863 = vector.broadcast %862 : f32 to vector<17x17xf32>
    %864 = arith.mulf %861, %863 : vector<17x17xf32>
    %865 = arith.addf %847, %864 : vector<17x17xf32>
    %c245 = arith.constant 245 : index
    %866 = memref.load %arg5[%c245] : memref<288xf32, #tpu.memory_space<smem>>
    %867 = vector.broadcast %866 : f32 to vector<17x17xf32>
    %868 = arith.mulf %861, %867 : vector<17x17xf32>
    %869 = arith.addf %851, %868 : vector<17x17xf32>
    %c246 = arith.constant 246 : index
    %870 = memref.load %arg5[%c246] : memref<288xf32, #tpu.memory_space<smem>>
    %871 = vector.broadcast %870 : f32 to vector<17x17xf32>
    %872 = arith.mulf %861, %871 : vector<17x17xf32>
    %873 = arith.addf %855, %872 : vector<17x17xf32>
    %c247 = arith.constant 247 : index
    %874 = memref.load %arg5[%c247] : memref<288xf32, #tpu.memory_space<smem>>
    %875 = vector.broadcast %874 : f32 to vector<17x17xf32>
    %876 = arith.mulf %861, %875 : vector<17x17xf32>
    %877 = arith.addf %859, %876 : vector<17x17xf32>
    %c6_188 = arith.constant 6 : index
    %c0_189 = arith.constant 0 : index
    %c1_190 = arith.constant 1 : index
    %878 = vector.load %arg8[%c6_188, %c0_189, %c1_190] : memref<8x18x18xf32, #tpu.memory_space<vmem>>, vector<1x17x17xf32>
    %879 = vector.shape_cast %878 : vector<1x17x17xf32> to vector<17x17xf32>
    %c248 = arith.constant 248 : index
    %880 = memref.load %arg5[%c248] : memref<288xf32, #tpu.memory_space<smem>>
    %881 = vector.broadcast %880 : f32 to vector<17x17xf32>
    %882 = arith.mulf %879, %881 : vector<17x17xf32>
    %883 = arith.addf %865, %882 : vector<17x17xf32>
    %c249 = arith.constant 249 : index
    %884 = memref.load %arg5[%c249] : memref<288xf32, #tpu.memory_space<smem>>
    %885 = vector.broadcast %884 : f32 to vector<17x17xf32>
    %886 = arith.mulf %879, %885 : vector<17x17xf32>
    %887 = arith.addf %869, %886 : vector<17x17xf32>
    %c250 = arith.constant 250 : index
    %888 = memref.load %arg5[%c250] : memref<288xf32, #tpu.memory_space<smem>>
    %889 = vector.broadcast %888 : f32 to vector<17x17xf32>
    %890 = arith.mulf %879, %889 : vector<17x17xf32>
    %891 = arith.addf %873, %890 : vector<17x17xf32>
    %c251 = arith.constant 251 : index
    %892 = memref.load %arg5[%c251] : memref<288xf32, #tpu.memory_space<smem>>
    %893 = vector.broadcast %892 : f32 to vector<17x17xf32>
    %894 = arith.mulf %879, %893 : vector<17x17xf32>
    %895 = arith.addf %877, %894 : vector<17x17xf32>
    %c7_191 = arith.constant 7 : index
    %c0_192 = arith.constant 0 : index
    %c1_193 = arith.constant 1 : index
    %896 = vector.load %arg8[%c7_191, %c0_192, %c1_193] : memref<8x18x18xf32, #tpu.memory_space<vmem>>, vector<1x17x17xf32>
    %897 = vector.shape_cast %896 : vector<1x17x17xf32> to vector<17x17xf32>
    %c252 = arith.constant 252 : index
    %898 = memref.load %arg5[%c252] : memref<288xf32, #tpu.memory_space<smem>>
    %899 = vector.broadcast %898 : f32 to vector<17x17xf32>
    %900 = arith.mulf %897, %899 : vector<17x17xf32>
    %901 = arith.addf %883, %900 : vector<17x17xf32>
    %c253 = arith.constant 253 : index
    %902 = memref.load %arg5[%c253] : memref<288xf32, #tpu.memory_space<smem>>
    %903 = vector.broadcast %902 : f32 to vector<17x17xf32>
    %904 = arith.mulf %897, %903 : vector<17x17xf32>
    %905 = arith.addf %887, %904 : vector<17x17xf32>
    %c254 = arith.constant 254 : index
    %906 = memref.load %arg5[%c254] : memref<288xf32, #tpu.memory_space<smem>>
    %907 = vector.broadcast %906 : f32 to vector<17x17xf32>
    %908 = arith.mulf %897, %907 : vector<17x17xf32>
    %909 = arith.addf %891, %908 : vector<17x17xf32>
    %c255 = arith.constant 255 : index
    %910 = memref.load %arg5[%c255] : memref<288xf32, #tpu.memory_space<smem>>
    %911 = vector.broadcast %910 : f32 to vector<17x17xf32>
    %912 = arith.mulf %897, %911 : vector<17x17xf32>
    %913 = arith.addf %895, %912 : vector<17x17xf32>
    %c0_194 = arith.constant 0 : index
    %914 = memref.load %arg6[%c0_194] : memref<4xf32, #tpu.memory_space<smem>>
    %915 = vector.broadcast %914 : f32 to vector<17x17xf32>
    %916 = arith.addf %901, %915 : vector<17x17xf32>
    %cst_195 = arith.constant 0.000000e+00 : f32
    %917 = vector.broadcast %cst_195 : f32 to vector<17x17xf32>
    %918 = arith.maximumf %916, %917 : vector<17x17xf32>
    %cst_196 = arith.constant dense<0.000000e+00> : vector<17x32xf32>
    %919 = tpu.matmul %918, %12, %cst_196 {dimension_numbers = #tpu.dot_dimension_numbers<[1], [0], [0], [1], [0, 0, 1, 1], [], []>} : vector<17x17xf32>, vector<17x32xf32>, vector<17x32xf32> -> vector<17x32xf32>
    %920 = arith.addf %603, %919 : vector<17x32xf32>
    %c1_197 = arith.constant 1 : index
    %921 = memref.load %arg6[%c1_197] : memref<4xf32, #tpu.memory_space<smem>>
    %922 = vector.broadcast %921 : f32 to vector<17x17xf32>
    %923 = arith.addf %905, %922 : vector<17x17xf32>
    %cst_198 = arith.constant 0.000000e+00 : f32
    %924 = vector.broadcast %cst_198 : f32 to vector<17x17xf32>
    %925 = arith.maximumf %923, %924 : vector<17x17xf32>
    %cst_199 = arith.constant dense<0.000000e+00> : vector<17x32xf32>
    %926 = tpu.matmul %925, %12, %cst_199 {dimension_numbers = #tpu.dot_dimension_numbers<[1], [0], [0], [1], [0, 0, 1, 1], [], []>} : vector<17x17xf32>, vector<17x32xf32>, vector<17x32xf32> -> vector<17x32xf32>
    %927 = arith.addf %609, %926 : vector<17x32xf32>
    %c2_200 = arith.constant 2 : index
    %928 = memref.load %arg6[%c2_200] : memref<4xf32, #tpu.memory_space<smem>>
    %929 = vector.broadcast %928 : f32 to vector<17x17xf32>
    %930 = arith.addf %909, %929 : vector<17x17xf32>
    %cst_201 = arith.constant 0.000000e+00 : f32
    %931 = vector.broadcast %cst_201 : f32 to vector<17x17xf32>
    %932 = arith.maximumf %930, %931 : vector<17x17xf32>
    %cst_202 = arith.constant dense<0.000000e+00> : vector<17x32xf32>
    %933 = tpu.matmul %932, %12, %cst_202 {dimension_numbers = #tpu.dot_dimension_numbers<[1], [0], [0], [1], [0, 0, 1, 1], [], []>} : vector<17x17xf32>, vector<17x32xf32>, vector<17x32xf32> -> vector<17x32xf32>
    %934 = arith.addf %615, %933 : vector<17x32xf32>
    %c3_203 = arith.constant 3 : index
    %935 = memref.load %arg6[%c3_203] : memref<4xf32, #tpu.memory_space<smem>>
    %936 = vector.broadcast %935 : f32 to vector<17x17xf32>
    %937 = arith.addf %913, %936 : vector<17x17xf32>
    %cst_204 = arith.constant 0.000000e+00 : f32
    %938 = vector.broadcast %cst_204 : f32 to vector<17x17xf32>
    %939 = arith.maximumf %937, %938 : vector<17x17xf32>
    %cst_205 = arith.constant dense<0.000000e+00> : vector<17x32xf32>
    %940 = tpu.matmul %939, %12, %cst_205 {dimension_numbers = #tpu.dot_dimension_numbers<[1], [0], [0], [1], [0, 0, 1, 1], [], []>} : vector<17x17xf32>, vector<17x32xf32>, vector<17x32xf32> -> vector<17x32xf32>
    %941 = arith.addf %621, %940 : vector<17x32xf32>
    %cst_206 = arith.constant 0.000000e+00 : f32
    %942 = vector.broadcast %cst_206 : f32 to vector<17x17xf32>
    %cst_207 = arith.constant 0.000000e+00 : f32
    %943 = vector.broadcast %cst_207 : f32 to vector<17x17xf32>
    %cst_208 = arith.constant 0.000000e+00 : f32
    %944 = vector.broadcast %cst_208 : f32 to vector<17x17xf32>
    %cst_209 = arith.constant 0.000000e+00 : f32
    %945 = vector.broadcast %cst_209 : f32 to vector<17x17xf32>
    %c0_210 = arith.constant 0 : index
    %c1_211 = arith.constant 1 : index
    %c1_212 = arith.constant 1 : index
    %946 = vector.load %arg8[%c0_210, %c1_211, %c1_212] : memref<8x18x18xf32, #tpu.memory_space<vmem>>, vector<1x17x17xf32>
    %947 = vector.shape_cast %946 : vector<1x17x17xf32> to vector<17x17xf32>
    %c96 = arith.constant 96 : index
    %948 = memref.load %arg5[%c96] : memref<288xf32, #tpu.memory_space<smem>>
    %949 = vector.broadcast %948 : f32 to vector<17x17xf32>
    %950 = arith.mulf %947, %949 : vector<17x17xf32>
    %951 = arith.addf %942, %950 : vector<17x17xf32>
    %c97 = arith.constant 97 : index
    %952 = memref.load %arg5[%c97] : memref<288xf32, #tpu.memory_space<smem>>
    %953 = vector.broadcast %952 : f32 to vector<17x17xf32>
    %954 = arith.mulf %947, %953 : vector<17x17xf32>
    %955 = arith.addf %943, %954 : vector<17x17xf32>
    %c98 = arith.constant 98 : index
    %956 = memref.load %arg5[%c98] : memref<288xf32, #tpu.memory_space<smem>>
    %957 = vector.broadcast %956 : f32 to vector<17x17xf32>
    %958 = arith.mulf %947, %957 : vector<17x17xf32>
    %959 = arith.addf %944, %958 : vector<17x17xf32>
    %c99 = arith.constant 99 : index
    %960 = memref.load %arg5[%c99] : memref<288xf32, #tpu.memory_space<smem>>
    %961 = vector.broadcast %960 : f32 to vector<17x17xf32>
    %962 = arith.mulf %947, %961 : vector<17x17xf32>
    %963 = arith.addf %945, %962 : vector<17x17xf32>
    %c1_213 = arith.constant 1 : index
    %c1_214 = arith.constant 1 : index
    %c1_215 = arith.constant 1 : index
    %964 = vector.load %arg8[%c1_213, %c1_214, %c1_215] : memref<8x18x18xf32, #tpu.memory_space<vmem>>, vector<1x17x17xf32>
    %965 = vector.shape_cast %964 : vector<1x17x17xf32> to vector<17x17xf32>
    %c100 = arith.constant 100 : index
    %966 = memref.load %arg5[%c100] : memref<288xf32, #tpu.memory_space<smem>>
    %967 = vector.broadcast %966 : f32 to vector<17x17xf32>
    %968 = arith.mulf %965, %967 : vector<17x17xf32>
    %969 = arith.addf %951, %968 : vector<17x17xf32>
    %c101 = arith.constant 101 : index
    %970 = memref.load %arg5[%c101] : memref<288xf32, #tpu.memory_space<smem>>
    %971 = vector.broadcast %970 : f32 to vector<17x17xf32>
    %972 = arith.mulf %965, %971 : vector<17x17xf32>
    %973 = arith.addf %955, %972 : vector<17x17xf32>
    %c102 = arith.constant 102 : index
    %974 = memref.load %arg5[%c102] : memref<288xf32, #tpu.memory_space<smem>>
    %975 = vector.broadcast %974 : f32 to vector<17x17xf32>
    %976 = arith.mulf %965, %975 : vector<17x17xf32>
    %977 = arith.addf %959, %976 : vector<17x17xf32>
    %c103 = arith.constant 103 : index
    %978 = memref.load %arg5[%c103] : memref<288xf32, #tpu.memory_space<smem>>
    %979 = vector.broadcast %978 : f32 to vector<17x17xf32>
    %980 = arith.mulf %965, %979 : vector<17x17xf32>
    %981 = arith.addf %963, %980 : vector<17x17xf32>
    %c2_216 = arith.constant 2 : index
    %c1_217 = arith.constant 1 : index
    %c1_218 = arith.constant 1 : index
    %982 = vector.load %arg8[%c2_216, %c1_217, %c1_218] : memref<8x18x18xf32, #tpu.memory_space<vmem>>, vector<1x17x17xf32>
    %983 = vector.shape_cast %982 : vector<1x17x17xf32> to vector<17x17xf32>
    %c104 = arith.constant 104 : index
    %984 = memref.load %arg5[%c104] : memref<288xf32, #tpu.memory_space<smem>>
    %985 = vector.broadcast %984 : f32 to vector<17x17xf32>
    %986 = arith.mulf %983, %985 : vector<17x17xf32>
    %987 = arith.addf %969, %986 : vector<17x17xf32>
    %c105 = arith.constant 105 : index
    %988 = memref.load %arg5[%c105] : memref<288xf32, #tpu.memory_space<smem>>
    %989 = vector.broadcast %988 : f32 to vector<17x17xf32>
    %990 = arith.mulf %983, %989 : vector<17x17xf32>
    %991 = arith.addf %973, %990 : vector<17x17xf32>
    %c106 = arith.constant 106 : index
    %992 = memref.load %arg5[%c106] : memref<288xf32, #tpu.memory_space<smem>>
    %993 = vector.broadcast %992 : f32 to vector<17x17xf32>
    %994 = arith.mulf %983, %993 : vector<17x17xf32>
    %995 = arith.addf %977, %994 : vector<17x17xf32>
    %c107 = arith.constant 107 : index
    %996 = memref.load %arg5[%c107] : memref<288xf32, #tpu.memory_space<smem>>
    %997 = vector.broadcast %996 : f32 to vector<17x17xf32>
    %998 = arith.mulf %983, %997 : vector<17x17xf32>
    %999 = arith.addf %981, %998 : vector<17x17xf32>
    %c3_219 = arith.constant 3 : index
    %c1_220 = arith.constant 1 : index
    %c1_221 = arith.constant 1 : index
    %1000 = vector.load %arg8[%c3_219, %c1_220, %c1_221] : memref<8x18x18xf32, #tpu.memory_space<vmem>>, vector<1x17x17xf32>
    %1001 = vector.shape_cast %1000 : vector<1x17x17xf32> to vector<17x17xf32>
    %c108 = arith.constant 108 : index
    %1002 = memref.load %arg5[%c108] : memref<288xf32, #tpu.memory_space<smem>>
    %1003 = vector.broadcast %1002 : f32 to vector<17x17xf32>
    %1004 = arith.mulf %1001, %1003 : vector<17x17xf32>
    %1005 = arith.addf %987, %1004 : vector<17x17xf32>
    %c109 = arith.constant 109 : index
    %1006 = memref.load %arg5[%c109] : memref<288xf32, #tpu.memory_space<smem>>
    %1007 = vector.broadcast %1006 : f32 to vector<17x17xf32>
    %1008 = arith.mulf %1001, %1007 : vector<17x17xf32>
    %1009 = arith.addf %991, %1008 : vector<17x17xf32>
    %c110 = arith.constant 110 : index
    %1010 = memref.load %arg5[%c110] : memref<288xf32, #tpu.memory_space<smem>>
    %1011 = vector.broadcast %1010 : f32 to vector<17x17xf32>
    %1012 = arith.mulf %1001, %1011 : vector<17x17xf32>
    %1013 = arith.addf %995, %1012 : vector<17x17xf32>
    %c111 = arith.constant 111 : index
    %1014 = memref.load %arg5[%c111] : memref<288xf32, #tpu.memory_space<smem>>
    %1015 = vector.broadcast %1014 : f32 to vector<17x17xf32>
    %1016 = arith.mulf %1001, %1015 : vector<17x17xf32>
    %1017 = arith.addf %999, %1016 : vector<17x17xf32>
    %c4_222 = arith.constant 4 : index
    %c1_223 = arith.constant 1 : index
    %c1_224 = arith.constant 1 : index
    %1018 = vector.load %arg8[%c4_222, %c1_223, %c1_224] : memref<8x18x18xf32, #tpu.memory_space<vmem>>, vector<1x17x17xf32>
    %1019 = vector.shape_cast %1018 : vector<1x17x17xf32> to vector<17x17xf32>
    %c112 = arith.constant 112 : index
    %1020 = memref.load %arg5[%c112] : memref<288xf32, #tpu.memory_space<smem>>
    %1021 = vector.broadcast %1020 : f32 to vector<17x17xf32>
    %1022 = arith.mulf %1019, %1021 : vector<17x17xf32>
    %1023 = arith.addf %1005, %1022 : vector<17x17xf32>
    %c113 = arith.constant 113 : index
    %1024 = memref.load %arg5[%c113] : memref<288xf32, #tpu.memory_space<smem>>
    %1025 = vector.broadcast %1024 : f32 to vector<17x17xf32>
    %1026 = arith.mulf %1019, %1025 : vector<17x17xf32>
    %1027 = arith.addf %1009, %1026 : vector<17x17xf32>
    %c114 = arith.constant 114 : index
    %1028 = memref.load %arg5[%c114] : memref<288xf32, #tpu.memory_space<smem>>
    %1029 = vector.broadcast %1028 : f32 to vector<17x17xf32>
    %1030 = arith.mulf %1019, %1029 : vector<17x17xf32>
    %1031 = arith.addf %1013, %1030 : vector<17x17xf32>
    %c115 = arith.constant 115 : index
    %1032 = memref.load %arg5[%c115] : memref<288xf32, #tpu.memory_space<smem>>
    %1033 = vector.broadcast %1032 : f32 to vector<17x17xf32>
    %1034 = arith.mulf %1019, %1033 : vector<17x17xf32>
    %1035 = arith.addf %1017, %1034 : vector<17x17xf32>
    %c5_225 = arith.constant 5 : index
    %c1_226 = arith.constant 1 : index
    %c1_227 = arith.constant 1 : index
    %1036 = vector.load %arg8[%c5_225, %c1_226, %c1_227] : memref<8x18x18xf32, #tpu.memory_space<vmem>>, vector<1x17x17xf32>
    %1037 = vector.shape_cast %1036 : vector<1x17x17xf32> to vector<17x17xf32>
    %c116 = arith.constant 116 : index
    %1038 = memref.load %arg5[%c116] : memref<288xf32, #tpu.memory_space<smem>>
    %1039 = vector.broadcast %1038 : f32 to vector<17x17xf32>
    %1040 = arith.mulf %1037, %1039 : vector<17x17xf32>
    %1041 = arith.addf %1023, %1040 : vector<17x17xf32>
    %c117 = arith.constant 117 : index
    %1042 = memref.load %arg5[%c117] : memref<288xf32, #tpu.memory_space<smem>>
    %1043 = vector.broadcast %1042 : f32 to vector<17x17xf32>
    %1044 = arith.mulf %1037, %1043 : vector<17x17xf32>
    %1045 = arith.addf %1027, %1044 : vector<17x17xf32>
    %c118 = arith.constant 118 : index
    %1046 = memref.load %arg5[%c118] : memref<288xf32, #tpu.memory_space<smem>>
    %1047 = vector.broadcast %1046 : f32 to vector<17x17xf32>
    %1048 = arith.mulf %1037, %1047 : vector<17x17xf32>
    %1049 = arith.addf %1031, %1048 : vector<17x17xf32>
    %c119 = arith.constant 119 : index
    %1050 = memref.load %arg5[%c119] : memref<288xf32, #tpu.memory_space<smem>>
    %1051 = vector.broadcast %1050 : f32 to vector<17x17xf32>
    %1052 = arith.mulf %1037, %1051 : vector<17x17xf32>
    %1053 = arith.addf %1035, %1052 : vector<17x17xf32>
    %c6_228 = arith.constant 6 : index
    %c1_229 = arith.constant 1 : index
    %c1_230 = arith.constant 1 : index
    %1054 = vector.load %arg8[%c6_228, %c1_229, %c1_230] : memref<8x18x18xf32, #tpu.memory_space<vmem>>, vector<1x17x17xf32>
    %1055 = vector.shape_cast %1054 : vector<1x17x17xf32> to vector<17x17xf32>
    %c120 = arith.constant 120 : index
    %1056 = memref.load %arg5[%c120] : memref<288xf32, #tpu.memory_space<smem>>
    %1057 = vector.broadcast %1056 : f32 to vector<17x17xf32>
    %1058 = arith.mulf %1055, %1057 : vector<17x17xf32>
    %1059 = arith.addf %1041, %1058 : vector<17x17xf32>
    %c121 = arith.constant 121 : index
    %1060 = memref.load %arg5[%c121] : memref<288xf32, #tpu.memory_space<smem>>
    %1061 = vector.broadcast %1060 : f32 to vector<17x17xf32>
    %1062 = arith.mulf %1055, %1061 : vector<17x17xf32>
    %1063 = arith.addf %1045, %1062 : vector<17x17xf32>
    %c122 = arith.constant 122 : index
    %1064 = memref.load %arg5[%c122] : memref<288xf32, #tpu.memory_space<smem>>
    %1065 = vector.broadcast %1064 : f32 to vector<17x17xf32>
    %1066 = arith.mulf %1055, %1065 : vector<17x17xf32>
    %1067 = arith.addf %1049, %1066 : vector<17x17xf32>
    %c123 = arith.constant 123 : index
    %1068 = memref.load %arg5[%c123] : memref<288xf32, #tpu.memory_space<smem>>
    %1069 = vector.broadcast %1068 : f32 to vector<17x17xf32>
    %1070 = arith.mulf %1055, %1069 : vector<17x17xf32>
    %1071 = arith.addf %1053, %1070 : vector<17x17xf32>
    %c7_231 = arith.constant 7 : index
    %c1_232 = arith.constant 1 : index
    %c1_233 = arith.constant 1 : index
    %1072 = vector.load %arg8[%c7_231, %c1_232, %c1_233] : memref<8x18x18xf32, #tpu.memory_space<vmem>>, vector<1x17x17xf32>
    %1073 = vector.shape_cast %1072 : vector<1x17x17xf32> to vector<17x17xf32>
    %c124 = arith.constant 124 : index
    %1074 = memref.load %arg5[%c124] : memref<288xf32, #tpu.memory_space<smem>>
    %1075 = vector.broadcast %1074 : f32 to vector<17x17xf32>
    %1076 = arith.mulf %1073, %1075 : vector<17x17xf32>
    %1077 = arith.addf %1059, %1076 : vector<17x17xf32>
    %c125 = arith.constant 125 : index
    %1078 = memref.load %arg5[%c125] : memref<288xf32, #tpu.memory_space<smem>>
    %1079 = vector.broadcast %1078 : f32 to vector<17x17xf32>
    %1080 = arith.mulf %1073, %1079 : vector<17x17xf32>
    %1081 = arith.addf %1063, %1080 : vector<17x17xf32>
    %c126 = arith.constant 126 : index
    %1082 = memref.load %arg5[%c126] : memref<288xf32, #tpu.memory_space<smem>>
    %1083 = vector.broadcast %1082 : f32 to vector<17x17xf32>
    %1084 = arith.mulf %1073, %1083 : vector<17x17xf32>
    %1085 = arith.addf %1067, %1084 : vector<17x17xf32>
    %c127 = arith.constant 127 : index
    %1086 = memref.load %arg5[%c127] : memref<288xf32, #tpu.memory_space<smem>>
    %1087 = vector.broadcast %1086 : f32 to vector<17x17xf32>
    %1088 = arith.mulf %1073, %1087 : vector<17x17xf32>
    %1089 = arith.addf %1071, %1088 : vector<17x17xf32>
    %c0_234 = arith.constant 0 : index
    %c1_235 = arith.constant 1 : index
    %c0_236 = arith.constant 0 : index
    %1090 = vector.load %arg8[%c0_234, %c1_235, %c0_236] : memref<8x18x18xf32, #tpu.memory_space<vmem>>, vector<1x17x17xf32>
    %1091 = vector.shape_cast %1090 : vector<1x17x17xf32> to vector<17x17xf32>
    %c160 = arith.constant 160 : index
    %1092 = memref.load %arg5[%c160] : memref<288xf32, #tpu.memory_space<smem>>
    %1093 = vector.broadcast %1092 : f32 to vector<17x17xf32>
    %1094 = arith.mulf %1091, %1093 : vector<17x17xf32>
    %1095 = arith.addf %1077, %1094 : vector<17x17xf32>
    %c161 = arith.constant 161 : index
    %1096 = memref.load %arg5[%c161] : memref<288xf32, #tpu.memory_space<smem>>
    %1097 = vector.broadcast %1096 : f32 to vector<17x17xf32>
    %1098 = arith.mulf %1091, %1097 : vector<17x17xf32>
    %1099 = arith.addf %1081, %1098 : vector<17x17xf32>
    %c162 = arith.constant 162 : index
    %1100 = memref.load %arg5[%c162] : memref<288xf32, #tpu.memory_space<smem>>
    %1101 = vector.broadcast %1100 : f32 to vector<17x17xf32>
    %1102 = arith.mulf %1091, %1101 : vector<17x17xf32>
    %1103 = arith.addf %1085, %1102 : vector<17x17xf32>
    %c163 = arith.constant 163 : index
    %1104 = memref.load %arg5[%c163] : memref<288xf32, #tpu.memory_space<smem>>
    %1105 = vector.broadcast %1104 : f32 to vector<17x17xf32>
    %1106 = arith.mulf %1091, %1105 : vector<17x17xf32>
    %1107 = arith.addf %1089, %1106 : vector<17x17xf32>
    %c1_237 = arith.constant 1 : index
    %c1_238 = arith.constant 1 : index
    %c0_239 = arith.constant 0 : index
    %1108 = vector.load %arg8[%c1_237, %c1_238, %c0_239] : memref<8x18x18xf32, #tpu.memory_space<vmem>>, vector<1x17x17xf32>
    %1109 = vector.shape_cast %1108 : vector<1x17x17xf32> to vector<17x17xf32>
    %c164 = arith.constant 164 : index
    %1110 = memref.load %arg5[%c164] : memref<288xf32, #tpu.memory_space<smem>>
    %1111 = vector.broadcast %1110 : f32 to vector<17x17xf32>
    %1112 = arith.mulf %1109, %1111 : vector<17x17xf32>
    %1113 = arith.addf %1095, %1112 : vector<17x17xf32>
    %c165 = arith.constant 165 : index
    %1114 = memref.load %arg5[%c165] : memref<288xf32, #tpu.memory_space<smem>>
    %1115 = vector.broadcast %1114 : f32 to vector<17x17xf32>
    %1116 = arith.mulf %1109, %1115 : vector<17x17xf32>
    %1117 = arith.addf %1099, %1116 : vector<17x17xf32>
    %c166 = arith.constant 166 : index
    %1118 = memref.load %arg5[%c166] : memref<288xf32, #tpu.memory_space<smem>>
    %1119 = vector.broadcast %1118 : f32 to vector<17x17xf32>
    %1120 = arith.mulf %1109, %1119 : vector<17x17xf32>
    %1121 = arith.addf %1103, %1120 : vector<17x17xf32>
    %c167 = arith.constant 167 : index
    %1122 = memref.load %arg5[%c167] : memref<288xf32, #tpu.memory_space<smem>>
    %1123 = vector.broadcast %1122 : f32 to vector<17x17xf32>
    %1124 = arith.mulf %1109, %1123 : vector<17x17xf32>
    %1125 = arith.addf %1107, %1124 : vector<17x17xf32>
    %c2_240 = arith.constant 2 : index
    %c1_241 = arith.constant 1 : index
    %c0_242 = arith.constant 0 : index
    %1126 = vector.load %arg8[%c2_240, %c1_241, %c0_242] : memref<8x18x18xf32, #tpu.memory_space<vmem>>, vector<1x17x17xf32>
    %1127 = vector.shape_cast %1126 : vector<1x17x17xf32> to vector<17x17xf32>
    %c168 = arith.constant 168 : index
    %1128 = memref.load %arg5[%c168] : memref<288xf32, #tpu.memory_space<smem>>
    %1129 = vector.broadcast %1128 : f32 to vector<17x17xf32>
    %1130 = arith.mulf %1127, %1129 : vector<17x17xf32>
    %1131 = arith.addf %1113, %1130 : vector<17x17xf32>
    %c169 = arith.constant 169 : index
    %1132 = memref.load %arg5[%c169] : memref<288xf32, #tpu.memory_space<smem>>
    %1133 = vector.broadcast %1132 : f32 to vector<17x17xf32>
    %1134 = arith.mulf %1127, %1133 : vector<17x17xf32>
    %1135 = arith.addf %1117, %1134 : vector<17x17xf32>
    %c170 = arith.constant 170 : index
    %1136 = memref.load %arg5[%c170] : memref<288xf32, #tpu.memory_space<smem>>
    %1137 = vector.broadcast %1136 : f32 to vector<17x17xf32>
    %1138 = arith.mulf %1127, %1137 : vector<17x17xf32>
    %1139 = arith.addf %1121, %1138 : vector<17x17xf32>
    %c171 = arith.constant 171 : index
    %1140 = memref.load %arg5[%c171] : memref<288xf32, #tpu.memory_space<smem>>
    %1141 = vector.broadcast %1140 : f32 to vector<17x17xf32>
    %1142 = arith.mulf %1127, %1141 : vector<17x17xf32>
    %1143 = arith.addf %1125, %1142 : vector<17x17xf32>
    %c3_243 = arith.constant 3 : index
    %c1_244 = arith.constant 1 : index
    %c0_245 = arith.constant 0 : index
    %1144 = vector.load %arg8[%c3_243, %c1_244, %c0_245] : memref<8x18x18xf32, #tpu.memory_space<vmem>>, vector<1x17x17xf32>
    %1145 = vector.shape_cast %1144 : vector<1x17x17xf32> to vector<17x17xf32>
    %c172 = arith.constant 172 : index
    %1146 = memref.load %arg5[%c172] : memref<288xf32, #tpu.memory_space<smem>>
    %1147 = vector.broadcast %1146 : f32 to vector<17x17xf32>
    %1148 = arith.mulf %1145, %1147 : vector<17x17xf32>
    %1149 = arith.addf %1131, %1148 : vector<17x17xf32>
    %c173 = arith.constant 173 : index
    %1150 = memref.load %arg5[%c173] : memref<288xf32, #tpu.memory_space<smem>>
    %1151 = vector.broadcast %1150 : f32 to vector<17x17xf32>
    %1152 = arith.mulf %1145, %1151 : vector<17x17xf32>
    %1153 = arith.addf %1135, %1152 : vector<17x17xf32>
    %c174 = arith.constant 174 : index
    %1154 = memref.load %arg5[%c174] : memref<288xf32, #tpu.memory_space<smem>>
    %1155 = vector.broadcast %1154 : f32 to vector<17x17xf32>
    %1156 = arith.mulf %1145, %1155 : vector<17x17xf32>
    %1157 = arith.addf %1139, %1156 : vector<17x17xf32>
    %c175 = arith.constant 175 : index
    %1158 = memref.load %arg5[%c175] : memref<288xf32, #tpu.memory_space<smem>>
    %1159 = vector.broadcast %1158 : f32 to vector<17x17xf32>
    %1160 = arith.mulf %1145, %1159 : vector<17x17xf32>
    %1161 = arith.addf %1143, %1160 : vector<17x17xf32>
    %c4_246 = arith.constant 4 : index
    %c1_247 = arith.constant 1 : index
    %c0_248 = arith.constant 0 : index
    %1162 = vector.load %arg8[%c4_246, %c1_247, %c0_248] : memref<8x18x18xf32, #tpu.memory_space<vmem>>, vector<1x17x17xf32>
    %1163 = vector.shape_cast %1162 : vector<1x17x17xf32> to vector<17x17xf32>
    %c176 = arith.constant 176 : index
    %1164 = memref.load %arg5[%c176] : memref<288xf32, #tpu.memory_space<smem>>
    %1165 = vector.broadcast %1164 : f32 to vector<17x17xf32>
    %1166 = arith.mulf %1163, %1165 : vector<17x17xf32>
    %1167 = arith.addf %1149, %1166 : vector<17x17xf32>
    %c177 = arith.constant 177 : index
    %1168 = memref.load %arg5[%c177] : memref<288xf32, #tpu.memory_space<smem>>
    %1169 = vector.broadcast %1168 : f32 to vector<17x17xf32>
    %1170 = arith.mulf %1163, %1169 : vector<17x17xf32>
    %1171 = arith.addf %1153, %1170 : vector<17x17xf32>
    %c178 = arith.constant 178 : index
    %1172 = memref.load %arg5[%c178] : memref<288xf32, #tpu.memory_space<smem>>
    %1173 = vector.broadcast %1172 : f32 to vector<17x17xf32>
    %1174 = arith.mulf %1163, %1173 : vector<17x17xf32>
    %1175 = arith.addf %1157, %1174 : vector<17x17xf32>
    %c179 = arith.constant 179 : index
    %1176 = memref.load %arg5[%c179] : memref<288xf32, #tpu.memory_space<smem>>
    %1177 = vector.broadcast %1176 : f32 to vector<17x17xf32>
    %1178 = arith.mulf %1163, %1177 : vector<17x17xf32>
    %1179 = arith.addf %1161, %1178 : vector<17x17xf32>
    %c5_249 = arith.constant 5 : index
    %c1_250 = arith.constant 1 : index
    %c0_251 = arith.constant 0 : index
    %1180 = vector.load %arg8[%c5_249, %c1_250, %c0_251] : memref<8x18x18xf32, #tpu.memory_space<vmem>>, vector<1x17x17xf32>
    %1181 = vector.shape_cast %1180 : vector<1x17x17xf32> to vector<17x17xf32>
    %c180 = arith.constant 180 : index
    %1182 = memref.load %arg5[%c180] : memref<288xf32, #tpu.memory_space<smem>>
    %1183 = vector.broadcast %1182 : f32 to vector<17x17xf32>
    %1184 = arith.mulf %1181, %1183 : vector<17x17xf32>
    %1185 = arith.addf %1167, %1184 : vector<17x17xf32>
    %c181 = arith.constant 181 : index
    %1186 = memref.load %arg5[%c181] : memref<288xf32, #tpu.memory_space<smem>>
    %1187 = vector.broadcast %1186 : f32 to vector<17x17xf32>
    %1188 = arith.mulf %1181, %1187 : vector<17x17xf32>
    %1189 = arith.addf %1171, %1188 : vector<17x17xf32>
    %c182 = arith.constant 182 : index
    %1190 = memref.load %arg5[%c182] : memref<288xf32, #tpu.memory_space<smem>>
    %1191 = vector.broadcast %1190 : f32 to vector<17x17xf32>
    %1192 = arith.mulf %1181, %1191 : vector<17x17xf32>
    %1193 = arith.addf %1175, %1192 : vector<17x17xf32>
    %c183 = arith.constant 183 : index
    %1194 = memref.load %arg5[%c183] : memref<288xf32, #tpu.memory_space<smem>>
    %1195 = vector.broadcast %1194 : f32 to vector<17x17xf32>
    %1196 = arith.mulf %1181, %1195 : vector<17x17xf32>
    %1197 = arith.addf %1179, %1196 : vector<17x17xf32>
    %c6_252 = arith.constant 6 : index
    %c1_253 = arith.constant 1 : index
    %c0_254 = arith.constant 0 : index
    %1198 = vector.load %arg8[%c6_252, %c1_253, %c0_254] : memref<8x18x18xf32, #tpu.memory_space<vmem>>, vector<1x17x17xf32>
    %1199 = vector.shape_cast %1198 : vector<1x17x17xf32> to vector<17x17xf32>
    %c184 = arith.constant 184 : index
    %1200 = memref.load %arg5[%c184] : memref<288xf32, #tpu.memory_space<smem>>
    %1201 = vector.broadcast %1200 : f32 to vector<17x17xf32>
    %1202 = arith.mulf %1199, %1201 : vector<17x17xf32>
    %1203 = arith.addf %1185, %1202 : vector<17x17xf32>
    %c185 = arith.constant 185 : index
    %1204 = memref.load %arg5[%c185] : memref<288xf32, #tpu.memory_space<smem>>
    %1205 = vector.broadcast %1204 : f32 to vector<17x17xf32>
    %1206 = arith.mulf %1199, %1205 : vector<17x17xf32>
    %1207 = arith.addf %1189, %1206 : vector<17x17xf32>
    %c186 = arith.constant 186 : index
    %1208 = memref.load %arg5[%c186] : memref<288xf32, #tpu.memory_space<smem>>
    %1209 = vector.broadcast %1208 : f32 to vector<17x17xf32>
    %1210 = arith.mulf %1199, %1209 : vector<17x17xf32>
    %1211 = arith.addf %1193, %1210 : vector<17x17xf32>
    %c187 = arith.constant 187 : index
    %1212 = memref.load %arg5[%c187] : memref<288xf32, #tpu.memory_space<smem>>
    %1213 = vector.broadcast %1212 : f32 to vector<17x17xf32>
    %1214 = arith.mulf %1199, %1213 : vector<17x17xf32>
    %1215 = arith.addf %1197, %1214 : vector<17x17xf32>
    %c7_255 = arith.constant 7 : index
    %c1_256 = arith.constant 1 : index
    %c0_257 = arith.constant 0 : index
    %1216 = vector.load %arg8[%c7_255, %c1_256, %c0_257] : memref<8x18x18xf32, #tpu.memory_space<vmem>>, vector<1x17x17xf32>
    %1217 = vector.shape_cast %1216 : vector<1x17x17xf32> to vector<17x17xf32>
    %c188 = arith.constant 188 : index
    %1218 = memref.load %arg5[%c188] : memref<288xf32, #tpu.memory_space<smem>>
    %1219 = vector.broadcast %1218 : f32 to vector<17x17xf32>
    %1220 = arith.mulf %1217, %1219 : vector<17x17xf32>
    %1221 = arith.addf %1203, %1220 : vector<17x17xf32>
    %c189 = arith.constant 189 : index
    %1222 = memref.load %arg5[%c189] : memref<288xf32, #tpu.memory_space<smem>>
    %1223 = vector.broadcast %1222 : f32 to vector<17x17xf32>
    %1224 = arith.mulf %1217, %1223 : vector<17x17xf32>
    %1225 = arith.addf %1207, %1224 : vector<17x17xf32>
    %c190 = arith.constant 190 : index
    %1226 = memref.load %arg5[%c190] : memref<288xf32, #tpu.memory_space<smem>>
    %1227 = vector.broadcast %1226 : f32 to vector<17x17xf32>
    %1228 = arith.mulf %1217, %1227 : vector<17x17xf32>
    %1229 = arith.addf %1211, %1228 : vector<17x17xf32>
    %c191 = arith.constant 191 : index
    %1230 = memref.load %arg5[%c191] : memref<288xf32, #tpu.memory_space<smem>>
    %1231 = vector.broadcast %1230 : f32 to vector<17x17xf32>
    %1232 = arith.mulf %1217, %1231 : vector<17x17xf32>
    %1233 = arith.addf %1215, %1232 : vector<17x17xf32>
    %c0_258 = arith.constant 0 : index
    %1234 = memref.load %arg6[%c0_258] : memref<4xf32, #tpu.memory_space<smem>>
    %1235 = vector.broadcast %1234 : f32 to vector<17x17xf32>
    %1236 = arith.addf %1221, %1235 : vector<17x17xf32>
    %cst_259 = arith.constant 0.000000e+00 : f32
    %1237 = vector.broadcast %cst_259 : f32 to vector<17x17xf32>
    %1238 = arith.maximumf %1236, %1237 : vector<17x17xf32>
    %cst_260 = arith.constant dense<0.000000e+00> : vector<17x32xf32>
    %1239 = tpu.matmul %1238, %10, %cst_260 {dimension_numbers = #tpu.dot_dimension_numbers<[1], [0], [0], [1], [0, 0, 1, 1], [], []>} : vector<17x17xf32>, vector<17x32xf32>, vector<17x32xf32> -> vector<17x32xf32>
    %c1_261 = arith.constant 1 : index
    %1240 = memref.load %arg6[%c1_261] : memref<4xf32, #tpu.memory_space<smem>>
    %1241 = vector.broadcast %1240 : f32 to vector<17x17xf32>
    %1242 = arith.addf %1225, %1241 : vector<17x17xf32>
    %cst_262 = arith.constant 0.000000e+00 : f32
    %1243 = vector.broadcast %cst_262 : f32 to vector<17x17xf32>
    %1244 = arith.maximumf %1242, %1243 : vector<17x17xf32>
    %cst_263 = arith.constant dense<0.000000e+00> : vector<17x32xf32>
    %1245 = tpu.matmul %1244, %10, %cst_263 {dimension_numbers = #tpu.dot_dimension_numbers<[1], [0], [0], [1], [0, 0, 1, 1], [], []>} : vector<17x17xf32>, vector<17x32xf32>, vector<17x32xf32> -> vector<17x32xf32>
    %c2_264 = arith.constant 2 : index
    %1246 = memref.load %arg6[%c2_264] : memref<4xf32, #tpu.memory_space<smem>>
    %1247 = vector.broadcast %1246 : f32 to vector<17x17xf32>
    %1248 = arith.addf %1229, %1247 : vector<17x17xf32>
    %cst_265 = arith.constant 0.000000e+00 : f32
    %1249 = vector.broadcast %cst_265 : f32 to vector<17x17xf32>
    %1250 = arith.maximumf %1248, %1249 : vector<17x17xf32>
    %cst_266 = arith.constant dense<0.000000e+00> : vector<17x32xf32>
    %1251 = tpu.matmul %1250, %10, %cst_266 {dimension_numbers = #tpu.dot_dimension_numbers<[1], [0], [0], [1], [0, 0, 1, 1], [], []>} : vector<17x17xf32>, vector<17x32xf32>, vector<17x32xf32> -> vector<17x32xf32>
    %c3_267 = arith.constant 3 : index
    %1252 = memref.load %arg6[%c3_267] : memref<4xf32, #tpu.memory_space<smem>>
    %1253 = vector.broadcast %1252 : f32 to vector<17x17xf32>
    %1254 = arith.addf %1233, %1253 : vector<17x17xf32>
    %cst_268 = arith.constant 0.000000e+00 : f32
    %1255 = vector.broadcast %cst_268 : f32 to vector<17x17xf32>
    %1256 = arith.maximumf %1254, %1255 : vector<17x17xf32>
    %cst_269 = arith.constant dense<0.000000e+00> : vector<17x32xf32>
    %1257 = tpu.matmul %1256, %10, %cst_269 {dimension_numbers = #tpu.dot_dimension_numbers<[1], [0], [0], [1], [0, 0, 1, 1], [], []>} : vector<17x17xf32>, vector<17x32xf32>, vector<17x32xf32> -> vector<17x32xf32>
    %cst_270 = arith.constant 0.000000e+00 : f32
    %1258 = vector.broadcast %cst_270 : f32 to vector<17x17xf32>
    %cst_271 = arith.constant 0.000000e+00 : f32
    %1259 = vector.broadcast %cst_271 : f32 to vector<17x17xf32>
    %cst_272 = arith.constant 0.000000e+00 : f32
    %1260 = vector.broadcast %cst_272 : f32 to vector<17x17xf32>
    %cst_273 = arith.constant 0.000000e+00 : f32
    %1261 = vector.broadcast %cst_273 : f32 to vector<17x17xf32>
    %c0_274 = arith.constant 0 : index
    %c1_275 = arith.constant 1 : index
    %c1_276 = arith.constant 1 : index
    %1262 = vector.load %arg8[%c0_274, %c1_275, %c1_276] : memref<8x18x18xf32, #tpu.memory_space<vmem>>, vector<1x17x17xf32>
    %1263 = vector.shape_cast %1262 : vector<1x17x17xf32> to vector<17x17xf32>
    %c128 = arith.constant 128 : index
    %1264 = memref.load %arg5[%c128] : memref<288xf32, #tpu.memory_space<smem>>
    %1265 = vector.broadcast %1264 : f32 to vector<17x17xf32>
    %1266 = arith.mulf %1263, %1265 : vector<17x17xf32>
    %1267 = arith.addf %1258, %1266 : vector<17x17xf32>
    %c129 = arith.constant 129 : index
    %1268 = memref.load %arg5[%c129] : memref<288xf32, #tpu.memory_space<smem>>
    %1269 = vector.broadcast %1268 : f32 to vector<17x17xf32>
    %1270 = arith.mulf %1263, %1269 : vector<17x17xf32>
    %1271 = arith.addf %1259, %1270 : vector<17x17xf32>
    %c130 = arith.constant 130 : index
    %1272 = memref.load %arg5[%c130] : memref<288xf32, #tpu.memory_space<smem>>
    %1273 = vector.broadcast %1272 : f32 to vector<17x17xf32>
    %1274 = arith.mulf %1263, %1273 : vector<17x17xf32>
    %1275 = arith.addf %1260, %1274 : vector<17x17xf32>
    %c131 = arith.constant 131 : index
    %1276 = memref.load %arg5[%c131] : memref<288xf32, #tpu.memory_space<smem>>
    %1277 = vector.broadcast %1276 : f32 to vector<17x17xf32>
    %1278 = arith.mulf %1263, %1277 : vector<17x17xf32>
    %1279 = arith.addf %1261, %1278 : vector<17x17xf32>
    %c1_277 = arith.constant 1 : index
    %c1_278 = arith.constant 1 : index
    %c1_279 = arith.constant 1 : index
    %1280 = vector.load %arg8[%c1_277, %c1_278, %c1_279] : memref<8x18x18xf32, #tpu.memory_space<vmem>>, vector<1x17x17xf32>
    %1281 = vector.shape_cast %1280 : vector<1x17x17xf32> to vector<17x17xf32>
    %c132 = arith.constant 132 : index
    %1282 = memref.load %arg5[%c132] : memref<288xf32, #tpu.memory_space<smem>>
    %1283 = vector.broadcast %1282 : f32 to vector<17x17xf32>
    %1284 = arith.mulf %1281, %1283 : vector<17x17xf32>
    %1285 = arith.addf %1267, %1284 : vector<17x17xf32>
    %c133 = arith.constant 133 : index
    %1286 = memref.load %arg5[%c133] : memref<288xf32, #tpu.memory_space<smem>>
    %1287 = vector.broadcast %1286 : f32 to vector<17x17xf32>
    %1288 = arith.mulf %1281, %1287 : vector<17x17xf32>
    %1289 = arith.addf %1271, %1288 : vector<17x17xf32>
    %c134 = arith.constant 134 : index
    %1290 = memref.load %arg5[%c134] : memref<288xf32, #tpu.memory_space<smem>>
    %1291 = vector.broadcast %1290 : f32 to vector<17x17xf32>
    %1292 = arith.mulf %1281, %1291 : vector<17x17xf32>
    %1293 = arith.addf %1275, %1292 : vector<17x17xf32>
    %c135 = arith.constant 135 : index
    %1294 = memref.load %arg5[%c135] : memref<288xf32, #tpu.memory_space<smem>>
    %1295 = vector.broadcast %1294 : f32 to vector<17x17xf32>
    %1296 = arith.mulf %1281, %1295 : vector<17x17xf32>
    %1297 = arith.addf %1279, %1296 : vector<17x17xf32>
    %c2_280 = arith.constant 2 : index
    %c1_281 = arith.constant 1 : index
    %c1_282 = arith.constant 1 : index
    %1298 = vector.load %arg8[%c2_280, %c1_281, %c1_282] : memref<8x18x18xf32, #tpu.memory_space<vmem>>, vector<1x17x17xf32>
    %1299 = vector.shape_cast %1298 : vector<1x17x17xf32> to vector<17x17xf32>
    %c136 = arith.constant 136 : index
    %1300 = memref.load %arg5[%c136] : memref<288xf32, #tpu.memory_space<smem>>
    %1301 = vector.broadcast %1300 : f32 to vector<17x17xf32>
    %1302 = arith.mulf %1299, %1301 : vector<17x17xf32>
    %1303 = arith.addf %1285, %1302 : vector<17x17xf32>
    %c137 = arith.constant 137 : index
    %1304 = memref.load %arg5[%c137] : memref<288xf32, #tpu.memory_space<smem>>
    %1305 = vector.broadcast %1304 : f32 to vector<17x17xf32>
    %1306 = arith.mulf %1299, %1305 : vector<17x17xf32>
    %1307 = arith.addf %1289, %1306 : vector<17x17xf32>
    %c138 = arith.constant 138 : index
    %1308 = memref.load %arg5[%c138] : memref<288xf32, #tpu.memory_space<smem>>
    %1309 = vector.broadcast %1308 : f32 to vector<17x17xf32>
    %1310 = arith.mulf %1299, %1309 : vector<17x17xf32>
    %1311 = arith.addf %1293, %1310 : vector<17x17xf32>
    %c139 = arith.constant 139 : index
    %1312 = memref.load %arg5[%c139] : memref<288xf32, #tpu.memory_space<smem>>
    %1313 = vector.broadcast %1312 : f32 to vector<17x17xf32>
    %1314 = arith.mulf %1299, %1313 : vector<17x17xf32>
    %1315 = arith.addf %1297, %1314 : vector<17x17xf32>
    %c3_283 = arith.constant 3 : index
    %c1_284 = arith.constant 1 : index
    %c1_285 = arith.constant 1 : index
    %1316 = vector.load %arg8[%c3_283, %c1_284, %c1_285] : memref<8x18x18xf32, #tpu.memory_space<vmem>>, vector<1x17x17xf32>
    %1317 = vector.shape_cast %1316 : vector<1x17x17xf32> to vector<17x17xf32>
    %c140 = arith.constant 140 : index
    %1318 = memref.load %arg5[%c140] : memref<288xf32, #tpu.memory_space<smem>>
    %1319 = vector.broadcast %1318 : f32 to vector<17x17xf32>
    %1320 = arith.mulf %1317, %1319 : vector<17x17xf32>
    %1321 = arith.addf %1303, %1320 : vector<17x17xf32>
    %c141 = arith.constant 141 : index
    %1322 = memref.load %arg5[%c141] : memref<288xf32, #tpu.memory_space<smem>>
    %1323 = vector.broadcast %1322 : f32 to vector<17x17xf32>
    %1324 = arith.mulf %1317, %1323 : vector<17x17xf32>
    %1325 = arith.addf %1307, %1324 : vector<17x17xf32>
    %c142 = arith.constant 142 : index
    %1326 = memref.load %arg5[%c142] : memref<288xf32, #tpu.memory_space<smem>>
    %1327 = vector.broadcast %1326 : f32 to vector<17x17xf32>
    %1328 = arith.mulf %1317, %1327 : vector<17x17xf32>
    %1329 = arith.addf %1311, %1328 : vector<17x17xf32>
    %c143 = arith.constant 143 : index
    %1330 = memref.load %arg5[%c143] : memref<288xf32, #tpu.memory_space<smem>>
    %1331 = vector.broadcast %1330 : f32 to vector<17x17xf32>
    %1332 = arith.mulf %1317, %1331 : vector<17x17xf32>
    %1333 = arith.addf %1315, %1332 : vector<17x17xf32>
    %c4_286 = arith.constant 4 : index
    %c1_287 = arith.constant 1 : index
    %c1_288 = arith.constant 1 : index
    %1334 = vector.load %arg8[%c4_286, %c1_287, %c1_288] : memref<8x18x18xf32, #tpu.memory_space<vmem>>, vector<1x17x17xf32>
    %1335 = vector.shape_cast %1334 : vector<1x17x17xf32> to vector<17x17xf32>
    %c144 = arith.constant 144 : index
    %1336 = memref.load %arg5[%c144] : memref<288xf32, #tpu.memory_space<smem>>
    %1337 = vector.broadcast %1336 : f32 to vector<17x17xf32>
    %1338 = arith.mulf %1335, %1337 : vector<17x17xf32>
    %1339 = arith.addf %1321, %1338 : vector<17x17xf32>
    %c145 = arith.constant 145 : index
    %1340 = memref.load %arg5[%c145] : memref<288xf32, #tpu.memory_space<smem>>
    %1341 = vector.broadcast %1340 : f32 to vector<17x17xf32>
    %1342 = arith.mulf %1335, %1341 : vector<17x17xf32>
    %1343 = arith.addf %1325, %1342 : vector<17x17xf32>
    %c146 = arith.constant 146 : index
    %1344 = memref.load %arg5[%c146] : memref<288xf32, #tpu.memory_space<smem>>
    %1345 = vector.broadcast %1344 : f32 to vector<17x17xf32>
    %1346 = arith.mulf %1335, %1345 : vector<17x17xf32>
    %1347 = arith.addf %1329, %1346 : vector<17x17xf32>
    %c147 = arith.constant 147 : index
    %1348 = memref.load %arg5[%c147] : memref<288xf32, #tpu.memory_space<smem>>
    %1349 = vector.broadcast %1348 : f32 to vector<17x17xf32>
    %1350 = arith.mulf %1335, %1349 : vector<17x17xf32>
    %1351 = arith.addf %1333, %1350 : vector<17x17xf32>
    %c5_289 = arith.constant 5 : index
    %c1_290 = arith.constant 1 : index
    %c1_291 = arith.constant 1 : index
    %1352 = vector.load %arg8[%c5_289, %c1_290, %c1_291] : memref<8x18x18xf32, #tpu.memory_space<vmem>>, vector<1x17x17xf32>
    %1353 = vector.shape_cast %1352 : vector<1x17x17xf32> to vector<17x17xf32>
    %c148 = arith.constant 148 : index
    %1354 = memref.load %arg5[%c148] : memref<288xf32, #tpu.memory_space<smem>>
    %1355 = vector.broadcast %1354 : f32 to vector<17x17xf32>
    %1356 = arith.mulf %1353, %1355 : vector<17x17xf32>
    %1357 = arith.addf %1339, %1356 : vector<17x17xf32>
    %c149 = arith.constant 149 : index
    %1358 = memref.load %arg5[%c149] : memref<288xf32, #tpu.memory_space<smem>>
    %1359 = vector.broadcast %1358 : f32 to vector<17x17xf32>
    %1360 = arith.mulf %1353, %1359 : vector<17x17xf32>
    %1361 = arith.addf %1343, %1360 : vector<17x17xf32>
    %c150 = arith.constant 150 : index
    %1362 = memref.load %arg5[%c150] : memref<288xf32, #tpu.memory_space<smem>>
    %1363 = vector.broadcast %1362 : f32 to vector<17x17xf32>
    %1364 = arith.mulf %1353, %1363 : vector<17x17xf32>
    %1365 = arith.addf %1347, %1364 : vector<17x17xf32>
    %c151 = arith.constant 151 : index
    %1366 = memref.load %arg5[%c151] : memref<288xf32, #tpu.memory_space<smem>>
    %1367 = vector.broadcast %1366 : f32 to vector<17x17xf32>
    %1368 = arith.mulf %1353, %1367 : vector<17x17xf32>
    %1369 = arith.addf %1351, %1368 : vector<17x17xf32>
    %c6_292 = arith.constant 6 : index
    %c1_293 = arith.constant 1 : index
    %c1_294 = arith.constant 1 : index
    %1370 = vector.load %arg8[%c6_292, %c1_293, %c1_294] : memref<8x18x18xf32, #tpu.memory_space<vmem>>, vector<1x17x17xf32>
    %1371 = vector.shape_cast %1370 : vector<1x17x17xf32> to vector<17x17xf32>
    %c152 = arith.constant 152 : index
    %1372 = memref.load %arg5[%c152] : memref<288xf32, #tpu.memory_space<smem>>
    %1373 = vector.broadcast %1372 : f32 to vector<17x17xf32>
    %1374 = arith.mulf %1371, %1373 : vector<17x17xf32>
    %1375 = arith.addf %1357, %1374 : vector<17x17xf32>
    %c153 = arith.constant 153 : index
    %1376 = memref.load %arg5[%c153] : memref<288xf32, #tpu.memory_space<smem>>
    %1377 = vector.broadcast %1376 : f32 to vector<17x17xf32>
    %1378 = arith.mulf %1371, %1377 : vector<17x17xf32>
    %1379 = arith.addf %1361, %1378 : vector<17x17xf32>
    %c154 = arith.constant 154 : index
    %1380 = memref.load %arg5[%c154] : memref<288xf32, #tpu.memory_space<smem>>
    %1381 = vector.broadcast %1380 : f32 to vector<17x17xf32>
    %1382 = arith.mulf %1371, %1381 : vector<17x17xf32>
    %1383 = arith.addf %1365, %1382 : vector<17x17xf32>
    %c155 = arith.constant 155 : index
    %1384 = memref.load %arg5[%c155] : memref<288xf32, #tpu.memory_space<smem>>
    %1385 = vector.broadcast %1384 : f32 to vector<17x17xf32>
    %1386 = arith.mulf %1371, %1385 : vector<17x17xf32>
    %1387 = arith.addf %1369, %1386 : vector<17x17xf32>
    %c7_295 = arith.constant 7 : index
    %c1_296 = arith.constant 1 : index
    %c1_297 = arith.constant 1 : index
    %1388 = vector.load %arg8[%c7_295, %c1_296, %c1_297] : memref<8x18x18xf32, #tpu.memory_space<vmem>>, vector<1x17x17xf32>
    %1389 = vector.shape_cast %1388 : vector<1x17x17xf32> to vector<17x17xf32>
    %c156 = arith.constant 156 : index
    %1390 = memref.load %arg5[%c156] : memref<288xf32, #tpu.memory_space<smem>>
    %1391 = vector.broadcast %1390 : f32 to vector<17x17xf32>
    %1392 = arith.mulf %1389, %1391 : vector<17x17xf32>
    %1393 = arith.addf %1375, %1392 : vector<17x17xf32>
    %c157 = arith.constant 157 : index
    %1394 = memref.load %arg5[%c157] : memref<288xf32, #tpu.memory_space<smem>>
    %1395 = vector.broadcast %1394 : f32 to vector<17x17xf32>
    %1396 = arith.mulf %1389, %1395 : vector<17x17xf32>
    %1397 = arith.addf %1379, %1396 : vector<17x17xf32>
    %c158 = arith.constant 158 : index
    %1398 = memref.load %arg5[%c158] : memref<288xf32, #tpu.memory_space<smem>>
    %1399 = vector.broadcast %1398 : f32 to vector<17x17xf32>
    %1400 = arith.mulf %1389, %1399 : vector<17x17xf32>
    %1401 = arith.addf %1383, %1400 : vector<17x17xf32>
    %c159 = arith.constant 159 : index
    %1402 = memref.load %arg5[%c159] : memref<288xf32, #tpu.memory_space<smem>>
    %1403 = vector.broadcast %1402 : f32 to vector<17x17xf32>
    %1404 = arith.mulf %1389, %1403 : vector<17x17xf32>
    %1405 = arith.addf %1387, %1404 : vector<17x17xf32>
    %c0_298 = arith.constant 0 : index
    %1406 = memref.load %arg6[%c0_298] : memref<4xf32, #tpu.memory_space<smem>>
    %1407 = vector.broadcast %1406 : f32 to vector<17x17xf32>
    %1408 = arith.addf %1393, %1407 : vector<17x17xf32>
    %cst_299 = arith.constant 0.000000e+00 : f32
    %1409 = vector.broadcast %cst_299 : f32 to vector<17x17xf32>
    %1410 = arith.maximumf %1408, %1409 : vector<17x17xf32>
    %cst_300 = arith.constant dense<0.000000e+00> : vector<17x32xf32>
    %1411 = tpu.matmul %1410, %12, %cst_300 {dimension_numbers = #tpu.dot_dimension_numbers<[1], [0], [0], [1], [0, 0, 1, 1], [], []>} : vector<17x17xf32>, vector<17x32xf32>, vector<17x32xf32> -> vector<17x32xf32>
    %1412 = arith.addf %1239, %1411 : vector<17x32xf32>
    %c1_301 = arith.constant 1 : index
    %1413 = memref.load %arg6[%c1_301] : memref<4xf32, #tpu.memory_space<smem>>
    %1414 = vector.broadcast %1413 : f32 to vector<17x17xf32>
    %1415 = arith.addf %1397, %1414 : vector<17x17xf32>
    %cst_302 = arith.constant 0.000000e+00 : f32
    %1416 = vector.broadcast %cst_302 : f32 to vector<17x17xf32>
    %1417 = arith.maximumf %1415, %1416 : vector<17x17xf32>
    %cst_303 = arith.constant dense<0.000000e+00> : vector<17x32xf32>
    %1418 = tpu.matmul %1417, %12, %cst_303 {dimension_numbers = #tpu.dot_dimension_numbers<[1], [0], [0], [1], [0, 0, 1, 1], [], []>} : vector<17x17xf32>, vector<17x32xf32>, vector<17x32xf32> -> vector<17x32xf32>
    %1419 = arith.addf %1245, %1418 : vector<17x32xf32>
    %c2_304 = arith.constant 2 : index
    %1420 = memref.load %arg6[%c2_304] : memref<4xf32, #tpu.memory_space<smem>>
    %1421 = vector.broadcast %1420 : f32 to vector<17x17xf32>
    %1422 = arith.addf %1401, %1421 : vector<17x17xf32>
    %cst_305 = arith.constant 0.000000e+00 : f32
    %1423 = vector.broadcast %cst_305 : f32 to vector<17x17xf32>
    %1424 = arith.maximumf %1422, %1423 : vector<17x17xf32>
    %cst_306 = arith.constant dense<0.000000e+00> : vector<17x32xf32>
    %1425 = tpu.matmul %1424, %12, %cst_306 {dimension_numbers = #tpu.dot_dimension_numbers<[1], [0], [0], [1], [0, 0, 1, 1], [], []>} : vector<17x17xf32>, vector<17x32xf32>, vector<17x32xf32> -> vector<17x32xf32>
    %1426 = arith.addf %1251, %1425 : vector<17x32xf32>
    %c3_307 = arith.constant 3 : index
    %1427 = memref.load %arg6[%c3_307] : memref<4xf32, #tpu.memory_space<smem>>
    %1428 = vector.broadcast %1427 : f32 to vector<17x17xf32>
    %1429 = arith.addf %1405, %1428 : vector<17x17xf32>
    %cst_308 = arith.constant 0.000000e+00 : f32
    %1430 = vector.broadcast %cst_308 : f32 to vector<17x17xf32>
    %1431 = arith.maximumf %1429, %1430 : vector<17x17xf32>
    %cst_309 = arith.constant dense<0.000000e+00> : vector<17x32xf32>
    %1432 = tpu.matmul %1431, %12, %cst_309 {dimension_numbers = #tpu.dot_dimension_numbers<[1], [0], [0], [1], [0, 0, 1, 1], [], []>} : vector<17x17xf32>, vector<17x32xf32>, vector<17x32xf32> -> vector<17x32xf32>
    %1433 = arith.addf %1257, %1432 : vector<17x32xf32>
    %cst_310 = arith.constant dense<0.000000e+00> : vector<32x32xf32>
    %1434 = tpu.matmul %6, %920, %cst_310 {dimension_numbers = #tpu.dot_dimension_numbers<[1], [0], [0], [1], [0, 0, 1, 1], [], []>} : vector<32x17xf32>, vector<17x32xf32>, vector<32x32xf32> -> vector<32x32xf32>
    %cst_311 = arith.constant dense<0.000000e+00> : vector<32x32xf32>
    %1435 = tpu.matmul %8, %1412, %cst_311 {dimension_numbers = #tpu.dot_dimension_numbers<[1], [0], [0], [1], [0, 0, 1, 1], [], []>} : vector<32x17xf32>, vector<17x32xf32>, vector<32x32xf32> -> vector<32x32xf32>
    %1436 = arith.addf %1434, %1435 : vector<32x32xf32>
    %c0_312 = arith.constant 0 : index
    %c6_313 = arith.constant 6 : index
    %c0_314 = arith.constant 0 : index
    %c0_315 = arith.constant 0 : index
    %1437 = vector.load %arg7[%c0_312, %c6_313, %c0_314, %c0_315] : memref<1x10x32x32xf32, #tpu.memory_space<vmem>>, vector<1x1x32x32xf32>
    %1438 = vector.shape_cast %1437 : vector<1x1x32x32xf32> to vector<32x32xf32>
    %1439 = vector.shape_cast %1436 : vector<32x32xf32> to vector<1x1x32x32xf32>
    tpu.vector_store %arg7[%c0_312, %c6_313, %c0_314, %c0_315], %1439 {strides = array<i32>} : memref<1x10x32x32xf32, #tpu.memory_space<vmem>>, vector<1x1x32x32xf32>,
    %cst_316 = arith.constant dense<0.000000e+00> : vector<32x32xf32>
    %1440 = tpu.matmul %6, %927, %cst_316 {dimension_numbers = #tpu.dot_dimension_numbers<[1], [0], [0], [1], [0, 0, 1, 1], [], []>} : vector<32x17xf32>, vector<17x32xf32>, vector<32x32xf32> -> vector<32x32xf32>
    %cst_317 = arith.constant dense<0.000000e+00> : vector<32x32xf32>
    %1441 = tpu.matmul %8, %1419, %cst_317 {dimension_numbers = #tpu.dot_dimension_numbers<[1], [0], [0], [1], [0, 0, 1, 1], [], []>} : vector<32x17xf32>, vector<17x32xf32>, vector<32x32xf32> -> vector<32x32xf32>
    %1442 = arith.addf %1440, %1441 : vector<32x32xf32>
    %c0_318 = arith.constant 0 : index
    %c7_319 = arith.constant 7 : index
    %c0_320 = arith.constant 0 : index
    %c0_321 = arith.constant 0 : index
    %1443 = vector.load %arg7[%c0_318, %c7_319, %c0_320, %c0_321] : memref<1x10x32x32xf32, #tpu.memory_space<vmem>>, vector<1x1x32x32xf32>
    %1444 = vector.shape_cast %1443 : vector<1x1x32x32xf32> to vector<32x32xf32>
    %1445 = vector.shape_cast %1442 : vector<32x32xf32> to vector<1x1x32x32xf32>
    tpu.vector_store %arg7[%c0_318, %c7_319, %c0_320, %c0_321], %1445 {strides = array<i32>} : memref<1x10x32x32xf32, #tpu.memory_space<vmem>>, vector<1x1x32x32xf32>,
    %cst_322 = arith.constant dense<0.000000e+00> : vector<32x32xf32>
    %1446 = tpu.matmul %6, %934, %cst_322 {dimension_numbers = #tpu.dot_dimension_numbers<[1], [0], [0], [1], [0, 0, 1, 1], [], []>} : vector<32x17xf32>, vector<17x32xf32>, vector<32x32xf32> -> vector<32x32xf32>
    %cst_323 = arith.constant dense<0.000000e+00> : vector<32x32xf32>
    %1447 = tpu.matmul %8, %1426, %cst_323 {dimension_numbers = #tpu.dot_dimension_numbers<[1], [0], [0], [1], [0, 0, 1, 1], [], []>} : vector<32x17xf32>, vector<17x32xf32>, vector<32x32xf32> -> vector<32x32xf32>
    %1448 = arith.addf %1446, %1447 : vector<32x32xf32>
    %c0_324 = arith.constant 0 : index
    %c8_325 = arith.constant 8 : index
    %c0_326 = arith.constant 0 : index
    %c0_327 = arith.constant 0 : index
    %1449 = vector.load %arg7[%c0_324, %c8_325, %c0_326, %c0_327] : memref<1x10x32x32xf32, #tpu.memory_space<vmem>>, vector<1x1x32x32xf32>
    %1450 = vector.shape_cast %1449 : vector<1x1x32x32xf32> to vector<32x32xf32>
    %1451 = vector.shape_cast %1448 : vector<32x32xf32> to vector<1x1x32x32xf32>
    tpu.vector_store %arg7[%c0_324, %c8_325, %c0_326, %c0_327], %1451 {strides = array<i32>} : memref<1x10x32x32xf32, #tpu.memory_space<vmem>>, vector<1x1x32x32xf32>,
    %cst_328 = arith.constant dense<0.000000e+00> : vector<32x32xf32>
    %1452 = tpu.matmul %6, %941, %cst_328 {dimension_numbers = #tpu.dot_dimension_numbers<[1], [0], [0], [1], [0, 0, 1, 1], [], []>} : vector<32x17xf32>, vector<17x32xf32>, vector<32x32xf32> -> vector<32x32xf32>
    %cst_329 = arith.constant dense<0.000000e+00> : vector<32x32xf32>
    %1453 = tpu.matmul %8, %1433, %cst_329 {dimension_numbers = #tpu.dot_dimension_numbers<[1], [0], [0], [1], [0, 0, 1, 1], [], []>} : vector<32x17xf32>, vector<17x32xf32>, vector<32x32xf32> -> vector<32x32xf32>
    %1454 = arith.addf %1452, %1453 : vector<32x32xf32>
    %c0_330 = arith.constant 0 : index
    %c9_331 = arith.constant 9 : index
    %c0_332 = arith.constant 0 : index
    %c0_333 = arith.constant 0 : index
    %1455 = vector.load %arg7[%c0_330, %c9_331, %c0_332, %c0_333] : memref<1x10x32x32xf32, #tpu.memory_space<vmem>>, vector<1x1x32x32xf32>
    %1456 = vector.shape_cast %1455 : vector<1x1x32x32xf32> to vector<32x32xf32>
    %1457 = vector.shape_cast %1454 : vector<32x32xf32> to vector<1x1x32x32xf32>
    tpu.vector_store %arg7[%c0_330, %c9_331, %c0_332, %c0_333], %1457 {strides = array<i32>} : memref<1x10x32x32xf32, #tpu.memory_space<vmem>>, vector<1x1x32x32xf32>,
    return
  }
  func.func @transform_0(%arg0: i32) -> (i32, i32, i32, i32) {
    %c0_i32 = arith.constant 0 : i32
    %c0_i32_0 = arith.constant 0 : i32
    %c0_i32_1 = arith.constant 0 : i32
    %c0_i32_2 = arith.constant 0 : i32
    return %arg0, %c0_i32, %c0_i32_0, %c0_i32_1 : i32, i32, i32, i32
  }
  func.func @transform_1(%arg0: i32) -> (i32, i32, i32, i32) {
    %c0_i32 = arith.constant 0 : i32
    %c0_i32_0 = arith.constant 0 : i32
    %c0_i32_1 = arith.constant 0 : i32
    %c0_i32_2 = arith.constant 0 : i32
    return %arg0, %c0_i32, %c0_i32_0, %c0_i32_1 : i32, i32, i32, i32
  }
  func.func @transform_2(%arg0: i32) -> (i32, i32, i32) {
    %c0_i32 = arith.constant 0 : i32
    %c0_i32_0 = arith.constant 0 : i32
    %c0_i32_1 = arith.constant 0 : i32
    %c0_i32_2 = arith.constant 0 : i32
    return %c0_i32, %c0_i32_0, %c0_i32_1 : i32, i32, i32
  }
  func.func @transform_3(%arg0: i32) -> (i32, i32, i32) {
    %c0_i32 = arith.constant 0 : i32
    %c0_i32_0 = arith.constant 0 : i32
    %c0_i32_1 = arith.constant 0 : i32
    %c0_i32_2 = arith.constant 0 : i32
    return %c0_i32, %c0_i32_0, %c0_i32_1 : i32, i32, i32
  }
  func.func @transform_4(%arg0: i32) -> i32 {
    %c0_i32 = arith.constant 0 : i32
    %c0_i32_0 = arith.constant 0 : i32
    return %c0_i32 : i32
  }
  func.func @transform_5(%arg0: i32) -> i32 {
    %c0_i32 = arith.constant 0 : i32
    %c0_i32_0 = arith.constant 0 : i32
    return %c0_i32 : i32
  }
  func.func @transform_6(%arg0: i32) -> (i32, i32, i32, i32) {
    %c0_i32 = arith.constant 0 : i32
    %c0_i32_0 = arith.constant 0 : i32
    %c0_i32_1 = arith.constant 0 : i32
    %c0_i32_2 = arith.constant 0 : i32
    return %arg0, %c0_i32, %c0_i32_0, %c0_i32_1 : i32, i32, i32, i32
  }
}

</mosaic_0001>

<llo_original>
// kernel: transition_up_forward.1
$region0: #{transition_up_forward.1}
  #allocation0 [shape = 'u32[]', space=smem, size = 0x4, offset = 0x4, fixed_abs, tag = 'smem constant byte address 0x4 - core index']
  #allocation1 [shape = 'u32[72,128]{1,0:T(1,128)}', space=vmem, size = 0x9000, scoped, tag = 'internal scratch']
  #allocation2 [shape = 'f32[8,18,18]{2,1,0:T(8,128)}', space=vmem, size = 0x18000, scoped, tag = 'scratch operand']
  %s0 = inlined_call_operand.hbm [shape: f32[2,8,16,16], index: 0, kind: input, shape index: {}]
  %s1 = inlined_call_operand.hbm [shape: f32[2,6,32,32], index: 1, kind: input, shape index: {}]
  %s2 = inlined_call_operand.vmem [shape: f32[2,32,17], index: 2, kind: input, shape index: {}]
  %s3 = inlined_call_operand.vmem [shape: f32[2,17,32], index: 3, kind: input, shape index: {}]
  %s4 = inlined_call_operand.vmem [shape: f32[288], index: 4, kind: input, shape index: {}]
  %s5 = inlined_call_operand.vmem [shape: f32[4], index: 5, kind: input, shape index: {}]
  %s6 = inlined_call_operand.hbm [shape: f32[2,10,32,32], index: 6, kind: output, shape index: {}]
  %s7 = sld [smem:[#allocation0]]
  $region73: #{transition_up_forward.1} parent=0
    _
  %s9 = ssub.s32 1, %s7
  %s10 = scalar_select 0, %s9, %s7
  $region1: #{transition_up_forward.1} parent=0
    #allocation3 [shape = 'u8[131072]{0}', space=vmem, size = 0x20000, scoped, tag = 'input window, operand 0']
    #allocation4 [shape = 's32[2]{0}', space=sflag, size = 0x8, scoped, tag = 'scoped memory for transition_up_forward.1']
    #allocation5 [shape = 's32[2]{0}', space=sflag, size = 0x8, scoped, tag = 'scoped memory for transition_up_forward.1']
    #allocation6 [shape = 's32[2]{0}', space=sflag, size = 0x8, scoped, tag = 'scoped memory for transition_up_forward.1']
    #allocation7 [shape = 'u8[196608]{0}', space=vmem, size = 0x30000, scoped, tag = 'input window, operand 1']
    #allocation8 [shape = 's32[2]{0}', space=sflag, size = 0x8, scoped, tag = 'scoped memory for transition_up_forward.1']
    #allocation9 [shape = 'u8[1536]{0}', space=smem, size = 0x600, scoped, tag = 'input window, operand 4, single buffered']
    #allocation10 [shape = 'u8[512]{0}', space=smem, size = 0x200, scoped, tag = 'input window, operand 5, single buffered']
    #allocation11 [shape = 's32[1]{0}', space=sflag, size = 0x4, scoped, tag = 'scoped memory for transition_up_forward.1']
    #allocation12 [shape = 'u8[327680]{0}', space=vmem, size = 0x50000, scoped, tag = 'output window, operand 0']
    %11 = vsyncpa [#allocation4], 0
    %s12 = scalar_lea.sflag [#allocation4], 1
    %13 = vsyncpa %s12, 0
    %14 = vsyncpa [#allocation8], 0
    %s15 = scalar_lea.sflag [#allocation8], 1
    %16 = vsyncpa %s15, 0
    %17 = vsyncpa [#allocation6], 0
    %18 = vsyncpa [#allocation11], 0
    %19 = vsyncpa [#allocation5], 0
    %s20 = scalar_lea.sflag [#allocation5], 1
    %21 = vsyncpa %s20, 0
    loop: start=0, step=1, limit=4
    $region2: #{transition_up_forward.1} parent=1 // loop_pre_header
      _
    $region3: #{transition_up_forward.1} parent=1 // loop_header
      %s23 = sphi 0, %s27
      %p24 = scmp.ge.s32.totalorder %s23, 4
      %s33 = sphi 0, %s35
      %s36 = sphi 0, %s33
      %s37 = sphi 0, %s36
      %s53 = sphi 0, %s37
      %s59 = sphi 0, %s61
      %s62 = sphi 0, %s59
      %s63 = sphi 0, %s62
      %s79 = sphi 0, %s63
      %s83 = sphi 0, %s83
      %s85 = sphi 0, %s83
      %s86 = sphi 0, %s85
      %s100 = sphi 0, %s86
      %s104 = sphi 0, %s104
      %s106 = sphi 0, %s104
      %s107 = sphi 0, %s106
      %s121 = sphi 0, %s107
      %s125 = sphi 0, %s125
      %s127 = sphi 0, %s125
      %s128 = sphi 0, %s127
      %s142 = sphi 0, %s128
      %s146 = sphi 0, %s146
      %s148 = sphi 0, %s146
      %s149 = sphi 0, %s148
      %s163 = sphi 0, %s149
      %s169 = sphi 0, %s171
      %s172 = sphi 0, %s169
      %s173 = sphi 0, %s172
      %s189 = sphi 0, %s173
    $region4: #{transition_up_forward.1} parent=1 // loop_header_branch
      %26 = sbr.rel (%p24) target = $region8
    $region5: #{transition_up_forward.1} parent=1 // loop_body
      %s28 = ssub.s32 %s23, 1
      %s29 = ssub.s32 %s23, 2
      %s30 = sadd.s32 %s23, 1
      %s31 = ssub.s32 %s23, %s30
      %p32 = scmp.eq.s32.totalorder %s31, 0
      %s34 = sadd.s32 %s33, 1
      %s35 = scalar_select %p32, %s33, %s34
      %p38 = pneg %p32
      %p39 = scmp.eq.s32.totalorder %s23, 1
      %p40 = por %p38, %p39
      %p41 = scmp.ne.s32.totalorder %s33, %s36
      %p42 = scmp.eq.s32.totalorder %s23, 0
      %p43 = por %p41, %p42
      %p44 = scmp.ne.s32.totalorder %s33, %s36
      %p45 = scmp.eq.s32.totalorder %s28, 1
      %p46 = por %p44, %p45
      %p47 = scmp.ne.s32.totalorder %s36, %s37
      %p48 = scmp.eq.s32.totalorder %s28, 0
      %p49 = por %p47, %p48
      %p50 = scmp.ne.s32.totalorder %s36, %s37
      %p51 = scmp.eq.s32.totalorder %s29, 1
      %p52 = por %p50, %p51
      %p54 = scmp.ne.s32.totalorder %s37, %s53
      %p55 = scmp.eq.s32.totalorder %s29, 0
      %p56 = por %p54, %p55
      %s57 = ssub.s32 %s23, %s30
      %p58 = scmp.eq.s32.totalorder %s57, 0
      %s60 = sadd.s32 %s59, 1
      %s61 = scalar_select %p58, %s59, %s60
      %p64 = pneg %p58
      %p65 = scmp.eq.s32.totalorder %s23, 1
      %p66 = por %p64, %p65
      %p67 = scmp.ne.s32.totalorder %s59, %s62
      %p68 = scmp.eq.s32.totalorder %s23, 0
      %p69 = por %p67, %p68
      %p70 = scmp.ne.s32.totalorder %s59, %s62
      %p71 = scmp.eq.s32.totalorder %s28, 1
      %p72 = por %p70, %p71
      %p73 = scmp.ne.s32.totalorder %s62, %s63
      %p74 = scmp.eq.s32.totalorder %s28, 0
      %p75 = por %p73, %p74
      %p76 = scmp.ne.s32.totalorder %s62, %s63
      %p77 = scmp.eq.s32.totalorder %s29, 1
      %p78 = por %p76, %p77
      %p80 = scmp.ne.s32.totalorder %s63, %s79
      %p81 = scmp.eq.s32.totalorder %s29, 0
      %p82 = por %p80, %p81
      %s84 = sadd.s32 %s83, 1
      %p87 = scmp.eq.s32.totalorder %s23, 1
      %p88 = scmp.ne.s32.totalorder %s83, %s85
      %p89 = scmp.eq.s32.totalorder %s23, 0
      %p90 = por %p88, %p89
      %p91 = scmp.ne.s32.totalorder %s83, %s85
      %p92 = scmp.eq.s32.totalorder %s28, 1
      %p93 = por %p91, %p92
      %p94 = scmp.ne.s32.totalorder %s85, %s86
      %p95 = scmp.eq.s32.totalorder %s28, 0
      %p96 = por %p94, %p95
      %p97 = scmp.ne.s32.totalorder %s85, %s86
      %p98 = scmp.eq.s32.totalorder %s29, 1
      %p99 = por %p97, %p98
      %p101 = scmp.ne.s32.totalorder %s86, %s100
      %p102 = scmp.eq.s32.totalorder %s29, 0
      %p103 = por %p101, %p102
      %s105 = sadd.s32 %s104, 1
      %p108 = scmp.eq.s32.totalorder %s23, 1
      %p109 = scmp.ne.s32.totalorder %s104, %s106
      %p110 = scmp.eq.s32.totalorder %s23, 0
      %p111 = por %p109, %p110
      %p112 = scmp.ne.s32.totalorder %s104, %s106
      %p113 = scmp.eq.s32.totalorder %s28, 1
      %p114 = por %p112, %p113
      %p115 = scmp.ne.s32.totalorder %s106, %s107
      %p116 = scmp.eq.s32.totalorder %s28, 0
      %p117 = por %p115, %p116
      %p118 = scmp.ne.s32.totalorder %s106, %s107
      %p119 = scmp.eq.s32.totalorder %s29, 1
      %p120 = por %p118, %p119
      %p122 = scmp.ne.s32.totalorder %s107, %s121
      %p123 = scmp.eq.s32.totalorder %s29, 0
      %p124 = por %p122, %p123
      %s126 = sadd.s32 %s125, 1
      %p129 = scmp.eq.s32.totalorder %s23, 1
      %p130 = scmp.ne.s32.totalorder %s125, %s127
      %p131 = scmp.eq.s32.totalorder %s23, 0
      %p132 = por %p130, %p131
      %p133 = scmp.ne.s32.totalorder %s125, %s127
      %p134 = scmp.eq.s32.totalorder %s28, 1
      %p135 = por %p133, %p134
      %p136 = scmp.ne.s32.totalorder %s127, %s128
      %p137 = scmp.eq.s32.totalorder %s28, 0
      %p138 = por %p136, %p137
      %p139 = scmp.ne.s32.totalorder %s127, %s128
      %p140 = scmp.eq.s32.totalorder %s29, 1
      %p141 = por %p139, %p140
      %p143 = scmp.ne.s32.totalorder %s128, %s142
      %p144 = scmp.eq.s32.totalorder %s29, 0
      %p145 = por %p143, %p144
      %s147 = sadd.s32 %s146, 1
      %p150 = scmp.eq.s32.totalorder %s23, 1
      %p151 = scmp.ne.s32.totalorder %s146, %s148
      %p152 = scmp.eq.s32.totalorder %s23, 0
      %p153 = por %p151, %p152
      %p154 = scmp.ne.s32.totalorder %s146, %s148
      %p155 = scmp.eq.s32.totalorder %s28, 1
      %p156 = por %p154, %p155
      %p157 = scmp.ne.s32.totalorder %s148, %s149
      %p158 = scmp.eq.s32.totalorder %s28, 0
      %p159 = por %p157, %p158
      %p160 = scmp.ne.s32.totalorder %s148, %s149
      %p161 = scmp.eq.s32.totalorder %s29, 1
      %p162 = por %p160, %p161
      %p164 = scmp.ne.s32.totalorder %s149, %s163
      %p165 = scmp.eq.s32.totalorder %s29, 0
      %p166 = por %p164, %p165
      %s167 = ssub.s32 %s23, %s30
      %p168 = scmp.eq.s32.totalorder %s167, 0
      %s170 = sadd.s32 %s169, 1
      %s171 = scalar_select %p168, %s169, %s170
      %p174 = pneg %p168
      %p175 = scmp.eq.s32.totalorder %s23, 1
      %p176 = por %p174, %p175
      %p177 = scmp.ne.s32.totalorder %s169, %s172
      %p178 = scmp.eq.s32.totalorder %s23, 0
      %p179 = por %p177, %p178
      %p180 = scmp.ne.s32.totalorder %s169, %s172
      %p181 = scmp.eq.s32.totalorder %s28, 1
      %p182 = por %p180, %p181
      %p183 = scmp.ne.s32.totalorder %s172, %s173
      %p184 = scmp.eq.s32.totalorder %s28, 0
      %p185 = por %p183, %p184
      %p186 = scmp.ne.s32.totalorder %s172, %s173
      %p187 = scmp.eq.s32.totalorder %s29, 1
      %p188 = por %p186, %p187
      %p190 = scmp.ne.s32.totalorder %s173, %s189
      %p191 = scmp.eq.s32.totalorder %s29, 0
      %p192 = por %p190, %p191
      %p193 = scmp.le.s32.totalorder 1, %s23
      %p194 = scmp.lt.s32.totalorder %s23, 3
      %p195 = pnand %p193, %p194
      %p196 = pneg %p195
      // Predicated region
      $region9: #{transition_up_forward.1} parent=5 // pred_check
        _
      $region10: #{transition_up_forward.1} parent=5 // pred_check_branch
        %198 = sbr.rel (%p195) target = $region12
      $region11: #{transition_up_forward.1} parent=5 // pred_region
        %s199 = ssub.s32 %s23, 1
        // Predicated region
        $region13: #{transition_up_forward.1} parent=11 // pred_check
          %p200 = pneg %p96
        $region14: #{transition_up_forward.1} parent=11 // pred_check_branch
          %202 = sbr.rel (%p200) target = $region16
        $region15: #{transition_up_forward.1} parent=11 // pred_region
          _
        $region16: #{transition_up_forward.1} parent=11 // pred_fallthru
          _
        // Predicated region
        $region17: #{transition_up_forward.1} parent=11 // pred_check
          %p203 = pneg %p117
        $region18: #{transition_up_forward.1} parent=11 // pred_check_branch
          %205 = sbr.rel (%p203) target = $region20
        $region19: #{transition_up_forward.1} parent=11 // pred_region
          _
        $region20: #{transition_up_forward.1} parent=11 // pred_fallthru
          _
        // Predicated region
        $region21: #{transition_up_forward.1} parent=11 // pred_check
          %p206 = pneg %p138
        $region22: #{transition_up_forward.1} parent=11 // pred_check_branch
          %208 = sbr.rel (%p206) target = $region24
        $region23: #{transition_up_forward.1} parent=11 // pred_region
          %210 = vsyncadd [#allocation6], 0
          %s212 = sshll.u32 %s4, 4
          %s213 = int_to_ptr.vmem [resolvable:$true] %s212
          %215 = dma.vmem_to_smem %s213, 48, [#allocation9], [#allocation6]
        $region24: #{transition_up_forward.1} parent=11 // pred_fallthru
          _
        // Predicated region
        $region25: #{transition_up_forward.1} parent=11 // pred_check
          %p216 = pneg %p159
        $region26: #{transition_up_forward.1} parent=11 // pred_check_branch
          %218 = sbr.rel (%p216) target = $region28
        $region27: #{transition_up_forward.1} parent=11 // pred_region
          %220 = vsyncadd [#allocation11], 0
          %s222 = sshll.u32 %s5, 4
          %s223 = int_to_ptr.vmem [resolvable:$true] %s222
          %225 = dma.vmem_to_smem %s223, 16, [#allocation10], [#allocation11]
        $region28: #{transition_up_forward.1} parent=11 // pred_fallthru
          _
      $region12: #{transition_up_forward.1} parent=5 // pred_fallthru
        _
      %p226 = scmp.lt.s32.totalorder %s23, 2
      // Predicated region
      $region29: #{transition_up_forward.1} parent=5 // pred_check
        %p227 = pneg %p226
      $region30: #{transition_up_forward.1} parent=5 // pred_check_branch
        %229 = sbr.rel (%p227) target = $region32
      $region31: #{transition_up_forward.1} parent=5 // pred_region
        // Predicated region
        $region33: #{transition_up_forward.1} parent=31 // pred_check
          %p230 = pneg %p43
        $region34: #{transition_up_forward.1} parent=31 // pred_check_branch
          %232 = sbr.rel (%p230) target = $region36
        $region35: #{transition_up_forward.1} parent=31 // pred_region
          %s233 = sand.u32 %s33, 1
          %s234 = scalar_lea.sflag [#allocation4], %s233
          %s235 = sand.u32 %s33, 1
          %s236 = smul.addr %s235, 128
          %s237 = scalar_lea.vmem [#allocation3], %s236
          %239 = vsyncadd %s234, 0
          %s240 = smul.addr %s23, 16
          %s241 = smul.addr %s240, 8
          %s242 = scalar_lea.hbm %s0, %s241
          %s243 = sshll.u32 %s242, 4
          %s244 = int_to_ptr.hbm [resolvable:$true] %s243
          %s245 = sshll.u32 %s237, 4
          %s246 = int_to_ptr.vmem [resolvable:$true] %s245
          %251 = dma.hbm_to_vmem [thread:$0]  %s244, 2048, %s246, %s234, 128, 128, 8
        $region36: #{transition_up_forward.1} parent=31 // pred_fallthru
          _
        // Predicated region
        $region37: #{transition_up_forward.1} parent=31 // pred_check
          %p252 = pneg %p69
        $region38: #{transition_up_forward.1} parent=31 // pred_check_branch
          %254 = sbr.rel (%p252) target = $region40
        $region39: #{transition_up_forward.1} parent=31 // pred_region
          %s255 = sand.u32 %s59, 1
          %s256 = scalar_lea.sflag [#allocation8], %s255
          %s257 = sand.u32 %s59, 1
          %s258 = smul.addr %s257, 192
          %s259 = scalar_lea.vmem [#allocation7], %s258
          %261 = vsyncadd %s256, 0
          %s262 = smul.addr %s23, 24
          %s263 = smul.addr %s262, 8
          %s264 = scalar_lea.hbm %s1, %s263
          %s265 = sshll.u32 %s264, 4
          %s266 = int_to_ptr.hbm [resolvable:$true] %s265
          %s267 = sshll.u32 %s259, 4
          %s268 = int_to_ptr.vmem [resolvable:$true] %s267
          %273 = dma.hbm_to_vmem [thread:$0]  %s266, 3072, %s268, %s256, 128, 128, 8
        $region40: #{transition_up_forward.1} parent=31 // pred_fallthru
          _
      $region32: #{transition_up_forward.1} parent=5 // pred_fallthru
        _
      %p274 = scmp.le.s32.totalorder 1, %s23
      %p275 = scmp.lt.s32.totalorder %s23, 3
      %p276 = pnand %p274, %p275
      %p277 = pneg %p276
      // Predicated region
      $region41: #{transition_up_forward.1} parent=5 // pred_check
        _
      $region42: #{transition_up_forward.1} parent=5 // pred_check_branch
        %279 = sbr.rel (%p276) target = $region44
      $region43: #{transition_up_forward.1} parent=5 // pred_region
        %s280 = ssub.s32 %s23, 1
        %s281 = sand.u32 %s36, 1
        %s282 = scalar_lea.sflag [#allocation4], %s281
        %s283 = sand.u32 %s36, 1
        %s284 = smul.addr %s283, 128
        %s285 = scalar_lea.vmem [#allocation3], %s284
        // Predicated region
        $region45: #{transition_up_forward.1} parent=43 // pred_check
          %p286 = pneg %p49
        $region46: #{transition_up_forward.1} parent=43 // pred_check_branch
          %288 = sbr.rel (%p286) target = $region48
        $region47: #{transition_up_forward.1} parent=43 // pred_region
          %290 = dma.done %s282, 2048
        $region48: #{transition_up_forward.1} parent=43 // pred_fallthru
          _
        %s291 = sand.u32 %s62, 1
        %s292 = scalar_lea.sflag [#allocation8], %s291
        %s293 = sand.u32 %s62, 1
        %s294 = smul.addr %s293, 192
        %s295 = scalar_lea.vmem [#allocation7], %s294
        // Predicated region
        $region49: #{transition_up_forward.1} parent=43 // pred_check
          %p296 = pneg %p75
        $region50: #{transition_up_forward.1} parent=43 // pred_check_branch
          %298 = sbr.rel (%p296) target = $region52
        $region51: #{transition_up_forward.1} parent=43 // pred_region
          %300 = dma.done %s292, 3072
        $region52: #{transition_up_forward.1} parent=43 // pred_fallthru
          _
        // Predicated region
        $region53: #{transition_up_forward.1} parent=43 // pred_check
          %p301 = pneg %p138
        $region54: #{transition_up_forward.1} parent=43 // pred_check_branch
          %303 = sbr.rel (%p301) target = $region56
        $region55: #{transition_up_forward.1} parent=43 // pred_region
          %305 = dma.done [#allocation6], 48
        $region56: #{transition_up_forward.1} parent=43 // pred_fallthru
          _
        // Predicated region
        $region57: #{transition_up_forward.1} parent=43 // pred_check
          %p306 = pneg %p159
        $region58: #{transition_up_forward.1} parent=43 // pred_check_branch
          %308 = sbr.rel (%p306) target = $region60
        $region59: #{transition_up_forward.1} parent=43 // pred_region
          %310 = dma.done [#allocation11], 16
        $region60: #{transition_up_forward.1} parent=43 // pred_fallthru
          _
        %311 = sfence
        %s312 = sand.u32 %s36, 1
        %s313 = scalar_lea.sflag [#allocation4], %s312
        %s314 = sand.u32 %s36, 1
        %s315 = smul.addr %s314, 128
        %s316 = scalar_lea.vmem [#allocation3], %s315
        %p317 = pneg %p49
        %p318 = pneg %p46
        %s319 = sand.u32 %s62, 1
        %s320 = scalar_lea.sflag [#allocation8], %s319
        %s321 = sand.u32 %s62, 1
        %s322 = smul.addr %s321, 192
        %s323 = scalar_lea.vmem [#allocation7], %s322
        %p324 = pneg %p75
        %p325 = pneg %p72
        %p326 = pneg %p96
        %p327 = pneg %p93
        %p328 = pneg %p117
        %p329 = pneg %p114
        %p330 = pneg %p138
        %p331 = pneg %p135
        %p332 = pneg %p159
        %p333 = pneg %p156
        %p334 = pneg %p185
        %p335 = pneg %p182
        %s336 = sand.u32 %s172, 1
        %s337 = scalar_lea.sflag [#allocation5], %s336
        %s338 = sand.u32 %s172, 1
        %s339 = smul.addr %s338, 320
        %s340 = scalar_lea.vmem [#allocation12], %s339
        %vm341 = vcmask 146432
        %342 = vst.msk [vmem:[#allocation2] sm:$0xff] %vm341, 0.0
        %343 = vst.msk [vmem:[#allocation2 + $0x8] sm:$0xff] %vm341, 0.0
        %vm344 = vcmask 140288
        %345 = vst.msk [vmem:[#allocation2 + $0x10] sm:$0x3] %vm344, 0.0
        %346 = vst.msk [vmem:[#allocation2 + $0x18] sm:$0xff] %vm341, 0.0
        %347 = vst.msk [vmem:[#allocation2 + $0x20] sm:$0xff] %vm341, 0.0
        %348 = vst.msk [vmem:[#allocation2 + $0x28] sm:$0x3] %vm344, 0.0
        %349 = vst.msk [vmem:[#allocation2 + $0x30] sm:$0xff] %vm341, 0.0
        %350 = vst.msk [vmem:[#allocation2 + $0x38] sm:$0xff] %vm341, 0.0
        %351 = vst.msk [vmem:[#allocation2 + $0x40] sm:$0x3] %vm344, 0.0
        %352 = vst.msk [vmem:[#allocation2 + $0x48] sm:$0xff] %vm341, 0.0
        %353 = vst.msk [vmem:[#allocation2 + $0x50] sm:$0xff] %vm341, 0.0
        %354 = vst.msk [vmem:[#allocation2 + $0x58] sm:$0x3] %vm344, 0.0
        %355 = vst.msk [vmem:[#allocation2 + $0x60] sm:$0xff] %vm341, 0.0
        %356 = vst.msk [vmem:[#allocation2 + $0x68] sm:$0xff] %vm341, 0.0
        %357 = vst.msk [vmem:[#allocation2 + $0x70] sm:$0x3] %vm344, 0.0
        %358 = vst.msk [vmem:[#allocation2 + $0x78] sm:$0xff] %vm341, 0.0
        %359 = vst.msk [vmem:[#allocation2 + $0x80] sm:$0xff] %vm341, 0.0
        %360 = vst.msk [vmem:[#allocation2 + $0x88] sm:$0x3] %vm344, 0.0
        %361 = vst.msk [vmem:[#allocation2 + $0x90] sm:$0xff] %vm341, 0.0
        %362 = vst.msk [vmem:[#allocation2 + $0x98] sm:$0xff] %vm341, 0.0
        %363 = vst.msk [vmem:[#allocation2 + $0xa0] sm:$0x3] %vm344, 0.0
        %364 = vst.msk [vmem:[#allocation2 + $0xa8] sm:$0xff] %vm341, 0.0
        %365 = vst.msk [vmem:[#allocation2 + $0xb0] sm:$0xff] %vm341, 0.0
        %366 = vst.msk [vmem:[#allocation2 + $0xb8] sm:$0x3] %vm344, 0.0
        %v367 = vld [vmem:[%s285] sm:$0xff]
        %v368 = vld [vmem:[%s285 + $0x8] sm:$0xff]
        %v369 = vld [vmem:[%s285 + $0x10] sm:$0xff]
        %v370 = vld [vmem:[%s285 + $0x18] sm:$0xff]
        %v371 = vld [vmem:[%s285 + $0x20] sm:$0xff]
        %v372 = vld [vmem:[%s285 + $0x28] sm:$0xff]
        %v373 = vld [vmem:[%s285 + $0x30] sm:$0xff]
        %v374 = vld [vmem:[%s285 + $0x38] sm:$0xff]
        %v375 = vld [vmem:[%s285 + $0x40] sm:$0xff]
        %v376 = vld [vmem:[%s285 + $0x48] sm:$0xff]
        %v377 = vld [vmem:[%s285 + $0x50] sm:$0xff]
        %v378 = vld [vmem:[%s285 + $0x58] sm:$0xff]
        %v379 = vld [vmem:[%s285 + $0x60] sm:$0xff]
        %v380 = vld [vmem:[%s285 + $0x68] sm:$0xff]
        %v381 = vld [vmem:[%s285 + $0x70] sm:$0xff]
        %v382 = vld [vmem:[%s285 + $0x78] sm:$0xff]
        %399 = vrot.lane.b32.xlu0 %v367, 1
        %v400 = vpop.permute.xlu0 %399
        %401 = vrot.lane.b32.xlu0 %v368, 1
        %v402 = vpop.permute.xlu0 %401
        %403 = vrot.lane.b32.xlu0 %v369, 1
        %v404 = vpop.permute.xlu0 %403
        %405 = vrot.lane.b32.xlu0 %v370, 1
        %v406 = vpop.permute.xlu0 %405
        %407 = vrot.lane.b32.xlu0 %v371, 1
        %v408 = vpop.permute.xlu0 %407
        %409 = vrot.lane.b32.xlu0 %v372, 1
        %v410 = vpop.permute.xlu0 %409
        %411 = vrot.lane.b32.xlu0 %v373, 1
        %v412 = vpop.permute.xlu0 %411
        %413 = vrot.lane.b32.xlu0 %v374, 1
        %v414 = vpop.permute.xlu0 %413
        %415 = vrot.lane.b32.xlu0 %v375, 1
        %v416 = vpop.permute.xlu0 %415
        %417 = vrot.lane.b32.xlu0 %v376, 1
        %v418 = vpop.permute.xlu0 %417
        %419 = vrot.lane.b32.xlu0 %v377, 1
        %v420 = vpop.permute.xlu0 %419
        %421 = vrot.lane.b32.xlu0 %v378, 1
        %v422 = vpop.permute.xlu0 %421
        %423 = vrot.lane.b32.xlu0 %v379, 1
        %v424 = vpop.permute.xlu0 %423
        %425 = vrot.lane.b32.xlu0 %v380, 1
        %v426 = vpop.permute.xlu0 %425
        %427 = vrot.lane.b32.xlu0 %v381, 1
        %v428 = vpop.permute.xlu0 %427
        %429 = vrot.lane.b32.xlu0 %v382, 1
        %v430 = vpop.permute.xlu0 %429
        %vm447 = vcmask 138248
        %448 = vst.msk [vmem:[#allocation2 + $0x1] sm:$0xff] %vm447, %v400
        %449 = vst.msk [vmem:[#allocation2 + $0x9] sm:$0xff] %vm447, %v402
        %450 = vst.msk [vmem:[#allocation2 + $0x19] sm:$0xff] %vm447, %v404
        %451 = vst.msk [vmem:[#allocation2 + $0x21] sm:$0xff] %vm447, %v406
        %452 = vst.msk [vmem:[#allocation2 + $0x31] sm:$0xff] %vm447, %v408
        %453 = vst.msk [vmem:[#allocation2 + $0x39] sm:$0xff] %vm447, %v410
        %454 = vst.msk [vmem:[#allocation2 + $0x49] sm:$0xff] %vm447, %v412
        %455 = vst.msk [vmem:[#allocation2 + $0x51] sm:$0xff] %vm447, %v414
        %456 = vst.msk [vmem:[#allocation2 + $0x61] sm:$0xff] %vm447, %v416
        %457 = vst.msk [vmem:[#allocation2 + $0x69] sm:$0xff] %vm447, %v418
        %458 = vst.msk [vmem:[#allocation2 + $0x79] sm:$0xff] %vm447, %v420
        %459 = vst.msk [vmem:[#allocation2 + $0x81] sm:$0xff] %vm447, %v422
        %460 = vst.msk [vmem:[#allocation2 + $0x91] sm:$0xff] %vm447, %v424
        %461 = vst.msk [vmem:[#allocation2 + $0x99] sm:$0xff] %vm447, %v426
        %462 = vst.msk [vmem:[#allocation2 + $0xa9] sm:$0xff] %vm447, %v428
        %463 = vst.msk [vmem:[#allocation2 + $0xb1] sm:$0xff] %vm447, %v430
        %v464 = vld [vmem:[%s2] sm:$0xff]
        %v465 = vld [vmem:[%s2 + $0x8] sm:$0xff]
        %v466 = vld [vmem:[%s2 + $0x10] sm:$0xff]
        %v467 = vld [vmem:[%s2 + $0x18] sm:$0xff]
        %s468 = scalar_lea.vmem %s2, 32
        %v469 = vld [vmem:[%s468] sm:$0xff]
        %v470 = vld [vmem:[%s468 + $0x8] sm:$0xff]
        %v471 = vld [vmem:[%s468 + $0x10] sm:$0xff]
        %v472 = vld [vmem:[%s468 + $0x18] sm:$0xff]
        %v473 = vld [vmem:[%s3] sm:$0xff]
        %v474 = vld [vmem:[%s3 + $0x8] sm:$0xff]
        %v475 = vld [vmem:[%s3 + $0x10] sm:$0x1]
        %s476 = scalar_lea.vmem %s3, 24
        %v477 = vld [vmem:[%s476] sm:$0xff]
        %v478 = vld [vmem:[%s476 + $0x8] sm:$0xff]
        %v479 = vld [vmem:[%s476 + $0x10] sm:$0x1]
        %v480 = vld [vmem:[%s295] sm:$0xff]
        %v481 = vld [vmem:[%s295 + $0x8] sm:$0xff]
        %v482 = vld [vmem:[%s295 + $0x10] sm:$0xff]
        %v483 = vld [vmem:[%s295 + $0x18] sm:$0xff]
        %v484 = vld [vmem:[%s295 + $0x20] sm:$0xff]
        %v485 = vld [vmem:[%s295 + $0x28] sm:$0xff]
        %v486 = vld [vmem:[%s295 + $0x30] sm:$0xff]
        %v487 = vld [vmem:[%s295 + $0x38] sm:$0xff]
        %v488 = vld [vmem:[%s295 + $0x40] sm:$0xff]
        %v489 = vld [vmem:[%s295 + $0x48] sm:$0xff]
        %v490 = vld [vmem:[%s295 + $0x50] sm:$0xff]
        %v491 = vld [vmem:[%s295 + $0x58] sm:$0xff]
        %v492 = vld [vmem:[%s295 + $0x60] sm:$0xff]
        %v493 = vld [vmem:[%s295 + $0x68] sm:$0xff]
        %v494 = vld [vmem:[%s295 + $0x70] sm:$0xff]
        %v495 = vld [vmem:[%s295 + $0x78] sm:$0xff]
        %v496 = vld [vmem:[%s295 + $0x80] sm:$0xff]
        %v497 = vld [vmem:[%s295 + $0x88] sm:$0xff]
        %v498 = vld [vmem:[%s295 + $0x90] sm:$0xff]
        %v499 = vld [vmem:[%s295 + $0x98] sm:$0xff]
        %v500 = vld [vmem:[%s295 + $0xa0] sm:$0xff]
        %v501 = vld [vmem:[%s295 + $0xa8] sm:$0xff]
        %v502 = vld [vmem:[%s295 + $0xb0] sm:$0xff]
        %v503 = vld [vmem:[%s295 + $0xb8] sm:$0xff]
        %vm504 = vcmask 261120
        %505 = vst.msk [vmem:[%s340] sm:$0xff] %vm504, %v480
        %506 = vst.msk [vmem:[%s340 + $0x8] sm:$0xff] %vm504, %v481
        %507 = vst.msk [vmem:[%s340 + $0x10] sm:$0xff] %vm504, %v482
        %508 = vst.msk [vmem:[%s340 + $0x18] sm:$0xff] %vm504, %v483
        %509 = vst.msk [vmem:[%s340 + $0x20] sm:$0xff] %vm504, %v484
        %510 = vst.msk [vmem:[%s340 + $0x28] sm:$0xff] %vm504, %v485
        %511 = vst.msk [vmem:[%s340 + $0x30] sm:$0xff] %vm504, %v486
        %512 = vst.msk [vmem:[%s340 + $0x38] sm:$0xff] %vm504, %v487
        %513 = vst.msk [vmem:[%s340 + $0x40] sm:$0xff] %vm504, %v488
        %514 = vst.msk [vmem:[%s340 + $0x48] sm:$0xff] %vm504, %v489
        %515 = vst.msk [vmem:[%s340 + $0x50] sm:$0xff] %vm504, %v490
        %516 = vst.msk [vmem:[%s340 + $0x58] sm:$0xff] %vm504, %v491
        %517 = vst.msk [vmem:[%s340 + $0x60] sm:$0xff] %vm504, %v492
        %518 = vst.msk [vmem:[%s340 + $0x68] sm:$0xff] %vm504, %v493
        %519 = vst.msk [vmem:[%s340 + $0x70] sm:$0xff] %vm504, %v494
        %520 = vst.msk [vmem:[%s340 + $0x78] sm:$0xff] %vm504, %v495
        %521 = vst.msk [vmem:[%s340 + $0x80] sm:$0xff] %vm504, %v496
        %522 = vst.msk [vmem:[%s340 + $0x88] sm:$0xff] %vm504, %v497
        %523 = vst.msk [vmem:[%s340 + $0x90] sm:$0xff] %vm504, %v498
        %524 = vst.msk [vmem:[%s340 + $0x98] sm:$0xff] %vm504, %v499
        %525 = vst.msk [vmem:[%s340 + $0xa0] sm:$0xff] %vm504, %v500
        %526 = vst.msk [vmem:[%s340 + $0xa8] sm:$0xff] %vm504, %v501
        %527 = vst.msk [vmem:[%s340 + $0xb0] sm:$0xff] %vm504, %v502
        %528 = vst.msk [vmem:[%s340 + $0xb8] sm:$0xff] %vm504, %v503
        %v529 = vld [vmem:[#allocation2 + $0x1] sm:$0xff]
        %v530 = vld [vmem:[#allocation2 + $0x9] sm:$0xff]
        %v531 = vld [vmem:[#allocation2 + $0x11] sm:$0x1]
        %s532 = sld [smem:[#allocation9]]
        %v533 = vstv %s532
        %v534 = vmul.f32 %v529, %v533
        %v535 = vmul.f32 %v530, %v533
        %v536 = vmul.f32 %v531, %v533
        %v537 = vadd.f32 %v534, 0.0
        %v538 = vadd.f32 %v535, 0.0
        %v539 = vadd.f32 %v536, 0.0
        %s540 = sld [smem:[#allocation9 + $0x1]]
        %v541 = vstv %s540
        %v542 = vmul.f32 %v529, %v541
        %v543 = vmul.f32 %v530, %v541
        %v544 = vmul.f32 %v531, %v541
        %v545 = vadd.f32 %v542, 0.0
        %v546 = vadd.f32 %v543, 0.0
        %v547 = vadd.f32 %v544, 0.0
        %s548 = sld [smem:[#allocation9 + $0x2]]
        %v549 = vstv %s548
        %v550 = vmul.f32 %v529, %v549
        %v551 = vmul.f32 %v530, %v549
        %v552 = vmul.f32 %v531, %v549
        %v553 = vadd.f32 %v550, 0.0
        %v554 = vadd.f32 %v551, 0.0
        %v555 = vadd.f32 %v552, 0.0
        %s556 = sld [smem:[#allocation9 + $0x3]]
        %v557 = vstv %s556
        %v558 = vmul.f32 %v529, %v557
        %v559 = vmul.f32 %v530, %v557
        %v560 = vmul.f32 %v531, %v557
        %v561 = vadd.f32 %v558, 0.0
        %v562 = vadd.f32 %v559, 0.0
        %v563 = vadd.f32 %v560, 0.0
        %s564 = scalar_lea.vmem [#allocation2], 24
        %v565 = vld [vmem:[%s564 + $0x1] sm:$0xff]
        %v566 = vld [vmem:[%s564 + $0x9] sm:$0xff]
        %v567 = vld [vmem:[%s564 + $0x11] sm:$0x1]
        %s568 = sld [smem:[#allocation9 + $0x4]]
        %v569 = vstv %s568
        %v570 = vmul.f32 %v565, %v569
        %v571 = vmul.f32 %v566, %v569
        %v572 = vmul.f32 %v567, %v569
        %v573 = vadd.f32 %v537, %v570
        %v574 = vadd.f32 %v538, %v571
        %v575 = vadd.f32 %v539, %v572
        %s576 = sld [smem:[#allocation9 + $0x5]]
        %v577 = vstv %s576
        %v578 = vmul.f32 %v565, %v577
        %v579 = vmul.f32 %v566, %v577
        %v580 = vmul.f32 %v567, %v577
        %v581 = vadd.f32 %v545, %v578
        %v582 = vadd.f32 %v546, %v579
        %v583 = vadd.f32 %v547, %v580
        %s584 = sld [smem:[#allocation9 + $0x6]]
        %v585 = vstv %s584
        %v586 = vmul.f32 %v565, %v585
        %v587 = vmul.f32 %v566, %v585
        %v588 = vmul.f32 %v567, %v585
        %v589 = vadd.f32 %v553, %v586
        %v590 = vadd.f32 %v554, %v587
        %v591 = vadd.f32 %v555, %v588
        %s592 = sld [smem:[#allocation9 + $0x7]]
        %v593 = vstv %s592
        %v594 = vmul.f32 %v565, %v593
        %v595 = vmul.f32 %v566, %v593
        %v596 = vmul.f32 %v567, %v593
        %v597 = vadd.f32 %v561, %v594
        %v598 = vadd.f32 %v562, %v595
        %v599 = vadd.f32 %v563, %v596
        %s600 = scalar_lea.vmem [#allocation2], 48
        %v601 = vld [vmem:[%s600 + $0x1] sm:$0xff]
        %v602 = vld [vmem:[%s600 + $0x9] sm:$0xff]
        %v603 = vld [vmem:[%s600 + $0x11] sm:$0x1]
        %s604 = sld [smem:[#allocation9 + $0x8]]
        %v605 = vstv %s604
        %v606 = vmul.f32 %v601, %v605
        %v607 = vmul.f32 %v602, %v605
        %v608 = vmul.f32 %v603, %v605
        %v609 = vadd.f32 %v573, %v606
        %v610 = vadd.f32 %v574, %v607
        %v611 = vadd.f32 %v575, %v608
        %s612 = sld [smem:[#allocation9 + $0x9]]
        %v613 = vstv %s612
        %v614 = vmul.f32 %v601, %v613
        %v615 = vmul.f32 %v602, %v613
        %v616 = vmul.f32 %v603, %v613
        %v617 = vadd.f32 %v581, %v614
        %v618 = vadd.f32 %v582, %v615
        %v619 = vadd.f32 %v583, %v616
        %s620 = sld [smem:[#allocation9 + $0xa]]
        %v621 = vstv %s620
        %v622 = vmul.f32 %v601, %v621
        %v623 = vmul.f32 %v602, %v621
        %v624 = vmul.f32 %v603, %v621
        %v625 = vadd.f32 %v589, %v622
        %v626 = vadd.f32 %v590, %v623
        %v627 = vadd.f32 %v591, %v624
        %s628 = sld [smem:[#allocation9 + $0xb]]
        %v629 = vstv %s628
        %v630 = vmul.f32 %v601, %v629
        %v631 = vmul.f32 %v602, %v629
        %v632 = vmul.f32 %v603, %v629
        %v633 = vadd.f32 %v597, %v630
        %v634 = vadd.f32 %v598, %v631
        %v635 = vadd.f32 %v599, %v632
        %s636 = scalar_lea.vmem [#allocation2], 72
        %v637 = vld [vmem:[%s636 + $0x1] sm:$0xff]
        %v638 = vld [vmem:[%s636 + $0x9] sm:$0xff]
        %v639 = vld [vmem:[%s636 + $0x11] sm:$0x1]
        %s640 = sld [smem:[#allocation9 + $0xc]]
        %v641 = vstv %s640
        %v642 = vmul.f32 %v637, %v641
        %v643 = vmul.f32 %v638, %v641
        %v644 = vmul.f32 %v639, %v641
        %v645 = vadd.f32 %v609, %v642
        %v646 = vadd.f32 %v610, %v643
        %v647 = vadd.f32 %v611, %v644
        %s648 = sld [smem:[#allocation9 + $0xd]]
        %v649 = vstv %s648
        %v650 = vmul.f32 %v637, %v649
        %v651 = vmul.f32 %v638, %v649
        %v652 = vmul.f32 %v639, %v649
        %v653 = vadd.f32 %v617, %v650
        %v654 = vadd.f32 %v618, %v651
        %v655 = vadd.f32 %v619, %v652
        %s656 = sld [smem:[#allocation9 + $0xe]]
        %v657 = vstv %s656
        %v658 = vmul.f32 %v637, %v657
        %v659 = vmul.f32 %v638, %v657
        %v660 = vmul.f32 %v639, %v657
        %v661 = vadd.f32 %v625, %v658
        %v662 = vadd.f32 %v626, %v659
        %v663 = vadd.f32 %v627, %v660
        %s664 = sld [smem:[#allocation9 + $0xf]]
        %v665 = vstv %s664
        %v666 = vmul.f32 %v637, %v665
        %v667 = vmul.f32 %v638, %v665
        %v668 = vmul.f32 %v639, %v665
        %v669 = vadd.f32 %v633, %v666
        %v670 = vadd.f32 %v634, %v667
        %v671 = vadd.f32 %v635, %v668
        %s672 = scalar_lea.vmem [#allocation2], 96
        %v673 = vld [vmem:[%s672 + $0x1] sm:$0xff]
        %v674 = vld [vmem:[%s672 + $0x9] sm:$0xff]
        %v675 = vld [vmem:[%s672 + $0x11] sm:$0x1]
        %s676 = sld [smem:[#allocation9 + $0x10]]
        %v677 = vstv %s676
        %v678 = vmul.f32 %v673, %v677
        %v679 = vmul.f32 %v674, %v677
        %v680 = vmul.f32 %v675, %v677
        %v681 = vadd.f32 %v645, %v678
        %v682 = vadd.f32 %v646, %v679
        %v683 = vadd.f32 %v647, %v680
        %s684 = sld [smem:[#allocation9 + $0x11]]
        %v685 = vstv %s684
        %v686 = vmul.f32 %v673, %v685
        %v687 = vmul.f32 %v674, %v685
        %v688 = vmul.f32 %v675, %v685
        %v689 = vadd.f32 %v653, %v686
        %v690 = vadd.f32 %v654, %v687
        %v691 = vadd.f32 %v655, %v688
        %s692 = sld [smem:[#allocation9 + $0x12]]
        %v693 = vstv %s692
        %v694 = vmul.f32 %v673, %v693
        %v695 = vmul.f32 %v674, %v693
        %v696 = vmul.f32 %v675, %v693
        %v697 = vadd.f32 %v661, %v694
        %v698 = vadd.f32 %v662, %v695
        %v699 = vadd.f32 %v663, %v696
        %s700 = sld [smem:[#allocation9 + $0x13]]
        %v701 = vstv %s700
        %v702 = vmul.f32 %v673, %v701
        %v703 = vmul.f32 %v674, %v701
        %v704 = vmul.f32 %v675, %v701
        %v705 = vadd.f32 %v669, %v702
        %v706 = vadd.f32 %v670, %v703
        %v707 = vadd.f32 %v671, %v704
        %s708 = scalar_lea.vmem [#allocation2], 120
        %v709 = vld [vmem:[%s708 + $0x1] sm:$0xff]
        %v710 = vld [vmem:[%s708 + $0x9] sm:$0xff]
        %v711 = vld [vmem:[%s708 + $0x11] sm:$0x1]
        %s712 = sld [smem:[#allocation9 + $0x14]]
        %v713 = vstv %s712
        %v714 = vmul.f32 %v709, %v713
        %v715 = vmul.f32 %v710, %v713
        %v716 = vmul.f32 %v711, %v713
        %v717 = vadd.f32 %v681, %v714
        %v718 = vadd.f32 %v682, %v715
        %v719 = vadd.f32 %v683, %v716
        %s720 = sld [smem:[#allocation9 + $0x15]]
        %v721 = vstv %s720
        %v722 = vmul.f32 %v709, %v721
        %v723 = vmul.f32 %v710, %v721
        %v724 = vmul.f32 %v711, %v721
        %v725 = vadd.f32 %v689, %v722
        %v726 = vadd.f32 %v690, %v723
        %v727 = vadd.f32 %v691, %v724
        %s728 = sld [smem:[#allocation9 + $0x16]]
        %v729 = vstv %s728
        %v730 = vmul.f32 %v709, %v729
        %v731 = vmul.f32 %v710, %v729
        %v732 = vmul.f32 %v711, %v729
        %v733 = vadd.f32 %v697, %v730
        %v734 = vadd.f32 %v698, %v731
        %v735 = vadd.f32 %v699, %v732
        %s736 = sld [smem:[#allocation9 + $0x17]]
        %v737 = vstv %s736
        %v738 = vmul.f32 %v709, %v737
        %v739 = vmul.f32 %v710, %v737
        %v740 = vmul.f32 %v711, %v737
        %v741 = vadd.f32 %v705, %v738
        %v742 = vadd.f32 %v706, %v739
        %v743 = vadd.f32 %v707, %v740
        %s744 = scalar_lea.vmem [#allocation2], 144
        %v745 = vld [vmem:[%s744 + $0x1] sm:$0xff]
        %v746 = vld [vmem:[%s744 + $0x9] sm:$0xff]
        %v747 = vld [vmem:[%s744 + $0x11] sm:$0x1]
        %s748 = sld [smem:[#allocation9 + $0x18]]
        %v749 = vstv %s748
        %v750 = vmul.f32 %v745, %v749
        %v751 = vmul.f32 %v746, %v749
        %v752 = vmul.f32 %v747, %v749
        %v753 = vadd.f32 %v717, %v750
        %v754 = vadd.f32 %v718, %v751
        %v755 = vadd.f32 %v719, %v752
        %s756 = sld [smem:[#allocation9 + $0x19]]
        %v757 = vstv %s756
        %v758 = vmul.f32 %v745, %v757
        %v759 = vmul.f32 %v746, %v757
        %v760 = vmul.f32 %v747, %v757
        %v761 = vadd.f32 %v725, %v758
        %v762 = vadd.f32 %v726, %v759
        %v763 = vadd.f32 %v727, %v760
        %s764 = sld [smem:[#allocation9 + $0x1a]]
        %v765 = vstv %s764
        %v766 = vmul.f32 %v745, %v765
        %v767 = vmul.f32 %v746, %v765
        %v768 = vmul.f32 %v747, %v765
        %v769 = vadd.f32 %v733, %v766
        %v770 = vadd.f32 %v734, %v767
        %v771 = vadd.f32 %v735, %v768
        %s772 = sld [smem:[#allocation9 + $0x1b]]
        %v773 = vstv %s772
        %v774 = vmul.f32 %v745, %v773
        %v775 = vmul.f32 %v746, %v773
        %v776 = vmul.f32 %v747, %v773
        %v777 = vadd.f32 %v741, %v774
        %v778 = vadd.f32 %v742, %v775
        %v779 = vadd.f32 %v743, %v776
        %s780 = scalar_lea.vmem [#allocation2], 168
        %v781 = vld [vmem:[%s780 + $0x1] sm:$0xff]
        %v782 = vld [vmem:[%s780 + $0x9] sm:$0xff]
        %v783 = vld [vmem:[%s780 + $0x11] sm:$0x1]
        %s784 = sld [smem:[#allocation9 + $0x1c]]
        %v785 = vstv %s784
        %v786 = vmul.f32 %v781, %v785
        %v787 = vmul.f32 %v782, %v785
        %v788 = vmul.f32 %v783, %v785
        %v789 = vadd.f32 %v753, %v786
        %v790 = vadd.f32 %v754, %v787
        %v791 = vadd.f32 %v755, %v788
        %s792 = sld [smem:[#allocation9 + $0x1d]]
        %v793 = vstv %s792
        %v794 = vmul.f32 %v781, %v793
        %v795 = vmul.f32 %v782, %v793
        %v796 = vmul.f32 %v783, %v793
        %v797 = vadd.f32 %v761, %v794
        %v798 = vadd.f32 %v762, %v795
        %v799 = vadd.f32 %v763, %v796
        %s800 = sld [smem:[#allocation9 + $0x1e]]
        %v801 = vstv %s800
        %v802 = vmul.f32 %v781, %v801
        %v803 = vmul.f32 %v782, %v801
        %v804 = vmul.f32 %v783, %v801
        %v805 = vadd.f32 %v769, %v802
        %v806 = vadd.f32 %v770, %v803
        %v807 = vadd.f32 %v771, %v804
        %s808 = sld [smem:[#allocation9 + $0x1f]]
        %v809 = vstv %s808
        %v810 = vmul.f32 %v781, %v809
        %v811 = vmul.f32 %v782, %v809
        %v812 = vmul.f32 %v783, %v809
        %v813 = vadd.f32 %v777, %v810
        %v814 = vadd.f32 %v778, %v811
        %v815 = vadd.f32 %v779, %v812
        %s816 = sld [smem:[#allocation9 + $0x40]]
        %v817 = vstv %s816
        %v818 = vmul.f32 %v529, %v817
        %v819 = vmul.f32 %v530, %v817
        %v820 = vmul.f32 %v531, %v817
        %824 = vrot.lane.b32.xlu0 %v818, 1
        %v825 = vpop.permute.xlu0 %824
        %826 = vrot.lane.b32.xlu0 %v819, 1
        %v827 = vpop.permute.xlu0 %826
        %828 = vrot.lane.b32.xlu0 %v820, 1
        %v829 = vpop.permute.xlu0 %828
        %v833 = vadd.f32 %v789, %v825
        %v834 = vadd.f32 %v790, %v827
        %v835 = vadd.f32 %v791, %v829
        %s836 = sld [smem:[#allocation9 + $0x41]]
        %v837 = vstv %s836
        %v838 = vmul.f32 %v529, %v837
        %v839 = vmul.f32 %v530, %v837
        %v840 = vmul.f32 %v531, %v837
        %844 = vrot.lane.b32.xlu0 %v838, 1
        %v845 = vpop.permute.xlu0 %844
        %846 = vrot.lane.b32.xlu0 %v839, 1
        %v847 = vpop.permute.xlu0 %846
        %848 = vrot.lane.b32.xlu0 %v840, 1
        %v849 = vpop.permute.xlu0 %848
        %v853 = vadd.f32 %v797, %v845
        %v854 = vadd.f32 %v798, %v847
        %v855 = vadd.f32 %v799, %v849
        %s856 = sld [smem:[#allocation9 + $0x42]]
        %v857 = vstv %s856
        %v858 = vmul.f32 %v529, %v857
        %v859 = vmul.f32 %v530, %v857
        %v860 = vmul.f32 %v531, %v857
        %864 = vrot.lane.b32.xlu0 %v858, 1
        %v865 = vpop.permute.xlu0 %864
        %866 = vrot.lane.b32.xlu0 %v859, 1
        %v867 = vpop.permute.xlu0 %866
        %868 = vrot.lane.b32.xlu0 %v860, 1
        %v869 = vpop.permute.xlu0 %868
        %v873 = vadd.f32 %v805, %v865
        %v874 = vadd.f32 %v806, %v867
        %v875 = vadd.f32 %v807, %v869
        %s876 = sld [smem:[#allocation9 + $0x43]]
        %v877 = vstv %s876
        %v878 = vmul.f32 %v529, %v877
        %v879 = vmul.f32 %v530, %v877
        %v880 = vmul.f32 %v531, %v877
        %884 = vrot.lane.b32.xlu0 %v878, 1
        %v885 = vpop.permute.xlu0 %884
        %886 = vrot.lane.b32.xlu0 %v879, 1
        %v887 = vpop.permute.xlu0 %886
        %888 = vrot.lane.b32.xlu0 %v880, 1
        %v889 = vpop.permute.xlu0 %888
        %v893 = vadd.f32 %v813, %v885
        %v894 = vadd.f32 %v814, %v887
        %v895 = vadd.f32 %v815, %v889
        %s896 = sld [smem:[#allocation9 + $0x44]]
        %v897 = vstv %s896
        %v898 = vmul.f32 %v565, %v897
        %v899 = vmul.f32 %v566, %v897
        %v900 = vmul.f32 %v567, %v897
        %904 = vrot.lane.b32.xlu0 %v898, 1
        %v905 = vpop.permute.xlu0 %904
        %906 = vrot.lane.b32.xlu0 %v899, 1
        %v907 = vpop.permute.xlu0 %906
        %908 = vrot.lane.b32.xlu0 %v900, 1
        %v909 = vpop.permute.xlu0 %908
        %v913 = vadd.f32 %v833, %v905
        %v914 = vadd.f32 %v834, %v907
        %v915 = vadd.f32 %v835, %v909
        %s916 = sld [smem:[#allocation9 + $0x45]]
        %v917 = vstv %s916
        %v918 = vmul.f32 %v565, %v917
        %v919 = vmul.f32 %v566, %v917
        %v920 = vmul.f32 %v567, %v917
        %924 = vrot.lane.b32.xlu0 %v918, 1
        %v925 = vpop.permute.xlu0 %924
        %926 = vrot.lane.b32.xlu0 %v919, 1
        %v927 = vpop.permute.xlu0 %926
        %928 = vrot.lane.b32.xlu0 %v920, 1
        %v929 = vpop.permute.xlu0 %928
        %v933 = vadd.f32 %v853, %v925
        %v934 = vadd.f32 %v854, %v927
        %v935 = vadd.f32 %v855, %v929
        %s936 = sld [smem:[#allocation9 + $0x46]]
        %v937 = vstv %s936
        %v938 = vmul.f32 %v565, %v937
        %v939 = vmul.f32 %v566, %v937
        %v940 = vmul.f32 %v567, %v937
        %944 = vrot.lane.b32.xlu0 %v938, 1
        %v945 = vpop.permute.xlu0 %944
        %946 = vrot.lane.b32.xlu0 %v939, 1
        %v947 = vpop.permute.xlu0 %946
        %948 = vrot.lane.b32.xlu0 %v940, 1
        %v949 = vpop.permute.xlu0 %948
        %v953 = vadd.f32 %v873, %v945
        %v954 = vadd.f32 %v874, %v947
        %v955 = vadd.f32 %v875, %v949
        %s956 = sld [smem:[#allocation9 + $0x47]]
        %v957 = vstv %s956
        %v958 = vmul.f32 %v565, %v957
        %v959 = vmul.f32 %v566, %v957
        %v960 = vmul.f32 %v567, %v957
        %964 = vrot.lane.b32.xlu0 %v958, 1
        %v965 = vpop.permute.xlu0 %964
        %966 = vrot.lane.b32.xlu0 %v959, 1
        %v967 = vpop.permute.xlu0 %966
        %968 = vrot.lane.b32.xlu0 %v960, 1
        %v969 = vpop.permute.xlu0 %968
        %v973 = vadd.f32 %v893, %v965
        %v974 = vadd.f32 %v894, %v967
        %v975 = vadd.f32 %v895, %v969
        %s976 = sld [smem:[#allocation9 + $0x48]]
        %v977 = vstv %s976
        %v978 = vmul.f32 %v601, %v977
        %v979 = vmul.f32 %v602, %v977
        %v980 = vmul.f32 %v603, %v977
        %984 = vrot.lane.b32.xlu0 %v978, 1
        %v985 = vpop.permute.xlu0 %984
        %986 = vrot.lane.b32.xlu0 %v979, 1
        %v987 = vpop.permute.xlu0 %986
        %988 = vrot.lane.b32.xlu0 %v980, 1
        %v989 = vpop.permute.xlu0 %988
        %v993 = vadd.f32 %v913, %v985
        %v994 = vadd.f32 %v914, %v987
        %v995 = vadd.f32 %v915, %v989
        %s996 = sld [smem:[#allocation9 + $0x49]]
        %v997 = vstv %s996
        %v998 = vmul.f32 %v601, %v997
        %v999 = vmul.f32 %v602, %v997
        %v1000 = vmul.f32 %v603, %v997
        %1004 = vrot.lane.b32.xlu0 %v998, 1
        %v1005 = vpop.permute.xlu0 %1004
        %1006 = vrot.lane.b32.xlu0 %v999, 1
        %v1007 = vpop.permute.xlu0 %1006
        %1008 = vrot.lane.b32.xlu0 %v1000, 1
        %v1009 = vpop.permute.xlu0 %1008
        %v1013 = vadd.f32 %v933, %v1005
        %v1014 = vadd.f32 %v934, %v1007
        %v1015 = vadd.f32 %v935, %v1009
        %s1016 = sld [smem:[#allocation9 + $0x4a]]
        %v1017 = vstv %s1016
        %v1018 = vmul.f32 %v601, %v1017
        %v1019 = vmul.f32 %v602, %v1017
        %v1020 = vmul.f32 %v603, %v1017
        %1024 = vrot.lane.b32.xlu0 %v1018, 1
        %v1025 = vpop.permute.xlu0 %1024
        %1026 = vrot.lane.b32.xlu0 %v1019, 1
        %v1027 = vpop.permute.xlu0 %1026
        %1028 = vrot.lane.b32.xlu0 %v1020, 1
        %v1029 = vpop.permute.xlu0 %1028
        %v1033 = vadd.f32 %v953, %v1025
        %v1034 = vadd.f32 %v954, %v1027
        %v1035 = vadd.f32 %v955, %v1029
        %s1036 = sld [smem:[#allocation9 + $0x4b]]
        %v1037 = vstv %s1036
        %v1038 = vmul.f32 %v601, %v1037
        %v1039 = vmul.f32 %v602, %v1037
        %v1040 = vmul.f32 %v603, %v1037
        %1044 = vrot.lane.b32.xlu0 %v1038, 1
        %v1045 = vpop.permute.xlu0 %1044
        %1046 = vrot.lane.b32.xlu0 %v1039, 1
        %v1047 = vpop.permute.xlu0 %1046
        %1048 = vrot.lane.b32.xlu0 %v1040, 1
        %v1049 = vpop.permute.xlu0 %1048
        %v1053 = vadd.f32 %v973, %v1045
        %v1054 = vadd.f32 %v974, %v1047
        %v1055 = vadd.f32 %v975, %v1049
        %s1056 = sld [smem:[#allocation9 + $0x4c]]
        %v1057 = vstv %s1056
        %v1058 = vmul.f32 %v637, %v1057
        %v1059 = vmul.f32 %v638, %v1057
        %v1060 = vmul.f32 %v639, %v1057
        %1064 = vrot.lane.b32.xlu0 %v1058, 1
        %v1065 = vpop.permute.xlu0 %1064
        %1066 = vrot.lane.b32.xlu0 %v1059, 1
        %v1067 = vpop.permute.xlu0 %1066
        %1068 = vrot.lane.b32.xlu0 %v1060, 1
        %v1069 = vpop.permute.xlu0 %1068
        %v1073 = vadd.f32 %v993, %v1065
        %v1074 = vadd.f32 %v994, %v1067
        %v1075 = vadd.f32 %v995, %v1069
        %s1076 = sld [smem:[#allocation9 + $0x4d]]
        %v1077 = vstv %s1076
        %v1078 = vmul.f32 %v637, %v1077
        %v1079 = vmul.f32 %v638, %v1077
        %v1080 = vmul.f32 %v639, %v1077
        %1084 = vrot.lane.b32.xlu0 %v1078, 1
        %v1085 = vpop.permute.xlu0 %1084
        %1086 = vrot.lane.b32.xlu0 %v1079, 1
        %v1087 = vpop.permute.xlu0 %1086
        %1088 = vrot.lane.b32.xlu0 %v1080, 1
        %v1089 = vpop.permute.xlu0 %1088
        %v1093 = vadd.f32 %v1013, %v1085
        %v1094 = vadd.f32 %v1014, %v1087
        %v1095 = vadd.f32 %v1015, %v1089
        %s1096 = sld [smem:[#allocation9 + $0x4e]]
        %v1097 = vstv %s1096
        %v1098 = vmul.f32 %v637, %v1097
        %v1099 = vmul.f32 %v638, %v1097
        %v1100 = vmul.f32 %v639, %v1097
        %1104 = vrot.lane.b32.xlu0 %v1098, 1
        %v1105 = vpop.permute.xlu0 %1104
        %1106 = vrot.lane.b32.xlu0 %v1099, 1
        %v1107 = vpop.permute.xlu0 %1106
        %1108 = vrot.lane.b32.xlu0 %v1100, 1
        %v1109 = vpop.permute.xlu0 %1108
        %v1113 = vadd.f32 %v1033, %v1105
        %v1114 = vadd.f32 %v1034, %v1107
        %v1115 = vadd.f32 %v1035, %v1109
        %s1116 = sld [smem:[#allocation9 + $0x4f]]
        %v1117 = vstv %s1116
        %v1118 = vmul.f32 %v637, %v1117
        %v1119 = vmul.f32 %v638, %v1117
        %v1120 = vmul.f32 %v639, %v1117
        %1124 = vrot.lane.b32.xlu0 %v1118, 1
        %v1125 = vpop.permute.xlu0 %1124
        %1126 = vrot.lane.b32.xlu0 %v1119, 1
        %v1127 = vpop.permute.xlu0 %1126
        %1128 = vrot.lane.b32.xlu0 %v1120, 1
        %v1129 = vpop.permute.xlu0 %1128
        %v1133 = vadd.f32 %v1053, %v1125
        %v1134 = vadd.f32 %v1054, %v1127
        %v1135 = vadd.f32 %v1055, %v1129
        %s1136 = sld [smem:[#allocation9 + $0x50]]
        %v1137 = vstv %s1136
        %v1138 = vmul.f32 %v673, %v1137
        %v1139 = vmul.f32 %v674, %v1137
        %v1140 = vmul.f32 %v675, %v1137
        %1144 = vrot.lane.b32.xlu0 %v1138, 1
        %v1145 = vpop.permute.xlu0 %1144
        %1146 = vrot.lane.b32.xlu0 %v1139, 1
        %v1147 = vpop.permute.xlu0 %1146
        %1148 = vrot.lane.b32.xlu0 %v1140, 1
        %v1149 = vpop.permute.xlu0 %1148
        %v1153 = vadd.f32 %v1073, %v1145
        %v1154 = vadd.f32 %v1074, %v1147
        %v1155 = vadd.f32 %v1075, %v1149
        %s1156 = sld [smem:[#allocation9 + $0x51]]
        %v1157 = vstv %s1156
        %v1158 = vmul.f32 %v673, %v1157
        %v1159 = vmul.f32 %v674, %v1157
        %v1160 = vmul.f32 %v675, %v1157
        %1164 = vrot.lane.b32.xlu0 %v1158, 1
        %v1165 = vpop.permute.xlu0 %1164
        %1166 = vrot.lane.b32.xlu0 %v1159, 1
        %v1167 = vpop.permute.xlu0 %1166
        %1168 = vrot.lane.b32.xlu0 %v1160, 1
        %v1169 = vpop.permute.xlu0 %1168
        %v1173 = vadd.f32 %v1093, %v1165
        %v1174 = vadd.f32 %v1094, %v1167
        %v1175 = vadd.f32 %v1095, %v1169
        %s1176 = sld [smem:[#allocation9 + $0x52]]
        %v1177 = vstv %s1176
        %v1178 = vmul.f32 %v673, %v1177
        %v1179 = vmul.f32 %v674, %v1177
        %v1180 = vmul.f32 %v675, %v1177
        %1184 = vrot.lane.b32.xlu0 %v1178, 1
        %v1185 = vpop.permute.xlu0 %1184
        %1186 = vrot.lane.b32.xlu0 %v1179, 1
        %v1187 = vpop.permute.xlu0 %1186
        %1188 = vrot.lane.b32.xlu0 %v1180, 1
        %v1189 = vpop.permute.xlu0 %1188
        %v1193 = vadd.f32 %v1113, %v1185
        %v1194 = vadd.f32 %v1114, %v1187
        %v1195 = vadd.f32 %v1115, %v1189
        %s1196 = sld [smem:[#allocation9 + $0x53]]
        %v1197 = vstv %s1196
        %v1198 = vmul.f32 %v673, %v1197
        %v1199 = vmul.f32 %v674, %v1197
        %v1200 = vmul.f32 %v675, %v1197
        %1204 = vrot.lane.b32.xlu0 %v1198, 1
        %v1205 = vpop.permute.xlu0 %1204
        %1206 = vrot.lane.b32.xlu0 %v1199, 1
        %v1207 = vpop.permute.xlu0 %1206
        %1208 = vrot.lane.b32.xlu0 %v1200, 1
        %v1209 = vpop.permute.xlu0 %1208
        %v1213 = vadd.f32 %v1133, %v1205
        %v1214 = vadd.f32 %v1134, %v1207
        %v1215 = vadd.f32 %v1135, %v1209
        %s1216 = sld [smem:[#allocation9 + $0x54]]
        %v1217 = vstv %s1216
        %v1218 = vmul.f32 %v709, %v1217
        %v1219 = vmul.f32 %v710, %v1217
        %v1220 = vmul.f32 %v711, %v1217
        %1224 = vrot.lane.b32.xlu0 %v1218, 1
        %v1225 = vpop.permute.xlu0 %1224
        %1226 = vrot.lane.b32.xlu0 %v1219, 1
        %v1227 = vpop.permute.xlu0 %1226
        %1228 = vrot.lane.b32.xlu0 %v1220, 1
        %v1229 = vpop.permute.xlu0 %1228
        %v1233 = vadd.f32 %v1153, %v1225
        %v1234 = vadd.f32 %v1154, %v1227
        %v1235 = vadd.f32 %v1155, %v1229
        %s1236 = sld [smem:[#allocation9 + $0x55]]
        %v1237 = vstv %s1236
        %v1238 = vmul.f32 %v709, %v1237
        %v1239 = vmul.f32 %v710, %v1237
        %v1240 = vmul.f32 %v711, %v1237
        %1244 = vrot.lane.b32.xlu0 %v1238, 1
        %v1245 = vpop.permute.xlu0 %1244
        %1246 = vrot.lane.b32.xlu0 %v1239, 1
        %v1247 = vpop.permute.xlu0 %1246
        %1248 = vrot.lane.b32.xlu0 %v1240, 1
        %v1249 = vpop.permute.xlu0 %1248
        %v1253 = vadd.f32 %v1173, %v1245
        %v1254 = vadd.f32 %v1174, %v1247
        %v1255 = vadd.f32 %v1175, %v1249
        %s1256 = sld [smem:[#allocation9 + $0x56]]
        %v1257 = vstv %s1256
        %v1258 = vmul.f32 %v709, %v1257
        %v1259 = vmul.f32 %v710, %v1257
        %v1260 = vmul.f32 %v711, %v1257
        %1264 = vrot.lane.b32.xlu0 %v1258, 1
        %v1265 = vpop.permute.xlu0 %1264
        %1266 = vrot.lane.b32.xlu0 %v1259, 1
        %v1267 = vpop.permute.xlu0 %1266
        %1268 = vrot.lane.b32.xlu0 %v1260, 1
        %v1269 = vpop.permute.xlu0 %1268
        %v1273 = vadd.f32 %v1193, %v1265
        %v1274 = vadd.f32 %v1194, %v1267
        %v1275 = vadd.f32 %v1195, %v1269
        %s1276 = sld [smem:[#allocation9 + $0x57]]
        %v1277 = vstv %s1276
        %v1278 = vmul.f32 %v709, %v1277
        %v1279 = vmul.f32 %v710, %v1277
        %v1280 = vmul.f32 %v711, %v1277
        %1284 = vrot.lane.b32.xlu0 %v1278, 1
        %v1285 = vpop.permute.xlu0 %1284
        %1286 = vrot.lane.b32.xlu0 %v1279, 1
        %v1287 = vpop.permute.xlu0 %1286
        %1288 = vrot.lane.b32.xlu0 %v1280, 1
        %v1289 = vpop.permute.xlu0 %1288
        %v1293 = vadd.f32 %v1213, %v1285
        %v1294 = vadd.f32 %v1214, %v1287
        %v1295 = vadd.f32 %v1215, %v1289
        %s1296 = sld [smem:[#allocation9 + $0x58]]
        %v1297 = vstv %s1296
        %v1298 = vmul.f32 %v745, %v1297
        %v1299 = vmul.f32 %v746, %v1297
        %v1300 = vmul.f32 %v747, %v1297
        %1304 = vrot.lane.b32.xlu0 %v1298, 1
        %v1305 = vpop.permute.xlu0 %1304
        %1306 = vrot.lane.b32.xlu0 %v1299, 1
        %v1307 = vpop.permute.xlu0 %1306
        %1308 = vrot.lane.b32.xlu0 %v1300, 1
        %v1309 = vpop.permute.xlu0 %1308
        %v1313 = vadd.f32 %v1233, %v1305
        %v1314 = vadd.f32 %v1234, %v1307
        %v1315 = vadd.f32 %v1235, %v1309
        %s1316 = sld [smem:[#allocation9 + $0x59]]
        %v1317 = vstv %s1316
        %v1318 = vmul.f32 %v745, %v1317
        %v1319 = vmul.f32 %v746, %v1317
        %v1320 = vmul.f32 %v747, %v1317
        %1324 = vrot.lane.b32.xlu0 %v1318, 1
        %v1325 = vpop.permute.xlu0 %1324
        %1326 = vrot.lane.b32.xlu0 %v1319, 1
        %v1327 = vpop.permute.xlu0 %1326
        %1328 = vrot.lane.b32.xlu0 %v1320, 1
        %v1329 = vpop.permute.xlu0 %1328
        %v1333 = vadd.f32 %v1253, %v1325
        %v1334 = vadd.f32 %v1254, %v1327
        %v1335 = vadd.f32 %v1255, %v1329
        %s1336 = sld [smem:[#allocation9 + $0x5a]]
        %v1337 = vstv %s1336
        %v1338 = vmul.f32 %v745, %v1337
        %v1339 = vmul.f32 %v746, %v1337
        %v1340 = vmul.f32 %v747, %v1337
        %1344 = vrot.lane.b32.xlu0 %v1338, 1
        %v1345 = vpop.permute.xlu0 %1344
        %1346 = vrot.lane.b32.xlu0 %v1339, 1
        %v1347 = vpop.permute.xlu0 %1346
        %1348 = vrot.lane.b32.xlu0 %v1340, 1
        %v1349 = vpop.permute.xlu0 %1348
        %v1353 = vadd.f32 %v1273, %v1345
        %v1354 = vadd.f32 %v1274, %v1347
        %v1355 = vadd.f32 %v1275, %v1349
        %s1356 = sld [smem:[#allocation9 + $0x5b]]
        %v1357 = vstv %s1356
        %v1358 = vmul.f32 %v745, %v1357
        %v1359 = vmul.f32 %v746, %v1357
        %v1360 = vmul.f32 %v747, %v1357
        %1364 = vrot.lane.b32.xlu0 %v1358, 1
        %v1365 = vpop.permute.xlu0 %1364
        %1366 = vrot.lane.b32.xlu0 %v1359, 1
        %v1367 = vpop.permute.xlu0 %1366
        %1368 = vrot.lane.b32.xlu0 %v1360, 1
        %v1369 = vpop.permute.xlu0 %1368
        %v1373 = vadd.f32 %v1293, %v1365
        %v1374 = vadd.f32 %v1294, %v1367
        %v1375 = vadd.f32 %v1295, %v1369
        %s1376 = sld [smem:[#allocation9 + $0x5c]]
        %v1377 = vstv %s1376
        %v1378 = vmul.f32 %v781, %v1377
        %v1379 = vmul.f32 %v782, %v1377
        %v1380 = vmul.f32 %v783, %v1377
        %1384 = vrot.lane.b32.xlu0 %v1378, 1
        %v1385 = vpop.permute.xlu0 %1384
        %1386 = vrot.lane.b32.xlu0 %v1379, 1
        %v1387 = vpop.permute.xlu0 %1386
        %1388 = vrot.lane.b32.xlu0 %v1380, 1
        %v1389 = vpop.permute.xlu0 %1388
        %v1393 = vadd.f32 %v1313, %v1385
        %v1394 = vadd.f32 %v1314, %v1387
        %v1395 = vadd.f32 %v1315, %v1389
        %s1396 = sld [smem:[#allocation9 + $0x5d]]
        %v1397 = vstv %s1396
        %v1398 = vmul.f32 %v781, %v1397
        %v1399 = vmul.f32 %v782, %v1397
        %v1400 = vmul.f32 %v783, %v1397
        %1404 = vrot.lane.b32.xlu0 %v1398, 1
        %v1405 = vpop.permute.xlu0 %1404
        %1406 = vrot.lane.b32.xlu0 %v1399, 1
        %v1407 = vpop.permute.xlu0 %1406
        %1408 = vrot.lane.b32.xlu0 %v1400, 1
        %v1409 = vpop.permute.xlu0 %1408
        %v1413 = vadd.f32 %v1333, %v1405
        %v1414 = vadd.f32 %v1334, %v1407
        %v1415 = vadd.f32 %v1335, %v1409
        %s1416 = sld [smem:[#allocation9 + $0x5e]]
        %v1417 = vstv %s1416
        %v1418 = vmul.f32 %v781, %v1417
        %v1419 = vmul.f32 %v782, %v1417
        %v1420 = vmul.f32 %v783, %v1417
        %1424 = vrot.lane.b32.xlu0 %v1418, 1
        %v1425 = vpop.permute.xlu0 %1424
        %1426 = vrot.lane.b32.xlu0 %v1419, 1
        %v1427 = vpop.permute.xlu0 %1426
        %1428 = vrot.lane.b32.xlu0 %v1420, 1
        %v1429 = vpop.permute.xlu0 %1428
        %v1433 = vadd.f32 %v1353, %v1425
        %v1434 = vadd.f32 %v1354, %v1427
        %v1435 = vadd.f32 %v1355, %v1429
        %s1436 = sld [smem:[#allocation9 + $0x5f]]
        %v1437 = vstv %s1436
        %v1438 = vmul.f32 %v781, %v1437
        %v1439 = vmul.f32 %v782, %v1437
        %v1440 = vmul.f32 %v783, %v1437
        %1444 = vrot.lane.b32.xlu0 %v1438, 1
        %v1445 = vpop.permute.xlu0 %1444
        %1446 = vrot.lane.b32.xlu0 %v1439, 1
        %v1447 = vpop.permute.xlu0 %1446
        %1448 = vrot.lane.b32.xlu0 %v1440, 1
        %v1449 = vpop.permute.xlu0 %1448
        %v1453 = vadd.f32 %v1373, %v1445
        %v1454 = vadd.f32 %v1374, %v1447
        %v1455 = vadd.f32 %v1375, %v1449
        %v1456 = vld [vmem:[#allocation2] sm:$0xff]
        %v1457 = vld [vmem:[#allocation2 + $0x8] sm:$0xff]
        %v1458 = vld [vmem:[#allocation2 + $0x10] sm:$0x1]
        %s1459 = sld [smem:[#allocation9 + $0xc0]]
        %v1460 = vstv %s1459
        %v1461 = vmul.f32 %v1456, %v1460
        %v1462 = vmul.f32 %v1457, %v1460
        %v1463 = vmul.f32 %v1458, %v1460
        %v1464 = vadd.f32 %v1393, %v1461
        %v1465 = vadd.f32 %v1394, %v1462
        %v1466 = vadd.f32 %v1395, %v1463
        %s1467 = sld [smem:[#allocation9 + $0xc1]]
        %v1468 = vstv %s1467
        %v1469 = vmul.f32 %v1456, %v1468
        %v1470 = vmul.f32 %v1457, %v1468
        %v1471 = vmul.f32 %v1458, %v1468
        %v1472 = vadd.f32 %v1413, %v1469
        %v1473 = vadd.f32 %v1414, %v1470
        %v1474 = vadd.f32 %v1415, %v1471
        %s1475 = sld [smem:[#allocation9 + $0xc2]]
        %v1476 = vstv %s1475
        %v1477 = vmul.f32 %v1456, %v1476
        %v1478 = vmul.f32 %v1457, %v1476
        %v1479 = vmul.f32 %v1458, %v1476
        %v1480 = vadd.f32 %v1433, %v1477
        %v1481 = vadd.f32 %v1434, %v1478
        %v1482 = vadd.f32 %v1435, %v1479
        %s1483 = sld [smem:[#allocation9 + $0xc3]]
        %v1484 = vstv %s1483
        %v1485 = vmul.f32 %v1456, %v1484
        %v1486 = vmul.f32 %v1457, %v1484
        %v1487 = vmul.f32 %v1458, %v1484
        %v1488 = vadd.f32 %v1453, %v1485
        %v1489 = vadd.f32 %v1454, %v1486
        %v1490 = vadd.f32 %v1455, %v1487
        %v1491 = vld [vmem:[%s564] sm:$0xff]
        %v1492 = vld [vmem:[%s564 + $0x8] sm:$0xff]
        %v1493 = vld [vmem:[%s564 + $0x10] sm:$0x1]
        %s1494 = sld [smem:[#allocation9 + $0xc4]]
        %v1495 = vstv %s1494
        %v1496 = vmul.f32 %v1491, %v1495
        %v1497 = vmul.f32 %v1492, %v1495
        %v1498 = vmul.f32 %v1493, %v1495
        %v1499 = vadd.f32 %v1464, %v1496
        %v1500 = vadd.f32 %v1465, %v1497
        %v1501 = vadd.f32 %v1466, %v1498
        %s1502 = sld [smem:[#allocation9 + $0xc5]]
        %v1503 = vstv %s1502
        %v1504 = vmul.f32 %v1491, %v1503
        %v1505 = vmul.f32 %v1492, %v1503
        %v1506 = vmul.f32 %v1493, %v1503
        %v1507 = vadd.f32 %v1472, %v1504
        %v1508 = vadd.f32 %v1473, %v1505
        %v1509 = vadd.f32 %v1474, %v1506
        %s1510 = sld [smem:[#allocation9 + $0xc6]]
        %v1511 = vstv %s1510
        %v1512 = vmul.f32 %v1491, %v1511
        %v1513 = vmul.f32 %v1492, %v1511
        %v1514 = vmul.f32 %v1493, %v1511
        %v1515 = vadd.f32 %v1480, %v1512
        %v1516 = vadd.f32 %v1481, %v1513
        %v1517 = vadd.f32 %v1482, %v1514
        %s1518 = sld [smem:[#allocation9 + $0xc7]]
        %v1519 = vstv %s1518
        %v1520 = vmul.f32 %v1491, %v1519
        %v1521 = vmul.f32 %v1492, %v1519
        %v1522 = vmul.f32 %v1493, %v1519
        %v1523 = vadd.f32 %v1488, %v1520
        %v1524 = vadd.f32 %v1489, %v1521
        %v1525 = vadd.f32 %v1490, %v1522
        %v1526 = vld [vmem:[%s600] sm:$0xff]
        %v1527 = vld [vmem:[%s600 + $0x8] sm:$0xff]
        %v1528 = vld [vmem:[%s600 + $0x10] sm:$0x1]
        %s1529 = sld [smem:[#allocation9 + $0xc8]]
        %v1530 = vstv %s1529
        %v1531 = vmul.f32 %v1526, %v1530
        %v1532 = vmul.f32 %v1527, %v1530
        %v1533 = vmul.f32 %v1528, %v1530
        %v1534 = vadd.f32 %v1499, %v1531
        %v1535 = vadd.f32 %v1500, %v1532
        %v1536 = vadd.f32 %v1501, %v1533
        %s1537 = sld [smem:[#allocation9 + $0xc9]]
        %v1538 = vstv %s1537
        %v1539 = vmul.f32 %v1526, %v1538
        %v1540 = vmul.f32 %v1527, %v1538
        %v1541 = vmul.f32 %v1528, %v1538
        %v1542 = vadd.f32 %v1507, %v1539
        %v1543 = vadd.f32 %v1508, %v1540
        %v1544 = vadd.f32 %v1509, %v1541
        %s1545 = sld [smem:[#allocation9 + $0xca]]
        %v1546 = vstv %s1545
        %v1547 = vmul.f32 %v1526, %v1546
        %v1548 = vmul.f32 %v1527, %v1546
        %v1549 = vmul.f32 %v1528, %v1546
        %v1550 = vadd.f32 %v1515, %v1547
        %v1551 = vadd.f32 %v1516, %v1548
        %v1552 = vadd.f32 %v1517, %v1549
        %s1553 = sld [smem:[#allocation9 + $0xcb]]
        %v1554 = vstv %s1553
        %v1555 = vmul.f32 %v1526, %v1554
        %v1556 = vmul.f32 %v1527, %v1554
        %v1557 = vmul.f32 %v1528, %v1554
        %v1558 = vadd.f32 %v1523, %v1555
        %v1559 = vadd.f32 %v1524, %v1556
        %v1560 = vadd.f32 %v1525, %v1557
        %v1561 = vld [vmem:[%s636] sm:$0xff]
        %v1562 = vld [vmem:[%s636 + $0x8] sm:$0xff]
        %v1563 = vld [vmem:[%s636 + $0x10] sm:$0x1]
        %s1564 = sld [smem:[#allocation9 + $0xcc]]
        %v1565 = vstv %s1564
        %v1566 = vmul.f32 %v1561, %v1565
        %v1567 = vmul.f32 %v1562, %v1565
        %v1568 = vmul.f32 %v1563, %v1565
        %v1569 = vadd.f32 %v1534, %v1566
        %v1570 = vadd.f32 %v1535, %v1567
        %v1571 = vadd.f32 %v1536, %v1568
        %s1572 = sld [smem:[#allocation9 + $0xcd]]
        %v1573 = vstv %s1572
        %v1574 = vmul.f32 %v1561, %v1573
        %v1575 = vmul.f32 %v1562, %v1573
        %v1576 = vmul.f32 %v1563, %v1573
        %v1577 = vadd.f32 %v1542, %v1574
        %v1578 = vadd.f32 %v1543, %v1575
        %v1579 = vadd.f32 %v1544, %v1576
        %s1580 = sld [smem:[#allocation9 + $0xce]]
        %v1581 = vstv %s1580
        %v1582 = vmul.f32 %v1561, %v1581
        %v1583 = vmul.f32 %v1562, %v1581
        %v1584 = vmul.f32 %v1563, %v1581
        %v1585 = vadd.f32 %v1550, %v1582
        %v1586 = vadd.f32 %v1551, %v1583
        %v1587 = vadd.f32 %v1552, %v1584
        %s1588 = sld [smem:[#allocation9 + $0xcf]]
        %v1589 = vstv %s1588
        %v1590 = vmul.f32 %v1561, %v1589
        %v1591 = vmul.f32 %v1562, %v1589
        %v1592 = vmul.f32 %v1563, %v1589
        %v1593 = vadd.f32 %v1558, %v1590
        %v1594 = vadd.f32 %v1559, %v1591
        %v1595 = vadd.f32 %v1560, %v1592
        %v1596 = vld [vmem:[%s672] sm:$0xff]
        %v1597 = vld [vmem:[%s672 + $0x8] sm:$0xff]
        %v1598 = vld [vmem:[%s672 + $0x10] sm:$0x1]
        %s1599 = sld [smem:[#allocation9 + $0xd0]]
        %v1600 = vstv %s1599
        %v1601 = vmul.f32 %v1596, %v1600
        %v1602 = vmul.f32 %v1597, %v1600
        %v1603 = vmul.f32 %v1598, %v1600
        %v1604 = vadd.f32 %v1569, %v1601
        %v1605 = vadd.f32 %v1570, %v1602
        %v1606 = vadd.f32 %v1571, %v1603
        %s1607 = sld [smem:[#allocation9 + $0xd1]]
        %v1608 = vstv %s1607
        %v1609 = vmul.f32 %v1596, %v1608
        %v1610 = vmul.f32 %v1597, %v1608
        %v1611 = vmul.f32 %v1598, %v1608
        %v1612 = vadd.f32 %v1577, %v1609
        %v1613 = vadd.f32 %v1578, %v1610
        %v1614 = vadd.f32 %v1579, %v1611
        %s1615 = sld [smem:[#allocation9 + $0xd2]]
        %v1616 = vstv %s1615
        %v1617 = vmul.f32 %v1596, %v1616
        %v1618 = vmul.f32 %v1597, %v1616
        %v1619 = vmul.f32 %v1598, %v1616
        %v1620 = vadd.f32 %v1585, %v1617
        %v1621 = vadd.f32 %v1586, %v1618
        %v1622 = vadd.f32 %v1587, %v1619
        %s1623 = sld [smem:[#allocation9 + $0xd3]]
        %v1624 = vstv %s1623
        %v1625 = vmul.f32 %v1596, %v1624
        %v1626 = vmul.f32 %v1597, %v1624
        %v1627 = vmul.f32 %v1598, %v1624
        %v1628 = vadd.f32 %v1593, %v1625
        %v1629 = vadd.f32 %v1594, %v1626
        %v1630 = vadd.f32 %v1595, %v1627
        %v1631 = vld [vmem:[%s708] sm:$0xff]
        %v1632 = vld [vmem:[%s708 + $0x8] sm:$0xff]
        %v1633 = vld [vmem:[%s708 + $0x10] sm:$0x1]
        %s1634 = sld [smem:[#allocation9 + $0xd4]]
        %v1635 = vstv %s1634
        %v1636 = vmul.f32 %v1631, %v1635
        %v1637 = vmul.f32 %v1632, %v1635
        %v1638 = vmul.f32 %v1633, %v1635
        %v1639 = vadd.f32 %v1604, %v1636
        %v1640 = vadd.f32 %v1605, %v1637
        %v1641 = vadd.f32 %v1606, %v1638
        %s1642 = sld [smem:[#allocation9 + $0xd5]]
        %v1643 = vstv %s1642
        %v1644 = vmul.f32 %v1631, %v1643
        %v1645 = vmul.f32 %v1632, %v1643
        %v1646 = vmul.f32 %v1633, %v1643
        %v1647 = vadd.f32 %v1612, %v1644
        %v1648 = vadd.f32 %v1613, %v1645
        %v1649 = vadd.f32 %v1614, %v1646
        %s1650 = sld [smem:[#allocation9 + $0xd6]]
        %v1651 = vstv %s1650
        %v1652 = vmul.f32 %v1631, %v1651
        %v1653 = vmul.f32 %v1632, %v1651
        %v1654 = vmul.f32 %v1633, %v1651
        %v1655 = vadd.f32 %v1620, %v1652
        %v1656 = vadd.f32 %v1621, %v1653
        %v1657 = vadd.f32 %v1622, %v1654
        %s1658 = sld [smem:[#allocation9 + $0xd7]]
        %v1659 = vstv %s1658
        %v1660 = vmul.f32 %v1631, %v1659
        %v1661 = vmul.f32 %v1632, %v1659
        %v1662 = vmul.f32 %v1633, %v1659
        %v1663 = vadd.f32 %v1628, %v1660
        %v1664 = vadd.f32 %v1629, %v1661
        %v1665 = vadd.f32 %v1630, %v1662
        %v1666 = vld [vmem:[%s744] sm:$0xff]
        %v1667 = vld [vmem:[%s744 + $0x8] sm:$0xff]
        %v1668 = vld [vmem:[%s744 + $0x10] sm:$0x1]
        %s1669 = sld [smem:[#allocation9 + $0xd8]]
        %v1670 = vstv %s1669
        %v1671 = vmul.f32 %v1666, %v1670
        %v1672 = vmul.f32 %v1667, %v1670
        %v1673 = vmul.f32 %v1668, %v1670
        %v1674 = vadd.f32 %v1639, %v1671
        %v1675 = vadd.f32 %v1640, %v1672
        %v1676 = vadd.f32 %v1641, %v1673
        %s1677 = sld [smem:[#allocation9 + $0xd9]]
        %v1678 = vstv %s1677
        %v1679 = vmul.f32 %v1666, %v1678
        %v1680 = vmul.f32 %v1667, %v1678
        %v1681 = vmul.f32 %v1668, %v1678
        %v1682 = vadd.f32 %v1647, %v1679
        %v1683 = vadd.f32 %v1648, %v1680
        %v1684 = vadd.f32 %v1649, %v1681
        %s1685 = sld [smem:[#allocation9 + $0xda]]
        %v1686 = vstv %s1685
        %v1687 = vmul.f32 %v1666, %v1686
        %v1688 = vmul.f32 %v1667, %v1686
        %v1689 = vmul.f32 %v1668, %v1686
        %v1690 = vadd.f32 %v1655, %v1687
        %v1691 = vadd.f32 %v1656, %v1688
        %v1692 = vadd.f32 %v1657, %v1689
        %s1693 = sld [smem:[#allocation9 + $0xdb]]
        %v1694 = vstv %s1693
        %v1695 = vmul.f32 %v1666, %v1694
        %v1696 = vmul.f32 %v1667, %v1694
        %v1697 = vmul.f32 %v1668, %v1694
        %v1698 = vadd.f32 %v1663, %v1695
        %v1699 = vadd.f32 %v1664, %v1696
        %v1700 = vadd.f32 %v1665, %v1697
        %v1701 = vld [vmem:[%s780] sm:$0xff]
        %v1702 = vld [vmem:[%s780 + $0x8] sm:$0xff]
        %v1703 = vld [vmem:[%s780 + $0x10] sm:$0x1]
        %s1704 = sld [smem:[#allocation9 + $0xdc]]
        %v1705 = vstv %s1704
        %v1706 = vmul.f32 %v1701, %v1705
        %v1707 = vmul.f32 %v1702, %v1705
        %v1708 = vmul.f32 %v1703, %v1705
        %v1709 = vadd.f32 %v1674, %v1706
        %v1710 = vadd.f32 %v1675, %v1707
        %v1711 = vadd.f32 %v1676, %v1708
        %s1712 = sld [smem:[#allocation9 + $0xdd]]
        %v1713 = vstv %s1712
        %v1714 = vmul.f32 %v1701, %v1713
        %v1715 = vmul.f32 %v1702, %v1713
        %v1716 = vmul.f32 %v1703, %v1713
        %v1717 = vadd.f32 %v1682, %v1714
        %v1718 = vadd.f32 %v1683, %v1715
        %v1719 = vadd.f32 %v1684, %v1716
        %s1720 = sld [smem:[#allocation9 + $0xde]]
        %v1721 = vstv %s1720
        %v1722 = vmul.f32 %v1701, %v1721
        %v1723 = vmul.f32 %v1702, %v1721
        %v1724 = vmul.f32 %v1703, %v1721
        %v1725 = vadd.f32 %v1690, %v1722
        %v1726 = vadd.f32 %v1691, %v1723
        %v1727 = vadd.f32 %v1692, %v1724
        %s1728 = sld [smem:[#allocation9 + $0xdf]]
        %v1729 = vstv %s1728
        %v1730 = vmul.f32 %v1701, %v1729
        %v1731 = vmul.f32 %v1702, %v1729
        %v1732 = vmul.f32 %v1703, %v1729
        %v1733 = vadd.f32 %v1698, %v1730
        %v1734 = vadd.f32 %v1699, %v1731
        %v1735 = vadd.f32 %v1700, %v1732
        %s1736 = sld [smem:[#allocation9 + $0x100]]
        %v1737 = vstv %s1736
        %v1738 = vmul.f32 %v1456, %v1737
        %v1739 = vmul.f32 %v1457, %v1737
        %v1740 = vmul.f32 %v1458, %v1737
        %1744 = vrot.lane.b32.xlu0 %v1738, 1
        %v1745 = vpop.permute.xlu0 %1744
        %1746 = vrot.lane.b32.xlu0 %v1739, 1
        %v1747 = vpop.permute.xlu0 %1746
        %1748 = vrot.lane.b32.xlu0 %v1740, 1
        %v1749 = vpop.permute.xlu0 %1748
        %v1753 = vadd.f32 %v1709, %v1745
        %v1754 = vadd.f32 %v1710, %v1747
        %v1755 = vadd.f32 %v1711, %v1749
        %s1756 = sld [smem:[#allocation9 + $0x101]]
        %v1757 = vstv %s1756
        %v1758 = vmul.f32 %v1456, %v1757
        %v1759 = vmul.f32 %v1457, %v1757
        %v1760 = vmul.f32 %v1458, %v1757
        %1764 = vrot.lane.b32.xlu0 %v1758, 1
        %v1765 = vpop.permute.xlu0 %1764
        %1766 = vrot.lane.b32.xlu0 %v1759, 1
        %v1767 = vpop.permute.xlu0 %1766
        %1768 = vrot.lane.b32.xlu0 %v1760, 1
        %v1769 = vpop.permute.xlu0 %1768
        %v1773 = vadd.f32 %v1717, %v1765
        %v1774 = vadd.f32 %v1718, %v1767
        %v1775 = vadd.f32 %v1719, %v1769
        %s1776 = sld [smem:[#allocation9 + $0x102]]
        %v1777 = vstv %s1776
        %v1778 = vmul.f32 %v1456, %v1777
        %v1779 = vmul.f32 %v1457, %v1777
        %v1780 = vmul.f32 %v1458, %v1777
        %1784 = vrot.lane.b32.xlu0 %v1778, 1
        %v1785 = vpop.permute.xlu0 %1784
        %1786 = vrot.lane.b32.xlu0 %v1779, 1
        %v1787 = vpop.permute.xlu0 %1786
        %1788 = vrot.lane.b32.xlu0 %v1780, 1
        %v1789 = vpop.permute.xlu0 %1788
        %v1793 = vadd.f32 %v1725, %v1785
        %v1794 = vadd.f32 %v1726, %v1787
        %v1795 = vadd.f32 %v1727, %v1789
        %s1796 = sld [smem:[#allocation9 + $0x103]]
        %v1797 = vstv %s1796
        %v1798 = vmul.f32 %v1456, %v1797
        %v1799 = vmul.f32 %v1457, %v1797
        %v1800 = vmul.f32 %v1458, %v1797
        %1804 = vrot.lane.b32.xlu0 %v1798, 1
        %v1805 = vpop.permute.xlu0 %1804
        %1806 = vrot.lane.b32.xlu0 %v1799, 1
        %v1807 = vpop.permute.xlu0 %1806
        %1808 = vrot.lane.b32.xlu0 %v1800, 1
        %v1809 = vpop.permute.xlu0 %1808
        %v1813 = vadd.f32 %v1733, %v1805
        %v1814 = vadd.f32 %v1734, %v1807
        %v1815 = vadd.f32 %v1735, %v1809
        %s1816 = sld [smem:[#allocation9 + $0x104]]
        %v1817 = vstv %s1816
        %v1818 = vmul.f32 %v1491, %v1817
        %v1819 = vmul.f32 %v1492, %v1817
        %v1820 = vmul.f32 %v1493, %v1817
        %1824 = vrot.lane.b32.xlu0 %v1818, 1
        %v1825 = vpop.permute.xlu0 %1824
        %1826 = vrot.lane.b32.xlu0 %v1819, 1
        %v1827 = vpop.permute.xlu0 %1826
        %1828 = vrot.lane.b32.xlu0 %v1820, 1
        %v1829 = vpop.permute.xlu0 %1828
        %v1833 = vadd.f32 %v1753, %v1825
        %v1834 = vadd.f32 %v1754, %v1827
        %v1835 = vadd.f32 %v1755, %v1829
        %s1836 = sld [smem:[#allocation9 + $0x105]]
        %v1837 = vstv %s1836
        %v1838 = vmul.f32 %v1491, %v1837
        %v1839 = vmul.f32 %v1492, %v1837
        %v1840 = vmul.f32 %v1493, %v1837
        %1844 = vrot.lane.b32.xlu0 %v1838, 1
        %v1845 = vpop.permute.xlu0 %1844
        %1846 = vrot.lane.b32.xlu0 %v1839, 1
        %v1847 = vpop.permute.xlu0 %1846
        %1848 = vrot.lane.b32.xlu0 %v1840, 1
        %v1849 = vpop.permute.xlu0 %1848
        %v1853 = vadd.f32 %v1773, %v1845
        %v1854 = vadd.f32 %v1774, %v1847
        %v1855 = vadd.f32 %v1775, %v1849
        %s1856 = sld [smem:[#allocation9 + $0x106]]
        %v1857 = vstv %s1856
        %v1858 = vmul.f32 %v1491, %v1857
        %v1859 = vmul.f32 %v1492, %v1857
        %v1860 = vmul.f32 %v1493, %v1857
        %1864 = vrot.lane.b32.xlu0 %v1858, 1
        %v1865 = vpop.permute.xlu0 %1864
        %1866 = vrot.lane.b32.xlu0 %v1859, 1
        %v1867 = vpop.permute.xlu0 %1866
        %1868 = vrot.lane.b32.xlu0 %v1860, 1
        %v1869 = vpop.permute.xlu0 %1868
        %v1873 = vadd.f32 %v1793, %v1865
        %v1874 = vadd.f32 %v1794, %v1867
        %v1875 = vadd.f32 %v1795, %v1869
        %s1876 = sld [smem:[#allocation9 + $0x107]]
        %v1877 = vstv %s1876
        %v1878 = vmul.f32 %v1491, %v1877
        %v1879 = vmul.f32 %v1492, %v1877
        %v1880 = vmul.f32 %v1493, %v1877
        %1884 = vrot.lane.b32.xlu0 %v1878, 1
        %v1885 = vpop.permute.xlu0 %1884
        %1886 = vrot.lane.b32.xlu0 %v1879, 1
        %v1887 = vpop.permute.xlu0 %1886
        %1888 = vrot.lane.b32.xlu0 %v1880, 1
        %v1889 = vpop.permute.xlu0 %1888
        %v1893 = vadd.f32 %v1813, %v1885
        %v1894 = vadd.f32 %v1814, %v1887
        %v1895 = vadd.f32 %v1815, %v1889
        %s1896 = sld [smem:[#allocation9 + $0x108]]
        %v1897 = vstv %s1896
        %v1898 = vmul.f32 %v1526, %v1897
        %v1899 = vmul.f32 %v1527, %v1897
        %v1900 = vmul.f32 %v1528, %v1897
        %1904 = vrot.lane.b32.xlu0 %v1898, 1
        %v1905 = vpop.permute.xlu0 %1904
        %1906 = vrot.lane.b32.xlu0 %v1899, 1
        %v1907 = vpop.permute.xlu0 %1906
        %1908 = vrot.lane.b32.xlu0 %v1900, 1
        %v1909 = vpop.permute.xlu0 %1908
        %v1913 = vadd.f32 %v1833, %v1905
        %v1914 = vadd.f32 %v1834, %v1907
        %v1915 = vadd.f32 %v1835, %v1909
        %s1916 = sld [smem:[#allocation9 + $0x109]]
        %v1917 = vstv %s1916
        %v1918 = vmul.f32 %v1526, %v1917
        %v1919 = vmul.f32 %v1527, %v1917
        %v1920 = vmul.f32 %v1528, %v1917
        %1924 = vrot.lane.b32.xlu0 %v1918, 1
        %v1925 = vpop.permute.xlu0 %1924
        %1926 = vrot.lane.b32.xlu0 %v1919, 1
        %v1927 = vpop.permute.xlu0 %1926
        %1928 = vrot.lane.b32.xlu0 %v1920, 1
        %v1929 = vpop.permute.xlu0 %1928
        %v1933 = vadd.f32 %v1853, %v1925
        %v1934 = vadd.f32 %v1854, %v1927
        %v1935 = vadd.f32 %v1855, %v1929
        %s1936 = sld [smem:[#allocation9 + $0x10a]]
        %v1937 = vstv %s1936
        %v1938 = vmul.f32 %v1526, %v1937
        %v1939 = vmul.f32 %v1527, %v1937
        %v1940 = vmul.f32 %v1528, %v1937
        %1944 = vrot.lane.b32.xlu0 %v1938, 1
        %v1945 = vpop.permute.xlu0 %1944
        %1946 = vrot.lane.b32.xlu0 %v1939, 1
        %v1947 = vpop.permute.xlu0 %1946
        %1948 = vrot.lane.b32.xlu0 %v1940, 1
        %v1949 = vpop.permute.xlu0 %1948
        %v1953 = vadd.f32 %v1873, %v1945
        %v1954 = vadd.f32 %v1874, %v1947
        %v1955 = vadd.f32 %v1875, %v1949
        %s1956 = sld [smem:[#allocation9 + $0x10b]]
        %v1957 = vstv %s1956
        %v1958 = vmul.f32 %v1526, %v1957
        %v1959 = vmul.f32 %v1527, %v1957
        %v1960 = vmul.f32 %v1528, %v1957
        %1964 = vrot.lane.b32.xlu0 %v1958, 1
        %v1965 = vpop.permute.xlu0 %1964
        %1966 = vrot.lane.b32.xlu0 %v1959, 1
        %v1967 = vpop.permute.xlu0 %1966
        %1968 = vrot.lane.b32.xlu0 %v1960, 1
        %v1969 = vpop.permute.xlu0 %1968
        %v1973 = vadd.f32 %v1893, %v1965
        %v1974 = vadd.f32 %v1894, %v1967
        %v1975 = vadd.f32 %v1895, %v1969
        %s1976 = sld [smem:[#allocation9 + $0x10c]]
        %v1977 = vstv %s1976
        %v1978 = vmul.f32 %v1561, %v1977
        %v1979 = vmul.f32 %v1562, %v1977
        %v1980 = vmul.f32 %v1563, %v1977
        %1984 = vrot.lane.b32.xlu0 %v1978, 1
        %v1985 = vpop.permute.xlu0 %1984
        %1986 = vrot.lane.b32.xlu0 %v1979, 1
        %v1987 = vpop.permute.xlu0 %1986
        %1988 = vrot.lane.b32.xlu0 %v1980, 1
        %v1989 = vpop.permute.xlu0 %1988
        %v1993 = vadd.f32 %v1913, %v1985
        %v1994 = vadd.f32 %v1914, %v1987
        %v1995 = vadd.f32 %v1915, %v1989
        %s1996 = sld [smem:[#allocation9 + $0x10d]]
        %v1997 = vstv %s1996
        %v1998 = vmul.f32 %v1561, %v1997
        %v1999 = vmul.f32 %v1562, %v1997
        %v2000 = vmul.f32 %v1563, %v1997
        %2004 = vrot.lane.b32.xlu0 %v1998, 1
        %v2005 = vpop.permute.xlu0 %2004
        %2006 = vrot.lane.b32.xlu0 %v1999, 1
        %v2007 = vpop.permute.xlu0 %2006
        %2008 = vrot.lane.b32.xlu0 %v2000, 1
        %v2009 = vpop.permute.xlu0 %2008
        %v2013 = vadd.f32 %v1933, %v2005
        %v2014 = vadd.f32 %v1934, %v2007
        %v2015 = vadd.f32 %v1935, %v2009
        %s2016 = sld [smem:[#allocation9 + $0x10e]]
        %v2017 = vstv %s2016
        %v2018 = vmul.f32 %v1561, %v2017
        %v2019 = vmul.f32 %v1562, %v2017
        %v2020 = vmul.f32 %v1563, %v2017
        %2024 = vrot.lane.b32.xlu0 %v2018, 1
        %v2025 = vpop.permute.xlu0 %2024
        %2026 = vrot.lane.b32.xlu0 %v2019, 1
        %v2027 = vpop.permute.xlu0 %2026
        %2028 = vrot.lane.b32.xlu0 %v2020, 1
        %v2029 = vpop.permute.xlu0 %2028
        %v2033 = vadd.f32 %v1953, %v2025
        %v2034 = vadd.f32 %v1954, %v2027
        %v2035 = vadd.f32 %v1955, %v2029
        %s2036 = sld [smem:[#allocation9 + $0x10f]]
        %v2037 = vstv %s2036
        %v2038 = vmul.f32 %v1561, %v2037
        %v2039 = vmul.f32 %v1562, %v2037
        %v2040 = vmul.f32 %v1563, %v2037
        %2044 = vrot.lane.b32.xlu0 %v2038, 1
        %v2045 = vpop.permute.xlu0 %2044
        %2046 = vrot.lane.b32.xlu0 %v2039, 1
        %v2047 = vpop.permute.xlu0 %2046
        %2048 = vrot.lane.b32.xlu0 %v2040, 1
        %v2049 = vpop.permute.xlu0 %2048
        %v2053 = vadd.f32 %v1973, %v2045
        %v2054 = vadd.f32 %v1974, %v2047
        %v2055 = vadd.f32 %v1975, %v2049
        %s2056 = sld [smem:[#allocation9 + $0x110]]
        %v2057 = vstv %s2056
        %v2058 = vmul.f32 %v1596, %v2057
        %v2059 = vmul.f32 %v1597, %v2057
        %v2060 = vmul.f32 %v1598, %v2057
        %2064 = vrot.lane.b32.xlu0 %v2058, 1
        %v2065 = vpop.permute.xlu0 %2064
        %2066 = vrot.lane.b32.xlu0 %v2059, 1
        %v2067 = vpop.permute.xlu0 %2066
        %2068 = vrot.lane.b32.xlu0 %v2060, 1
        %v2069 = vpop.permute.xlu0 %2068
        %v2073 = vadd.f32 %v1993, %v2065
        %v2074 = vadd.f32 %v1994, %v2067
        %v2075 = vadd.f32 %v1995, %v2069
        %s2076 = sld [smem:[#allocation9 + $0x111]]
        %v2077 = vstv %s2076
        %v2078 = vmul.f32 %v1596, %v2077
        %v2079 = vmul.f32 %v1597, %v2077
        %v2080 = vmul.f32 %v1598, %v2077
        %2084 = vrot.lane.b32.xlu0 %v2078, 1
        %v2085 = vpop.permute.xlu0 %2084
        %2086 = vrot.lane.b32.xlu0 %v2079, 1
        %v2087 = vpop.permute.xlu0 %2086
        %2088 = vrot.lane.b32.xlu0 %v2080, 1
        %v2089 = vpop.permute.xlu0 %2088
        %v2093 = vadd.f32 %v2013, %v2085
        %v2094 = vadd.f32 %v2014, %v2087
        %v2095 = vadd.f32 %v2015, %v2089
        %s2096 = sld [smem:[#allocation9 + $0x112]]
        %v2097 = vstv %s2096
        %v2098 = vmul.f32 %v1596, %v2097
        %v2099 = vmul.f32 %v1597, %v2097
        %v2100 = vmul.f32 %v1598, %v2097
        %2104 = vrot.lane.b32.xlu0 %v2098, 1
        %v2105 = vpop.permute.xlu0 %2104
        %2106 = vrot.lane.b32.xlu0 %v2099, 1
        %v2107 = vpop.permute.xlu0 %2106
        %2108 = vrot.lane.b32.xlu0 %v2100, 1
        %v2109 = vpop.permute.xlu0 %2108
        %v2113 = vadd.f32 %v2033, %v2105
        %v2114 = vadd.f32 %v2034, %v2107
        %v2115 = vadd.f32 %v2035, %v2109
        %s2116 = sld [smem:[#allocation9 + $0x113]]
        %v2117 = vstv %s2116
        %v2118 = vmul.f32 %v1596, %v2117
        %v2119 = vmul.f32 %v1597, %v2117
        %v2120 = vmul.f32 %v1598, %v2117
        %2124 = vrot.lane.b32.xlu0 %v2118, 1
        %v2125 = vpop.permute.xlu0 %2124
        %2126 = vrot.lane.b32.xlu0 %v2119, 1
        %v2127 = vpop.permute.xlu0 %2126
        %2128 = vrot.lane.b32.xlu0 %v2120, 1
        %v2129 = vpop.permute.xlu0 %2128
        %v2133 = vadd.f32 %v2053, %v2125
        %v2134 = vadd.f32 %v2054, %v2127
        %v2135 = vadd.f32 %v2055, %v2129
        %s2136 = sld [smem:[#allocation9 + $0x114]]
        %v2137 = vstv %s2136
        %v2138 = vmul.f32 %v1631, %v2137
        %v2139 = vmul.f32 %v1632, %v2137
        %v2140 = vmul.f32 %v1633, %v2137
        %2144 = vrot.lane.b32.xlu0 %v2138, 1
        %v2145 = vpop.permute.xlu0 %2144
        %2146 = vrot.lane.b32.xlu0 %v2139, 1
        %v2147 = vpop.permute.xlu0 %2146
        %2148 = vrot.lane.b32.xlu0 %v2140, 1
        %v2149 = vpop.permute.xlu0 %2148
        %v2153 = vadd.f32 %v2073, %v2145
        %v2154 = vadd.f32 %v2074, %v2147
        %v2155 = vadd.f32 %v2075, %v2149
        %s2156 = sld [smem:[#allocation9 + $0x115]]
        %v2157 = vstv %s2156
        %v2158 = vmul.f32 %v1631, %v2157
        %v2159 = vmul.f32 %v1632, %v2157
        %v2160 = vmul.f32 %v1633, %v2157
        %2164 = vrot.lane.b32.xlu0 %v2158, 1
        %v2165 = vpop.permute.xlu0 %2164
        %2166 = vrot.lane.b32.xlu0 %v2159, 1
        %v2167 = vpop.permute.xlu0 %2166
        %2168 = vrot.lane.b32.xlu0 %v2160, 1
        %v2169 = vpop.permute.xlu0 %2168
        %v2173 = vadd.f32 %v2093, %v2165
        %v2174 = vadd.f32 %v2094, %v2167
        %v2175 = vadd.f32 %v2095, %v2169
        %s2176 = sld [smem:[#allocation9 + $0x116]]
        %v2177 = vstv %s2176
        %v2178 = vmul.f32 %v1631, %v2177
        %v2179 = vmul.f32 %v1632, %v2177
        %v2180 = vmul.f32 %v1633, %v2177
        %2184 = vrot.lane.b32.xlu0 %v2178, 1
        %v2185 = vpop.permute.xlu0 %2184
        %2186 = vrot.lane.b32.xlu0 %v2179, 1
        %v2187 = vpop.permute.xlu0 %2186
        %2188 = vrot.lane.b32.xlu0 %v2180, 1
        %v2189 = vpop.permute.xlu0 %2188
        %v2193 = vadd.f32 %v2113, %v2185
        %v2194 = vadd.f32 %v2114, %v2187
        %v2195 = vadd.f32 %v2115, %v2189
        %s2196 = sld [smem:[#allocation9 + $0x117]]
        %v2197 = vstv %s2196
        %v2198 = vmul.f32 %v1631, %v2197
        %v2199 = vmul.f32 %v1632, %v2197
        %v2200 = vmul.f32 %v1633, %v2197
        %2204 = vrot.lane.b32.xlu0 %v2198, 1
        %v2205 = vpop.permute.xlu0 %2204
        %2206 = vrot.lane.b32.xlu0 %v2199, 1
        %v2207 = vpop.permute.xlu0 %2206
        %2208 = vrot.lane.b32.xlu0 %v2200, 1
        %v2209 = vpop.permute.xlu0 %2208
        %v2213 = vadd.f32 %v2133, %v2205
        %v2214 = vadd.f32 %v2134, %v2207
        %v2215 = vadd.f32 %v2135, %v2209
        %s2216 = sld [smem:[#allocation9 + $0x118]]
        %v2217 = vstv %s2216
        %v2218 = vmul.f32 %v1666, %v2217
        %v2219 = vmul.f32 %v1667, %v2217
        %v2220 = vmul.f32 %v1668, %v2217
        %2224 = vrot.lane.b32.xlu0 %v2218, 1
        %v2225 = vpop.permute.xlu0 %2224
        %2226 = vrot.lane.b32.xlu0 %v2219, 1
        %v2227 = vpop.permute.xlu0 %2226
        %2228 = vrot.lane.b32.xlu0 %v2220, 1
        %v2229 = vpop.permute.xlu0 %2228
        %v2233 = vadd.f32 %v2153, %v2225
        %v2234 = vadd.f32 %v2154, %v2227
        %v2235 = vadd.f32 %v2155, %v2229
        %s2236 = sld [smem:[#allocation9 + $0x119]]
        %v2237 = vstv %s2236
        %v2238 = vmul.f32 %v1666, %v2237
        %v2239 = vmul.f32 %v1667, %v2237
        %v2240 = vmul.f32 %v1668, %v2237
        %2244 = vrot.lane.b32.xlu0 %v2238, 1
        %v2245 = vpop.permute.xlu0 %2244
        %2246 = vrot.lane.b32.xlu0 %v2239, 1
        %v2247 = vpop.permute.xlu0 %2246
        %2248 = vrot.lane.b32.xlu0 %v2240, 1
        %v2249 = vpop.permute.xlu0 %2248
        %v2253 = vadd.f32 %v2173, %v2245
        %v2254 = vadd.f32 %v2174, %v2247
        %v2255 = vadd.f32 %v2175, %v2249
        %s2256 = sld [smem:[#allocation9 + $0x11a]]
        %v2257 = vstv %s2256
        %v2258 = vmul.f32 %v1666, %v2257
        %v2259 = vmul.f32 %v1667, %v2257
        %v2260 = vmul.f32 %v1668, %v2257
        %2264 = vrot.lane.b32.xlu0 %v2258, 1
        %v2265 = vpop.permute.xlu0 %2264
        %2266 = vrot.lane.b32.xlu0 %v2259, 1
        %v2267 = vpop.permute.xlu0 %2266
        %2268 = vrot.lane.b32.xlu0 %v2260, 1
        %v2269 = vpop.permute.xlu0 %2268
        %v2273 = vadd.f32 %v2193, %v2265
        %v2274 = vadd.f32 %v2194, %v2267
        %v2275 = vadd.f32 %v2195, %v2269
        %s2276 = sld [smem:[#allocation9 + $0x11b]]
        %v2277 = vstv %s2276
        %v2278 = vmul.f32 %v1666, %v2277
        %v2279 = vmul.f32 %v1667, %v2277
        %v2280 = vmul.f32 %v1668, %v2277
        %2284 = vrot.lane.b32.xlu0 %v2278, 1
        %v2285 = vpop.permute.xlu0 %2284
        %2286 = vrot.lane.b32.xlu0 %v2279, 1
        %v2287 = vpop.permute.xlu0 %2286
        %2288 = vrot.lane.b32.xlu0 %v2280, 1
        %v2289 = vpop.permute.xlu0 %2288
        %v2293 = vadd.f32 %v2213, %v2285
        %v2294 = vadd.f32 %v2214, %v2287
        %v2295 = vadd.f32 %v2215, %v2289
        %s2296 = sld [smem:[#allocation9 + $0x11c]]
        %v2297 = vstv %s2296
        %v2298 = vmul.f32 %v1701, %v2297
        %v2299 = vmul.f32 %v1702, %v2297
        %v2300 = vmul.f32 %v1703, %v2297
        %2304 = vrot.lane.b32.xlu0 %v2298, 1
        %v2305 = vpop.permute.xlu0 %2304
        %2306 = vrot.lane.b32.xlu0 %v2299, 1
        %v2307 = vpop.permute.xlu0 %2306
        %2308 = vrot.lane.b32.xlu0 %v2300, 1
        %v2309 = vpop.permute.xlu0 %2308
        %v2313 = vadd.f32 %v2233, %v2305
        %v2314 = vadd.f32 %v2234, %v2307
        %v2315 = vadd.f32 %v2235, %v2309
        %s2316 = sld [smem:[#allocation9 + $0x11d]]
        %v2317 = vstv %s2316
        %v2318 = vmul.f32 %v1701, %v2317
        %v2319 = vmul.f32 %v1702, %v2317
        %v2320 = vmul.f32 %v1703, %v2317
        %2324 = vrot.lane.b32.xlu0 %v2318, 1
        %v2325 = vpop.permute.xlu0 %2324
        %2326 = vrot.lane.b32.xlu0 %v2319, 1
        %v2327 = vpop.permute.xlu0 %2326
        %2328 = vrot.lane.b32.xlu0 %v2320, 1
        %v2329 = vpop.permute.xlu0 %2328
        %v2333 = vadd.f32 %v2253, %v2325
        %v2334 = vadd.f32 %v2254, %v2327
        %v2335 = vadd.f32 %v2255, %v2329
        %s2336 = sld [smem:[#allocation9 + $0x11e]]
        %v2337 = vstv %s2336
        %v2338 = vmul.f32 %v1701, %v2337
        %v2339 = vmul.f32 %v1702, %v2337
        %v2340 = vmul.f32 %v1703, %v2337
        %2344 = vrot.lane.b32.xlu0 %v2338, 1
        %v2345 = vpop.permute.xlu0 %2344
        %2346 = vrot.lane.b32.xlu0 %v2339, 1
        %v2347 = vpop.permute.xlu0 %2346
        %2348 = vrot.lane.b32.xlu0 %v2340, 1
        %v2349 = vpop.permute.xlu0 %2348
        %v2353 = vadd.f32 %v2273, %v2345
        %v2354 = vadd.f32 %v2274, %v2347
        %v2355 = vadd.f32 %v2275, %v2349
        %s2356 = sld [smem:[#allocation9 + $0x11f]]
        %v2357 = vstv %s2356
        %v2358 = vmul.f32 %v1701, %v2357
        %v2359 = vmul.f32 %v1702, %v2357
        %v2360 = vmul.f32 %v1703, %v2357
        %2364 = vrot.lane.b32.xlu0 %v2358, 1
        %v2365 = vpop.permute.xlu0 %2364
        %2366 = vrot.lane.b32.xlu0 %v2359, 1
        %v2367 = vpop.permute.xlu0 %2366
        %2368 = vrot.lane.b32.xlu0 %v2360, 1
        %v2369 = vpop.permute.xlu0 %2368
        %v2373 = vadd.f32 %v2293, %v2365
        %v2374 = vadd.f32 %v2294, %v2367
        %v2375 = vadd.f32 %v2295, %v2369
        %s2376 = sld [smem:[#allocation10]]
        %v2377 = vstv %s2376
        %v2378 = vadd.f32 %v2313, %v2377
        %v2379 = vadd.f32 %v2314, %v2377
        %v2380 = vadd.f32 %v2315, %v2377
        %v2381 = vmax.f32 %v2378, 0.0
        %v2382 = vmax.f32 %v2379, 0.0
        %v2383 = vmax.f32 %v2380, 0.0
        %s2384 = sld [smem:[#allocation10 + $0x1]]
        %v2385 = vstv %s2384
        %v2386 = vadd.f32 %v2333, %v2385
        %v2387 = vadd.f32 %v2334, %v2385
        %v2388 = vadd.f32 %v2335, %v2385
        %v2389 = vmax.f32 %v2386, 0.0
        %v2390 = vmax.f32 %v2387, 0.0
        %v2391 = vmax.f32 %v2388, 0.0
        %s2392 = sld [smem:[#allocation10 + $0x2]]
        %v2393 = vstv %s2392
        %v2394 = vadd.f32 %v2353, %v2393
        %v2395 = vadd.f32 %v2354, %v2393
        %v2396 = vadd.f32 %v2355, %v2393
        %v2397 = vmax.f32 %v2394, 0.0
        %v2398 = vmax.f32 %v2395, 0.0
        %v2399 = vmax.f32 %v2396, 0.0
        %s2400 = sld [smem:[#allocation10 + $0x3]]
        %v2401 = vstv %s2400
        %v2402 = vadd.f32 %v2373, %v2401
        %v2403 = vadd.f32 %v2374, %v2401
        %v2404 = vadd.f32 %v2375, %v2401
        %v2405 = vmax.f32 %v2402, 0.0
        %v2406 = vmax.f32 %v2403, 0.0
        %v2407 = vmax.f32 %v2404, 0.0
        %s2408 = sld [smem:[#allocation9 + $0x20]]
        %v2409 = vstv %s2408
        %v2410 = vmul.f32 %v529, %v2409
        %v2411 = vmul.f32 %v530, %v2409
        %v2412 = vmul.f32 %v531, %v2409
        %v2413 = vadd.f32 %v2410, 0.0
        %v2414 = vadd.f32 %v2411, 0.0
        %v2415 = vadd.f32 %v2412, 0.0
        %s2416 = sld [smem:[#allocation9 + $0x21]]
        %v2417 = vstv %s2416
        %v2418 = vmul.f32 %v529, %v2417
        %v2419 = vmul.f32 %v530, %v2417
        %v2420 = vmul.f32 %v531, %v2417
        %v2421 = vadd.f32 %v2418, 0.0
        %v2422 = vadd.f32 %v2419, 0.0
        %v2423 = vadd.f32 %v2420, 0.0
        %s2424 = sld [smem:[#allocation9 + $0x22]]
        %v2425 = vstv %s2424
        %v2426 = vmul.f32 %v529, %v2425
        %v2427 = vmul.f32 %v530, %v2425
        %v2428 = vmul.f32 %v531, %v2425
        %v2429 = vadd.f32 %v2426, 0.0
        %v2430 = vadd.f32 %v2427, 0.0
        %v2431 = vadd.f32 %v2428, 0.0
        %s2432 = sld [smem:[#allocation9 + $0x23]]
        %v2433 = vstv %s2432
        %v2434 = vmul.f32 %v529, %v2433
        %v2435 = vmul.f32 %v530, %v2433
        %v2436 = vmul.f32 %v531, %v2433
        %v2437 = vadd.f32 %v2434, 0.0
        %v2438 = vadd.f32 %v2435, 0.0
        %v2439 = vadd.f32 %v2436, 0.0
        %s2440 = sld [smem:[#allocation9 + $0x24]]
        %v2441 = vstv %s2440
        %v2442 = vmul.f32 %v565, %v2441
        %v2443 = vmul.f32 %v566, %v2441
        %v2444 = vmul.f32 %v567, %v2441
        %v2445 = vadd.f32 %v2413, %v2442
        %v2446 = vadd.f32 %v2414, %v2443
        %v2447 = vadd.f32 %v2415, %v2444
        %s2448 = sld [smem:[#allocation9 + $0x25]]
        %v2449 = vstv %s2448
        %v2450 = vmul.f32 %v565, %v2449
        %v2451 = vmul.f32 %v566, %v2449
        %v2452 = vmul.f32 %v567, %v2449
        %v2453 = vadd.f32 %v2421, %v2450
        %v2454 = vadd.f32 %v2422, %v2451
        %v2455 = vadd.f32 %v2423, %v2452
        %s2456 = sld [smem:[#allocation9 + $0x26]]
        %v2457 = vstv %s2456
        %v2458 = vmul.f32 %v565, %v2457
        %v2459 = vmul.f32 %v566, %v2457
        %v2460 = vmul.f32 %v567, %v2457
        %v2461 = vadd.f32 %v2429, %v2458
        %v2462 = vadd.f32 %v2430, %v2459
        %v2463 = vadd.f32 %v2431, %v2460
        %s2464 = sld [smem:[#allocation9 + $0x27]]
        %v2465 = vstv %s2464
        %v2466 = vmul.f32 %v565, %v2465
        %v2467 = vmul.f32 %v566, %v2465
        %v2468 = vmul.f32 %v567, %v2465
        %v2469 = vadd.f32 %v2437, %v2466
        %v2470 = vadd.f32 %v2438, %v2467
        %v2471 = vadd.f32 %v2439, %v2468
        %s2472 = sld [smem:[#allocation9 + $0x28]]
        %v2473 = vstv %s2472
        %v2474 = vmul.f32 %v601, %v2473
        %v2475 = vmul.f32 %v602, %v2473
        %v2476 = vmul.f32 %v603, %v2473
        %v2477 = vadd.f32 %v2445, %v2474
        %v2478 = vadd.f32 %v2446, %v2475
        %v2479 = vadd.f32 %v2447, %v2476
        %s2480 = sld [smem:[#allocation9 + $0x29]]
        %v2481 = vstv %s2480
        %v2482 = vmul.f32 %v601, %v2481
        %v2483 = vmul.f32 %v602, %v2481
        %v2484 = vmul.f32 %v603, %v2481
        %v2485 = vadd.f32 %v2453, %v2482
        %v2486 = vadd.f32 %v2454, %v2483
        %v2487 = vadd.f32 %v2455, %v2484
        %s2488 = sld [smem:[#allocation9 + $0x2a]]
        %v2489 = vstv %s2488
        %v2490 = vmul.f32 %v601, %v2489
        %v2491 = vmul.f32 %v602, %v2489
        %v2492 = vmul.f32 %v603, %v2489
        %v2493 = vadd.f32 %v2461, %v2490
        %v2494 = vadd.f32 %v2462, %v2491
        %v2495 = vadd.f32 %v2463, %v2492
        %s2496 = sld [smem:[#allocation9 + $0x2b]]
        %v2497 = vstv %s2496
        %v2498 = vmul.f32 %v601, %v2497
        %v2499 = vmul.f32 %v602, %v2497
        %v2500 = vmul.f32 %v603, %v2497
        %v2501 = vadd.f32 %v2469, %v2498
        %v2502 = vadd.f32 %v2470, %v2499
        %v2503 = vadd.f32 %v2471, %v2500
        %s2504 = sld [smem:[#allocation9 + $0x2c]]
        %v2505 = vstv %s2504
        %v2506 = vmul.f32 %v637, %v2505
        %v2507 = vmul.f32 %v638, %v2505
        %v2508 = vmul.f32 %v639, %v2505
        %v2509 = vadd.f32 %v2477, %v2506
        %v2510 = vadd.f32 %v2478, %v2507
        %v2511 = vadd.f32 %v2479, %v2508
        %s2512 = sld [smem:[#allocation9 + $0x2d]]
        %v2513 = vstv %s2512
        %v2514 = vmul.f32 %v637, %v2513
        %v2515 = vmul.f32 %v638, %v2513
        %v2516 = vmul.f32 %v639, %v2513
        %v2517 = vadd.f32 %v2485, %v2514
        %v2518 = vadd.f32 %v2486, %v2515
        %v2519 = vadd.f32 %v2487, %v2516
        %s2520 = sld [smem:[#allocation9 + $0x2e]]
        %v2521 = vstv %s2520
        %v2522 = vmul.f32 %v637, %v2521
        %v2523 = vmul.f32 %v638, %v2521
        %v2524 = vmul.f32 %v639, %v2521
        %v2525 = vadd.f32 %v2493, %v2522
        %v2526 = vadd.f32 %v2494, %v2523
        %v2527 = vadd.f32 %v2495, %v2524
        %s2528 = sld [smem:[#allocation9 + $0x2f]]
        %v2529 = vstv %s2528
        %v2530 = vmul.f32 %v637, %v2529
        %v2531 = vmul.f32 %v638, %v2529
        %v2532 = vmul.f32 %v639, %v2529
        %v2533 = vadd.f32 %v2501, %v2530
        %v2534 = vadd.f32 %v2502, %v2531
        %v2535 = vadd.f32 %v2503, %v2532
        %s2536 = sld [smem:[#allocation9 + $0x30]]
        %v2537 = vstv %s2536
        %v2538 = vmul.f32 %v673, %v2537
        %v2539 = vmul.f32 %v674, %v2537
        %v2540 = vmul.f32 %v675, %v2537
        %v2541 = vadd.f32 %v2509, %v2538
        %v2542 = vadd.f32 %v2510, %v2539
        %v2543 = vadd.f32 %v2511, %v2540
        %s2544 = sld [smem:[#allocation9 + $0x31]]
        %v2545 = vstv %s2544
        %v2546 = vmul.f32 %v673, %v2545
        %v2547 = vmul.f32 %v674, %v2545
        %v2548 = vmul.f32 %v675, %v2545
        %v2549 = vadd.f32 %v2517, %v2546
        %v2550 = vadd.f32 %v2518, %v2547
        %v2551 = vadd.f32 %v2519, %v2548
        %s2552 = sld [smem:[#allocation9 + $0x32]]
        %v2553 = vstv %s2552
        %v2554 = vmul.f32 %v673, %v2553
        %v2555 = vmul.f32 %v674, %v2553
        %v2556 = vmul.f32 %v675, %v2553
        %v2557 = vadd.f32 %v2525, %v2554
        %v2558 = vadd.f32 %v2526, %v2555
        %v2559 = vadd.f32 %v2527, %v2556
        %s2560 = sld [smem:[#allocation9 + $0x33]]
        %v2561 = vstv %s2560
        %v2562 = vmul.f32 %v673, %v2561
        %v2563 = vmul.f32 %v674, %v2561
        %v2564 = vmul.f32 %v675, %v2561
        %v2565 = vadd.f32 %v2533, %v2562
        %v2566 = vadd.f32 %v2534, %v2563
        %v2567 = vadd.f32 %v2535, %v2564
        %s2568 = sld [smem:[#allocation9 + $0x34]]
        %v2569 = vstv %s2568
        %v2570 = vmul.f32 %v709, %v2569
        %v2571 = vmul.f32 %v710, %v2569
        %v2572 = vmul.f32 %v711, %v2569
        %v2573 = vadd.f32 %v2541, %v2570
        %v2574 = vadd.f32 %v2542, %v2571
        %v2575 = vadd.f32 %v2543, %v2572
        %s2576 = sld [smem:[#allocation9 + $0x35]]
        %v2577 = vstv %s2576
        %v2578 = vmul.f32 %v709, %v2577
        %v2579 = vmul.f32 %v710, %v2577
        %v2580 = vmul.f32 %v711, %v2577
        %v2581 = vadd.f32 %v2549, %v2578
        %v2582 = vadd.f32 %v2550, %v2579
        %v2583 = vadd.f32 %v2551, %v2580
        %s2584 = sld [smem:[#allocation9 + $0x36]]
        %v2585 = vstv %s2584
        %v2586 = vmul.f32 %v709, %v2585
        %v2587 = vmul.f32 %v710, %v2585
        %v2588 = vmul.f32 %v711, %v2585
        %v2589 = vadd.f32 %v2557, %v2586
        %v2590 = vadd.f32 %v2558, %v2587
        %v2591 = vadd.f32 %v2559, %v2588
        %s2592 = sld [smem:[#allocation9 + $0x37]]
        %v2593 = vstv %s2592
        %v2594 = vmul.f32 %v709, %v2593
        %v2595 = vmul.f32 %v710, %v2593
        %v2596 = vmul.f32 %v711, %v2593
        %v2597 = vadd.f32 %v2565, %v2594
        %v2598 = vadd.f32 %v2566, %v2595
        %v2599 = vadd.f32 %v2567, %v2596
        %s2600 = sld [smem:[#allocation9 + $0x38]]
        %v2601 = vstv %s2600
        %v2602 = vmul.f32 %v745, %v2601
        %v2603 = vmul.f32 %v746, %v2601
        %v2604 = vmul.f32 %v747, %v2601
        %v2605 = vadd.f32 %v2573, %v2602
        %v2606 = vadd.f32 %v2574, %v2603
        %v2607 = vadd.f32 %v2575, %v2604
        %s2608 = sld [smem:[#allocation9 + $0x39]]
        %v2609 = vstv %s2608
        %v2610 = vmul.f32 %v745, %v2609
        %v2611 = vmul.f32 %v746, %v2609
        %v2612 = vmul.f32 %v747, %v2609
        %v2613 = vadd.f32 %v2581, %v2610
        %v2614 = vadd.f32 %v2582, %v2611
        %v2615 = vadd.f32 %v2583, %v2612
        %s2616 = sld [smem:[#allocation9 + $0x3a]]
        %v2617 = vstv %s2616
        %v2618 = vmul.f32 %v745, %v2617
        %v2619 = vmul.f32 %v746, %v2617
        %v2620 = vmul.f32 %v747, %v2617
        %v2621 = vadd.f32 %v2589, %v2618
        %v2622 = vadd.f32 %v2590, %v2619
        %v2623 = vadd.f32 %v2591, %v2620
        %s2624 = sld [smem:[#allocation9 + $0x3b]]
        %v2625 = vstv %s2624
        %v2626 = vmul.f32 %v745, %v2625
        %v2627 = vmul.f32 %v746, %v2625
        %v2628 = vmul.f32 %v747, %v2625
        %v2629 = vadd.f32 %v2597, %v2626
        %v2630 = vadd.f32 %v2598, %v2627
        %v2631 = vadd.f32 %v2599, %v2628
        %s2632 = sld [smem:[#allocation9 + $0x3c]]
        %v2633 = vstv %s2632
        %v2634 = vmul.f32 %v781, %v2633
        %v2635 = vmul.f32 %v782, %v2633
        %v2636 = vmul.f32 %v783, %v2633
        %v2637 = vadd.f32 %v2605, %v2634
        %v2638 = vadd.f32 %v2606, %v2635
        %v2639 = vadd.f32 %v2607, %v2636
        %s2640 = sld [smem:[#allocation9 + $0x3d]]
        %v2641 = vstv %s2640
        %v2642 = vmul.f32 %v781, %v2641
        %v2643 = vmul.f32 %v782, %v2641
        %v2644 = vmul.f32 %v783, %v2641
        %v2645 = vadd.f32 %v2613, %v2642
        %v2646 = vadd.f32 %v2614, %v2643
        %v2647 = vadd.f32 %v2615, %v2644
        %s2648 = sld [smem:[#allocation9 + $0x3e]]
        %v2649 = vstv %s2648
        %v2650 = vmul.f32 %v781, %v2649
        %v2651 = vmul.f32 %v782, %v2649
        %v2652 = vmul.f32 %v783, %v2649
        %v2653 = vadd.f32 %v2621, %v2650
        %v2654 = vadd.f32 %v2622, %v2651
        %v2655 = vadd.f32 %v2623, %v2652
        %s2656 = sld [smem:[#allocation9 + $0x3f]]
        %v2657 = vstv %s2656
        %v2658 = vmul.f32 %v781, %v2657
        %v2659 = vmul.f32 %v782, %v2657
        %v2660 = vmul.f32 %v783, %v2657
        %v2661 = vadd.f32 %v2629, %v2658
        %v2662 = vadd.f32 %v2630, %v2659
        %v2663 = vadd.f32 %v2631, %v2660
        %s2664 = sld [smem:[#allocation9 + $0xe0]]
        %v2665 = vstv %s2664
        %v2666 = vmul.f32 %v1456, %v2665
        %v2667 = vmul.f32 %v1457, %v2665
        %v2668 = vmul.f32 %v1458, %v2665
        %v2669 = vadd.f32 %v2637, %v2666
        %v2670 = vadd.f32 %v2638, %v2667
        %v2671 = vadd.f32 %v2639, %v2668
        %s2672 = sld [smem:[#allocation9 + $0xe1]]
        %v2673 = vstv %s2672
        %v2674 = vmul.f32 %v1456, %v2673
        %v2675 = vmul.f32 %v1457, %v2673
        %v2676 = vmul.f32 %v1458, %v2673
        %v2677 = vadd.f32 %v2645, %v2674
        %v2678 = vadd.f32 %v2646, %v2675
        %v2679 = vadd.f32 %v2647, %v2676
        %s2680 = sld [smem:[#allocation9 + $0xe2]]
        %v2681 = vstv %s2680
        %v2682 = vmul.f32 %v1456, %v2681
        %v2683 = vmul.f32 %v1457, %v2681
        %v2684 = vmul.f32 %v1458, %v2681
        %v2685 = vadd.f32 %v2653, %v2682
        %v2686 = vadd.f32 %v2654, %v2683
        %v2687 = vadd.f32 %v2655, %v2684
        %s2688 = sld [smem:[#allocation9 + $0xe3]]
        %v2689 = vstv %s2688
        %v2690 = vmul.f32 %v1456, %v2689
        %v2691 = vmul.f32 %v1457, %v2689
        %v2692 = vmul.f32 %v1458, %v2689
        %v2693 = vadd.f32 %v2661, %v2690
        %v2694 = vadd.f32 %v2662, %v2691
        %v2695 = vadd.f32 %v2663, %v2692
        %s2696 = sld [smem:[#allocation9 + $0xe4]]
        %v2697 = vstv %s2696
        %v2698 = vmul.f32 %v1491, %v2697
        %v2699 = vmul.f32 %v1492, %v2697
        %v2700 = vmul.f32 %v1493, %v2697
        %v2701 = vadd.f32 %v2669, %v2698
        %v2702 = vadd.f32 %v2670, %v2699
        %v2703 = vadd.f32 %v2671, %v2700
        %s2704 = sld [smem:[#allocation9 + $0xe5]]
        %v2705 = vstv %s2704
        %v2706 = vmul.f32 %v1491, %v2705
        %v2707 = vmul.f32 %v1492, %v2705
        %v2708 = vmul.f32 %v1493, %v2705
        %v2709 = vadd.f32 %v2677, %v2706
        %v2710 = vadd.f32 %v2678, %v2707
        %v2711 = vadd.f32 %v2679, %v2708
        %s2712 = sld [smem:[#allocation9 + $0xe6]]
        %v2713 = vstv %s2712
        %v2714 = vmul.f32 %v1491, %v2713
        %v2715 = vmul.f32 %v1492, %v2713
        %v2716 = vmul.f32 %v1493, %v2713
        %v2717 = vadd.f32 %v2685, %v2714
        %v2718 = vadd.f32 %v2686, %v2715
        %v2719 = vadd.f32 %v2687, %v2716
        %s2720 = sld [smem:[#allocation9 + $0xe7]]
        %v2721 = vstv %s2720
        %v2722 = vmul.f32 %v1491, %v2721
        %v2723 = vmul.f32 %v1492, %v2721
        %v2724 = vmul.f32 %v1493, %v2721
        %v2725 = vadd.f32 %v2693, %v2722
        %v2726 = vadd.f32 %v2694, %v2723
        %v2727 = vadd.f32 %v2695, %v2724
        %s2728 = sld [smem:[#allocation9 + $0xe8]]
        %v2729 = vstv %s2728
        %v2730 = vmul.f32 %v1526, %v2729
        %v2731 = vmul.f32 %v1527, %v2729
        %v2732 = vmul.f32 %v1528, %v2729
        %v2733 = vadd.f32 %v2701, %v2730
        %v2734 = vadd.f32 %v2702, %v2731
        %v2735 = vadd.f32 %v2703, %v2732
        %s2736 = sld [smem:[#allocation9 + $0xe9]]
        %v2737 = vstv %s2736
        %v2738 = vmul.f32 %v1526, %v2737
        %v2739 = vmul.f32 %v1527, %v2737
        %v2740 = vmul.f32 %v1528, %v2737
        %v2741 = vadd.f32 %v2709, %v2738
        %v2742 = vadd.f32 %v2710, %v2739
        %v2743 = vadd.f32 %v2711, %v2740
        %s2744 = sld [smem:[#allocation9 + $0xea]]
        %v2745 = vstv %s2744
        %v2746 = vmul.f32 %v1526, %v2745
        %v2747 = vmul.f32 %v1527, %v2745
        %v2748 = vmul.f32 %v1528, %v2745
        %v2749 = vadd.f32 %v2717, %v2746
        %v2750 = vadd.f32 %v2718, %v2747
        %v2751 = vadd.f32 %v2719, %v2748
        %s2752 = sld [smem:[#allocation9 + $0xeb]]
        %v2753 = vstv %s2752
        %v2754 = vmul.f32 %v1526, %v2753
        %v2755 = vmul.f32 %v1527, %v2753
        %v2756 = vmul.f32 %v1528, %v2753
        %v2757 = vadd.f32 %v2725, %v2754
        %v2758 = vadd.f32 %v2726, %v2755
        %v2759 = vadd.f32 %v2727, %v2756
        %s2760 = sld [smem:[#allocation9 + $0xec]]
        %v2761 = vstv %s2760
        %v2762 = vmul.f32 %v1561, %v2761
        %v2763 = vmul.f32 %v1562, %v2761
        %v2764 = vmul.f32 %v1563, %v2761
        %v2765 = vadd.f32 %v2733, %v2762
        %v2766 = vadd.f32 %v2734, %v2763
        %v2767 = vadd.f32 %v2735, %v2764
        %s2768 = sld [smem:[#allocation9 + $0xed]]
        %v2769 = vstv %s2768
        %v2770 = vmul.f32 %v1561, %v2769
        %v2771 = vmul.f32 %v1562, %v2769
        %v2772 = vmul.f32 %v1563, %v2769
        %v2773 = vadd.f32 %v2741, %v2770
        %v2774 = vadd.f32 %v2742, %v2771
        %v2775 = vadd.f32 %v2743, %v2772
        %s2776 = sld [smem:[#allocation9 + $0xee]]
        %v2777 = vstv %s2776
        %v2778 = vmul.f32 %v1561, %v2777
        %v2779 = vmul.f32 %v1562, %v2777
        %v2780 = vmul.f32 %v1563, %v2777
        %v2781 = vadd.f32 %v2749, %v2778
        %v2782 = vadd.f32 %v2750, %v2779
        %v2783 = vadd.f32 %v2751, %v2780
        %s2784 = sld [smem:[#allocation9 + $0xef]]
        %v2785 = vstv %s2784
        %v2786 = vmul.f32 %v1561, %v2785
        %v2787 = vmul.f32 %v1562, %v2785
        %v2788 = vmul.f32 %v1563, %v2785
        %v2789 = vadd.f32 %v2757, %v2786
        %v2790 = vadd.f32 %v2758, %v2787
        %v2791 = vadd.f32 %v2759, %v2788
        %s2792 = sld [smem:[#allocation9 + $0xf0]]
        %v2793 = vstv %s2792
        %v2794 = vmul.f32 %v1596, %v2793
        %v2795 = vmul.f32 %v1597, %v2793
        %v2796 = vmul.f32 %v1598, %v2793
        %v2797 = vadd.f32 %v2765, %v2794
        %v2798 = vadd.f32 %v2766, %v2795
        %v2799 = vadd.f32 %v2767, %v2796
        %s2800 = sld [smem:[#allocation9 + $0xf1]]
        %v2801 = vstv %s2800
        %v2802 = vmul.f32 %v1596, %v2801
        %v2803 = vmul.f32 %v1597, %v2801
        %v2804 = vmul.f32 %v1598, %v2801
        %v2805 = vadd.f32 %v2773, %v2802
        %v2806 = vadd.f32 %v2774, %v2803
        %v2807 = vadd.f32 %v2775, %v2804
        %s2808 = sld [smem:[#allocation9 + $0xf2]]
        %v2809 = vstv %s2808
        %v2810 = vmul.f32 %v1596, %v2809
        %v2811 = vmul.f32 %v1597, %v2809
        %v2812 = vmul.f32 %v1598, %v2809
        %v2813 = vadd.f32 %v2781, %v2810
        %v2814 = vadd.f32 %v2782, %v2811
        %v2815 = vadd.f32 %v2783, %v2812
        %s2816 = sld [smem:[#allocation9 + $0xf3]]
        %v2817 = vstv %s2816
        %v2818 = vmul.f32 %v1596, %v2817
        %v2819 = vmul.f32 %v1597, %v2817
        %v2820 = vmul.f32 %v1598, %v2817
        %v2821 = vadd.f32 %v2789, %v2818
        %v2822 = vadd.f32 %v2790, %v2819
        %v2823 = vadd.f32 %v2791, %v2820
        %s2824 = sld [smem:[#allocation9 + $0xf4]]
        %v2825 = vstv %s2824
        %v2826 = vmul.f32 %v1631, %v2825
        %v2827 = vmul.f32 %v1632, %v2825
        %v2828 = vmul.f32 %v1633, %v2825
        %v2829 = vadd.f32 %v2797, %v2826
        %v2830 = vadd.f32 %v2798, %v2827
        %v2831 = vadd.f32 %v2799, %v2828
        %s2832 = sld [smem:[#allocation9 + $0xf5]]
        %v2833 = vstv %s2832
        %v2834 = vmul.f32 %v1631, %v2833
        %v2835 = vmul.f32 %v1632, %v2833
        %v2836 = vmul.f32 %v1633, %v2833
        %v2837 = vadd.f32 %v2805, %v2834
        %v2838 = vadd.f32 %v2806, %v2835
        %v2839 = vadd.f32 %v2807, %v2836
        %s2840 = sld [smem:[#allocation9 + $0xf6]]
        %v2841 = vstv %s2840
        %v2842 = vmul.f32 %v1631, %v2841
        %v2843 = vmul.f32 %v1632, %v2841
        %v2844 = vmul.f32 %v1633, %v2841
        %v2845 = vadd.f32 %v2813, %v2842
        %v2846 = vadd.f32 %v2814, %v2843
        %v2847 = vadd.f32 %v2815, %v2844
        %s2848 = sld [smem:[#allocation9 + $0xf7]]
        %v2849 = vstv %s2848
        %v2850 = vmul.f32 %v1631, %v2849
        %v2851 = vmul.f32 %v1632, %v2849
        %v2852 = vmul.f32 %v1633, %v2849
        %v2853 = vadd.f32 %v2821, %v2850
        %v2854 = vadd.f32 %v2822, %v2851
        %v2855 = vadd.f32 %v2823, %v2852
        %s2856 = sld [smem:[#allocation9 + $0xf8]]
        %v2857 = vstv %s2856
        %v2858 = vmul.f32 %v1666, %v2857
        %v2859 = vmul.f32 %v1667, %v2857
        %v2860 = vmul.f32 %v1668, %v2857
        %v2861 = vadd.f32 %v2829, %v2858
        %v2862 = vadd.f32 %v2830, %v2859
        %v2863 = vadd.f32 %v2831, %v2860
        %s2864 = sld [smem:[#allocation9 + $0xf9]]
        %v2865 = vstv %s2864
        %v2866 = vmul.f32 %v1666, %v2865
        %v2867 = vmul.f32 %v1667, %v2865
        %v2868 = vmul.f32 %v1668, %v2865
        %v2869 = vadd.f32 %v2837, %v2866
        %v2870 = vadd.f32 %v2838, %v2867
        %v2871 = vadd.f32 %v2839, %v2868
        %s2872 = sld [smem:[#allocation9 + $0xfa]]
        %v2873 = vstv %s2872
        %v2874 = vmul.f32 %v1666, %v2873
        %v2875 = vmul.f32 %v1667, %v2873
        %v2876 = vmul.f32 %v1668, %v2873
        %v2877 = vadd.f32 %v2845, %v2874
        %v2878 = vadd.f32 %v2846, %v2875
        %v2879 = vadd.f32 %v2847, %v2876
        %s2880 = sld [smem:[#allocation9 + $0xfb]]
        %v2881 = vstv %s2880
        %v2882 = vmul.f32 %v1666, %v2881
        %v2883 = vmul.f32 %v1667, %v2881
        %v2884 = vmul.f32 %v1668, %v2881
        %v2885 = vadd.f32 %v2853, %v2882
        %v2886 = vadd.f32 %v2854, %v2883
        %v2887 = vadd.f32 %v2855, %v2884
        %s2888 = sld [smem:[#allocation9 + $0xfc]]
        %v2889 = vstv %s2888
        %v2890 = vmul.f32 %v1701, %v2889
        %v2891 = vmul.f32 %v1702, %v2889
        %v2892 = vmul.f32 %v1703, %v2889
        %v2893 = vadd.f32 %v2861, %v2890
        %v2894 = vadd.f32 %v2862, %v2891
        %v2895 = vadd.f32 %v2863, %v2892
        %s2896 = sld [smem:[#allocation9 + $0xfd]]
        %v2897 = vstv %s2896
        %v2898 = vmul.f32 %v1701, %v2897
        %v2899 = vmul.f32 %v1702, %v2897
        %v2900 = vmul.f32 %v1703, %v2897
        %v2901 = vadd.f32 %v2869, %v2898
        %v2902 = vadd.f32 %v2870, %v2899
        %v2903 = vadd.f32 %v2871, %v2900
        %s2904 = sld [smem:[#allocation9 + $0xfe]]
        %v2905 = vstv %s2904
        %v2906 = vmul.f32 %v1701, %v2905
        %v2907 = vmul.f32 %v1702, %v2905
        %v2908 = vmul.f32 %v1703, %v2905
        %v2909 = vadd.f32 %v2877, %v2906
        %v2910 = vadd.f32 %v2878, %v2907
        %v2911 = vadd.f32 %v2879, %v2908
        %s2912 = sld [smem:[#allocation9 + $0xff]]
        %v2913 = vstv %s2912
        %v2914 = vmul.f32 %v1701, %v2913
        %v2915 = vmul.f32 %v1702, %v2913
        %v2916 = vmul.f32 %v1703, %v2913
        %v2917 = vadd.f32 %v2885, %v2914
        %v2918 = vadd.f32 %v2886, %v2915
        %v2919 = vadd.f32 %v2887, %v2916
        %v2920 = vadd.f32 %v2893, %v2377
        %v2921 = vadd.f32 %v2894, %v2377
        %v2922 = vadd.f32 %v2895, %v2377
        %v2923 = vmax.f32 %v2920, 0.0
        %v2924 = vmax.f32 %v2921, 0.0
        %v2925 = vmax.f32 %v2922, 0.0
        %2929 = vrot.lane.b32.xlu0 %v2923, 127
        %v2930 = vpop.permute.xlu0 %2929
        %2931 = vrot.lane.b32.xlu0 %v2924, 127
        %v2932 = vpop.permute.xlu0 %2931
        %2933 = vrot.lane.b32.xlu0 %v2925, 127
        %v2934 = vpop.permute.xlu0 %2933
        %vm2935 = vcmask 138240
        %v2936 = vsel %vm2935, %v2930, 0
        %v2938 = vsel %vm2935, %v2932, 0
        %v2940 = vsel %vm2935, %v2934, 0
        %vm2942 = vcmask 1040384
        %v2944 = vsel %vm2942, %v479, 0
        %2946 = vmatpush.msra.mxu0 0.0
        %2947 = vmatpush.msra.mxu0 0.0
        %2948 = vmatpush.msra.mxu0 0.0
        %2949 = vmatpush.msra.mxu0 0.0
        %2950 = vmatpush.msra.mxu0 0.0
        %2951 = vmatpush.msra.mxu0 0.0
        %2952 = vmatpush.msra.mxu0 0.0
        %2953 = vmatpush.msra.mxu0 0.0
        %2954 = vmatpush.msra.mxu0 0.0
        %2955 = vmatpush.msra.mxu0 0.0
        %2956 = vmatpush.msra.mxu0 0.0
        %2957 = vmatpush.msra.mxu0 0.0
        %2958 = vmatpush.msra.mxu0 0.0
        %2959 = vmatpush.msra.mxu0 %v2944
        %2960 = vmatpush.msra.mxu0 %v478
        %2961 = vmatpush.msra.mxu0 %v477
        %2962 = vmatmul.f32.gmra.mxu0 %v2936
        %v2963 = vpop.f32.mrf.mxu0
        %v2964 = vadd.f32 0.0, %v2963
        %2965 = vmatmul.f32.gmra.mxu0 %v2938
        %v2966 = vpop.f32.mrf.mxu0
        %v2967 = vadd.f32 0.0, %v2966
        %2968 = vmatmul.f32.gmra.mxu0 %v2940
        %v2969 = vpop.f32.mrf.mxu0
        %v2970 = vadd.f32 0.0, %v2969
        %2971 = vdwg.mxu0
        %2975 = vrot.lane.b32.xlu0 %v2381, 127
        %v2976 = vpop.permute.xlu0 %2975
        %2977 = vrot.lane.b32.xlu0 %v2382, 127
        %v2978 = vpop.permute.xlu0 %2977
        %2979 = vrot.lane.b32.xlu0 %v2383, 127
        %v2980 = vpop.permute.xlu0 %2979
        %v2981 = vsel %vm2935, %v2976, 0
        %v2983 = vsel %vm2935, %v2978, 0
        %v2985 = vsel %vm2935, %v2980, 0
        %v2988 = vsel %vm2942, %v475, 0
        %2990 = vmatpush.msra.mxu0 0.0
        %2991 = vmatpush.msra.mxu0 0.0
        %2992 = vmatpush.msra.mxu0 0.0
        %2993 = vmatpush.msra.mxu0 0.0
        %2994 = vmatpush.msra.mxu0 0.0
        %2995 = vmatpush.msra.mxu0 0.0
        %2996 = vmatpush.msra.mxu0 0.0
        %2997 = vmatpush.msra.mxu0 0.0
        %2998 = vmatpush.msra.mxu0 0.0
        %2999 = vmatpush.msra.mxu0 0.0
        %3000 = vmatpush.msra.mxu0 0.0
        %3001 = vmatpush.msra.mxu0 0.0
        %3002 = vmatpush.msra.mxu0 0.0
        %3003 = vmatpush.msra.mxu0 %v2988
        %3004 = vmatpush.msra.mxu0 %v474
        %3005 = vmatpush.msra.mxu0 %v473
        %3006 = vmatmul.f32.gmra.mxu0 %v2981
        %v3007 = vpop.f32.mrf.mxu0
        %v3008 = vadd.f32 %v2964, %v3007
        %3009 = vmatmul.f32.gmra.mxu0 %v2983
        %v3010 = vpop.f32.mrf.mxu0
        %v3011 = vadd.f32 %v2967, %v3010
        %3012 = vmatmul.f32.gmra.mxu0 %v2985
        %v3013 = vpop.f32.mrf.mxu0
        %v3014 = vadd.f32 %v2970, %v3013
        %3015 = vdwg.mxu0
        %v3016 = vadd.f32 %v2901, %v2385
        %v3017 = vadd.f32 %v2902, %v2385
        %v3018 = vadd.f32 %v2903, %v2385
        %v3019 = vmax.f32 %v3016, 0.0
        %v3020 = vmax.f32 %v3017, 0.0
        %v3021 = vmax.f32 %v3018, 0.0
        %3025 = vrot.lane.b32.xlu0 %v3019, 127
        %v3026 = vpop.permute.xlu0 %3025
        %3027 = vrot.lane.b32.xlu0 %v3020, 127
        %v3028 = vpop.permute.xlu0 %3027
        %3029 = vrot.lane.b32.xlu0 %v3021, 127
        %v3030 = vpop.permute.xlu0 %3029
        %v3031 = vsel %vm2935, %v3026, 0
        %v3033 = vsel %vm2935, %v3028, 0
        %v3035 = vsel %vm2935, %v3030, 0
        %3037 = vmatpush.msra.mxu0 0.0
        %3038 = vmatpush.msra.mxu0 0.0
        %3039 = vmatpush.msra.mxu0 0.0
        %3040 = vmatpush.msra.mxu0 0.0
        %3041 = vmatpush.msra.mxu0 0.0
        %3042 = vmatpush.msra.mxu0 0.0
        %3043 = vmatpush.msra.mxu0 0.0
        %3044 = vmatpush.msra.mxu0 0.0
        %3045 = vmatpush.msra.mxu0 0.0
        %3046 = vmatpush.msra.mxu0 0.0
        %3047 = vmatpush.msra.mxu0 0.0
        %3048 = vmatpush.msra.mxu0 0.0
        %3049 = vmatpush.msra.mxu0 0.0
        %3050 = vmatpush.msra.mxu0 %v2944
        %3051 = vmatpush.msra.mxu0 %v478
        %3052 = vmatpush.msra.mxu0 %v477
        %3053 = vmatmul.f32.gmra.mxu0 %v3031
        %v3054 = vpop.f32.mrf.mxu0
        %v3055 = vadd.f32 0.0, %v3054
        %3056 = vmatmul.f32.gmra.mxu0 %v3033
        %v3057 = vpop.f32.mrf.mxu0
        %v3058 = vadd.f32 0.0, %v3057
        %3059 = vmatmul.f32.gmra.mxu0 %v3035
        %v3060 = vpop.f32.mrf.mxu0
        %v3061 = vadd.f32 0.0, %v3060
        %3062 = vdwg.mxu0
        %3066 = vrot.lane.b32.xlu0 %v2389, 127
        %v3067 = vpop.permute.xlu0 %3066
        %3068 = vrot.lane.b32.xlu0 %v2390, 127
        %v3069 = vpop.permute.xlu0 %3068
        %3070 = vrot.lane.b32.xlu0 %v2391, 127
        %v3071 = vpop.permute.xlu0 %3070
        %v3072 = vsel %vm2935, %v3067, 0
        %v3074 = vsel %vm2935, %v3069, 0
        %v3076 = vsel %vm2935, %v3071, 0
        %3078 = vmatpush.msra.mxu0 0.0
        %3079 = vmatpush.msra.mxu0 0.0
        %3080 = vmatpush.msra.mxu0 0.0
        %3081 = vmatpush.msra.mxu0 0.0
        %3082 = vmatpush.msra.mxu0 0.0
        %3083 = vmatpush.msra.mxu0 0.0
        %3084 = vmatpush.msra.mxu0 0.0
        %3085 = vmatpush.msra.mxu0 0.0
        %3086 = vmatpush.msra.mxu0 0.0
        %3087 = vmatpush.msra.mxu0 0.0
        %3088 = vmatpush.msra.mxu0 0.0
        %3089 = vmatpush.msra.mxu0 0.0
        %3090 = vmatpush.msra.mxu0 0.0
        %3091 = vmatpush.msra.mxu0 %v2988
        %3092 = vmatpush.msra.mxu0 %v474
        %3093 = vmatpush.msra.mxu0 %v473
        %3094 = vmatmul.f32.gmra.mxu0 %v3072
        %v3095 = vpop.f32.mrf.mxu0
        %v3096 = vadd.f32 %v3055, %v3095
        %3097 = vmatmul.f32.gmra.mxu0 %v3074
        %v3098 = vpop.f32.mrf.mxu0
        %v3099 = vadd.f32 %v3058, %v3098
        %3100 = vmatmul.f32.gmra.mxu0 %v3076
        %v3101 = vpop.f32.mrf.mxu0
        %v3102 = vadd.f32 %v3061, %v3101
        %3103 = vdwg.mxu0
        %v3104 = vadd.f32 %v2909, %v2393
        %v3105 = vadd.f32 %v2910, %v2393
        %v3106 = vadd.f32 %v2911, %v2393
        %v3107 = vmax.f32 %v3104, 0.0
        %v3108 = vmax.f32 %v3105, 0.0
        %v3109 = vmax.f32 %v3106, 0.0
        %3113 = vrot.lane.b32.xlu0 %v3107, 127
        %v3114 = vpop.permute.xlu0 %3113
        %3115 = vrot.lane.b32.xlu0 %v3108, 127
        %v3116 = vpop.permute.xlu0 %3115
        %3117 = vrot.lane.b32.xlu0 %v3109, 127
        %v3118 = vpop.permute.xlu0 %3117
        %v3119 = vsel %vm2935, %v3114, 0
        %v3121 = vsel %vm2935, %v3116, 0
        %v3123 = vsel %vm2935, %v3118, 0
        %3125 = vmatpush.msra.mxu0 0.0
        %3126 = vmatpush.msra.mxu0 0.0
        %3127 = vmatpush.msra.mxu0 0.0
        %3128 = vmatpush.msra.mxu0 0.0
        %3129 = vmatpush.msra.mxu0 0.0
        %3130 = vmatpush.msra.mxu0 0.0
        %3131 = vmatpush.msra.mxu0 0.0
        %3132 = vmatpush.msra.mxu0 0.0
        %3133 = vmatpush.msra.mxu0 0.0
        %3134 = vmatpush.msra.mxu0 0.0
        %3135 = vmatpush.msra.mxu0 0.0
        %3136 = vmatpush.msra.mxu0 0.0
        %3137 = vmatpush.msra.mxu0 0.0
        %3138 = vmatpush.msra.mxu0 %v2944
        %3139 = vmatpush.msra.mxu0 %v478
        %3140 = vmatpush.msra.mxu0 %v477
        %3141 = vmatmul.f32.gmra.mxu0 %v3119
        %v3142 = vpop.f32.mrf.mxu0
        %v3143 = vadd.f32 0.0, %v3142
        %3144 = vmatmul.f32.gmra.mxu0 %v3121
        %v3145 = vpop.f32.mrf.mxu0
        %v3146 = vadd.f32 0.0, %v3145
        %3147 = vmatmul.f32.gmra.mxu0 %v3123
        %v3148 = vpop.f32.mrf.mxu0
        %v3149 = vadd.f32 0.0, %v3148
        %3150 = vdwg.mxu0
        %3154 = vrot.lane.b32.xlu0 %v2397, 127
        %v3155 = vpop.permute.xlu0 %3154
        %3156 = vrot.lane.b32.xlu0 %v2398, 127
        %v3157 = vpop.permute.xlu0 %3156
        %3158 = vrot.lane.b32.xlu0 %v2399, 127
        %v3159 = vpop.permute.xlu0 %3158
        %v3160 = vsel %vm2935, %v3155, 0
        %v3162 = vsel %vm2935, %v3157, 0
        %v3164 = vsel %vm2935, %v3159, 0
        %3166 = vmatpush.msra.mxu0 0.0
        %3167 = vmatpush.msra.mxu0 0.0
        %3168 = vmatpush.msra.mxu0 0.0
        %3169 = vmatpush.msra.mxu0 0.0
        %3170 = vmatpush.msra.mxu0 0.0
        %3171 = vmatpush.msra.mxu0 0.0
        %3172 = vmatpush.msra.mxu0 0.0
        %3173 = vmatpush.msra.mxu0 0.0
        %3174 = vmatpush.msra.mxu0 0.0
        %3175 = vmatpush.msra.mxu0 0.0
        %3176 = vmatpush.msra.mxu0 0.0
        %3177 = vmatpush.msra.mxu0 0.0
        %3178 = vmatpush.msra.mxu0 0.0
        %3179 = vmatpush.msra.mxu0 %v2988
        %3180 = vmatpush.msra.mxu0 %v474
        %3181 = vmatpush.msra.mxu0 %v473
        %3182 = vmatmul.f32.gmra.mxu0 %v3160
        %v3183 = vpop.f32.mrf.mxu0
        %v3184 = vadd.f32 %v3143, %v3183
        %3185 = vmatmul.f32.gmra.mxu0 %v3162
        %v3186 = vpop.f32.mrf.mxu0
        %v3187 = vadd.f32 %v3146, %v3186
        %3188 = vmatmul.f32.gmra.mxu0 %v3164
        %v3189 = vpop.f32.mrf.mxu0
        %v3190 = vadd.f32 %v3149, %v3189
        %3191 = vdwg.mxu0
        %v3192 = vadd.f32 %v2917, %v2401
        %v3193 = vadd.f32 %v2918, %v2401
        %v3194 = vadd.f32 %v2919, %v2401
        %v3195 = vmax.f32 %v3192, 0.0
        %v3196 = vmax.f32 %v3193, 0.0
        %v3197 = vmax.f32 %v3194, 0.0
        %3201 = vrot.lane.b32.xlu0 %v3195, 127
        %v3202 = vpop.permute.xlu0 %3201
        %3203 = vrot.lane.b32.xlu0 %v3196, 127
        %v3204 = vpop.permute.xlu0 %3203
        %3205 = vrot.lane.b32.xlu0 %v3197, 127
        %v3206 = vpop.permute.xlu0 %3205
        %v3207 = vsel %vm2935, %v3202, 0
        %v3209 = vsel %vm2935, %v3204, 0
        %v3211 = vsel %vm2935, %v3206, 0
        %3213 = vmatpush.msra.mxu0 0.0
        %3214 = vmatpush.msra.mxu0 0.0
        %3215 = vmatpush.msra.mxu0 0.0
        %3216 = vmatpush.msra.mxu0 0.0
        %3217 = vmatpush.msra.mxu0 0.0
        %3218 = vmatpush.msra.mxu0 0.0
        %3219 = vmatpush.msra.mxu0 0.0
        %3220 = vmatpush.msra.mxu0 0.0
        %3221 = vmatpush.msra.mxu0 0.0
        %3222 = vmatpush.msra.mxu0 0.0
        %3223 = vmatpush.msra.mxu0 0.0
        %3224 = vmatpush.msra.mxu0 0.0
        %3225 = vmatpush.msra.mxu0 0.0
        %3226 = vmatpush.msra.mxu0 %v2944
        %3227 = vmatpush.msra.mxu0 %v478
        %3228 = vmatpush.msra.mxu0 %v477
        %3229 = vmatmul.f32.gmra.mxu0 %v3207
        %v3230 = vpop.f32.mrf.mxu0
        %v3231 = vadd.f32 0.0, %v3230
        %3232 = vmatmul.f32.gmra.mxu0 %v3209
        %v3233 = vpop.f32.mrf.mxu0
        %v3234 = vadd.f32 0.0, %v3233
        %3235 = vmatmul.f32.gmra.mxu0 %v3211
        %v3236 = vpop.f32.mrf.mxu0
        %v3237 = vadd.f32 0.0, %v3236
        %3238 = vdwg.mxu0
        %3242 = vrot.lane.b32.xlu0 %v2405, 127
        %v3243 = vpop.permute.xlu0 %3242
        %3244 = vrot.lane.b32.xlu0 %v2406, 127
        %v3245 = vpop.permute.xlu0 %3244
        %3246 = vrot.lane.b32.xlu0 %v2407, 127
        %v3247 = vpop.permute.xlu0 %3246
        %v3248 = vsel %vm2935, %v3243, 0
        %v3250 = vsel %vm2935, %v3245, 0
        %v3252 = vsel %vm2935, %v3247, 0
        %3254 = vmatpush.msra.mxu0 0.0
        %3255 = vmatpush.msra.mxu0 0.0
        %3256 = vmatpush.msra.mxu0 0.0
        %3257 = vmatpush.msra.mxu0 0.0
        %3258 = vmatpush.msra.mxu0 0.0
        %3259 = vmatpush.msra.mxu0 0.0
        %3260 = vmatpush.msra.mxu0 0.0
        %3261 = vmatpush.msra.mxu0 0.0
        %3262 = vmatpush.msra.mxu0 0.0
        %3263 = vmatpush.msra.mxu0 0.0
        %3264 = vmatpush.msra.mxu0 0.0
        %3265 = vmatpush.msra.mxu0 0.0
        %3266 = vmatpush.msra.mxu0 0.0
        %3267 = vmatpush.msra.mxu0 %v2988
        %3268 = vmatpush.msra.mxu0 %v474
        %3269 = vmatpush.msra.mxu0 %v473
        %3270 = vmatmul.f32.gmra.mxu0 %v3248
        %v3271 = vpop.f32.mrf.mxu0
        %v3272 = vadd.f32 %v3231, %v3271
        %3273 = vmatmul.f32.gmra.mxu0 %v3250
        %v3274 = vpop.f32.mrf.mxu0
        %v3275 = vadd.f32 %v3234, %v3274
        %3276 = vmatmul.f32.gmra.mxu0 %v3252
        %v3277 = vpop.f32.mrf.mxu0
        %v3278 = vadd.f32 %v3237, %v3277
        %3279 = vdwg.mxu0
        %s3280 = sld [smem:[#allocation9 + $0x60]]
        %v3281 = vstv %s3280
        %v3282 = vmul.f32 %v529, %v3281
        %v3283 = vmul.f32 %v530, %v3281
        %v3284 = vmul.f32 %v531, %v3281
        %v3285 = vadd.f32 %v3282, 0.0
        %v3286 = vadd.f32 %v3283, 0.0
        %v3287 = vadd.f32 %v3284, 0.0
        %s3288 = sld [smem:[#allocation9 + $0x61]]
        %v3289 = vstv %s3288
        %v3290 = vmul.f32 %v529, %v3289
        %v3291 = vmul.f32 %v530, %v3289
        %v3292 = vmul.f32 %v531, %v3289
        %v3293 = vadd.f32 %v3290, 0.0
        %v3294 = vadd.f32 %v3291, 0.0
        %v3295 = vadd.f32 %v3292, 0.0
        %s3296 = sld [smem:[#allocation9 + $0x62]]
        %v3297 = vstv %s3296
        %v3298 = vmul.f32 %v529, %v3297
        %v3299 = vmul.f32 %v530, %v3297
        %v3300 = vmul.f32 %v531, %v3297
        %v3301 = vadd.f32 %v3298, 0.0
        %v3302 = vadd.f32 %v3299, 0.0
        %v3303 = vadd.f32 %v3300, 0.0
        %s3304 = sld [smem:[#allocation9 + $0x63]]
        %v3305 = vstv %s3304
        %v3306 = vmul.f32 %v529, %v3305
        %v3307 = vmul.f32 %v530, %v3305
        %v3308 = vmul.f32 %v531, %v3305
        %v3309 = vadd.f32 %v3306, 0.0
        %v3310 = vadd.f32 %v3307, 0.0
        %v3311 = vadd.f32 %v3308, 0.0
        %s3312 = sld [smem:[#allocation9 + $0x64]]
        %v3313 = vstv %s3312
        %v3314 = vmul.f32 %v565, %v3313
        %v3315 = vmul.f32 %v566, %v3313
        %v3316 = vmul.f32 %v567, %v3313
        %v3317 = vadd.f32 %v3285, %v3314
        %v3318 = vadd.f32 %v3286, %v3315
        %v3319 = vadd.f32 %v3287, %v3316
        %s3320 = sld [smem:[#allocation9 + $0x65]]
        %v3321 = vstv %s3320
        %v3322 = vmul.f32 %v565, %v3321
        %v3323 = vmul.f32 %v566, %v3321
        %v3324 = vmul.f32 %v567, %v3321
        %v3325 = vadd.f32 %v3293, %v3322
        %v3326 = vadd.f32 %v3294, %v3323
        %v3327 = vadd.f32 %v3295, %v3324
        %s3328 = sld [smem:[#allocation9 + $0x66]]
        %v3329 = vstv %s3328
        %v3330 = vmul.f32 %v565, %v3329
        %v3331 = vmul.f32 %v566, %v3329
        %v3332 = vmul.f32 %v567, %v3329
        %v3333 = vadd.f32 %v3301, %v3330
        %v3334 = vadd.f32 %v3302, %v3331
        %v3335 = vadd.f32 %v3303, %v3332
        %s3336 = sld [smem:[#allocation9 + $0x67]]
        %v3337 = vstv %s3336
        %v3338 = vmul.f32 %v565, %v3337
        %v3339 = vmul.f32 %v566, %v3337
        %v3340 = vmul.f32 %v567, %v3337
        %v3341 = vadd.f32 %v3309, %v3338
        %v3342 = vadd.f32 %v3310, %v3339
        %v3343 = vadd.f32 %v3311, %v3340
        %s3344 = sld [smem:[#allocation9 + $0x68]]
        %v3345 = vstv %s3344
        %v3346 = vmul.f32 %v601, %v3345
        %v3347 = vmul.f32 %v602, %v3345
        %v3348 = vmul.f32 %v603, %v3345
        %v3349 = vadd.f32 %v3317, %v3346
        %v3350 = vadd.f32 %v3318, %v3347
        %v3351 = vadd.f32 %v3319, %v3348
        %s3352 = sld [smem:[#allocation9 + $0x69]]
        %v3353 = vstv %s3352
        %v3354 = vmul.f32 %v601, %v3353
        %v3355 = vmul.f32 %v602, %v3353
        %v3356 = vmul.f32 %v603, %v3353
        %v3357 = vadd.f32 %v3325, %v3354
        %v3358 = vadd.f32 %v3326, %v3355
        %v3359 = vadd.f32 %v3327, %v3356
        %s3360 = sld [smem:[#allocation9 + $0x6a]]
        %v3361 = vstv %s3360
        %v3362 = vmul.f32 %v601, %v3361
        %v3363 = vmul.f32 %v602, %v3361
        %v3364 = vmul.f32 %v603, %v3361
        %v3365 = vadd.f32 %v3333, %v3362
        %v3366 = vadd.f32 %v3334, %v3363
        %v3367 = vadd.f32 %v3335, %v3364
        %s3368 = sld [smem:[#allocation9 + $0x6b]]
        %v3369 = vstv %s3368
        %v3370 = vmul.f32 %v601, %v3369
        %v3371 = vmul.f32 %v602, %v3369
        %v3372 = vmul.f32 %v603, %v3369
        %v3373 = vadd.f32 %v3341, %v3370
        %v3374 = vadd.f32 %v3342, %v3371
        %v3375 = vadd.f32 %v3343, %v3372
        %s3376 = sld [smem:[#allocation9 + $0x6c]]
        %v3377 = vstv %s3376
        %v3378 = vmul.f32 %v637, %v3377
        %v3379 = vmul.f32 %v638, %v3377
        %v3380 = vmul.f32 %v639, %v3377
        %v3381 = vadd.f32 %v3349, %v3378
        %v3382 = vadd.f32 %v3350, %v3379
        %v3383 = vadd.f32 %v3351, %v3380
        %s3384 = sld [smem:[#allocation9 + $0x6d]]
        %v3385 = vstv %s3384
        %v3386 = vmul.f32 %v637, %v3385
        %v3387 = vmul.f32 %v638, %v3385
        %v3388 = vmul.f32 %v639, %v3385
        %v3389 = vadd.f32 %v3357, %v3386
        %v3390 = vadd.f32 %v3358, %v3387
        %v3391 = vadd.f32 %v3359, %v3388
        %s3392 = sld [smem:[#allocation9 + $0x6e]]
        %v3393 = vstv %s3392
        %v3394 = vmul.f32 %v637, %v3393
        %v3395 = vmul.f32 %v638, %v3393
        %v3396 = vmul.f32 %v639, %v3393
        %v3397 = vadd.f32 %v3365, %v3394
        %v3398 = vadd.f32 %v3366, %v3395
        %v3399 = vadd.f32 %v3367, %v3396
        %s3400 = sld [smem:[#allocation9 + $0x6f]]
        %v3401 = vstv %s3400
        %v3402 = vmul.f32 %v637, %v3401
        %v3403 = vmul.f32 %v638, %v3401
        %v3404 = vmul.f32 %v639, %v3401
        %v3405 = vadd.f32 %v3373, %v3402
        %v3406 = vadd.f32 %v3374, %v3403
        %v3407 = vadd.f32 %v3375, %v3404
        %s3408 = sld [smem:[#allocation9 + $0x70]]
        %v3409 = vstv %s3408
        %v3410 = vmul.f32 %v673, %v3409
        %v3411 = vmul.f32 %v674, %v3409
        %v3412 = vmul.f32 %v675, %v3409
        %v3413 = vadd.f32 %v3381, %v3410
        %v3414 = vadd.f32 %v3382, %v3411
        %v3415 = vadd.f32 %v3383, %v3412
        %s3416 = sld [smem:[#allocation9 + $0x71]]
        %v3417 = vstv %s3416
        %v3418 = vmul.f32 %v673, %v3417
        %v3419 = vmul.f32 %v674, %v3417
        %v3420 = vmul.f32 %v675, %v3417
        %v3421 = vadd.f32 %v3389, %v3418
        %v3422 = vadd.f32 %v3390, %v3419
        %v3423 = vadd.f32 %v3391, %v3420
        %s3424 = sld [smem:[#allocation9 + $0x72]]
        %v3425 = vstv %s3424
        %v3426 = vmul.f32 %v673, %v3425
        %v3427 = vmul.f32 %v674, %v3425
        %v3428 = vmul.f32 %v675, %v3425
        %v3429 = vadd.f32 %v3397, %v3426
        %v3430 = vadd.f32 %v3398, %v3427
        %v3431 = vadd.f32 %v3399, %v3428
        %s3432 = sld [smem:[#allocation9 + $0x73]]
        %v3433 = vstv %s3432
        %v3434 = vmul.f32 %v673, %v3433
        %v3435 = vmul.f32 %v674, %v3433
        %v3436 = vmul.f32 %v675, %v3433
        %v3437 = vadd.f32 %v3405, %v3434
        %v3438 = vadd.f32 %v3406, %v3435
        %v3439 = vadd.f32 %v3407, %v3436
        %s3440 = sld [smem:[#allocation9 + $0x74]]
        %v3441 = vstv %s3440
        %v3442 = vmul.f32 %v709, %v3441
        %v3443 = vmul.f32 %v710, %v3441
        %v3444 = vmul.f32 %v711, %v3441
        %v3445 = vadd.f32 %v3413, %v3442
        %v3446 = vadd.f32 %v3414, %v3443
        %v3447 = vadd.f32 %v3415, %v3444
        %s3448 = sld [smem:[#allocation9 + $0x75]]
        %v3449 = vstv %s3448
        %v3450 = vmul.f32 %v709, %v3449
        %v3451 = vmul.f32 %v710, %v3449
        %v3452 = vmul.f32 %v711, %v3449
        %v3453 = vadd.f32 %v3421, %v3450
        %v3454 = vadd.f32 %v3422, %v3451
        %v3455 = vadd.f32 %v3423, %v3452
        %s3456 = sld [smem:[#allocation9 + $0x76]]
        %v3457 = vstv %s3456
        %v3458 = vmul.f32 %v709, %v3457
        %v3459 = vmul.f32 %v710, %v3457
        %v3460 = vmul.f32 %v711, %v3457
        %v3461 = vadd.f32 %v3429, %v3458
        %v3462 = vadd.f32 %v3430, %v3459
        %v3463 = vadd.f32 %v3431, %v3460
        %s3464 = sld [smem:[#allocation9 + $0x77]]
        %v3465 = vstv %s3464
        %v3466 = vmul.f32 %v709, %v3465
        %v3467 = vmul.f32 %v710, %v3465
        %v3468 = vmul.f32 %v711, %v3465
        %v3469 = vadd.f32 %v3437, %v3466
        %v3470 = vadd.f32 %v3438, %v3467
        %v3471 = vadd.f32 %v3439, %v3468
        %s3472 = sld [smem:[#allocation9 + $0x78]]
        %v3473 = vstv %s3472
        %v3474 = vmul.f32 %v745, %v3473
        %v3475 = vmul.f32 %v746, %v3473
        %v3476 = vmul.f32 %v747, %v3473
        %v3477 = vadd.f32 %v3445, %v3474
        %v3478 = vadd.f32 %v3446, %v3475
        %v3479 = vadd.f32 %v3447, %v3476
        %s3480 = sld [smem:[#allocation9 + $0x79]]
        %v3481 = vstv %s3480
        %v3482 = vmul.f32 %v745, %v3481
        %v3483 = vmul.f32 %v746, %v3481
        %v3484 = vmul.f32 %v747, %v3481
        %v3485 = vadd.f32 %v3453, %v3482
        %v3486 = vadd.f32 %v3454, %v3483
        %v3487 = vadd.f32 %v3455, %v3484
        %s3488 = sld [smem:[#allocation9 + $0x7a]]
        %v3489 = vstv %s3488
        %v3490 = vmul.f32 %v745, %v3489
        %v3491 = vmul.f32 %v746, %v3489
        %v3492 = vmul.f32 %v747, %v3489
        %v3493 = vadd.f32 %v3461, %v3490
        %v3494 = vadd.f32 %v3462, %v3491
        %v3495 = vadd.f32 %v3463, %v3492
        %s3496 = sld [smem:[#allocation9 + $0x7b]]
        %v3497 = vstv %s3496
        %v3498 = vmul.f32 %v745, %v3497
        %v3499 = vmul.f32 %v746, %v3497
        %v3500 = vmul.f32 %v747, %v3497
        %v3501 = vadd.f32 %v3469, %v3498
        %v3502 = vadd.f32 %v3470, %v3499
        %v3503 = vadd.f32 %v3471, %v3500
        %s3504 = sld [smem:[#allocation9 + $0x7c]]
        %v3505 = vstv %s3504
        %v3506 = vmul.f32 %v781, %v3505
        %v3507 = vmul.f32 %v782, %v3505
        %v3508 = vmul.f32 %v783, %v3505
        %v3509 = vadd.f32 %v3477, %v3506
        %v3510 = vadd.f32 %v3478, %v3507
        %v3511 = vadd.f32 %v3479, %v3508
        %s3512 = sld [smem:[#allocation9 + $0x7d]]
        %v3513 = vstv %s3512
        %v3514 = vmul.f32 %v781, %v3513
        %v3515 = vmul.f32 %v782, %v3513
        %v3516 = vmul.f32 %v783, %v3513
        %v3517 = vadd.f32 %v3485, %v3514
        %v3518 = vadd.f32 %v3486, %v3515
        %v3519 = vadd.f32 %v3487, %v3516
        %s3520 = sld [smem:[#allocation9 + $0x7e]]
        %v3521 = vstv %s3520
        %v3522 = vmul.f32 %v781, %v3521
        %v3523 = vmul.f32 %v782, %v3521
        %v3524 = vmul.f32 %v783, %v3521
        %v3525 = vadd.f32 %v3493, %v3522
        %v3526 = vadd.f32 %v3494, %v3523
        %v3527 = vadd.f32 %v3495, %v3524
        %s3528 = sld [smem:[#allocation9 + $0x7f]]
        %v3529 = vstv %s3528
        %v3530 = vmul.f32 %v781, %v3529
        %v3531 = vmul.f32 %v782, %v3529
        %v3532 = vmul.f32 %v783, %v3529
        %v3533 = vadd.f32 %v3501, %v3530
        %v3534 = vadd.f32 %v3502, %v3531
        %v3535 = vadd.f32 %v3503, %v3532
        %s3536 = sld [smem:[#allocation9 + $0xa0]]
        %v3537 = vstv %s3536
        %v3538 = vmul.f32 %v529, %v3537
        %v3539 = vmul.f32 %v530, %v3537
        %v3540 = vmul.f32 %v531, %v3537
        %3544 = vrot.lane.b32.xlu0 %v3538, 1
        %v3545 = vpop.permute.xlu0 %3544
        %3546 = vrot.lane.b32.xlu0 %v3539, 1
        %v3547 = vpop.permute.xlu0 %3546
        %3548 = vrot.lane.b32.xlu0 %v3540, 1
        %v3549 = vpop.permute.xlu0 %3548
        %v3553 = vadd.f32 %v3509, %v3545
        %v3554 = vadd.f32 %v3510, %v3547
        %v3555 = vadd.f32 %v3511, %v3549
        %s3556 = sld [smem:[#allocation9 + $0xa1]]
        %v3557 = vstv %s3556
        %v3558 = vmul.f32 %v529, %v3557
        %v3559 = vmul.f32 %v530, %v3557
        %v3560 = vmul.f32 %v531, %v3557
        %3564 = vrot.lane.b32.xlu0 %v3558, 1
        %v3565 = vpop.permute.xlu0 %3564
        %3566 = vrot.lane.b32.xlu0 %v3559, 1
        %v3567 = vpop.permute.xlu0 %3566
        %3568 = vrot.lane.b32.xlu0 %v3560, 1
        %v3569 = vpop.permute.xlu0 %3568
        %v3573 = vadd.f32 %v3517, %v3565
        %v3574 = vadd.f32 %v3518, %v3567
        %v3575 = vadd.f32 %v3519, %v3569
        %s3576 = sld [smem:[#allocation9 + $0xa2]]
        %v3577 = vstv %s3576
        %v3578 = vmul.f32 %v529, %v3577
        %v3579 = vmul.f32 %v530, %v3577
        %v3580 = vmul.f32 %v531, %v3577
        %3584 = vrot.lane.b32.xlu0 %v3578, 1
        %v3585 = vpop.permute.xlu0 %3584
        %3586 = vrot.lane.b32.xlu0 %v3579, 1
        %v3587 = vpop.permute.xlu0 %3586
        %3588 = vrot.lane.b32.xlu0 %v3580, 1
        %v3589 = vpop.permute.xlu0 %3588
        %v3593 = vadd.f32 %v3525, %v3585
        %v3594 = vadd.f32 %v3526, %v3587
        %v3595 = vadd.f32 %v3527, %v3589
        %s3596 = sld [smem:[#allocation9 + $0xa3]]
        %v3597 = vstv %s3596
        %v3598 = vmul.f32 %v529, %v3597
        %v3599 = vmul.f32 %v530, %v3597
        %v3600 = vmul.f32 %v531, %v3597
        %3604 = vrot.lane.b32.xlu0 %v3598, 1
        %v3605 = vpop.permute.xlu0 %3604
        %3606 = vrot.lane.b32.xlu0 %v3599, 1
        %v3607 = vpop.permute.xlu0 %3606
        %3608 = vrot.lane.b32.xlu0 %v3600, 1
        %v3609 = vpop.permute.xlu0 %3608
        %v3613 = vadd.f32 %v3533, %v3605
        %v3614 = vadd.f32 %v3534, %v3607
        %v3615 = vadd.f32 %v3535, %v3609
        %s3616 = sld [smem:[#allocation9 + $0xa4]]
        %v3617 = vstv %s3616
        %v3618 = vmul.f32 %v565, %v3617
        %v3619 = vmul.f32 %v566, %v3617
        %v3620 = vmul.f32 %v567, %v3617
        %3624 = vrot.lane.b32.xlu0 %v3618, 1
        %v3625 = vpop.permute.xlu0 %3624
        %3626 = vrot.lane.b32.xlu0 %v3619, 1
        %v3627 = vpop.permute.xlu0 %3626
        %3628 = vrot.lane.b32.xlu0 %v3620, 1
        %v3629 = vpop.permute.xlu0 %3628
        %v3633 = vadd.f32 %v3553, %v3625
        %v3634 = vadd.f32 %v3554, %v3627
        %v3635 = vadd.f32 %v3555, %v3629
        %s3636 = sld [smem:[#allocation9 + $0xa5]]
        %v3637 = vstv %s3636
        %v3638 = vmul.f32 %v565, %v3637
        %v3639 = vmul.f32 %v566, %v3637
        %v3640 = vmul.f32 %v567, %v3637
        %3644 = vrot.lane.b32.xlu0 %v3638, 1
        %v3645 = vpop.permute.xlu0 %3644
        %3646 = vrot.lane.b32.xlu0 %v3639, 1
        %v3647 = vpop.permute.xlu0 %3646
        %3648 = vrot.lane.b32.xlu0 %v3640, 1
        %v3649 = vpop.permute.xlu0 %3648
        %v3653 = vadd.f32 %v3573, %v3645
        %v3654 = vadd.f32 %v3574, %v3647
        %v3655 = vadd.f32 %v3575, %v3649
        %s3656 = sld [smem:[#allocation9 + $0xa6]]
        %v3657 = vstv %s3656
        %v3658 = vmul.f32 %v565, %v3657
        %v3659 = vmul.f32 %v566, %v3657
        %v3660 = vmul.f32 %v567, %v3657
        %3664 = vrot.lane.b32.xlu0 %v3658, 1
        %v3665 = vpop.permute.xlu0 %3664
        %3666 = vrot.lane.b32.xlu0 %v3659, 1
        %v3667 = vpop.permute.xlu0 %3666
        %3668 = vrot.lane.b32.xlu0 %v3660, 1
        %v3669 = vpop.permute.xlu0 %3668
        %v3673 = vadd.f32 %v3593, %v3665
        %v3674 = vadd.f32 %v3594, %v3667
        %v3675 = vadd.f32 %v3595, %v3669
        %s3676 = sld [smem:[#allocation9 + $0xa7]]
        %v3677 = vstv %s3676
        %v3678 = vmul.f32 %v565, %v3677
        %v3679 = vmul.f32 %v566, %v3677
        %v3680 = vmul.f32 %v567, %v3677
        %3684 = vrot.lane.b32.xlu0 %v3678, 1
        %v3685 = vpop.permute.xlu0 %3684
        %3686 = vrot.lane.b32.xlu0 %v3679, 1
        %v3687 = vpop.permute.xlu0 %3686
        %3688 = vrot.lane.b32.xlu0 %v3680, 1
        %v3689 = vpop.permute.xlu0 %3688
        %v3693 = vadd.f32 %v3613, %v3685
        %v3694 = vadd.f32 %v3614, %v3687
        %v3695 = vadd.f32 %v3615, %v3689
        %s3696 = sld [smem:[#allocation9 + $0xa8]]
        %v3697 = vstv %s3696
        %v3698 = vmul.f32 %v601, %v3697
        %v3699 = vmul.f32 %v602, %v3697
        %v3700 = vmul.f32 %v603, %v3697
        %3704 = vrot.lane.b32.xlu0 %v3698, 1
        %v3705 = vpop.permute.xlu0 %3704
        %3706 = vrot.lane.b32.xlu0 %v3699, 1
        %v3707 = vpop.permute.xlu0 %3706
        %3708 = vrot.lane.b32.xlu0 %v3700, 1
        %v3709 = vpop.permute.xlu0 %3708
        %v3713 = vadd.f32 %v3633, %v3705
        %v3714 = vadd.f32 %v3634, %v3707
        %v3715 = vadd.f32 %v3635, %v3709
        %s3716 = sld [smem:[#allocation9 + $0xa9]]
        %v3717 = vstv %s3716
        %v3718 = vmul.f32 %v601, %v3717
        %v3719 = vmul.f32 %v602, %v3717
        %v3720 = vmul.f32 %v603, %v3717
        %3724 = vrot.lane.b32.xlu0 %v3718, 1
        %v3725 = vpop.permute.xlu0 %3724
        %3726 = vrot.lane.b32.xlu0 %v3719, 1
        %v3727 = vpop.permute.xlu0 %3726
        %3728 = vrot.lane.b32.xlu0 %v3720, 1
        %v3729 = vpop.permute.xlu0 %3728
        %v3733 = vadd.f32 %v3653, %v3725
        %v3734 = vadd.f32 %v3654, %v3727
        %v3735 = vadd.f32 %v3655, %v3729
        %s3736 = sld [smem:[#allocation9 + $0xaa]]
        %v3737 = vstv %s3736
        %v3738 = vmul.f32 %v601, %v3737
        %v3739 = vmul.f32 %v602, %v3737
        %v3740 = vmul.f32 %v603, %v3737
        %3744 = vrot.lane.b32.xlu0 %v3738, 1
        %v3745 = vpop.permute.xlu0 %3744
        %3746 = vrot.lane.b32.xlu0 %v3739, 1
        %v3747 = vpop.permute.xlu0 %3746
        %3748 = vrot.lane.b32.xlu0 %v3740, 1
        %v3749 = vpop.permute.xlu0 %3748
        %v3753 = vadd.f32 %v3673, %v3745
        %v3754 = vadd.f32 %v3674, %v3747
        %v3755 = vadd.f32 %v3675, %v3749
        %s3756 = sld [smem:[#allocation9 + $0xab]]
        %v3757 = vstv %s3756
        %v3758 = vmul.f32 %v601, %v3757
        %v3759 = vmul.f32 %v602, %v3757
        %v3760 = vmul.f32 %v603, %v3757
        %3764 = vrot.lane.b32.xlu0 %v3758, 1
        %v3765 = vpop.permute.xlu0 %3764
        %3766 = vrot.lane.b32.xlu0 %v3759, 1
        %v3767 = vpop.permute.xlu0 %3766
        %3768 = vrot.lane.b32.xlu0 %v3760, 1
        %v3769 = vpop.permute.xlu0 %3768
        %v3773 = vadd.f32 %v3693, %v3765
        %v3774 = vadd.f32 %v3694, %v3767
        %v3775 = vadd.f32 %v3695, %v3769
        %s3776 = sld [smem:[#allocation9 + $0xac]]
        %v3777 = vstv %s3776
        %v3778 = vmul.f32 %v637, %v3777
        %v3779 = vmul.f32 %v638, %v3777
        %v3780 = vmul.f32 %v639, %v3777
        %3784 = vrot.lane.b32.xlu0 %v3778, 1
        %v3785 = vpop.permute.xlu0 %3784
        %3786 = vrot.lane.b32.xlu0 %v3779, 1
        %v3787 = vpop.permute.xlu0 %3786
        %3788 = vrot.lane.b32.xlu0 %v3780, 1
        %v3789 = vpop.permute.xlu0 %3788
        %v3793 = vadd.f32 %v3713, %v3785
        %v3794 = vadd.f32 %v3714, %v3787
        %v3795 = vadd.f32 %v3715, %v3789
        %s3796 = sld [smem:[#allocation9 + $0xad]]
        %v3797 = vstv %s3796
        %v3798 = vmul.f32 %v637, %v3797
        %v3799 = vmul.f32 %v638, %v3797
        %v3800 = vmul.f32 %v639, %v3797
        %3804 = vrot.lane.b32.xlu0 %v3798, 1
        %v3805 = vpop.permute.xlu0 %3804
        %3806 = vrot.lane.b32.xlu0 %v3799, 1
        %v3807 = vpop.permute.xlu0 %3806
        %3808 = vrot.lane.b32.xlu0 %v3800, 1
        %v3809 = vpop.permute.xlu0 %3808
        %v3813 = vadd.f32 %v3733, %v3805
        %v3814 = vadd.f32 %v3734, %v3807
        %v3815 = vadd.f32 %v3735, %v3809
        %s3816 = sld [smem:[#allocation9 + $0xae]]
        %v3817 = vstv %s3816
        %v3818 = vmul.f32 %v637, %v3817
        %v3819 = vmul.f32 %v638, %v3817
        %v3820 = vmul.f32 %v639, %v3817
        %3824 = vrot.lane.b32.xlu0 %v3818, 1
        %v3825 = vpop.permute.xlu0 %3824
        %3826 = vrot.lane.b32.xlu0 %v3819, 1
        %v3827 = vpop.permute.xlu0 %3826
        %3828 = vrot.lane.b32.xlu0 %v3820, 1
        %v3829 = vpop.permute.xlu0 %3828
        %v3833 = vadd.f32 %v3753, %v3825
        %v3834 = vadd.f32 %v3754, %v3827
        %v3835 = vadd.f32 %v3755, %v3829
        %s3836 = sld [smem:[#allocation9 + $0xaf]]
        %v3837 = vstv %s3836
        %v3838 = vmul.f32 %v637, %v3837
        %v3839 = vmul.f32 %v638, %v3837
        %v3840 = vmul.f32 %v639, %v3837
        %3844 = vrot.lane.b32.xlu0 %v3838, 1
        %v3845 = vpop.permute.xlu0 %3844
        %3846 = vrot.lane.b32.xlu0 %v3839, 1
        %v3847 = vpop.permute.xlu0 %3846
        %3848 = vrot.lane.b32.xlu0 %v3840, 1
        %v3849 = vpop.permute.xlu0 %3848
        %v3853 = vadd.f32 %v3773, %v3845
        %v3854 = vadd.f32 %v3774, %v3847
        %v3855 = vadd.f32 %v3775, %v3849
        %s3856 = sld [smem:[#allocation9 + $0xb0]]
        %v3857 = vstv %s3856
        %v3858 = vmul.f32 %v673, %v3857
        %v3859 = vmul.f32 %v674, %v3857
        %v3860 = vmul.f32 %v675, %v3857
        %3864 = vrot.lane.b32.xlu0 %v3858, 1
        %v3865 = vpop.permute.xlu0 %3864
        %3866 = vrot.lane.b32.xlu0 %v3859, 1
        %v3867 = vpop.permute.xlu0 %3866
        %3868 = vrot.lane.b32.xlu0 %v3860, 1
        %v3869 = vpop.permute.xlu0 %3868
        %v3873 = vadd.f32 %v3793, %v3865
        %v3874 = vadd.f32 %v3794, %v3867
        %v3875 = vadd.f32 %v3795, %v3869
        %s3876 = sld [smem:[#allocation9 + $0xb1]]
        %v3877 = vstv %s3876
        %v3878 = vmul.f32 %v673, %v3877
        %v3879 = vmul.f32 %v674, %v3877
        %v3880 = vmul.f32 %v675, %v3877
        %3884 = vrot.lane.b32.xlu0 %v3878, 1
        %v3885 = vpop.permute.xlu0 %3884
        %3886 = vrot.lane.b32.xlu0 %v3879, 1
        %v3887 = vpop.permute.xlu0 %3886
        %3888 = vrot.lane.b32.xlu0 %v3880, 1
        %v3889 = vpop.permute.xlu0 %3888
        %v3893 = vadd.f32 %v3813, %v3885
        %v3894 = vadd.f32 %v3814, %v3887
        %v3895 = vadd.f32 %v3815, %v3889
        %s3896 = sld [smem:[#allocation9 + $0xb2]]
        %v3897 = vstv %s3896
        %v3898 = vmul.f32 %v673, %v3897
        %v3899 = vmul.f32 %v674, %v3897
        %v3900 = vmul.f32 %v675, %v3897
        %3904 = vrot.lane.b32.xlu0 %v3898, 1
        %v3905 = vpop.permute.xlu0 %3904
        %3906 = vrot.lane.b32.xlu0 %v3899, 1
        %v3907 = vpop.permute.xlu0 %3906
        %3908 = vrot.lane.b32.xlu0 %v3900, 1
        %v3909 = vpop.permute.xlu0 %3908
        %v3913 = vadd.f32 %v3833, %v3905
        %v3914 = vadd.f32 %v3834, %v3907
        %v3915 = vadd.f32 %v3835, %v3909
        %s3916 = sld [smem:[#allocation9 + $0xb3]]
        %v3917 = vstv %s3916
        %v3918 = vmul.f32 %v673, %v3917
        %v3919 = vmul.f32 %v674, %v3917
        %v3920 = vmul.f32 %v675, %v3917
        %3924 = vrot.lane.b32.xlu0 %v3918, 1
        %v3925 = vpop.permute.xlu0 %3924
        %3926 = vrot.lane.b32.xlu0 %v3919, 1
        %v3927 = vpop.permute.xlu0 %3926
        %3928 = vrot.lane.b32.xlu0 %v3920, 1
        %v3929 = vpop.permute.xlu0 %3928
        %v3933 = vadd.f32 %v3853, %v3925
        %v3934 = vadd.f32 %v3854, %v3927
        %v3935 = vadd.f32 %v3855, %v3929
        %s3936 = sld [smem:[#allocation9 + $0xb4]]
        %v3937 = vstv %s3936
        %v3938 = vmul.f32 %v709, %v3937
        %v3939 = vmul.f32 %v710, %v3937
        %v3940 = vmul.f32 %v711, %v3937
        %3944 = vrot.lane.b32.xlu0 %v3938, 1
        %v3945 = vpop.permute.xlu0 %3944
        %3946 = vrot.lane.b32.xlu0 %v3939, 1
        %v3947 = vpop.permute.xlu0 %3946
        %3948 = vrot.lane.b32.xlu0 %v3940, 1
        %v3949 = vpop.permute.xlu0 %3948
        %v3953 = vadd.f32 %v3873, %v3945
        %v3954 = vadd.f32 %v3874, %v3947
        %v3955 = vadd.f32 %v3875, %v3949
        %s3956 = sld [smem:[#allocation9 + $0xb5]]
        %v3957 = vstv %s3956
        %v3958 = vmul.f32 %v709, %v3957
        %v3959 = vmul.f32 %v710, %v3957
        %v3960 = vmul.f32 %v711, %v3957
        %3964 = vrot.lane.b32.xlu0 %v3958, 1
        %v3965 = vpop.permute.xlu0 %3964
        %3966 = vrot.lane.b32.xlu0 %v3959, 1
        %v3967 = vpop.permute.xlu0 %3966
        %3968 = vrot.lane.b32.xlu0 %v3960, 1
        %v3969 = vpop.permute.xlu0 %3968
        %v3973 = vadd.f32 %v3893, %v3965
        %v3974 = vadd.f32 %v3894, %v3967
        %v3975 = vadd.f32 %v3895, %v3969
        %s3976 = sld [smem:[#allocation9 + $0xb6]]
        %v3977 = vstv %s3976
        %v3978 = vmul.f32 %v709, %v3977
        %v3979 = vmul.f32 %v710, %v3977
        %v3980 = vmul.f32 %v711, %v3977
        %3984 = vrot.lane.b32.xlu0 %v3978, 1
        %v3985 = vpop.permute.xlu0 %3984
        %3986 = vrot.lane.b32.xlu0 %v3979, 1
        %v3987 = vpop.permute.xlu0 %3986
        %3988 = vrot.lane.b32.xlu0 %v3980, 1
        %v3989 = vpop.permute.xlu0 %3988
        %v3993 = vadd.f32 %v3913, %v3985
        %v3994 = vadd.f32 %v3914, %v3987
        %v3995 = vadd.f32 %v3915, %v3989
        %s3996 = sld [smem:[#allocation9 + $0xb7]]
        %v3997 = vstv %s3996
        %v3998 = vmul.f32 %v709, %v3997
        %v3999 = vmul.f32 %v710, %v3997
        %v4000 = vmul.f32 %v711, %v3997
        %4004 = vrot.lane.b32.xlu0 %v3998, 1
        %v4005 = vpop.permute.xlu0 %4004
        %4006 = vrot.lane.b32.xlu0 %v3999, 1
        %v4007 = vpop.permute.xlu0 %4006
        %4008 = vrot.lane.b32.xlu0 %v4000, 1
        %v4009 = vpop.permute.xlu0 %4008
        %v4013 = vadd.f32 %v3933, %v4005
        %v4014 = vadd.f32 %v3934, %v4007
        %v4015 = vadd.f32 %v3935, %v4009
        %s4016 = sld [smem:[#allocation9 + $0xb8]]
        %v4017 = vstv %s4016
        %v4018 = vmul.f32 %v745, %v4017
        %v4019 = vmul.f32 %v746, %v4017
        %v4020 = vmul.f32 %v747, %v4017
        %4024 = vrot.lane.b32.xlu0 %v4018, 1
        %v4025 = vpop.permute.xlu0 %4024
        %4026 = vrot.lane.b32.xlu0 %v4019, 1
        %v4027 = vpop.permute.xlu0 %4026
        %4028 = vrot.lane.b32.xlu0 %v4020, 1
        %v4029 = vpop.permute.xlu0 %4028
        %v4033 = vadd.f32 %v3953, %v4025
        %v4034 = vadd.f32 %v3954, %v4027
        %v4035 = vadd.f32 %v3955, %v4029
        %s4036 = sld [smem:[#allocation9 + $0xb9]]
        %v4037 = vstv %s4036
        %v4038 = vmul.f32 %v745, %v4037
        %v4039 = vmul.f32 %v746, %v4037
        %v4040 = vmul.f32 %v747, %v4037
        %4044 = vrot.lane.b32.xlu0 %v4038, 1
        %v4045 = vpop.permute.xlu0 %4044
        %4046 = vrot.lane.b32.xlu0 %v4039, 1
        %v4047 = vpop.permute.xlu0 %4046
        %4048 = vrot.lane.b32.xlu0 %v4040, 1
        %v4049 = vpop.permute.xlu0 %4048
        %v4053 = vadd.f32 %v3973, %v4045
        %v4054 = vadd.f32 %v3974, %v4047
        %v4055 = vadd.f32 %v3975, %v4049
        %s4056 = sld [smem:[#allocation9 + $0xba]]
        %v4057 = vstv %s4056
        %v4058 = vmul.f32 %v745, %v4057
        %v4059 = vmul.f32 %v746, %v4057
        %v4060 = vmul.f32 %v747, %v4057
        %4064 = vrot.lane.b32.xlu0 %v4058, 1
        %v4065 = vpop.permute.xlu0 %4064
        %4066 = vrot.lane.b32.xlu0 %v4059, 1
        %v4067 = vpop.permute.xlu0 %4066
        %4068 = vrot.lane.b32.xlu0 %v4060, 1
        %v4069 = vpop.permute.xlu0 %4068
        %v4073 = vadd.f32 %v3993, %v4065
        %v4074 = vadd.f32 %v3994, %v4067
        %v4075 = vadd.f32 %v3995, %v4069
        %s4076 = sld [smem:[#allocation9 + $0xbb]]
        %v4077 = vstv %s4076
        %v4078 = vmul.f32 %v745, %v4077
        %v4079 = vmul.f32 %v746, %v4077
        %v4080 = vmul.f32 %v747, %v4077
        %4084 = vrot.lane.b32.xlu0 %v4078, 1
        %v4085 = vpop.permute.xlu0 %4084
        %4086 = vrot.lane.b32.xlu0 %v4079, 1
        %v4087 = vpop.permute.xlu0 %4086
        %4088 = vrot.lane.b32.xlu0 %v4080, 1
        %v4089 = vpop.permute.xlu0 %4088
        %v4093 = vadd.f32 %v4013, %v4085
        %v4094 = vadd.f32 %v4014, %v4087
        %v4095 = vadd.f32 %v4015, %v4089
        %s4096 = sld [smem:[#allocation9 + $0xbc]]
        %v4097 = vstv %s4096
        %v4098 = vmul.f32 %v781, %v4097
        %v4099 = vmul.f32 %v782, %v4097
        %v4100 = vmul.f32 %v783, %v4097
        %4104 = vrot.lane.b32.xlu0 %v4098, 1
        %v4105 = vpop.permute.xlu0 %4104
        %4106 = vrot.lane.b32.xlu0 %v4099, 1
        %v4107 = vpop.permute.xlu0 %4106
        %4108 = vrot.lane.b32.xlu0 %v4100, 1
        %v4109 = vpop.permute.xlu0 %4108
        %v4113 = vadd.f32 %v4033, %v4105
        %v4114 = vadd.f32 %v4034, %v4107
        %v4115 = vadd.f32 %v4035, %v4109
        %s4116 = sld [smem:[#allocation9 + $0xbd]]
        %v4117 = vstv %s4116
        %v4118 = vmul.f32 %v781, %v4117
        %v4119 = vmul.f32 %v782, %v4117
        %v4120 = vmul.f32 %v783, %v4117
        %4124 = vrot.lane.b32.xlu0 %v4118, 1
        %v4125 = vpop.permute.xlu0 %4124
        %4126 = vrot.lane.b32.xlu0 %v4119, 1
        %v4127 = vpop.permute.xlu0 %4126
        %4128 = vrot.lane.b32.xlu0 %v4120, 1
        %v4129 = vpop.permute.xlu0 %4128
        %v4133 = vadd.f32 %v4053, %v4125
        %v4134 = vadd.f32 %v4054, %v4127
        %v4135 = vadd.f32 %v4055, %v4129
        %s4136 = sld [smem:[#allocation9 + $0xbe]]
        %v4137 = vstv %s4136
        %v4138 = vmul.f32 %v781, %v4137
        %v4139 = vmul.f32 %v782, %v4137
        %v4140 = vmul.f32 %v783, %v4137
        %4144 = vrot.lane.b32.xlu0 %v4138, 1
        %v4145 = vpop.permute.xlu0 %4144
        %4146 = vrot.lane.b32.xlu0 %v4139, 1
        %v4147 = vpop.permute.xlu0 %4146
        %4148 = vrot.lane.b32.xlu0 %v4140, 1
        %v4149 = vpop.permute.xlu0 %4148
        %v4153 = vadd.f32 %v4073, %v4145
        %v4154 = vadd.f32 %v4074, %v4147
        %v4155 = vadd.f32 %v4075, %v4149
        %s4156 = sld [smem:[#allocation9 + $0xbf]]
        %v4157 = vstv %s4156
        %v4158 = vmul.f32 %v781, %v4157
        %v4159 = vmul.f32 %v782, %v4157
        %v4160 = vmul.f32 %v783, %v4157
        %4164 = vrot.lane.b32.xlu0 %v4158, 1
        %v4165 = vpop.permute.xlu0 %4164
        %4166 = vrot.lane.b32.xlu0 %v4159, 1
        %v4167 = vpop.permute.xlu0 %4166
        %4168 = vrot.lane.b32.xlu0 %v4160, 1
        %v4169 = vpop.permute.xlu0 %4168
        %v4173 = vadd.f32 %v4093, %v4165
        %v4174 = vadd.f32 %v4094, %v4167
        %v4175 = vadd.f32 %v4095, %v4169
        %v4176 = vadd.f32 %v4113, %v2377
        %v4177 = vadd.f32 %v4114, %v2377
        %v4178 = vadd.f32 %v4115, %v2377
        %v4179 = vmax.f32 %v4176, 0.0
        %v4180 = vmax.f32 %v4177, 0.0
        %v4181 = vmax.f32 %v4178, 0.0
        %v4182 = vadd.f32 %v4133, %v2385
        %v4183 = vadd.f32 %v4134, %v2385
        %v4184 = vadd.f32 %v4135, %v2385
        %v4185 = vmax.f32 %v4182, 0.0
        %v4186 = vmax.f32 %v4183, 0.0
        %v4187 = vmax.f32 %v4184, 0.0
        %v4188 = vadd.f32 %v4153, %v2393
        %v4189 = vadd.f32 %v4154, %v2393
        %v4190 = vadd.f32 %v4155, %v2393
        %v4191 = vmax.f32 %v4188, 0.0
        %v4192 = vmax.f32 %v4189, 0.0
        %v4193 = vmax.f32 %v4190, 0.0
        %v4194 = vadd.f32 %v4173, %v2401
        %v4195 = vadd.f32 %v4174, %v2401
        %v4196 = vadd.f32 %v4175, %v2401
        %v4197 = vmax.f32 %v4194, 0.0
        %v4198 = vmax.f32 %v4195, 0.0
        %v4199 = vmax.f32 %v4196, 0.0
        %s4200 = sld [smem:[#allocation9 + $0x80]]
        %v4201 = vstv %s4200
        %v4202 = vmul.f32 %v529, %v4201
        %v4203 = vmul.f32 %v530, %v4201
        %v4204 = vmul.f32 %v531, %v4201
        %v4205 = vadd.f32 %v4202, 0.0
        %v4206 = vadd.f32 %v4203, 0.0
        %v4207 = vadd.f32 %v4204, 0.0
        %s4208 = sld [smem:[#allocation9 + $0x81]]
        %v4209 = vstv %s4208
        %v4210 = vmul.f32 %v529, %v4209
        %v4211 = vmul.f32 %v530, %v4209
        %v4212 = vmul.f32 %v531, %v4209
        %v4213 = vadd.f32 %v4210, 0.0
        %v4214 = vadd.f32 %v4211, 0.0
        %v4215 = vadd.f32 %v4212, 0.0
        %s4216 = sld [smem:[#allocation9 + $0x82]]
        %v4217 = vstv %s4216
        %v4218 = vmul.f32 %v529, %v4217
        %v4219 = vmul.f32 %v530, %v4217
        %v4220 = vmul.f32 %v531, %v4217
        %v4221 = vadd.f32 %v4218, 0.0
        %v4222 = vadd.f32 %v4219, 0.0
        %v4223 = vadd.f32 %v4220, 0.0
        %s4224 = sld [smem:[#allocation9 + $0x83]]
        %v4225 = vstv %s4224
        %v4226 = vmul.f32 %v529, %v4225
        %v4227 = vmul.f32 %v530, %v4225
        %v4228 = vmul.f32 %v531, %v4225
        %v4229 = vadd.f32 %v4226, 0.0
        %v4230 = vadd.f32 %v4227, 0.0
        %v4231 = vadd.f32 %v4228, 0.0
        %s4232 = sld [smem:[#allocation9 + $0x84]]
        %v4233 = vstv %s4232
        %v4234 = vmul.f32 %v565, %v4233
        %v4235 = vmul.f32 %v566, %v4233
        %v4236 = vmul.f32 %v567, %v4233
        %v4237 = vadd.f32 %v4205, %v4234
        %v4238 = vadd.f32 %v4206, %v4235
        %v4239 = vadd.f32 %v4207, %v4236
        %s4240 = sld [smem:[#allocation9 + $0x85]]
        %v4241 = vstv %s4240
        %v4242 = vmul.f32 %v565, %v4241
        %v4243 = vmul.f32 %v566, %v4241
        %v4244 = vmul.f32 %v567, %v4241
        %v4245 = vadd.f32 %v4213, %v4242
        %v4246 = vadd.f32 %v4214, %v4243
        %v4247 = vadd.f32 %v4215, %v4244
        %s4248 = sld [smem:[#allocation9 + $0x86]]
        %v4249 = vstv %s4248
        %v4250 = vmul.f32 %v565, %v4249
        %v4251 = vmul.f32 %v566, %v4249
        %v4252 = vmul.f32 %v567, %v4249
        %v4253 = vadd.f32 %v4221, %v4250
        %v4254 = vadd.f32 %v4222, %v4251
        %v4255 = vadd.f32 %v4223, %v4252
        %s4256 = sld [smem:[#allocation9 + $0x87]]
        %v4257 = vstv %s4256
        %v4258 = vmul.f32 %v565, %v4257
        %v4259 = vmul.f32 %v566, %v4257
        %v4260 = vmul.f32 %v567, %v4257
        %v4261 = vadd.f32 %v4229, %v4258
        %v4262 = vadd.f32 %v4230, %v4259
        %v4263 = vadd.f32 %v4231, %v4260
        %s4264 = sld [smem:[#allocation9 + $0x88]]
        %v4265 = vstv %s4264
        %v4266 = vmul.f32 %v601, %v4265
        %v4267 = vmul.f32 %v602, %v4265
        %v4268 = vmul.f32 %v603, %v4265
        %v4269 = vadd.f32 %v4237, %v4266
        %v4270 = vadd.f32 %v4238, %v4267
        %v4271 = vadd.f32 %v4239, %v4268
        %s4272 = sld [smem:[#allocation9 + $0x89]]
        %v4273 = vstv %s4272
        %v4274 = vmul.f32 %v601, %v4273
        %v4275 = vmul.f32 %v602, %v4273
        %v4276 = vmul.f32 %v603, %v4273
        %v4277 = vadd.f32 %v4245, %v4274
        %v4278 = vadd.f32 %v4246, %v4275
        %v4279 = vadd.f32 %v4247, %v4276
        %s4280 = sld [smem:[#allocation9 + $0x8a]]
        %v4281 = vstv %s4280
        %v4282 = vmul.f32 %v601, %v4281
        %v4283 = vmul.f32 %v602, %v4281
        %v4284 = vmul.f32 %v603, %v4281
        %v4285 = vadd.f32 %v4253, %v4282
        %v4286 = vadd.f32 %v4254, %v4283
        %v4287 = vadd.f32 %v4255, %v4284
        %s4288 = sld [smem:[#allocation9 + $0x8b]]
        %v4289 = vstv %s4288
        %v4290 = vmul.f32 %v601, %v4289
        %v4291 = vmul.f32 %v602, %v4289
        %v4292 = vmul.f32 %v603, %v4289
        %v4293 = vadd.f32 %v4261, %v4290
        %v4294 = vadd.f32 %v4262, %v4291
        %v4295 = vadd.f32 %v4263, %v4292
        %s4296 = sld [smem:[#allocation9 + $0x8c]]
        %v4297 = vstv %s4296
        %v4298 = vmul.f32 %v637, %v4297
        %v4299 = vmul.f32 %v638, %v4297
        %v4300 = vmul.f32 %v639, %v4297
        %v4301 = vadd.f32 %v4269, %v4298
        %v4302 = vadd.f32 %v4270, %v4299
        %v4303 = vadd.f32 %v4271, %v4300
        %s4304 = sld [smem:[#allocation9 + $0x8d]]
        %v4305 = vstv %s4304
        %v4306 = vmul.f32 %v637, %v4305
        %v4307 = vmul.f32 %v638, %v4305
        %v4308 = vmul.f32 %v639, %v4305
        %v4309 = vadd.f32 %v4277, %v4306
        %v4310 = vadd.f32 %v4278, %v4307
        %v4311 = vadd.f32 %v4279, %v4308
        %s4312 = sld [smem:[#allocation9 + $0x8e]]
        %v4313 = vstv %s4312
        %v4314 = vmul.f32 %v637, %v4313
        %v4315 = vmul.f32 %v638, %v4313
        %v4316 = vmul.f32 %v639, %v4313
        %v4317 = vadd.f32 %v4285, %v4314
        %v4318 = vadd.f32 %v4286, %v4315
        %v4319 = vadd.f32 %v4287, %v4316
        %s4320 = sld [smem:[#allocation9 + $0x8f]]
        %v4321 = vstv %s4320
        %v4322 = vmul.f32 %v637, %v4321
        %v4323 = vmul.f32 %v638, %v4321
        %v4324 = vmul.f32 %v639, %v4321
        %v4325 = vadd.f32 %v4293, %v4322
        %v4326 = vadd.f32 %v4294, %v4323
        %v4327 = vadd.f32 %v4295, %v4324
        %s4328 = sld [smem:[#allocation9 + $0x90]]
        %v4329 = vstv %s4328
        %v4330 = vmul.f32 %v673, %v4329
        %v4331 = vmul.f32 %v674, %v4329
        %v4332 = vmul.f32 %v675, %v4329
        %v4333 = vadd.f32 %v4301, %v4330
        %v4334 = vadd.f32 %v4302, %v4331
        %v4335 = vadd.f32 %v4303, %v4332
        %s4336 = sld [smem:[#allocation9 + $0x91]]
        %v4337 = vstv %s4336
        %v4338 = vmul.f32 %v673, %v4337
        %v4339 = vmul.f32 %v674, %v4337
        %v4340 = vmul.f32 %v675, %v4337
        %v4341 = vadd.f32 %v4309, %v4338
        %v4342 = vadd.f32 %v4310, %v4339
        %v4343 = vadd.f32 %v4311, %v4340
        %s4344 = sld [smem:[#allocation9 + $0x92]]
        %v4345 = vstv %s4344
        %v4346 = vmul.f32 %v673, %v4345
        %v4347 = vmul.f32 %v674, %v4345
        %v4348 = vmul.f32 %v675, %v4345
        %v4349 = vadd.f32 %v4317, %v4346
        %v4350 = vadd.f32 %v4318, %v4347
        %v4351 = vadd.f32 %v4319, %v4348
        %s4352 = sld [smem:[#allocation9 + $0x93]]
        %v4353 = vstv %s4352
        %v4354 = vmul.f32 %v673, %v4353
        %v4355 = vmul.f32 %v674, %v4353
        %v4356 = vmul.f32 %v675, %v4353
        %v4357 = vadd.f32 %v4325, %v4354
        %v4358 = vadd.f32 %v4326, %v4355
        %v4359 = vadd.f32 %v4327, %v4356
        %s4360 = sld [smem:[#allocation9 + $0x94]]
        %v4361 = vstv %s4360
        %v4362 = vmul.f32 %v709, %v4361
        %v4363 = vmul.f32 %v710, %v4361
        %v4364 = vmul.f32 %v711, %v4361
        %v4365 = vadd.f32 %v4333, %v4362
        %v4366 = vadd.f32 %v4334, %v4363
        %v4367 = vadd.f32 %v4335, %v4364
        %s4368 = sld [smem:[#allocation9 + $0x95]]
        %v4369 = vstv %s4368
        %v4370 = vmul.f32 %v709, %v4369
        %v4371 = vmul.f32 %v710, %v4369
        %v4372 = vmul.f32 %v711, %v4369
        %v4373 = vadd.f32 %v4341, %v4370
        %v4374 = vadd.f32 %v4342, %v4371
        %v4375 = vadd.f32 %v4343, %v4372
        %s4376 = sld [smem:[#allocation9 + $0x96]]
        %v4377 = vstv %s4376
        %v4378 = vmul.f32 %v709, %v4377
        %v4379 = vmul.f32 %v710, %v4377
        %v4380 = vmul.f32 %v711, %v4377
        %v4381 = vadd.f32 %v4349, %v4378
        %v4382 = vadd.f32 %v4350, %v4379
        %v4383 = vadd.f32 %v4351, %v4380
        %s4384 = sld [smem:[#allocation9 + $0x97]]
        %v4385 = vstv %s4384
        %v4386 = vmul.f32 %v709, %v4385
        %v4387 = vmul.f32 %v710, %v4385
        %v4388 = vmul.f32 %v711, %v4385
        %v4389 = vadd.f32 %v4357, %v4386
        %v4390 = vadd.f32 %v4358, %v4387
        %v4391 = vadd.f32 %v4359, %v4388
        %s4392 = sld [smem:[#allocation9 + $0x98]]
        %v4393 = vstv %s4392
        %v4394 = vmul.f32 %v745, %v4393
        %v4395 = vmul.f32 %v746, %v4393
        %v4396 = vmul.f32 %v747, %v4393
        %v4397 = vadd.f32 %v4365, %v4394
        %v4398 = vadd.f32 %v4366, %v4395
        %v4399 = vadd.f32 %v4367, %v4396
        %s4400 = sld [smem:[#allocation9 + $0x99]]
        %v4401 = vstv %s4400
        %v4402 = vmul.f32 %v745, %v4401
        %v4403 = vmul.f32 %v746, %v4401
        %v4404 = vmul.f32 %v747, %v4401
        %v4405 = vadd.f32 %v4373, %v4402
        %v4406 = vadd.f32 %v4374, %v4403
        %v4407 = vadd.f32 %v4375, %v4404
        %s4408 = sld [smem:[#allocation9 + $0x9a]]
        %v4409 = vstv %s4408
        %v4410 = vmul.f32 %v745, %v4409
        %v4411 = vmul.f32 %v746, %v4409
        %v4412 = vmul.f32 %v747, %v4409
        %v4413 = vadd.f32 %v4381, %v4410
        %v4414 = vadd.f32 %v4382, %v4411
        %v4415 = vadd.f32 %v4383, %v4412
        %s4416 = sld [smem:[#allocation9 + $0x9b]]
        %v4417 = vstv %s4416
        %v4418 = vmul.f32 %v745, %v4417
        %v4419 = vmul.f32 %v746, %v4417
        %v4420 = vmul.f32 %v747, %v4417
        %v4421 = vadd.f32 %v4389, %v4418
        %v4422 = vadd.f32 %v4390, %v4419
        %v4423 = vadd.f32 %v4391, %v4420
        %s4424 = sld [smem:[#allocation9 + $0x9c]]
        %v4425 = vstv %s4424
        %v4426 = vmul.f32 %v781, %v4425
        %v4427 = vmul.f32 %v782, %v4425
        %v4428 = vmul.f32 %v783, %v4425
        %v4429 = vadd.f32 %v4397, %v4426
        %v4430 = vadd.f32 %v4398, %v4427
        %v4431 = vadd.f32 %v4399, %v4428
        %s4432 = sld [smem:[#allocation9 + $0x9d]]
        %v4433 = vstv %s4432
        %v4434 = vmul.f32 %v781, %v4433
        %v4435 = vmul.f32 %v782, %v4433
        %v4436 = vmul.f32 %v783, %v4433
        %v4437 = vadd.f32 %v4405, %v4434
        %v4438 = vadd.f32 %v4406, %v4435
        %v4439 = vadd.f32 %v4407, %v4436
        %s4440 = sld [smem:[#allocation9 + $0x9e]]
        %v4441 = vstv %s4440
        %v4442 = vmul.f32 %v781, %v4441
        %v4443 = vmul.f32 %v782, %v4441
        %v4444 = vmul.f32 %v783, %v4441
        %v4445 = vadd.f32 %v4413, %v4442
        %v4446 = vadd.f32 %v4414, %v4443
        %v4447 = vadd.f32 %v4415, %v4444
        %s4448 = sld [smem:[#allocation9 + $0x9f]]
        %v4449 = vstv %s4448
        %v4450 = vmul.f32 %v781, %v4449
        %v4451 = vmul.f32 %v782, %v4449
        %v4452 = vmul.f32 %v783, %v4449
        %v4453 = vadd.f32 %v4421, %v4450
        %v4454 = vadd.f32 %v4422, %v4451
        %v4455 = vadd.f32 %v4423, %v4452
        %v4456 = vadd.f32 %v4429, %v2377
        %v4457 = vadd.f32 %v4430, %v2377
        %v4458 = vadd.f32 %v4431, %v2377
        %v4459 = vmax.f32 %v4456, 0.0
        %v4460 = vmax.f32 %v4457, 0.0
        %v4461 = vmax.f32 %v4458, 0.0
        %4465 = vrot.lane.b32.xlu0 %v4459, 127
        %v4466 = vpop.permute.xlu0 %4465
        %4467 = vrot.lane.b32.xlu0 %v4460, 127
        %v4468 = vpop.permute.xlu0 %4467
        %4469 = vrot.lane.b32.xlu0 %v4461, 127
        %v4470 = vpop.permute.xlu0 %4469
        %v4471 = vsel %vm2935, %v4466, 0
        %v4473 = vsel %vm2935, %v4468, 0
        %v4475 = vsel %vm2935, %v4470, 0
        %4477 = vmatpush.msra.mxu0 0.0
        %4478 = vmatpush.msra.mxu0 0.0
        %4479 = vmatpush.msra.mxu0 0.0
        %4480 = vmatpush.msra.mxu0 0.0
        %4481 = vmatpush.msra.mxu0 0.0
        %4482 = vmatpush.msra.mxu0 0.0
        %4483 = vmatpush.msra.mxu0 0.0
        %4484 = vmatpush.msra.mxu0 0.0
        %4485 = vmatpush.msra.mxu0 0.0
        %4486 = vmatpush.msra.mxu0 0.0
        %4487 = vmatpush.msra.mxu0 0.0
        %4488 = vmatpush.msra.mxu0 0.0
        %4489 = vmatpush.msra.mxu0 0.0
        %4490 = vmatpush.msra.mxu0 %v2944
        %4491 = vmatpush.msra.mxu0 %v478
        %4492 = vmatpush.msra.mxu0 %v477
        %4493 = vmatmul.f32.gmra.mxu0 %v4471
        %v4494 = vpop.f32.mrf.mxu0
        %v4495 = vadd.f32 0.0, %v4494
        %4496 = vmatmul.f32.gmra.mxu0 %v4473
        %v4497 = vpop.f32.mrf.mxu0
        %v4498 = vadd.f32 0.0, %v4497
        %4499 = vmatmul.f32.gmra.mxu0 %v4475
        %v4500 = vpop.f32.mrf.mxu0
        %v4501 = vadd.f32 0.0, %v4500
        %4502 = vdwg.mxu0
        %4506 = vrot.lane.b32.xlu0 %v4179, 127
        %v4507 = vpop.permute.xlu0 %4506
        %4508 = vrot.lane.b32.xlu0 %v4180, 127
        %v4509 = vpop.permute.xlu0 %4508
        %4510 = vrot.lane.b32.xlu0 %v4181, 127
        %v4511 = vpop.permute.xlu0 %4510
        %v4512 = vsel %vm2935, %v4507, 0
        %v4514 = vsel %vm2935, %v4509, 0
        %v4516 = vsel %vm2935, %v4511, 0
        %4518 = vmatpush.msra.mxu0 0.0
        %4519 = vmatpush.msra.mxu0 0.0
        %4520 = vmatpush.msra.mxu0 0.0
        %4521 = vmatpush.msra.mxu0 0.0
        %4522 = vmatpush.msra.mxu0 0.0
        %4523 = vmatpush.msra.mxu0 0.0
        %4524 = vmatpush.msra.mxu0 0.0
        %4525 = vmatpush.msra.mxu0 0.0
        %4526 = vmatpush.msra.mxu0 0.0
        %4527 = vmatpush.msra.mxu0 0.0
        %4528 = vmatpush.msra.mxu0 0.0
        %4529 = vmatpush.msra.mxu0 0.0
        %4530 = vmatpush.msra.mxu0 0.0
        %4531 = vmatpush.msra.mxu0 %v2988
        %4532 = vmatpush.msra.mxu0 %v474
        %4533 = vmatpush.msra.mxu0 %v473
        %4534 = vmatmul.f32.gmra.mxu0 %v4512
        %v4535 = vpop.f32.mrf.mxu0
        %v4536 = vadd.f32 %v4495, %v4535
        %4537 = vmatmul.f32.gmra.mxu0 %v4514
        %v4538 = vpop.f32.mrf.mxu0
        %v4539 = vadd.f32 %v4498, %v4538
        %4540 = vmatmul.f32.gmra.mxu0 %v4516
        %v4541 = vpop.f32.mrf.mxu0
        %v4542 = vadd.f32 %v4501, %v4541
        %4543 = vdwg.mxu0
        %v4544 = vadd.f32 %v4437, %v2385
        %v4545 = vadd.f32 %v4438, %v2385
        %v4546 = vadd.f32 %v4439, %v2385
        %v4547 = vmax.f32 %v4544, 0.0
        %v4548 = vmax.f32 %v4545, 0.0
        %v4549 = vmax.f32 %v4546, 0.0
        %4553 = vrot.lane.b32.xlu0 %v4547, 127
        %v4554 = vpop.permute.xlu0 %4553
        %4555 = vrot.lane.b32.xlu0 %v4548, 127
        %v4556 = vpop.permute.xlu0 %4555
        %4557 = vrot.lane.b32.xlu0 %v4549, 127
        %v4558 = vpop.permute.xlu0 %4557
        %v4559 = vsel %vm2935, %v4554, 0
        %v4561 = vsel %vm2935, %v4556, 0
        %v4563 = vsel %vm2935, %v4558, 0
        %4565 = vmatpush.msra.mxu0 0.0
        %4566 = vmatpush.msra.mxu0 0.0
        %4567 = vmatpush.msra.mxu0 0.0
        %4568 = vmatpush.msra.mxu0 0.0
        %4569 = vmatpush.msra.mxu0 0.0
        %4570 = vmatpush.msra.mxu0 0.0
        %4571 = vmatpush.msra.mxu0 0.0
        %4572 = vmatpush.msra.mxu0 0.0
        %4573 = vmatpush.msra.mxu0 0.0
        %4574 = vmatpush.msra.mxu0 0.0
        %4575 = vmatpush.msra.mxu0 0.0
        %4576 = vmatpush.msra.mxu0 0.0
        %4577 = vmatpush.msra.mxu0 0.0
        %4578 = vmatpush.msra.mxu0 %v2944
        %4579 = vmatpush.msra.mxu0 %v478
        %4580 = vmatpush.msra.mxu0 %v477
        %4581 = vmatmul.f32.gmra.mxu0 %v4559
        %v4582 = vpop.f32.mrf.mxu0
        %v4583 = vadd.f32 0.0, %v4582
        %4584 = vmatmul.f32.gmra.mxu0 %v4561
        %v4585 = vpop.f32.mrf.mxu0
        %v4586 = vadd.f32 0.0, %v4585
        %4587 = vmatmul.f32.gmra.mxu0 %v4563
        %v4588 = vpop.f32.mrf.mxu0
        %v4589 = vadd.f32 0.0, %v4588
        %4590 = vdwg.mxu0
        %4594 = vrot.lane.b32.xlu0 %v4185, 127
        %v4595 = vpop.permute.xlu0 %4594
        %4596 = vrot.lane.b32.xlu0 %v4186, 127
        %v4597 = vpop.permute.xlu0 %4596
        %4598 = vrot.lane.b32.xlu0 %v4187, 127
        %v4599 = vpop.permute.xlu0 %4598
        %v4600 = vsel %vm2935, %v4595, 0
        %v4602 = vsel %vm2935, %v4597, 0
        %v4604 = vsel %vm2935, %v4599, 0
        %4606 = vmatpush.msra.mxu0 0.0
        %4607 = vmatpush.msra.mxu0 0.0
        %4608 = vmatpush.msra.mxu0 0.0
        %4609 = vmatpush.msra.mxu0 0.0
        %4610 = vmatpush.msra.mxu0 0.0
        %4611 = vmatpush.msra.mxu0 0.0
        %4612 = vmatpush.msra.mxu0 0.0
        %4613 = vmatpush.msra.mxu0 0.0
        %4614 = vmatpush.msra.mxu0 0.0
        %4615 = vmatpush.msra.mxu0 0.0
        %4616 = vmatpush.msra.mxu0 0.0
        %4617 = vmatpush.msra.mxu0 0.0
        %4618 = vmatpush.msra.mxu0 0.0
        %4619 = vmatpush.msra.mxu0 %v2988
        %4620 = vmatpush.msra.mxu0 %v474
        %4621 = vmatpush.msra.mxu0 %v473
        %4622 = vmatmul.f32.gmra.mxu0 %v4600
        %v4623 = vpop.f32.mrf.mxu0
        %v4624 = vadd.f32 %v4583, %v4623
        %4625 = vmatmul.f32.gmra.mxu0 %v4602
        %v4626 = vpop.f32.mrf.mxu0
        %v4627 = vadd.f32 %v4586, %v4626
        %4628 = vmatmul.f32.gmra.mxu0 %v4604
        %v4629 = vpop.f32.mrf.mxu0
        %v4630 = vadd.f32 %v4589, %v4629
        %4631 = vdwg.mxu0
        %v4632 = vadd.f32 %v4445, %v2393
        %v4633 = vadd.f32 %v4446, %v2393
        %v4634 = vadd.f32 %v4447, %v2393
        %v4635 = vmax.f32 %v4632, 0.0
        %v4636 = vmax.f32 %v4633, 0.0
        %v4637 = vmax.f32 %v4634, 0.0
        %4641 = vrot.lane.b32.xlu0 %v4635, 127
        %v4642 = vpop.permute.xlu0 %4641
        %4643 = vrot.lane.b32.xlu0 %v4636, 127
        %v4644 = vpop.permute.xlu0 %4643
        %4645 = vrot.lane.b32.xlu0 %v4637, 127
        %v4646 = vpop.permute.xlu0 %4645
        %v4647 = vsel %vm2935, %v4642, 0
        %v4649 = vsel %vm2935, %v4644, 0
        %v4651 = vsel %vm2935, %v4646, 0
        %4653 = vmatpush.msra.mxu0 0.0
        %4654 = vmatpush.msra.mxu0 0.0
        %4655 = vmatpush.msra.mxu0 0.0
        %4656 = vmatpush.msra.mxu0 0.0
        %4657 = vmatpush.msra.mxu0 0.0
        %4658 = vmatpush.msra.mxu0 0.0
        %4659 = vmatpush.msra.mxu0 0.0
        %4660 = vmatpush.msra.mxu0 0.0
        %4661 = vmatpush.msra.mxu0 0.0
        %4662 = vmatpush.msra.mxu0 0.0
        %4663 = vmatpush.msra.mxu0 0.0
        %4664 = vmatpush.msra.mxu0 0.0
        %4665 = vmatpush.msra.mxu0 0.0
        %4666 = vmatpush.msra.mxu0 %v2944
        %4667 = vmatpush.msra.mxu0 %v478
        %4668 = vmatpush.msra.mxu0 %v477
        %4669 = vmatmul.f32.gmra.mxu0 %v4647
        %v4670 = vpop.f32.mrf.mxu0
        %v4671 = vadd.f32 0.0, %v4670
        %4672 = vmatmul.f32.gmra.mxu0 %v4649
        %v4673 = vpop.f32.mrf.mxu0
        %v4674 = vadd.f32 0.0, %v4673
        %4675 = vmatmul.f32.gmra.mxu0 %v4651
        %v4676 = vpop.f32.mrf.mxu0
        %v4677 = vadd.f32 0.0, %v4676
        %4678 = vdwg.mxu0
        %4682 = vrot.lane.b32.xlu0 %v4191, 127
        %v4683 = vpop.permute.xlu0 %4682
        %4684 = vrot.lane.b32.xlu0 %v4192, 127
        %v4685 = vpop.permute.xlu0 %4684
        %4686 = vrot.lane.b32.xlu0 %v4193, 127
        %v4687 = vpop.permute.xlu0 %4686
        %v4688 = vsel %vm2935, %v4683, 0
        %v4690 = vsel %vm2935, %v4685, 0
        %v4692 = vsel %vm2935, %v4687, 0
        %4694 = vmatpush.msra.mxu0 0.0
        %4695 = vmatpush.msra.mxu0 0.0
        %4696 = vmatpush.msra.mxu0 0.0
        %4697 = vmatpush.msra.mxu0 0.0
        %4698 = vmatpush.msra.mxu0 0.0
        %4699 = vmatpush.msra.mxu0 0.0
        %4700 = vmatpush.msra.mxu0 0.0
        %4701 = vmatpush.msra.mxu0 0.0
        %4702 = vmatpush.msra.mxu0 0.0
        %4703 = vmatpush.msra.mxu0 0.0
        %4704 = vmatpush.msra.mxu0 0.0
        %4705 = vmatpush.msra.mxu0 0.0
        %4706 = vmatpush.msra.mxu0 0.0
        %4707 = vmatpush.msra.mxu0 %v2988
        %4708 = vmatpush.msra.mxu0 %v474
        %4709 = vmatpush.msra.mxu0 %v473
        %4710 = vmatmul.f32.gmra.mxu0 %v4688
        %v4711 = vpop.f32.mrf.mxu0
        %v4712 = vadd.f32 %v4671, %v4711
        %4713 = vmatmul.f32.gmra.mxu0 %v4690
        %v4714 = vpop.f32.mrf.mxu0
        %v4715 = vadd.f32 %v4674, %v4714
        %4716 = vmatmul.f32.gmra.mxu0 %v4692
        %v4717 = vpop.f32.mrf.mxu0
        %v4718 = vadd.f32 %v4677, %v4717
        %4719 = vdwg.mxu0
        %v4720 = vadd.f32 %v4453, %v2401
        %v4721 = vadd.f32 %v4454, %v2401
        %v4722 = vadd.f32 %v4455, %v2401
        %v4723 = vmax.f32 %v4720, 0.0
        %v4724 = vmax.f32 %v4721, 0.0
        %v4725 = vmax.f32 %v4722, 0.0
        %4729 = vrot.lane.b32.xlu0 %v4723, 127
        %v4730 = vpop.permute.xlu0 %4729
        %4731 = vrot.lane.b32.xlu0 %v4724, 127
        %v4732 = vpop.permute.xlu0 %4731
        %4733 = vrot.lane.b32.xlu0 %v4725, 127
        %v4734 = vpop.permute.xlu0 %4733
        %v4735 = vsel %vm2935, %v4730, 0
        %v4737 = vsel %vm2935, %v4732, 0
        %v4739 = vsel %vm2935, %v4734, 0
        %4741 = vmatpush.msra.mxu0 0.0
        %4742 = vmatpush.msra.mxu0 0.0
        %4743 = vmatpush.msra.mxu0 0.0
        %4744 = vmatpush.msra.mxu0 0.0
        %4745 = vmatpush.msra.mxu0 0.0
        %4746 = vmatpush.msra.mxu0 0.0
        %4747 = vmatpush.msra.mxu0 0.0
        %4748 = vmatpush.msra.mxu0 0.0
        %4749 = vmatpush.msra.mxu0 0.0
        %4750 = vmatpush.msra.mxu0 0.0
        %4751 = vmatpush.msra.mxu0 0.0
        %4752 = vmatpush.msra.mxu0 0.0
        %4753 = vmatpush.msra.mxu0 0.0
        %4754 = vmatpush.msra.mxu0 %v2944
        %4755 = vmatpush.msra.mxu0 %v478
        %4756 = vmatpush.msra.mxu0 %v477
        %4757 = vmatmul.f32.gmra.mxu0 %v4735
        %v4758 = vpop.f32.mrf.mxu0
        %v4759 = vadd.f32 0.0, %v4758
        %4760 = vmatmul.f32.gmra.mxu0 %v4737
        %v4761 = vpop.f32.mrf.mxu0
        %v4762 = vadd.f32 0.0, %v4761
        %4763 = vmatmul.f32.gmra.mxu0 %v4739
        %v4764 = vpop.f32.mrf.mxu0
        %v4765 = vadd.f32 0.0, %v4764
        %4766 = vdwg.mxu0
        %4770 = vrot.lane.b32.xlu0 %v4197, 127
        %v4771 = vpop.permute.xlu0 %4770
        %4772 = vrot.lane.b32.xlu0 %v4198, 127
        %v4773 = vpop.permute.xlu0 %4772
        %4774 = vrot.lane.b32.xlu0 %v4199, 127
        %v4775 = vpop.permute.xlu0 %4774
        %v4776 = vsel %vm2935, %v4771, 0
        %v4778 = vsel %vm2935, %v4773, 0
        %v4780 = vsel %vm2935, %v4775, 0
        %4782 = vmatpush.msra.mxu0 0.0
        %4783 = vmatpush.msra.mxu0 0.0
        %4784 = vmatpush.msra.mxu0 0.0
        %4785 = vmatpush.msra.mxu0 0.0
        %4786 = vmatpush.msra.mxu0 0.0
        %4787 = vmatpush.msra.mxu0 0.0
        %4788 = vmatpush.msra.mxu0 0.0
        %4789 = vmatpush.msra.mxu0 0.0
        %4790 = vmatpush.msra.mxu0 0.0
        %4791 = vmatpush.msra.mxu0 0.0
        %4792 = vmatpush.msra.mxu0 0.0
        %4793 = vmatpush.msra.mxu0 0.0
        %4794 = vmatpush.msra.mxu0 0.0
        %4795 = vmatpush.msra.mxu0 %v2988
        %4796 = vmatpush.msra.mxu0 %v474
        %4797 = vmatpush.msra.mxu0 %v473
        %4798 = vmatmul.f32.gmra.mxu0 %v4776
        %v4799 = vpop.f32.mrf.mxu0
        %v4800 = vadd.f32 %v4759, %v4799
        %4801 = vmatmul.f32.gmra.mxu0 %v4778
        %v4802 = vpop.f32.mrf.mxu0
        %v4803 = vadd.f32 %v4762, %v4802
        %4804 = vmatmul.f32.gmra.mxu0 %v4780
        %v4805 = vpop.f32.mrf.mxu0
        %v4806 = vadd.f32 %v4765, %v4805
        %4807 = vdwg.mxu0
        %v4809 = vsel %vm2935, %v469, 0
        %v4812 = vsel %vm2935, %v470, 0
        %v4815 = vsel %vm2935, %v471, 0
        %v4818 = vsel %vm2935, %v472, 0
        %v4821 = vsel %vm2942, %v4542, 0
        %4823 = vmatpush.msra.mxu0 0.0
        %4824 = vmatpush.msra.mxu0 0.0
        %4825 = vmatpush.msra.mxu0 0.0
        %4826 = vmatpush.msra.mxu0 0.0
        %4827 = vmatpush.msra.mxu0 0.0
        %4828 = vmatpush.msra.mxu0 0.0
        %4829 = vmatpush.msra.mxu0 0.0
        %4830 = vmatpush.msra.mxu0 0.0
        %4831 = vmatpush.msra.mxu0 0.0
        %4832 = vmatpush.msra.mxu0 0.0
        %4833 = vmatpush.msra.mxu0 0.0
        %4834 = vmatpush.msra.mxu0 0.0
        %4835 = vmatpush.msra.mxu0 0.0
        %4836 = vmatpush.msra.mxu0 %v4821
        %4837 = vmatpush.msra.mxu0 %v4539
        %4838 = vmatpush.msra.mxu0 %v4536
        %4839 = vmatmul.f32.gmra.mxu0 %v4809
        %v4840 = vpop.f32.mrf.mxu0
        %v4841 = vadd.f32 0.0, %v4840
        %4842 = vmatmul.f32.gmra.mxu0 %v4812
        %v4843 = vpop.f32.mrf.mxu0
        %v4844 = vadd.f32 0.0, %v4843
        %4845 = vmatmul.f32.gmra.mxu0 %v4815
        %v4846 = vpop.f32.mrf.mxu0
        %v4847 = vadd.f32 0.0, %v4846
        %4848 = vmatmul.f32.gmra.mxu0 %v4818
        %v4849 = vpop.f32.mrf.mxu0
        %v4850 = vadd.f32 0.0, %v4849
        %4851 = vdwg.mxu0
        %v4853 = vsel %vm2935, %v464, 0
        %v4856 = vsel %vm2935, %v465, 0
        %v4859 = vsel %vm2935, %v466, 0
        %v4862 = vsel %vm2935, %v467, 0
        %v4865 = vsel %vm2942, %v3014, 0
        %4867 = vmatpush.msra.mxu0 0.0
        %4868 = vmatpush.msra.mxu0 0.0
        %4869 = vmatpush.msra.mxu0 0.0
        %4870 = vmatpush.msra.mxu0 0.0
        %4871 = vmatpush.msra.mxu0 0.0
        %4872 = vmatpush.msra.mxu0 0.0
        %4873 = vmatpush.msra.mxu0 0.0
        %4874 = vmatpush.msra.mxu0 0.0
        %4875 = vmatpush.msra.mxu0 0.0
        %4876 = vmatpush.msra.mxu0 0.0
        %4877 = vmatpush.msra.mxu0 0.0
        %4878 = vmatpush.msra.mxu0 0.0
        %4879 = vmatpush.msra.mxu0 0.0
        %4880 = vmatpush.msra.mxu0 %v4865
        %4881 = vmatpush.msra.mxu0 %v3011
        %4882 = vmatpush.msra.mxu0 %v3008
        %4883 = vmatmul.f32.gmra.mxu0 %v4853
        %v4884 = vpop.f32.mrf.mxu0
        %v4885 = vadd.f32 %v4841, %v4884
        %4886 = vmatmul.f32.gmra.mxu0 %v4856
        %v4887 = vpop.f32.mrf.mxu0
        %v4888 = vadd.f32 %v4844, %v4887
        %4889 = vmatmul.f32.gmra.mxu0 %v4859
        %v4890 = vpop.f32.mrf.mxu0
        %v4891 = vadd.f32 %v4847, %v4890
        %4892 = vmatmul.f32.gmra.mxu0 %v4862
        %v4893 = vpop.f32.mrf.mxu0
        %v4894 = vadd.f32 %v4850, %v4893
        %4895 = vdwg.mxu0
        %s4896 = scalar_lea.vmem %s340, 192 [#allocation12]
        %4897 = vst.msk [vmem:[%s4896] sm:$0xff] %vm504, %v4885
        %4898 = vst.msk [vmem:[%s4896 + $0x8] sm:$0xff] %vm504, %v4888
        %4899 = vst.msk [vmem:[%s4896 + $0x10] sm:$0xff] %vm504, %v4891
        %4900 = vst.msk [vmem:[%s4896 + $0x18] sm:$0xff] %vm504, %v4894
        %v4902 = vsel %vm2942, %v4630, 0
        %4904 = vmatpush.msra.mxu0 0.0
        %4905 = vmatpush.msra.mxu0 0.0
        %4906 = vmatpush.msra.mxu0 0.0
        %4907 = vmatpush.msra.mxu0 0.0
        %4908 = vmatpush.msra.mxu0 0.0
        %4909 = vmatpush.msra.mxu0 0.0
        %4910 = vmatpush.msra.mxu0 0.0
        %4911 = vmatpush.msra.mxu0 0.0
        %4912 = vmatpush.msra.mxu0 0.0
        %4913 = vmatpush.msra.mxu0 0.0
        %4914 = vmatpush.msra.mxu0 0.0
        %4915 = vmatpush.msra.mxu0 0.0
        %4916 = vmatpush.msra.mxu0 0.0
        %4917 = vmatpush.msra.mxu0 %v4902
        %4918 = vmatpush.msra.mxu0 %v4627
        %4919 = vmatpush.msra.mxu0 %v4624
        %4920 = vmatmul.f32.gmra.mxu0 %v4809
        %v4921 = vpop.f32.mrf.mxu0
        %v4922 = vadd.f32 0.0, %v4921
        %4923 = vmatmul.f32.gmra.mxu0 %v4812
        %v4924 = vpop.f32.mrf.mxu0
        %v4925 = vadd.f32 0.0, %v4924
        %4926 = vmatmul.f32.gmra.mxu0 %v4815
        %v4927 = vpop.f32.mrf.mxu0
        %v4928 = vadd.f32 0.0, %v4927
        %4929 = vmatmul.f32.gmra.mxu0 %v4818
        %v4930 = vpop.f32.mrf.mxu0
        %v4931 = vadd.f32 0.0, %v4930
        %4932 = vdwg.mxu0
        %v4934 = vsel %vm2942, %v3102, 0
        %4936 = vmatpush.msra.mxu0 0.0
        %4937 = vmatpush.msra.mxu0 0.0
        %4938 = vmatpush.msra.mxu0 0.0
        %4939 = vmatpush.msra.mxu0 0.0
        %4940 = vmatpush.msra.mxu0 0.0
        %4941 = vmatpush.msra.mxu0 0.0
        %4942 = vmatpush.msra.mxu0 0.0
        %4943 = vmatpush.msra.mxu0 0.0
        %4944 = vmatpush.msra.mxu0 0.0
        %4945 = vmatpush.msra.mxu0 0.0
        %4946 = vmatpush.msra.mxu0 0.0
        %4947 = vmatpush.msra.mxu0 0.0
        %4948 = vmatpush.msra.mxu0 0.0
        %4949 = vmatpush.msra.mxu0 %v4934
        %4950 = vmatpush.msra.mxu0 %v3099
        %4951 = vmatpush.msra.mxu0 %v3096
        %4952 = vmatmul.f32.gmra.mxu0 %v4853
        %v4953 = vpop.f32.mrf.mxu0
        %v4954 = vadd.f32 %v4922, %v4953
        %4955 = vmatmul.f32.gmra.mxu0 %v4856
        %v4956 = vpop.f32.mrf.mxu0
        %v4957 = vadd.f32 %v4925, %v4956
        %4958 = vmatmul.f32.gmra.mxu0 %v4859
        %v4959 = vpop.f32.mrf.mxu0
        %v4960 = vadd.f32 %v4928, %v4959
        %4961 = vmatmul.f32.gmra.mxu0 %v4862
        %v4962 = vpop.f32.mrf.mxu0
        %v4963 = vadd.f32 %v4931, %v4962
        %4964 = vdwg.mxu0
        %s4965 = scalar_lea.vmem %s340, 224 [#allocation12]
        %4966 = vst.msk [vmem:[%s4965] sm:$0xff] %vm504, %v4954
        %4967 = vst.msk [vmem:[%s4965 + $0x8] sm:$0xff] %vm504, %v4957
        %4968 = vst.msk [vmem:[%s4965 + $0x10] sm:$0xff] %vm504, %v4960
        %4969 = vst.msk [vmem:[%s4965 + $0x18] sm:$0xff] %vm504, %v4963
        %v4971 = vsel %vm2942, %v4718, 0
        %4973 = vmatpush.msra.mxu0 0.0
        %4974 = vmatpush.msra.mxu0 0.0
        %4975 = vmatpush.msra.mxu0 0.0
        %4976 = vmatpush.msra.mxu0 0.0
        %4977 = vmatpush.msra.mxu0 0.0
        %4978 = vmatpush.msra.mxu0 0.0
        %4979 = vmatpush.msra.mxu0 0.0
        %4980 = vmatpush.msra.mxu0 0.0
        %4981 = vmatpush.msra.mxu0 0.0
        %4982 = vmatpush.msra.mxu0 0.0
        %4983 = vmatpush.msra.mxu0 0.0
        %4984 = vmatpush.msra.mxu0 0.0
        %4985 = vmatpush.msra.mxu0 0.0
        %4986 = vmatpush.msra.mxu0 %v4971
        %4987 = vmatpush.msra.mxu0 %v4715
        %4988 = vmatpush.msra.mxu0 %v4712
        %4989 = vmatmul.f32.gmra.mxu0 %v4809
        %v4990 = vpop.f32.mrf.mxu0
        %v4991 = vadd.f32 0.0, %v4990
        %4992 = vmatmul.f32.gmra.mxu0 %v4812
        %v4993 = vpop.f32.mrf.mxu0
        %v4994 = vadd.f32 0.0, %v4993
        %4995 = vmatmul.f32.gmra.mxu0 %v4815
        %v4996 = vpop.f32.mrf.mxu0
        %v4997 = vadd.f32 0.0, %v4996
        %4998 = vmatmul.f32.gmra.mxu0 %v4818
        %v4999 = vpop.f32.mrf.mxu0
        %v5000 = vadd.f32 0.0, %v4999
        %5001 = vdwg.mxu0
        %v5003 = vsel %vm2942, %v3190, 0
        %5005 = vmatpush.msra.mxu0 0.0
        %5006 = vmatpush.msra.mxu0 0.0
        %5007 = vmatpush.msra.mxu0 0.0
        %5008 = vmatpush.msra.mxu0 0.0
        %5009 = vmatpush.msra.mxu0 0.0
        %5010 = vmatpush.msra.mxu0 0.0
        %5011 = vmatpush.msra.mxu0 0.0
        %5012 = vmatpush.msra.mxu0 0.0
        %5013 = vmatpush.msra.mxu0 0.0
        %5014 = vmatpush.msra.mxu0 0.0
        %5015 = vmatpush.msra.mxu0 0.0
        %5016 = vmatpush.msra.mxu0 0.0
        %5017 = vmatpush.msra.mxu0 0.0
        %5018 = vmatpush.msra.mxu0 %v5003
        %5019 = vmatpush.msra.mxu0 %v3187
        %5020 = vmatpush.msra.mxu0 %v3184
        %5021 = vmatmul.f32.gmra.mxu0 %v4853
        %v5022 = vpop.f32.mrf.mxu0
        %v5023 = vadd.f32 %v4991, %v5022
        %5024 = vmatmul.f32.gmra.mxu0 %v4856
        %v5025 = vpop.f32.mrf.mxu0
        %v5026 = vadd.f32 %v4994, %v5025
        %5027 = vmatmul.f32.gmra.mxu0 %v4859
        %v5028 = vpop.f32.mrf.mxu0
        %v5029 = vadd.f32 %v4997, %v5028
        %5030 = vmatmul.f32.gmra.mxu0 %v4862
        %v5031 = vpop.f32.mrf.mxu0
        %v5032 = vadd.f32 %v5000, %v5031
        %5033 = vdwg.mxu0
        %s5034 = scalar_lea.vmem %s340, 256 [#allocation12]
        %5035 = vst.msk [vmem:[%s5034] sm:$0xff] %vm504, %v5023
        %5036 = vst.msk [vmem:[%s5034 + $0x8] sm:$0xff] %vm504, %v5026
        %5037 = vst.msk [vmem:[%s5034 + $0x10] sm:$0xff] %vm504, %v5029
        %5038 = vst.msk [vmem:[%s5034 + $0x18] sm:$0xff] %vm504, %v5032
        %v5040 = vsel %vm2942, %v4806, 0
        %5042 = vmatpush.msra.mxu0 0.0
        %5043 = vmatpush.msra.mxu0 0.0
        %5044 = vmatpush.msra.mxu0 0.0
        %5045 = vmatpush.msra.mxu0 0.0
        %5046 = vmatpush.msra.mxu0 0.0
        %5047 = vmatpush.msra.mxu0 0.0
        %5048 = vmatpush.msra.mxu0 0.0
        %5049 = vmatpush.msra.mxu0 0.0
        %5050 = vmatpush.msra.mxu0 0.0
        %5051 = vmatpush.msra.mxu0 0.0
        %5052 = vmatpush.msra.mxu0 0.0
        %5053 = vmatpush.msra.mxu0 0.0
        %5054 = vmatpush.msra.mxu0 0.0
        %5055 = vmatpush.msra.mxu0 %v5040
        %5056 = vmatpush.msra.mxu0 %v4803
        %5057 = vmatpush.msra.mxu0 %v4800
        %5058 = vmatmul.f32.gmra.mxu0 %v4809
        %v5059 = vpop.f32.mrf.mxu0
        %v5060 = vadd.f32 0.0, %v5059
        %5061 = vmatmul.f32.gmra.mxu0 %v4812
        %v5062 = vpop.f32.mrf.mxu0
        %v5063 = vadd.f32 0.0, %v5062
        %5064 = vmatmul.f32.gmra.mxu0 %v4815
        %v5065 = vpop.f32.mrf.mxu0
        %v5066 = vadd.f32 0.0, %v5065
        %5067 = vmatmul.f32.gmra.mxu0 %v4818
        %v5068 = vpop.f32.mrf.mxu0
        %v5069 = vadd.f32 0.0, %v5068
        %5070 = vdwg.mxu0
        %v5072 = vsel %vm2942, %v3278, 0
        %5074 = vmatpush.msra.mxu0 0.0
        %5075 = vmatpush.msra.mxu0 0.0
        %5076 = vmatpush.msra.mxu0 0.0
        %5077 = vmatpush.msra.mxu0 0.0
        %5078 = vmatpush.msra.mxu0 0.0
        %5079 = vmatpush.msra.mxu0 0.0
        %5080 = vmatpush.msra.mxu0 0.0
        %5081 = vmatpush.msra.mxu0 0.0
        %5082 = vmatpush.msra.mxu0 0.0
        %5083 = vmatpush.msra.mxu0 0.0
        %5084 = vmatpush.msra.mxu0 0.0
        %5085 = vmatpush.msra.mxu0 0.0
        %5086 = vmatpush.msra.mxu0 0.0
        %5087 = vmatpush.msra.mxu0 %v5072
        %5088 = vmatpush.msra.mxu0 %v3275
        %5089 = vmatpush.msra.mxu0 %v3272
        %5090 = vmatmul.f32.gmra.mxu0 %v4853
        %v5091 = vpop.f32.mrf.mxu0
        %v5092 = vadd.f32 %v5060, %v5091
        %5093 = vmatmul.f32.gmra.mxu0 %v4856
        %v5094 = vpop.f32.mrf.mxu0
        %v5095 = vadd.f32 %v5063, %v5094
        %5096 = vmatmul.f32.gmra.mxu0 %v4859
        %v5097 = vpop.f32.mrf.mxu0
        %v5098 = vadd.f32 %v5066, %v5097
        %5099 = vmatmul.f32.gmra.mxu0 %v4862
        %v5100 = vpop.f32.mrf.mxu0
        %v5101 = vadd.f32 %v5069, %v5100
        %5102 = vdwg.mxu0
        %s5103 = scalar_lea.vmem %s340, 288 [#allocation12]
        %5104 = vst.msk [vmem:[%s5103] sm:$0xff] %vm504, %v5092
        %5105 = vst.msk [vmem:[%s5103 + $0x8] sm:$0xff] %vm504, %v5095
        %5106 = vst.msk [vmem:[%s5103 + $0x10] sm:$0xff] %vm504, %v5098
        %5107 = vst.msk [vmem:[%s5103 + $0x18] sm:$0xff] %vm504, %v5101
        %s5108 = sand.u32 %s172, 1
        %s5109 = scalar_lea.sflag [#allocation5], %s5108
        %s5110 = sand.u32 %s172, 1
        %s5111 = smul.addr %s5110, 320
        %s5112 = scalar_lea.vmem [#allocation12], %s5111
        // Predicated region
        $region61: #{transition_up_forward.1} parent=43 // pred_check
          %p5113 = pneg %p182
        $region62: #{transition_up_forward.1} parent=43 // pred_check_branch
          %5115 = sbr.rel (%p5113) target = $region64
        $region63: #{transition_up_forward.1} parent=43 // pred_region
          %5117 = vsyncadd %s5109, 0
          %s5118 = smul.addr %s28, 40
          %s5119 = smul.addr %s5118, 8
          %s5120 = scalar_lea.hbm %s6, %s5119
          %s5121 = sshll.u32 %s5112, 4
          %s5122 = int_to_ptr.vmem [resolvable:$true] %s5121
          %s5123 = sshll.u32 %s5120, 4
          %s5124 = int_to_ptr.hbm [resolvable:$true] %s5123
          %5129 = dma.vmem_to_hbm [thread:$0]  %s5122, 5120, %s5124, %s5109, 128, 128, 8
        $region64: #{transition_up_forward.1} parent=43 // pred_fallthru
          _
      $region44: #{transition_up_forward.1} parent=5 // pred_fallthru
        _
      %p5130 = scmp.le.s32.totalorder 2, %s23
      // Predicated region
      $region65: #{transition_up_forward.1} parent=5 // pred_check
        %p5131 = pneg %p5130
      $region66: #{transition_up_forward.1} parent=5 // pred_check_branch
        %5133 = sbr.rel (%p5131) target = $region68
      $region67: #{transition_up_forward.1} parent=5 // pred_region
        %s5134 = ssub.s32 %s23, 2
        // Predicated region
        $region69: #{transition_up_forward.1} parent=67 // pred_check
          %p5135 = pneg %p188
        $region70: #{transition_up_forward.1} parent=67 // pred_check_branch
          %5137 = sbr.rel (%p5135) target = $region72
        $region71: #{transition_up_forward.1} parent=67 // pred_region
          %s5138 = sand.u32 %s173, 1
          %s5139 = scalar_lea.sflag [#allocation5], %s5138
          %s5140 = sand.u32 %s173, 1
          %s5141 = smul.addr %s5140, 320
          %s5142 = scalar_lea.vmem [#allocation12], %s5141
          %5144 = dma.done %s5139, 5120
        $region72: #{transition_up_forward.1} parent=67 // pred_fallthru
          _
      $region68: #{transition_up_forward.1} parent=5 // pred_fallthru
        _
    $region6: #{transition_up_forward.1} parent=1 // loop_footer
      %s27 = sadd.s32 1, %s23
    $region7: #{transition_up_forward.1} parent=1 // loop_footer_branch
      %22 = sbr.rel target = $region3
    $region8: #{transition_up_forward.1} parent=1 // loop_exit
      _
    %5145 = vsyncpa [#allocation4], 1
    %s5146 = scalar_lea.sflag [#allocation4], 1
    %5147 = vsyncpa %s5146, 1
    %5148 = vsyncpa [#allocation8], 1
    %s5149 = scalar_lea.sflag [#allocation8], 1
    %5150 = vsyncpa %s5149, 1
    %5151 = vsyncpa [#allocation5], 1
    %s5152 = scalar_lea.sflag [#allocation5], 1
    %5153 = vsyncpa %s5152, 1
    %5154 = vsyncpa [#allocation6], 1
    %s5155 = scalar_lea.sflag [#allocation6], 1
    %5156 = vsyncpa %s5155, 1
    %5157 = vsyncpa [#allocation11], 1

</llo_original>
